<compile_context>
chip_gen: v7x
topology: tpu7x:2x2x1
jax: 0.10.0
libtpu: 0.0.40
codegen_flags: <defaults>
</compile_context>

<pallas_src>
import jax
import jax.numpy as jnp
from jax.experimental import pallas as pl
from jax.experimental.pallas import tpu as pltpu

_HI = jax.lax.Precision.HIGHEST


# ----------------------------- Pallas kernels ------------------------------

def _conv_pool_relu_kernel(p_ref, w_ref, o_ref):
    """Fused conv-as-GEMM (+bias) + ReLU + 2x2 max-pool for one batch tile.

    p_ref : (4, CKK+1, Bt*S)  im2col patches (last row = ones -> bias fold),
                              one slab per 2x2 pooling phase; lanes = (b, s).
    w_ref : (Cout, CKK+1)     conv weight matrix with bias as last column.
    o_ref : (Cout, Bt*S)      S = pooled_h * pooled_w.
    """
    w = w_ref[...]
    m = None
    for q in range(p_ref.shape[0]):          # static unroll over the 4 phases
        y = jnp.dot(w, p_ref[q], preferred_element_type=jnp.float32,
                    precision=_HI)
        m = y if m is None else jnp.maximum(m, y)
    # relu(max_q(conv_q + b)) == maxpool(relu(conv + b)): bias is a per-channel
    # constant across the pooling window and ReLU is monotone.
    o_ref[...] = jnp.maximum(m, 0.0)


def conv_pool_relu(patches_t, w_aug):
    """patches_t: (T, 4, CKK+1, Bt*S); w_aug: (Cout, CKK+1) -> (T, Cout, Bt*S)."""
    t, nq, ckk1, lanes = patches_t.shape
    cout = w_aug.shape[0]
    return pl.pallas_call(
        _conv_pool_relu_kernel,
        out_shape=jax.ShapeDtypeStruct((t, cout, lanes), jnp.float32),
        grid=(t,),
        in_specs=[
            pl.BlockSpec((None, nq, ckk1, lanes), lambda i: (i, 0, 0, 0)),
            pl.BlockSpec((cout, ckk1), lambda i: (0, 0)),      # VMEM-resident
        ],
        out_specs=pl.BlockSpec((None, cout, lanes), lambda i: (i, 0, 0)),
        compiler_params=pltpu.CompilerParams(
            dimension_semantics=("parallel",)),
    )(patches_t, w_aug)


def _fc_stack_kernel(x_ref, w1_ref, b1_ref, w2_ref, b2_ref, w3_ref, b3_ref,
                     o_ref):
    h = jnp.dot(x_ref[...], w1_ref[...], preferred_element_type=jnp.float32,
                precision=_HI)
    h = jnp.maximum(h + b1_ref[...], 0.0)
    h = jnp.dot(h, w2_ref[...], preferred_element_type=jnp.float32,
                precision=_HI)
    h = jnp.maximum(h + b2_ref[...], 0.0)
    o_ref[...] = (jnp.dot(h, w3_ref[...], preferred_element_type=jnp.float32,
                          precision=_HI) + b3_ref[...])


def fc_stack(x, w1, b1, w2, b2, w3, b3, tm):
    """Fused fc1+ReLU+fc2+ReLU+fc3, M-tiled over the batch; weight index maps
    are constant so the ~242 KB of fc weights stay VMEM-resident."""
    n, d = x.shape
    n_out = w3.shape[1]

    def full(a):
        nd = a.ndim
        return pl.BlockSpec(a.shape, lambda i, _nd=nd: (0,) * _nd)

    return pl.pallas_call(
        _fc_stack_kernel,
        out_shape=jax.ShapeDtypeStruct((n, n_out), jnp.float32),
        grid=(n // tm,),
        in_specs=[pl.BlockSpec((tm, d), lambda i: (i, 0)),
                  full(w1), full(b1), full(w2), full(b2), full(w3), full(b3)],
        out_specs=pl.BlockSpec((tm, n_out), lambda i: (i, 0)),
        compiler_params=pltpu.CompilerParams(
            dimension_semantics=("parallel",)),
    )(x, w1, b1, w2, b2, w3, b3)


# ------------------------- XLA-side layout plumbing -------------------------

def _pooled_im2col(x, k, ph, pw):
    """im2col for fused (valid, stride-1, kxk) conv + 2x2 max-pool.

    x: (N, C, H, W) -> (N, 4, C*k*k, ph*pw).  The size-4 axis enumerates the
    2x2 pooling-window phases; ph/pw are the POOLED output spatial dims.
    Feature order is (c, ky, kx), matching w.reshape(Cout, C*k*k).
    """
    n, c, _, _ = x.shape
    phases = []
    for qy in range(2):
        for qx in range(2):
            cols = []
            for ky in range(k):
                for kx in range(k):
                    sy, sx = qy + ky, qx + kx
                    cols.append(x[:, :,
                                  sy:sy + 2 * ph - 1:2,
                                  sx:sx + 2 * pw - 1:2])       # (N, C, ph, pw)
            p = jnp.stack(cols, axis=2)                        # (N, C, k*k, ph, pw)
            phases.append(p.reshape(n, c * k * k, ph * pw))
    return jnp.stack(phases, axis=1)                           # (N, 4, C*k*k, ph*pw)


def _prep_patches(patches, bt):
    """(N, 4, CKK, S) -> (N//bt, 4, CKK+1, bt*S): append a ones row (bias is
    folded into the GEMM) and fold the batch tile into the lane dimension."""
    n, nq, ckk, s = patches.shape
    ones = jnp.ones((n, nq, 1, s), patches.dtype)
    p = jnp.concatenate([patches, ones], axis=2)               # (N, 4, CKK+1, S)
    p = p.reshape(n // bt, bt, nq, ckk + 1, s)
    p = p.transpose(0, 2, 3, 1, 4)                             # (T, 4, CKK+1, bt, S)
    return p.reshape(n // bt, nq, ckk + 1, bt * s)


def _untile(out, bt, cout, s):
    """(T, Cout, bt*S) -> (T*bt, Cout, S)."""
    t = out.shape[0]
    return (out.reshape(t, cout, bt, s)
               .transpose(0, 2, 1, 3)
               .reshape(t * bt, cout, s))


def _batch_tile(n, pref):
    """Largest divisor of n that is <= pref (keeps every block exact)."""
    bt = min(n, pref)
    while n % bt:
        bt -= 1
    return bt


# --------------------------------- forward ----------------------------------

def init_params(key):
    """Deterministic PyTorch-style (uniform ±1/sqrt(fan_in)) init."""
    ks = jax.random.split(key, 10)

    def u(k, shape, fan_in):
        bound = 1.0 / jnp.sqrt(jnp.float32(fan_in))
        return jax.random.uniform(k, shape, jnp.float32, -bound, bound)

    return {
        "conv1_w": u(ks[0], (6, 1, 5, 5), 1 * 5 * 5),
        "conv1_b": u(ks[1], (6,), 1 * 5 * 5),
        "conv2_w": u(ks[2], (16, 6, 5, 5), 6 * 5 * 5),
        "conv2_b": u(ks[3], (16,), 6 * 5 * 5),
        "fc1_w": u(ks[4], (120, 400), 400),
        "fc1_b": u(ks[5], (120,), 400),
        "fc2_w": u(ks[6], (84, 120), 120),
        "fc2_b": u(ks[7], (84,), 120),
        "fc3_w": u(ks[8], (10, 84), 84),
        "fc3_b": u(ks[9], (10,), 84),
    }


def prepare_params(params):
    """One-time layout prep: conv weights as GEMM matrices with the bias folded
    in as an extra column; fc weights pre-transposed (nothing per-call)."""
    w1 = params["conv1_w"].reshape(6, 25)
    w2 = params["conv2_w"].reshape(16, 150)
    return {
        "w1": jnp.concatenate([w1, params["conv1_b"].reshape(6, 1)], axis=1),   # (6, 26)
        "w2": jnp.concatenate([w2, params["conv2_b"].reshape(16, 1)], axis=1),  # (16, 151)
        "fc1_w": params["fc1_w"].T,                  # (400, 120)
        "fc1_b": params["fc1_b"].reshape(1, 120),
        "fc2_w": params["fc2_w"].T,                  # (120, 84)
        "fc2_b": params["fc2_b"].reshape(1, 84),
        "fc3_w": params["fc3_w"].T,                  # (84, 10)
        "fc3_b": params["fc3_b"].reshape(1, 10),
    }


def net_forward(prep, x):
    # x: (N, 1, 32, 32) f32
    n = x.shape[0]
    # Batch-tile sizes (VMEM-aware caps, see header).  At the demo batch of 2
    # each conv stage is a single grid step; at larger N the conv grids get
    # multiple "parallel" steps (2nd TC on v7x) with lane-dense outputs.
    bt1 = _batch_tile(n, 32)     # conv1 lane dim = bt1 * 196
    bt2 = _batch_tile(n, 64)     # conv2 lane dim = bt2 * 25
    tm = _batch_tile(n, 256)     # fc M tile (matches 2x256^2 MXU rows)

    # conv1 + bias + ReLU + 2x2 pool : (N,1,32,32) -> (N, 6, 14, 14)
    p1 = _prep_patches(_pooled_im2col(x, 5, 14, 14), bt1)      # (N/bt1, 4, 26, bt1*196)
    a1 = conv_pool_relu(p1, prep["w1"])                        # (N/bt1, 6, bt1*196)
    a1 = _untile(a1, bt1, 6, 196).reshape(n, 6, 14, 14)

    # conv2 + bias + ReLU + 2x2 pool : -> (N, 16, 5, 5), flattened (C,H,W)
    p2 = _prep_patches(_pooled_im2col(a1, 5, 5, 5), bt2)       # (N/bt2, 4, 151, bt2*25)
    a2 = conv_pool_relu(p2, prep["w2"])                        # (N/bt2, 16, bt2*25)
    xf = _untile(a2, bt2, 16, 25).reshape(n, 16 * 5 * 5)       # (N, 400), PyTorch order

    # fc1+ReLU -> fc2+ReLU -> fc3 (single fused kernel)
    return fc_stack(xf, prep["fc1_w"], prep["fc1_b"],
                    prep["fc2_w"], prep["fc2_b"],
                    prep["fc3_w"], prep["fc3_b"], tm)          # (N, 10)


# --------------------------- pure-JAX reference -----------------------------

def net_reference(params, x):
    hp = jax.lax.Precision.HIGHEST

    def conv(x, w, b):
        y = jax.lax.conv_general_dilated(
            x, w, (1, 1), "VALID",
            dimension_numbers=("NCHW", "OIHW", "NCHW"), precision=hp)
        return jax.nn.relu(y + b[None, :, None, None])

    def pool(x):
        return jax.lax.reduce_window(
            x, -jnp.inf, jax.lax.max, (1, 1, 2, 2), (1, 1, 2, 2), "VALID")

    x = pool(conv(x, params["conv1_w"], params["conv1_b"]))
    x = pool(conv(x, params["conv2_w"], params["conv2_b"]))
    x = x.reshape(x.shape[0], -1)
    x = jax.nn.relu(jnp.dot(x, params["fc1_w"].T, precision=hp) + params["fc1_b"])
    x = jax.nn.relu(jnp.dot(x, params["fc2_w"].T, precision=hp) + params["fc2_b"])
    return jnp.dot(x, params["fc3_w"].T, precision=hp) + params["fc3_b"]


if __name__ == "__main__":
    key = jax.random.PRNGKey(0)
    pkey, xkey = jax.random.split(key)
    params = init_params(pkey)
    prep = prepare_params(params)
    x = jax.random.normal(xkey, (2, 1, 32, 32), dtype=jnp.float32)

    fwd = jax.jit(net_forward)
    out = jax.block_until_ready(fwd(prep, x))

    ref = net_reference(params, x)
    assert out.shape == (2, 10), out.shape
    assert bool(jnp.all(jnp.isfinite(out)))
    # All kernel matmuls run at precision=HIGHEST now -> f32-level parity.
    assert bool(jnp.allclose(out, ref, rtol=1e-4, atol=1e-4)), (
        f"max abs err {jnp.max(jnp.abs(out - ref))}")

    print("KERNEL_OK")
</pallas_src>

<mosaic_0001>
module attributes {stable_mosaic.version = 11 : i64} {
  func.func @_conv_pool_relu_kernel(%arg0: i32, %arg1: memref<1x4x26x392xf32, #tpu.memory_space<vmem>>, %arg2: memref<6x26xf32, #tpu.memory_space<vmem>>, %arg3: memref<1x6x392xf32, #tpu.memory_space<vmem>>) attributes {dimension_semantics = [#tpu.dimension_semantics<parallel>], iteration_bounds = array<i64: 1>, scalar_prefetch = 0 : i64, scratch_operands = 0 : i64, tpu.core_type = #tpu.core_type<tc>, window_params = [{transform_indices = @transform_0, window_bounds = array<i64: 1, 4, 26, 392>}, {pipeline_mode = #tpu.pipeline_mode<synchronous>, transform_indices = @transform_1, window_bounds = array<i64: 6, 26>}, {transform_indices = @transform_2, window_bounds = array<i64: 1, 6, 392>}]} {
    %c0 = arith.constant 0 : index
    %c0_0 = arith.constant 0 : index
    %0 = vector.load %arg2[%c0, %c0_0] : memref<6x26xf32, #tpu.memory_space<vmem>>, vector<6x26xf32>
    %c0_1 = arith.constant 0 : index
    %c0_2 = arith.constant 0 : index
    %c0_3 = arith.constant 0 : index
    %c0_4 = arith.constant 0 : index
    %1 = vector.load %arg1[%c0_1, %c0_2, %c0_3, %c0_4] : memref<1x4x26x392xf32, #tpu.memory_space<vmem>>, vector<1x1x26x392xf32>
    %2 = vector.shape_cast %1 : vector<1x1x26x392xf32> to vector<26x392xf32>
    %cst = arith.constant dense<0.000000e+00> : vector<6x392xf32>
    %3 = tpu.matmul %0, %2, %cst {dimension_numbers = #tpu.dot_dimension_numbers<[1], [0], [0], [1], [0, 0, 1, 1], [], []>, precision = #tpu.contract_precision<fp32>} : vector<6x26xf32>, vector<26x392xf32>, vector<6x392xf32> -> vector<6x392xf32>
    %c0_5 = arith.constant 0 : index
    %c1 = arith.constant 1 : index
    %c0_6 = arith.constant 0 : index
    %c0_7 = arith.constant 0 : index
    %4 = vector.load %arg1[%c0_5, %c1, %c0_6, %c0_7] : memref<1x4x26x392xf32, #tpu.memory_space<vmem>>, vector<1x1x26x392xf32>
    %5 = vector.shape_cast %4 : vector<1x1x26x392xf32> to vector<26x392xf32>
    %cst_8 = arith.constant dense<0.000000e+00> : vector<6x392xf32>
    %6 = tpu.matmul %0, %5, %cst_8 {dimension_numbers = #tpu.dot_dimension_numbers<[1], [0], [0], [1], [0, 0, 1, 1], [], []>, precision = #tpu.contract_precision<fp32>} : vector<6x26xf32>, vector<26x392xf32>, vector<6x392xf32> -> vector<6x392xf32>
    %7 = arith.maximumf %3, %6 : vector<6x392xf32>
    %c0_9 = arith.constant 0 : index
    %c2 = arith.constant 2 : index
    %c0_10 = arith.constant 0 : index
    %c0_11 = arith.constant 0 : index
    %8 = vector.load %arg1[%c0_9, %c2, %c0_10, %c0_11] : memref<1x4x26x392xf32, #tpu.memory_space<vmem>>, vector<1x1x26x392xf32>
    %9 = vector.shape_cast %8 : vector<1x1x26x392xf32> to vector<26x392xf32>
    %cst_12 = arith.constant dense<0.000000e+00> : vector<6x392xf32>
    %10 = tpu.matmul %0, %9, %cst_12 {dimension_numbers = #tpu.dot_dimension_numbers<[1], [0], [0], [1], [0, 0, 1, 1], [], []>, precision = #tpu.contract_precision<fp32>} : vector<6x26xf32>, vector<26x392xf32>, vector<6x392xf32> -> vector<6x392xf32>
    %11 = arith.maximumf %7, %10 : vector<6x392xf32>
    %c0_13 = arith.constant 0 : index
    %c3 = arith.constant 3 : index
    %c0_14 = arith.constant 0 : index
    %c0_15 = arith.constant 0 : index
    %12 = vector.load %arg1[%c0_13, %c3, %c0_14, %c0_15] : memref<1x4x26x392xf32, #tpu.memory_space<vmem>>, vector<1x1x26x392xf32>
    %13 = vector.shape_cast %12 : vector<1x1x26x392xf32> to vector<26x392xf32>
    %cst_16 = arith.constant dense<0.000000e+00> : vector<6x392xf32>
    %14 = tpu.matmul %0, %13, %cst_16 {dimension_numbers = #tpu.dot_dimension_numbers<[1], [0], [0], [1], [0, 0, 1, 1], [], []>, precision = #tpu.contract_precision<fp32>} : vector<6x26xf32>, vector<26x392xf32>, vector<6x392xf32> -> vector<6x392xf32>
    %15 = arith.maximumf %11, %14 : vector<6x392xf32>
    %cst_17 = arith.constant 0.000000e+00 : f32
    %16 = vector.broadcast %cst_17 : f32 to vector<6x392xf32>
    %17 = arith.maximumf %15, %16 : vector<6x392xf32>
    %c0_18 = arith.constant 0 : index
    %c0_19 = arith.constant 0 : index
    %c0_20 = arith.constant 0 : index
    %18 = vector.load %arg3[%c0_18, %c0_19, %c0_20] : memref<1x6x392xf32, #tpu.memory_space<vmem>>, vector<1x6x392xf32>
    %19 = vector.shape_cast %18 : vector<1x6x392xf32> to vector<6x392xf32>
    %20 = vector.shape_cast %17 : vector<6x392xf32> to vector<1x6x392xf32>
    tpu.vector_store %arg3[%c0_18, %c0_19, %c0_20], %20 {strides = array<i32>} : memref<1x6x392xf32, #tpu.memory_space<vmem>>, vector<1x6x392xf32>,
    return
  }
  func.func @transform_0(%arg0: i32) -> (i32, i32, i32, i32) {
    %c0_i32 = arith.constant 0 : i32
    %c0_i32_0 = arith.constant 0 : i32
    %c0_i32_1 = arith.constant 0 : i32
    %c0_i32_2 = arith.constant 0 : i32
    return %arg0, %c0_i32, %c0_i32_0, %c0_i32_1 : i32, i32, i32, i32
  }
  func.func @transform_1(%arg0: i32) -> (i32, i32) {
    %c0_i32 = arith.constant 0 : i32
    %c0_i32_0 = arith.constant 0 : i32
    %c0_i32_1 = arith.constant 0 : i32
    return %c0_i32, %c0_i32_0 : i32, i32
  }
  func.func @transform_2(%arg0: i32) -> (i32, i32, i32) {
    %c0_i32 = arith.constant 0 : i32
    %c0_i32_0 = arith.constant 0 : i32
    %c0_i32_1 = arith.constant 0 : i32
    return %arg0, %c0_i32, %c0_i32_0 : i32, i32, i32
  }
}

module attributes {stable_mosaic.version = 11 : i64} {
  func.func @_conv_pool_relu_kernel(%arg0: i32, %arg1: memref<1x4x151x50xf32, #tpu.memory_space<vmem>>, %arg2: memref<16x151xf32, #tpu.memory_space<vmem>>, %arg3: memref<1x16x50xf32, #tpu.memory_space<vmem>>) attributes {dimension_semantics = [#tpu.dimension_semantics<parallel>], iteration_bounds = array<i64: 1>, scalar_prefetch = 0 : i64, scratch_operands = 0 : i64, tpu.core_type = #tpu.core_type<tc>, window_params = [{transform_indices = @transform_0, window_bounds = array<i64: 1, 4, 151, 50>}, {pipeline_mode = #tpu.pipeline_mode<synchronous>, transform_indices = @transform_1, window_bounds = array<i64: 16, 151>}, {transform_indices = @transform_2, window_bounds = array<i64: 1, 16, 50>}]} {
    %c0 = arith.constant 0 : index
    %c0_0 = arith.constant 0 : index
    %0 = vector.load %arg2[%c0, %c0_0] : memref<16x151xf32, #tpu.memory_space<vmem>>, vector<16x151xf32>
    %c0_1 = arith.constant 0 : index
    %c0_2 = arith.constant 0 : index
    %c0_3 = arith.constant 0 : index
    %c0_4 = arith.constant 0 : index
    %1 = vector.load %arg1[%c0_1, %c0_2, %c0_3, %c0_4] : memref<1x4x151x50xf32, #tpu.memory_space<vmem>>, vector<1x1x151x50xf32>
    %2 = vector.shape_cast %1 : vector<1x1x151x50xf32> to vector<151x50xf32>
    %cst = arith.constant dense<0.000000e+00> : vector<16x50xf32>
    %3 = tpu.matmul %0, %2, %cst {dimension_numbers = #tpu.dot_dimension_numbers<[1], [0], [0], [1], [0, 0, 1, 1], [], []>, precision = #tpu.contract_precision<fp32>} : vector<16x151xf32>, vector<151x50xf32>, vector<16x50xf32> -> vector<16x50xf32>
    %c0_5 = arith.constant 0 : index
    %c1 = arith.constant 1 : index
    %c0_6 = arith.constant 0 : index
    %c0_7 = arith.constant 0 : index
    %4 = vector.load %arg1[%c0_5, %c1, %c0_6, %c0_7] : memref<1x4x151x50xf32, #tpu.memory_space<vmem>>, vector<1x1x151x50xf32>
    %5 = vector.shape_cast %4 : vector<1x1x151x50xf32> to vector<151x50xf32>
    %cst_8 = arith.constant dense<0.000000e+00> : vector<16x50xf32>
    %6 = tpu.matmul %0, %5, %cst_8 {dimension_numbers = #tpu.dot_dimension_numbers<[1], [0], [0], [1], [0, 0, 1, 1], [], []>, precision = #tpu.contract_precision<fp32>} : vector<16x151xf32>, vector<151x50xf32>, vector<16x50xf32> -> vector<16x50xf32>
    %7 = arith.maximumf %3, %6 : vector<16x50xf32>
    %c0_9 = arith.constant 0 : index
    %c2 = arith.constant 2 : index
    %c0_10 = arith.constant 0 : index
    %c0_11 = arith.constant 0 : index
    %8 = vector.load %arg1[%c0_9, %c2, %c0_10, %c0_11] : memref<1x4x151x50xf32, #tpu.memory_space<vmem>>, vector<1x1x151x50xf32>
    %9 = vector.shape_cast %8 : vector<1x1x151x50xf32> to vector<151x50xf32>
    %cst_12 = arith.constant dense<0.000000e+00> : vector<16x50xf32>
    %10 = tpu.matmul %0, %9, %cst_12 {dimension_numbers = #tpu.dot_dimension_numbers<[1], [0], [0], [1], [0, 0, 1, 1], [], []>, precision = #tpu.contract_precision<fp32>} : vector<16x151xf32>, vector<151x50xf32>, vector<16x50xf32> -> vector<16x50xf32>
    %11 = arith.maximumf %7, %10 : vector<16x50xf32>
    %c0_13 = arith.constant 0 : index
    %c3 = arith.constant 3 : index
    %c0_14 = arith.constant 0 : index
    %c0_15 = arith.constant 0 : index
    %12 = vector.load %arg1[%c0_13, %c3, %c0_14, %c0_15] : memref<1x4x151x50xf32, #tpu.memory_space<vmem>>, vector<1x1x151x50xf32>
    %13 = vector.shape_cast %12 : vector<1x1x151x50xf32> to vector<151x50xf32>
    %cst_16 = arith.constant dense<0.000000e+00> : vector<16x50xf32>
    %14 = tpu.matmul %0, %13, %cst_16 {dimension_numbers = #tpu.dot_dimension_numbers<[1], [0], [0], [1], [0, 0, 1, 1], [], []>, precision = #tpu.contract_precision<fp32>} : vector<16x151xf32>, vector<151x50xf32>, vector<16x50xf32> -> vector<16x50xf32>
    %15 = arith.maximumf %11, %14 : vector<16x50xf32>
    %cst_17 = arith.constant 0.000000e+00 : f32
    %16 = vector.broadcast %cst_17 : f32 to vector<16x50xf32>
    %17 = arith.maximumf %15, %16 : vector<16x50xf32>
    %c0_18 = arith.constant 0 : index
    %c0_19 = arith.constant 0 : index
    %c0_20 = arith.constant 0 : index
    %18 = vector.load %arg3[%c0_18, %c0_19, %c0_20] : memref<1x16x50xf32, #tpu.memory_space<vmem>>, vector<1x16x50xf32>
    %19 = vector.shape_cast %18 : vector<1x16x50xf32> to vector<16x50xf32>
    %20 = vector.shape_cast %17 : vector<16x50xf32> to vector<1x16x50xf32>
    tpu.vector_store %arg3[%c0_18, %c0_19, %c0_20], %20 {strides = array<i32>} : memref<1x16x50xf32, #tpu.memory_space<vmem>>, vector<1x16x50xf32>,
    return
  }
  func.func @transform_0(%arg0: i32) -> (i32, i32, i32, i32) {
    %c0_i32 = arith.constant 0 : i32
    %c0_i32_0 = arith.constant 0 : i32
    %c0_i32_1 = arith.constant 0 : i32
    %c0_i32_2 = arith.constant 0 : i32
    return %arg0, %c0_i32, %c0_i32_0, %c0_i32_1 : i32, i32, i32, i32
  }
  func.func @transform_1(%arg0: i32) -> (i32, i32) {
    %c0_i32 = arith.constant 0 : i32
    %c0_i32_0 = arith.constant 0 : i32
    %c0_i32_1 = arith.constant 0 : i32
    return %c0_i32, %c0_i32_0 : i32, i32
  }
  func.func @transform_2(%arg0: i32) -> (i32, i32, i32) {
    %c0_i32 = arith.constant 0 : i32
    %c0_i32_0 = arith.constant 0 : i32
    %c0_i32_1 = arith.constant 0 : i32
    return %arg0, %c0_i32, %c0_i32_0 : i32, i32, i32
  }
}

module attributes {stable_mosaic.version = 11 : i64} {
  func.func @_fc_stack_kernel(%arg0: i32, %arg1: memref<2x400xf32, #tpu.memory_space<vmem>>, %arg2: memref<400x120xf32, #tpu.memory_space<vmem>>, %arg3: memref<1x120xf32, #tpu.memory_space<vmem>>, %arg4: memref<120x84xf32, #tpu.memory_space<vmem>>, %arg5: memref<1x84xf32, #tpu.memory_space<vmem>>, %arg6: memref<84x10xf32, #tpu.memory_space<vmem>>, %arg7: memref<1x10xf32, #tpu.memory_space<vmem>>, %arg8: memref<2x10xf32, #tpu.memory_space<vmem>>) attributes {dimension_semantics = [#tpu.dimension_semantics<parallel>], iteration_bounds = array<i64: 1>, scalar_prefetch = 0 : i64, scratch_operands = 0 : i64, tpu.core_type = #tpu.core_type<tc>, window_params = [{transform_indices = @transform_0, window_bounds = array<i64: 2, 400>}, {pipeline_mode = #tpu.pipeline_mode<synchronous>, transform_indices = @transform_1, window_bounds = array<i64: 400, 120>}, {pipeline_mode = #tpu.pipeline_mode<synchronous>, transform_indices = @transform_2, window_bounds = array<i64: 1, 120>}, {pipeline_mode = #tpu.pipeline_mode<synchronous>, transform_indices = @transform_3, window_bounds = array<i64: 120, 84>}, {pipeline_mode = #tpu.pipeline_mode<synchronous>, transform_indices = @transform_4, window_bounds = array<i64: 1, 84>}, {pipeline_mode = #tpu.pipeline_mode<synchronous>, transform_indices = @transform_5, window_bounds = array<i64: 84, 10>}, {pipeline_mode = #tpu.pipeline_mode<synchronous>, transform_indices = @transform_6, window_bounds = array<i64: 1, 10>}, {transform_indices = @transform_7, window_bounds = array<i64: 2, 10>}]} {
    %c0 = arith.constant 0 : index
    %c0_0 = arith.constant 0 : index
    %0 = vector.load %arg1[%c0, %c0_0] : memref<2x400xf32, #tpu.memory_space<vmem>>, vector<2x400xf32>
    %c0_1 = arith.constant 0 : index
    %c0_2 = arith.constant 0 : index
    %1 = vector.load %arg2[%c0_1, %c0_2] : memref<400x120xf32, #tpu.memory_space<vmem>>, vector<400x120xf32>
    %cst = arith.constant dense<0.000000e+00> : vector<2x120xf32>
    %2 = tpu.matmul %0, %1, %cst {dimension_numbers = #tpu.dot_dimension_numbers<[1], [0], [0], [1], [0, 0, 1, 1], [], []>, precision = #tpu.contract_precision<fp32>} : vector<2x400xf32>, vector<400x120xf32>, vector<2x120xf32> -> vector<2x120xf32>
    %c0_3 = arith.constant 0 : index
    %c0_4 = arith.constant 0 : index
    %3 = vector.load %arg3[%c0_3, %c0_4] : memref<1x120xf32, #tpu.memory_space<vmem>>, vector<1x120xf32>
    %4 = vector.broadcast %3 : vector<1x120xf32> to vector<2x120xf32>
    %5 = arith.addf %2, %4 : vector<2x120xf32>
    %cst_5 = arith.constant 0.000000e+00 : f32
    %6 = vector.broadcast %cst_5 : f32 to vector<2x120xf32>
    %7 = arith.maximumf %5, %6 : vector<2x120xf32>
    %c0_6 = arith.constant 0 : index
    %c0_7 = arith.constant 0 : index
    %8 = vector.load %arg4[%c0_6, %c0_7] : memref<120x84xf32, #tpu.memory_space<vmem>>, vector<120x84xf32>
    %cst_8 = arith.constant dense<0.000000e+00> : vector<2x84xf32>
    %9 = tpu.matmul %7, %8, %cst_8 {dimension_numbers = #tpu.dot_dimension_numbers<[1], [0], [0], [1], [0, 0, 1, 1], [], []>, precision = #tpu.contract_precision<fp32>} : vector<2x120xf32>, vector<120x84xf32>, vector<2x84xf32> -> vector<2x84xf32>
    %c0_9 = arith.constant 0 : index
    %c0_10 = arith.constant 0 : index
    %10 = vector.load %arg5[%c0_9, %c0_10] : memref<1x84xf32, #tpu.memory_space<vmem>>, vector<1x84xf32>
    %11 = vector.broadcast %10 : vector<1x84xf32> to vector<2x84xf32>
    %12 = arith.addf %9, %11 : vector<2x84xf32>
    %cst_11 = arith.constant 0.000000e+00 : f32
    %13 = vector.broadcast %cst_11 : f32 to vector<2x84xf32>
    %14 = arith.maximumf %12, %13 : vector<2x84xf32>
    %c0_12 = arith.constant 0 : index
    %c0_13 = arith.constant 0 : index
    %15 = vector.load %arg6[%c0_12, %c0_13] : memref<84x10xf32, #tpu.memory_space<vmem>>, vector<84x10xf32>
    %cst_14 = arith.constant dense<0.000000e+00> : vector<2x10xf32>
    %16 = tpu.matmul %14, %15, %cst_14 {dimension_numbers = #tpu.dot_dimension_numbers<[1], [0], [0], [1], [0, 0, 1, 1], [], []>, precision = #tpu.contract_precision<fp32>} : vector<2x84xf32>, vector<84x10xf32>, vector<2x10xf32> -> vector<2x10xf32>
    %c0_15 = arith.constant 0 : index
    %c0_16 = arith.constant 0 : index
    %17 = vector.load %arg7[%c0_15, %c0_16] : memref<1x10xf32, #tpu.memory_space<vmem>>, vector<1x10xf32>
    %18 = vector.broadcast %17 : vector<1x10xf32> to vector<2x10xf32>
    %19 = arith.addf %16, %18 : vector<2x10xf32>
    %c0_17 = arith.constant 0 : index
    %c0_18 = arith.constant 0 : index
    %20 = vector.load %arg8[%c0_17, %c0_18] : memref<2x10xf32, #tpu.memory_space<vmem>>, vector<2x10xf32>
    tpu.vector_store %arg8[%c0_17, %c0_18], %19 {strides = array<i32>} : memref<2x10xf32, #tpu.memory_space<vmem>>, vector<2x10xf32>,
    return
  }
  func.func @transform_0(%arg0: i32) -> (i32, i32) {
    %c0_i32 = arith.constant 0 : i32
    %c0_i32_0 = arith.constant 0 : i32
    return %arg0, %c0_i32 : i32, i32
  }
  func.func @transform_1(%arg0: i32) -> (i32, i32) {
    %c0_i32 = arith.constant 0 : i32
    %c0_i32_0 = arith.constant 0 : i32
    %c0_i32_1 = arith.constant 0 : i32
    return %c0_i32, %c0_i32_0 : i32, i32
  }
  func.func @transform_2(%arg0: i32) -> (i32, i32) {
    %c0_i32 = arith.constant 0 : i32
    %c0_i32_0 = arith.constant 0 : i32
    %c0_i32_1 = arith.constant 0 : i32
    return %c0_i32, %c0_i32_0 : i32, i32
  }
  func.func @transform_3(%arg0: i32) -> (i32, i32) {
    %c0_i32 = arith.constant 0 : i32
    %c0_i32_0 = arith.constant 0 : i32
    %c0_i32_1 = arith.constant 0 : i32
    return %c0_i32, %c0_i32_0 : i32, i32
  }
  func.func @transform_4(%arg0: i32) -> (i32, i32) {
    %c0_i32 = arith.constant 0 : i32
    %c0_i32_0 = arith.constant 0 : i32
    %c0_i32_1 = arith.constant 0 : i32
    return %c0_i32, %c0_i32_0 : i32, i32
  }
  func.func @transform_5(%arg0: i32) -> (i32, i32) {
    %c0_i32 = arith.constant 0 : i32
    %c0_i32_0 = arith.constant 0 : i32
    %c0_i32_1 = arith.constant 0 : i32
    return %c0_i32, %c0_i32_0 : i32, i32
  }
  func.func @transform_6(%arg0: i32) -> (i32, i32) {
    %c0_i32 = arith.constant 0 : i32
    %c0_i32_0 = arith.constant 0 : i32
    %c0_i32_1 = arith.constant 0 : i32
    return %c0_i32, %c0_i32_0 : i32, i32
  }
  func.func @transform_7(%arg0: i32) -> (i32, i32) {
    %c0_i32 = arith.constant 0 : i32
    %c0_i32_0 = arith.constant 0 : i32
    return %arg0, %c0_i32 : i32, i32
  }
}

</mosaic_0001>

<llo_original>
// kernel: net_forward.3
$region0: #{net_forward.3}
  #allocation0 [shape = 'u32[]', space=smem, size = 0x4, offset = 0x4, fixed_abs, tag = 'smem constant byte address 0x4 - core index']
  #allocation1 [shape = 'u32[144,128]{1,0:T(1,128)}', space=vmem, size = 0x12000, scoped, tag = 'internal scratch']
  %s0 = inlined_call_operand.vmem [shape: f32[1,4,26,392], index: 0, kind: input, shape index: {}]
  %s1 = inlined_call_operand.vmem [shape: f32[6,26], index: 1, kind: input, shape index: {}]
  %s2 = inlined_call_operand.vmem [shape: f32[1,6,392], index: 2, kind: output, shape index: {}]
  %s3 = sld [smem:[#allocation0]]
  $region18: #{net_forward.3} parent=0
    _
  %s5 = ssub.s32 1, %s3
  %s6 = scalar_select 0, %s5, %s3
  // Predicated region
  $region2: #{net_forward.3} parent=0 // pred_check
    _
  $region3: #{net_forward.3} parent=0 // pred_check_branch
    %8 = sbr.rel (0) target = $region5
  $region4: #{net_forward.3} parent=0 // pred_region
    _
  $region5: #{net_forward.3} parent=0 // pred_fallthru
    _
  // Predicated region
  $region6: #{net_forward.3} parent=0 // pred_check
    _
  $region7: #{net_forward.3} parent=0 // pred_check_branch
    %10 = sbr.rel (0) target = $region9
  $region8: #{net_forward.3} parent=0 // pred_region
    _
  $region9: #{net_forward.3} parent=0 // pred_fallthru
    _
  %v11 = vld [vmem:[%s1] sm:$0x3f]
  %v12 = vld [vmem:[%s0] sm:$0xff]
  %v13 = vld [vmem:[%s0 + $0x8] sm:$0xff]
  %v14 = vld [vmem:[%s0 + $0x10] sm:$0xff]
  %v15 = vld [vmem:[%s0 + $0x18] sm:$0xff]
  %v16 = vld [vmem:[%s0 + $0x20] sm:$0xff]
  %v17 = vld [vmem:[%s0 + $0x28] sm:$0xff]
  %v18 = vld [vmem:[%s0 + $0x30] sm:$0xff]
  %v19 = vld [vmem:[%s0 + $0x38] sm:$0xff]
  %v20 = vld [vmem:[%s0 + $0x40] sm:$0xff]
  %v21 = vld [vmem:[%s0 + $0x48] sm:$0xff]
  %v22 = vld [vmem:[%s0 + $0x50] sm:$0xff]
  %v23 = vld [vmem:[%s0 + $0x58] sm:$0xff]
  %v24 = vld [vmem:[%s0 + $0x60] sm:$0x3]
  %v25 = vld [vmem:[%s0 + $0x68] sm:$0x3]
  %v26 = vld [vmem:[%s0 + $0x70] sm:$0x3]
  %v27 = vld [vmem:[%s0 + $0x78] sm:$0x3]
  %vm28 = vcmask 211968
  %v30 = vsel %vm28, %v11, 0
  %vm32 = vcmask 1041408
  %v34 = vsel %vm32, %v24, 0
  %v37 = vsel %vm32, %v25, 0
  %v40 = vsel %vm32, %v26, 0
  %v43 = vsel %vm32, %v27, 0
  %v45 = vand.u32 %v13, 4294901760
  %46 = vmatprep.subr.mxu0 %v45
  %v47 = vand.u32 %v12, 4294901760
  %48 = vmatpush1.msra.mxu0 %v47
  %v49 = vand.u32 %v17, 4294901760
  %50 = vmatprep.subr.mxu0 %v49
  %v51 = vand.u32 %v16, 4294901760
  %52 = vmatpush1.msra.mxu0 %v51
  %v53 = vand.u32 %v21, 4294901760
  %54 = vmatprep.subr.mxu0 %v53
  %v55 = vand.u32 %v20, 4294901760
  %56 = vmatpush1.msra.mxu0 %v55
  %v57 = vand.u32 %v37, 4294901760
  %58 = vmatprep.subr.mxu0 %v57
  %v59 = vand.u32 %v34, 4294901760
  %60 = vmatpush1.msra.mxu0 %v59
  %61 = vmatprep.subr.mxu0 0.0
  %62 = vmatpush1.msra.mxu0 0.0
  %63 = vmatprep.subr.mxu0 0.0
  %64 = vmatpush1.msra.mxu0 0.0
  %65 = vmatprep.subr.mxu0 0.0
  %66 = vmatpush1.msra.mxu0 0.0
  %67 = vmatprep.subr.mxu0 0.0
  %68 = vmatpush1.msra.mxu0 0.0
  %69 = vmatprep.subr.mxu0 0.0
  %70 = vmatpush1.msra.mxu0 0.0
  %71 = vmatprep.subr.mxu0 0.0
  %72 = vmatpush1.msra.mxu0 0.0
  %73 = vmatprep.subr.mxu0 0.0
  %74 = vmatpush1.msra.mxu0 0.0
  %75 = vmatprep.subr.mxu0 0.0
  %76 = vmatpush1.msra.mxu0 0.0
  %77 = vmatprep.subr.mxu0 0.0
  %78 = vmatpush1.msra.mxu0 0.0
  %79 = vmatprep.subr.mxu0 0.0
  %80 = vmatpush1.msra.mxu0 0.0
  %81 = vmatprep.subr.mxu0 0.0
  %82 = vmatpush1.msra.mxu0 0.0
  %83 = vmatprep.subr.mxu0 0.0
  %84 = vmatpush1.msra.mxu0 0.0
  %85 = vmatprep.subr.mxu0 0.0
  %86 = vmatpush1.msra.mxu0 0.0
  %87 = vmatprep.subr.mxu0 0.0
  %88 = vmatpush1.msra.mxu0 0.0
  %89 = vmatprep.subr.mxu0 0.0
  %90 = vmatpush1.msra.mxu0 0.0
  %91 = vmatprep.subr.mxu0 0.0
  %92 = vmatpush1.msra.mxu0 0.0
  %93 = vmatprep.subr.mxu0 0.0
  %94 = vmatpush1.msra.mxu0 0.0
  %95 = vmatprep.subr.mxu0 0.0
  %96 = vmatpush1.msra.mxu0 0.0
  %97 = vmatprep.subr.mxu0 0.0
  %98 = vmatpush1.msra.mxu0 0.0
  %99 = vmatprep.subr.mxu0 0.0
  %100 = vmatpush1.msra.mxu0 0.0
  %101 = vmatprep.subr.mxu0 0.0
  %102 = vmatpush1.msra.mxu0 0.0
  %103 = vmatprep.subr.mxu0 0.0
  %104 = vmatpush1.msra.mxu0 0.0
  %105 = vmatprep.subr.mxu0 0.0
  %106 = vmatpush1.msra.mxu0 0.0
  %107 = vmatprep.subr.mxu0 0.0
  %108 = vmatpush1.msra.mxu0 0.0
  %109 = vmatprep.subr.mxu0 0.0
  %110 = vmatpush1.msra.mxu0 0.0
  %111 = vmatprep.subr.mxu0 0.0
  %112 = vmatpush1.msra.mxu0 0.0
  %113 = vmatprep.subr.mxu0 0.0
  %114 = vmatpush1.msra.mxu0 0.0
  %115 = vmatprep.subr.mxu0 0.0
  %116 = vmatpush1.msra.mxu0 0.0
  %117 = vmatprep.mubr.f32.mxu0 0.0
  %v118 = vand.u32 %v30, 4294901760
  %v119 = vsub.f32 %v30, %v118
  %v120 = vand.u32 %v119, 4294901760
  %v121 = vsub.f32 %v119, %v120
  %v122 = vand.u32 %v121, 4294901760
  %123 = vmatmul.mubr.f32.gmra.mrb[0].mxu0 %v122
  %v124 = vpop.f32.mrb[0].mxu0
  %v125 = vadd.f32 0.0, %v124
  %v126 = vpop.f32.mrb[0].mxu0
  %v127 = vadd.f32 0.0, %v126
  %128 = vdwg.mxu0
  %v129 = vand.u32 %v13, 4294901760
  %v130 = vsub.f32 %v13, %v129
  %v131 = vand.u32 %v130, 4294901760
  %v132 = vsub.f32 %v130, %v131
  %v133 = vand.u32 %v132, 4294901760
  %134 = vmatprep.subr.mxu0 %v133
  %v135 = vand.u32 %v12, 4294901760
  %v136 = vsub.f32 %v12, %v135
  %v137 = vand.u32 %v136, 4294901760
  %v138 = vsub.f32 %v136, %v137
  %v139 = vand.u32 %v138, 4294901760
  %140 = vmatpush1.msra.mxu0 %v139
  %v141 = vand.u32 %v17, 4294901760
  %v142 = vsub.f32 %v17, %v141
  %v143 = vand.u32 %v142, 4294901760
  %v144 = vsub.f32 %v142, %v143
  %v145 = vand.u32 %v144, 4294901760
  %146 = vmatprep.subr.mxu0 %v145
  %v147 = vand.u32 %v16, 4294901760
  %v148 = vsub.f32 %v16, %v147
  %v149 = vand.u32 %v148, 4294901760
  %v150 = vsub.f32 %v148, %v149
  %v151 = vand.u32 %v150, 4294901760
  %152 = vmatpush1.msra.mxu0 %v151
  %v153 = vand.u32 %v21, 4294901760
  %v154 = vsub.f32 %v21, %v153
  %v155 = vand.u32 %v154, 4294901760
  %v156 = vsub.f32 %v154, %v155
  %v157 = vand.u32 %v156, 4294901760
  %158 = vmatprep.subr.mxu0 %v157
  %v159 = vand.u32 %v20, 4294901760
  %v160 = vsub.f32 %v20, %v159
  %v161 = vand.u32 %v160, 4294901760
  %v162 = vsub.f32 %v160, %v161
  %v163 = vand.u32 %v162, 4294901760
  %164 = vmatpush1.msra.mxu0 %v163
  %v165 = vand.u32 %v37, 4294901760
  %v166 = vsub.f32 %v37, %v165
  %v167 = vand.u32 %v166, 4294901760
  %v168 = vsub.f32 %v166, %v167
  %v169 = vand.u32 %v168, 4294901760
  %170 = vmatprep.subr.mxu0 %v169
  %v171 = vand.u32 %v34, 4294901760
  %v172 = vsub.f32 %v34, %v171
  %v173 = vand.u32 %v172, 4294901760
  %v174 = vsub.f32 %v172, %v173
  %v175 = vand.u32 %v174, 4294901760
  %176 = vmatpush1.msra.mxu0 %v175
  %177 = vmatprep.subr.mxu0 0.0
  %178 = vmatpush1.msra.mxu0 0.0
  %179 = vmatprep.subr.mxu0 0.0
  %180 = vmatpush1.msra.mxu0 0.0
  %181 = vmatprep.subr.mxu0 0.0
  %182 = vmatpush1.msra.mxu0 0.0
  %183 = vmatprep.subr.mxu0 0.0
  %184 = vmatpush1.msra.mxu0 0.0
  %185 = vmatprep.subr.mxu0 0.0
  %186 = vmatpush1.msra.mxu0 0.0
  %187 = vmatprep.subr.mxu0 0.0
  %188 = vmatpush1.msra.mxu0 0.0
  %189 = vmatprep.subr.mxu0 0.0
  %190 = vmatpush1.msra.mxu0 0.0
  %191 = vmatprep.subr.mxu0 0.0
  %192 = vmatpush1.msra.mxu0 0.0
  %193 = vmatprep.subr.mxu0 0.0
  %194 = vmatpush1.msra.mxu0 0.0
  %195 = vmatprep.subr.mxu0 0.0
  %196 = vmatpush1.msra.mxu0 0.0
  %197 = vmatprep.subr.mxu0 0.0
  %198 = vmatpush1.msra.mxu0 0.0
  %199 = vmatprep.subr.mxu0 0.0
  %200 = vmatpush1.msra.mxu0 0.0
  %201 = vmatprep.subr.mxu0 0.0
  %202 = vmatpush1.msra.mxu0 0.0
  %203 = vmatprep.subr.mxu0 0.0
  %204 = vmatpush1.msra.mxu0 0.0
  %205 = vmatprep.subr.mxu0 0.0
  %206 = vmatpush1.msra.mxu0 0.0
  %207 = vmatprep.subr.mxu0 0.0
  %208 = vmatpush1.msra.mxu0 0.0
  %209 = vmatprep.subr.mxu0 0.0
  %210 = vmatpush1.msra.mxu0 0.0
  %211 = vmatprep.subr.mxu0 0.0
  %212 = vmatpush1.msra.mxu0 0.0
  %213 = vmatprep.subr.mxu0 0.0
  %214 = vmatpush1.msra.mxu0 0.0
  %215 = vmatprep.subr.mxu0 0.0
  %216 = vmatpush1.msra.mxu0 0.0
  %217 = vmatprep.subr.mxu0 0.0
  %218 = vmatpush1.msra.mxu0 0.0
  %219 = vmatprep.subr.mxu0 0.0
  %220 = vmatpush1.msra.mxu0 0.0
  %221 = vmatprep.subr.mxu0 0.0
  %222 = vmatpush1.msra.mxu0 0.0
  %223 = vmatprep.subr.mxu0 0.0
  %224 = vmatpush1.msra.mxu0 0.0
  %225 = vmatprep.subr.mxu0 0.0
  %226 = vmatpush1.msra.mxu0 0.0
  %227 = vmatprep.subr.mxu0 0.0
  %228 = vmatpush1.msra.mxu0 0.0
  %229 = vmatprep.subr.mxu0 0.0
  %230 = vmatpush1.msra.mxu0 0.0
  %231 = vmatprep.subr.mxu0 0.0
  %232 = vmatpush1.msra.mxu0 0.0
  %233 = vmatprep.mubr.f32.mxu0 0.0
  %v234 = vand.u32 %v30, 4294901760
  %235 = vmatmul.mubr.f32.gmra.mrb[0].mxu0 %v234
  %v236 = vpop.f32.mrb[0].mxu0
  %v237 = vadd.f32 %v125, %v236
  %v238 = vpop.f32.mrb[0].mxu0
  %v239 = vadd.f32 %v127, %v238
  %240 = vdwg.mxu0
  %v241 = vand.u32 %v13, 4294901760
  %v242 = vsub.f32 %v13, %v241
  %243 = vmatprep.subr.mxu0 %v242
  %v244 = vand.u32 %v12, 4294901760
  %v245 = vsub.f32 %v12, %v244
  %246 = vmatpush1.msra.mxu0 %v245
  %v247 = vand.u32 %v17, 4294901760
  %v248 = vsub.f32 %v17, %v247
  %249 = vmatprep.subr.mxu0 %v248
  %v250 = vand.u32 %v16, 4294901760
  %v251 = vsub.f32 %v16, %v250
  %252 = vmatpush1.msra.mxu0 %v251
  %v253 = vand.u32 %v21, 4294901760
  %v254 = vsub.f32 %v21, %v253
  %255 = vmatprep.subr.mxu0 %v254
  %v256 = vand.u32 %v20, 4294901760
  %v257 = vsub.f32 %v20, %v256
  %258 = vmatpush1.msra.mxu0 %v257
  %v259 = vand.u32 %v37, 4294901760
  %v260 = vsub.f32 %v37, %v259
  %261 = vmatprep.subr.mxu0 %v260
  %v262 = vand.u32 %v34, 4294901760
  %v263 = vsub.f32 %v34, %v262
  %264 = vmatpush1.msra.mxu0 %v263
  %265 = vmatprep.subr.mxu0 0.0
  %266 = vmatpush1.msra.mxu0 0.0
  %267 = vmatprep.subr.mxu0 0.0
  %268 = vmatpush1.msra.mxu0 0.0
  %269 = vmatprep.subr.mxu0 0.0
  %270 = vmatpush1.msra.mxu0 0.0
  %271 = vmatprep.subr.mxu0 0.0
  %272 = vmatpush1.msra.mxu0 0.0
  %273 = vmatprep.subr.mxu0 0.0
  %274 = vmatpush1.msra.mxu0 0.0
  %275 = vmatprep.subr.mxu0 0.0
  %276 = vmatpush1.msra.mxu0 0.0
  %277 = vmatprep.subr.mxu0 0.0
  %278 = vmatpush1.msra.mxu0 0.0
  %279 = vmatprep.subr.mxu0 0.0
  %280 = vmatpush1.msra.mxu0 0.0
  %281 = vmatprep.subr.mxu0 0.0
  %282 = vmatpush1.msra.mxu0 0.0
  %283 = vmatprep.subr.mxu0 0.0
  %284 = vmatpush1.msra.mxu0 0.0
  %285 = vmatprep.subr.mxu0 0.0
  %286 = vmatpush1.msra.mxu0 0.0
  %287 = vmatprep.subr.mxu0 0.0
  %288 = vmatpush1.msra.mxu0 0.0
  %289 = vmatprep.subr.mxu0 0.0
  %290 = vmatpush1.msra.mxu0 0.0
  %291 = vmatprep.subr.mxu0 0.0
  %292 = vmatpush1.msra.mxu0 0.0
  %293 = vmatprep.subr.mxu0 0.0
  %294 = vmatpush1.msra.mxu0 0.0
  %295 = vmatprep.subr.mxu0 0.0
  %296 = vmatpush1.msra.mxu0 0.0
  %297 = vmatprep.subr.mxu0 0.0
  %298 = vmatpush1.msra.mxu0 0.0
  %299 = vmatprep.subr.mxu0 0.0
  %300 = vmatpush1.msra.mxu0 0.0
  %301 = vmatprep.subr.mxu0 0.0
  %302 = vmatpush1.msra.mxu0 0.0
  %303 = vmatprep.subr.mxu0 0.0
  %304 = vmatpush1.msra.mxu0 0.0
  %305 = vmatprep.subr.mxu0 0.0
  %306 = vmatpush1.msra.mxu0 0.0
  %307 = vmatprep.subr.mxu0 0.0
  %308 = vmatpush1.msra.mxu0 0.0
  %309 = vmatprep.subr.mxu0 0.0
  %310 = vmatpush1.msra.mxu0 0.0
  %311 = vmatprep.subr.mxu0 0.0
  %312 = vmatpush1.msra.mxu0 0.0
  %313 = vmatprep.subr.mxu0 0.0
  %314 = vmatpush1.msra.mxu0 0.0
  %315 = vmatprep.subr.mxu0 0.0
  %316 = vmatpush1.msra.mxu0 0.0
  %317 = vmatprep.subr.mxu0 0.0
  %318 = vmatpush1.msra.mxu0 0.0
  %319 = vmatprep.subr.mxu0 0.0
  %320 = vmatpush1.msra.mxu0 0.0
  %321 = vmatprep.mubr.f32.mxu0 0.0
  %v322 = vand.u32 %v30, 4294901760
  %v323 = vsub.f32 %v30, %v322
  %324 = vmatmul.mubr.f32.gmra.mrb[0].mxu0 %v323
  %v325 = vpop.f32.mrb[0].mxu0
  %v326 = vadd.f32 %v237, %v325
  %v327 = vpop.f32.mrb[0].mxu0
  %v328 = vadd.f32 %v239, %v327
  %329 = vdwg.mxu0
  %v330 = vand.u32 %v13, 4294901760
  %331 = vmatprep.subr.mxu0 %v330
  %v332 = vand.u32 %v12, 4294901760
  %333 = vmatpush1.msra.mxu0 %v332
  %v334 = vand.u32 %v17, 4294901760
  %335 = vmatprep.subr.mxu0 %v334
  %v336 = vand.u32 %v16, 4294901760
  %337 = vmatpush1.msra.mxu0 %v336
  %v338 = vand.u32 %v21, 4294901760
  %339 = vmatprep.subr.mxu0 %v338
  %v340 = vand.u32 %v20, 4294901760
  %341 = vmatpush1.msra.mxu0 %v340
  %v342 = vand.u32 %v37, 4294901760
  %343 = vmatprep.subr.mxu0 %v342
  %v344 = vand.u32 %v34, 4294901760
  %345 = vmatpush1.msra.mxu0 %v344
  %346 = vmatprep.subr.mxu0 0.0
  %347 = vmatpush1.msra.mxu0 0.0
  %348 = vmatprep.subr.mxu0 0.0
  %349 = vmatpush1.msra.mxu0 0.0
  %350 = vmatprep.subr.mxu0 0.0
  %351 = vmatpush1.msra.mxu0 0.0
  %352 = vmatprep.subr.mxu0 0.0
  %353 = vmatpush1.msra.mxu0 0.0
  %354 = vmatprep.subr.mxu0 0.0
  %355 = vmatpush1.msra.mxu0 0.0
  %356 = vmatprep.subr.mxu0 0.0
  %357 = vmatpush1.msra.mxu0 0.0
  %358 = vmatprep.subr.mxu0 0.0
  %359 = vmatpush1.msra.mxu0 0.0
  %360 = vmatprep.subr.mxu0 0.0
  %361 = vmatpush1.msra.mxu0 0.0
  %362 = vmatprep.subr.mxu0 0.0
  %363 = vmatpush1.msra.mxu0 0.0
  %364 = vmatprep.subr.mxu0 0.0
  %365 = vmatpush1.msra.mxu0 0.0
  %366 = vmatprep.subr.mxu0 0.0
  %367 = vmatpush1.msra.mxu0 0.0
  %368 = vmatprep.subr.mxu0 0.0
  %369 = vmatpush1.msra.mxu0 0.0
  %370 = vmatprep.subr.mxu0 0.0
  %371 = vmatpush1.msra.mxu0 0.0
  %372 = vmatprep.subr.mxu0 0.0
  %373 = vmatpush1.msra.mxu0 0.0
  %374 = vmatprep.subr.mxu0 0.0
  %375 = vmatpush1.msra.mxu0 0.0
  %376 = vmatprep.subr.mxu0 0.0
  %377 = vmatpush1.msra.mxu0 0.0
  %378 = vmatprep.subr.mxu0 0.0
  %379 = vmatpush1.msra.mxu0 0.0
  %380 = vmatprep.subr.mxu0 0.0
  %381 = vmatpush1.msra.mxu0 0.0
  %382 = vmatprep.subr.mxu0 0.0
  %383 = vmatpush1.msra.mxu0 0.0
  %384 = vmatprep.subr.mxu0 0.0
  %385 = vmatpush1.msra.mxu0 0.0
  %386 = vmatprep.subr.mxu0 0.0
  %387 = vmatpush1.msra.mxu0 0.0
  %388 = vmatprep.subr.mxu0 0.0
  %389 = vmatpush1.msra.mxu0 0.0
  %390 = vmatprep.subr.mxu0 0.0
  %391 = vmatpush1.msra.mxu0 0.0
  %392 = vmatprep.subr.mxu0 0.0
  %393 = vmatpush1.msra.mxu0 0.0
  %394 = vmatprep.subr.mxu0 0.0
  %395 = vmatpush1.msra.mxu0 0.0
  %396 = vmatprep.subr.mxu0 0.0
  %397 = vmatpush1.msra.mxu0 0.0
  %398 = vmatprep.subr.mxu0 0.0
  %399 = vmatpush1.msra.mxu0 0.0
  %400 = vmatprep.subr.mxu0 0.0
  %401 = vmatpush1.msra.mxu0 0.0
  %402 = vmatprep.mubr.f32.mxu0 0.0
  %v403 = vand.u32 %v30, 4294901760
  %v404 = vsub.f32 %v30, %v403
  %v405 = vand.u32 %v404, 4294901760
  %406 = vmatmul.mubr.f32.gmra.mrb[0].mxu0 %v405
  %v407 = vpop.f32.mrb[0].mxu0
  %v408 = vadd.f32 %v326, %v407
  %v409 = vpop.f32.mrb[0].mxu0
  %v410 = vadd.f32 %v328, %v409
  %411 = vdwg.mxu0
  %v412 = vand.u32 %v13, 4294901760
  %v413 = vsub.f32 %v13, %v412
  %v414 = vand.u32 %v413, 4294901760
  %415 = vmatprep.subr.mxu0 %v414
  %v416 = vand.u32 %v12, 4294901760
  %v417 = vsub.f32 %v12, %v416
  %v418 = vand.u32 %v417, 4294901760
  %419 = vmatpush1.msra.mxu0 %v418
  %v420 = vand.u32 %v17, 4294901760
  %v421 = vsub.f32 %v17, %v420
  %v422 = vand.u32 %v421, 4294901760
  %423 = vmatprep.subr.mxu0 %v422
  %v424 = vand.u32 %v16, 4294901760
  %v425 = vsub.f32 %v16, %v424
  %v426 = vand.u32 %v425, 4294901760
  %427 = vmatpush1.msra.mxu0 %v426
  %v428 = vand.u32 %v21, 4294901760
  %v429 = vsub.f32 %v21, %v428
  %v430 = vand.u32 %v429, 4294901760
  %431 = vmatprep.subr.mxu0 %v430
  %v432 = vand.u32 %v20, 4294901760
  %v433 = vsub.f32 %v20, %v432
  %v434 = vand.u32 %v433, 4294901760
  %435 = vmatpush1.msra.mxu0 %v434
  %v436 = vand.u32 %v37, 4294901760
  %v437 = vsub.f32 %v37, %v436
  %v438 = vand.u32 %v437, 4294901760
  %439 = vmatprep.subr.mxu0 %v438
  %v440 = vand.u32 %v34, 4294901760
  %v441 = vsub.f32 %v34, %v440
  %v442 = vand.u32 %v441, 4294901760
  %443 = vmatpush1.msra.mxu0 %v442
  %444 = vmatprep.subr.mxu0 0.0
  %445 = vmatpush1.msra.mxu0 0.0
  %446 = vmatprep.subr.mxu0 0.0
  %447 = vmatpush1.msra.mxu0 0.0
  %448 = vmatprep.subr.mxu0 0.0
  %449 = vmatpush1.msra.mxu0 0.0
  %450 = vmatprep.subr.mxu0 0.0
  %451 = vmatpush1.msra.mxu0 0.0
  %452 = vmatprep.subr.mxu0 0.0
  %453 = vmatpush1.msra.mxu0 0.0
  %454 = vmatprep.subr.mxu0 0.0
  %455 = vmatpush1.msra.mxu0 0.0
  %456 = vmatprep.subr.mxu0 0.0
  %457 = vmatpush1.msra.mxu0 0.0
  %458 = vmatprep.subr.mxu0 0.0
  %459 = vmatpush1.msra.mxu0 0.0
  %460 = vmatprep.subr.mxu0 0.0
  %461 = vmatpush1.msra.mxu0 0.0
  %462 = vmatprep.subr.mxu0 0.0
  %463 = vmatpush1.msra.mxu0 0.0
  %464 = vmatprep.subr.mxu0 0.0
  %465 = vmatpush1.msra.mxu0 0.0
  %466 = vmatprep.subr.mxu0 0.0
  %467 = vmatpush1.msra.mxu0 0.0
  %468 = vmatprep.subr.mxu0 0.0
  %469 = vmatpush1.msra.mxu0 0.0
  %470 = vmatprep.subr.mxu0 0.0
  %471 = vmatpush1.msra.mxu0 0.0
  %472 = vmatprep.subr.mxu0 0.0
  %473 = vmatpush1.msra.mxu0 0.0
  %474 = vmatprep.subr.mxu0 0.0
  %475 = vmatpush1.msra.mxu0 0.0
  %476 = vmatprep.subr.mxu0 0.0
  %477 = vmatpush1.msra.mxu0 0.0
  %478 = vmatprep.subr.mxu0 0.0
  %479 = vmatpush1.msra.mxu0 0.0
  %480 = vmatprep.subr.mxu0 0.0
  %481 = vmatpush1.msra.mxu0 0.0
  %482 = vmatprep.subr.mxu0 0.0
  %483 = vmatpush1.msra.mxu0 0.0
  %484 = vmatprep.subr.mxu0 0.0
  %485 = vmatpush1.msra.mxu0 0.0
  %486 = vmatprep.subr.mxu0 0.0
  %487 = vmatpush1.msra.mxu0 0.0
  %488 = vmatprep.subr.mxu0 0.0
  %489 = vmatpush1.msra.mxu0 0.0
  %490 = vmatprep.subr.mxu0 0.0
  %491 = vmatpush1.msra.mxu0 0.0
  %492 = vmatprep.subr.mxu0 0.0
  %493 = vmatpush1.msra.mxu0 0.0
  %494 = vmatprep.subr.mxu0 0.0
  %495 = vmatpush1.msra.mxu0 0.0
  %496 = vmatprep.subr.mxu0 0.0
  %497 = vmatpush1.msra.mxu0 0.0
  %498 = vmatprep.subr.mxu0 0.0
  %499 = vmatpush1.msra.mxu0 0.0
  %500 = vmatprep.mubr.f32.mxu0 0.0
  %v501 = vand.u32 %v30, 4294901760
  %502 = vmatmul.mubr.f32.gmra.mrb[0].mxu0 %v501
  %v503 = vpop.f32.mrb[0].mxu0
  %v504 = vadd.f32 %v408, %v503
  %v505 = vpop.f32.mrb[0].mxu0
  %v506 = vadd.f32 %v410, %v505
  %507 = vdwg.mxu0
  %v508 = vand.u32 %v13, 4294901760
  %509 = vmatprep.subr.mxu0 %v508
  %v510 = vand.u32 %v12, 4294901760
  %511 = vmatpush1.msra.mxu0 %v510
  %v512 = vand.u32 %v17, 4294901760
  %513 = vmatprep.subr.mxu0 %v512
  %v514 = vand.u32 %v16, 4294901760
  %515 = vmatpush1.msra.mxu0 %v514
  %v516 = vand.u32 %v21, 4294901760
  %517 = vmatprep.subr.mxu0 %v516
  %v518 = vand.u32 %v20, 4294901760
  %519 = vmatpush1.msra.mxu0 %v518
  %v520 = vand.u32 %v37, 4294901760
  %521 = vmatprep.subr.mxu0 %v520
  %v522 = vand.u32 %v34, 4294901760
  %523 = vmatpush1.msra.mxu0 %v522
  %524 = vmatprep.subr.mxu0 0.0
  %525 = vmatpush1.msra.mxu0 0.0
  %526 = vmatprep.subr.mxu0 0.0
  %527 = vmatpush1.msra.mxu0 0.0
  %528 = vmatprep.subr.mxu0 0.0
  %529 = vmatpush1.msra.mxu0 0.0
  %530 = vmatprep.subr.mxu0 0.0
  %531 = vmatpush1.msra.mxu0 0.0
  %532 = vmatprep.subr.mxu0 0.0
  %533 = vmatpush1.msra.mxu0 0.0
  %534 = vmatprep.subr.mxu0 0.0
  %535 = vmatpush1.msra.mxu0 0.0
  %536 = vmatprep.subr.mxu0 0.0
  %537 = vmatpush1.msra.mxu0 0.0
  %538 = vmatprep.subr.mxu0 0.0
  %539 = vmatpush1.msra.mxu0 0.0
  %540 = vmatprep.subr.mxu0 0.0
  %541 = vmatpush1.msra.mxu0 0.0
  %542 = vmatprep.subr.mxu0 0.0
  %543 = vmatpush1.msra.mxu0 0.0
  %544 = vmatprep.subr.mxu0 0.0
  %545 = vmatpush1.msra.mxu0 0.0
  %546 = vmatprep.subr.mxu0 0.0
  %547 = vmatpush1.msra.mxu0 0.0
  %548 = vmatprep.subr.mxu0 0.0
  %549 = vmatpush1.msra.mxu0 0.0
  %550 = vmatprep.subr.mxu0 0.0
  %551 = vmatpush1.msra.mxu0 0.0
  %552 = vmatprep.subr.mxu0 0.0
  %553 = vmatpush1.msra.mxu0 0.0
  %554 = vmatprep.subr.mxu0 0.0
  %555 = vmatpush1.msra.mxu0 0.0
  %556 = vmatprep.subr.mxu0 0.0
  %557 = vmatpush1.msra.mxu0 0.0
  %558 = vmatprep.subr.mxu0 0.0
  %559 = vmatpush1.msra.mxu0 0.0
  %560 = vmatprep.subr.mxu0 0.0
  %561 = vmatpush1.msra.mxu0 0.0
  %562 = vmatprep.subr.mxu0 0.0
  %563 = vmatpush1.msra.mxu0 0.0
  %564 = vmatprep.subr.mxu0 0.0
  %565 = vmatpush1.msra.mxu0 0.0
  %566 = vmatprep.subr.mxu0 0.0
  %567 = vmatpush1.msra.mxu0 0.0
  %568 = vmatprep.subr.mxu0 0.0
  %569 = vmatpush1.msra.mxu0 0.0
  %570 = vmatprep.subr.mxu0 0.0
  %571 = vmatpush1.msra.mxu0 0.0
  %572 = vmatprep.subr.mxu0 0.0
  %573 = vmatpush1.msra.mxu0 0.0
  %574 = vmatprep.subr.mxu0 0.0
  %575 = vmatpush1.msra.mxu0 0.0
  %576 = vmatprep.subr.mxu0 0.0
  %577 = vmatpush1.msra.mxu0 0.0
  %578 = vmatprep.subr.mxu0 0.0
  %579 = vmatpush1.msra.mxu0 0.0
  %580 = vmatprep.mubr.f32.mxu0 0.0
  %v581 = vand.u32 %v30, 4294901760
  %582 = vmatmul.mubr.f32.gmra.mrb[0].mxu0 %v581
  %v583 = vpop.f32.mrb[0].mxu0
  %v584 = vadd.f32 %v504, %v583
  %v585 = vpop.f32.mrb[0].mxu0
  %v586 = vadd.f32 %v506, %v585
  %587 = vdwg.mxu0
  %v588 = vand.u32 %v15, 4294901760
  %589 = vmatprep.subr.mxu0 %v588
  %v590 = vand.u32 %v14, 4294901760
  %591 = vmatpush1.msra.mxu0 %v590
  %v592 = vand.u32 %v19, 4294901760
  %593 = vmatprep.subr.mxu0 %v592
  %v594 = vand.u32 %v18, 4294901760
  %595 = vmatpush1.msra.mxu0 %v594
  %v596 = vand.u32 %v23, 4294901760
  %597 = vmatprep.subr.mxu0 %v596
  %v598 = vand.u32 %v22, 4294901760
  %599 = vmatpush1.msra.mxu0 %v598
  %v600 = vand.u32 %v43, 4294901760
  %601 = vmatprep.subr.mxu0 %v600
  %v602 = vand.u32 %v40, 4294901760
  %603 = vmatpush1.msra.mxu0 %v602
  %604 = vmatprep.subr.mxu0 0.0
  %605 = vmatpush1.msra.mxu0 0.0
  %606 = vmatprep.subr.mxu0 0.0
  %607 = vmatpush1.msra.mxu0 0.0
  %608 = vmatprep.subr.mxu0 0.0
  %609 = vmatpush1.msra.mxu0 0.0
  %610 = vmatprep.subr.mxu0 0.0
  %611 = vmatpush1.msra.mxu0 0.0
  %612 = vmatprep.subr.mxu0 0.0
  %613 = vmatpush1.msra.mxu0 0.0
  %614 = vmatprep.subr.mxu0 0.0
  %615 = vmatpush1.msra.mxu0 0.0
  %616 = vmatprep.subr.mxu0 0.0
  %617 = vmatpush1.msra.mxu0 0.0
  %618 = vmatprep.subr.mxu0 0.0
  %619 = vmatpush1.msra.mxu0 0.0
  %620 = vmatprep.subr.mxu0 0.0
  %621 = vmatpush1.msra.mxu0 0.0
  %622 = vmatprep.subr.mxu0 0.0
  %623 = vmatpush1.msra.mxu0 0.0
  %624 = vmatprep.subr.mxu0 0.0
  %625 = vmatpush1.msra.mxu0 0.0
  %626 = vmatprep.subr.mxu0 0.0
  %627 = vmatpush1.msra.mxu0 0.0
  %628 = vmatprep.subr.mxu0 0.0
  %629 = vmatpush1.msra.mxu0 0.0
  %630 = vmatprep.subr.mxu0 0.0
  %631 = vmatpush1.msra.mxu0 0.0
  %632 = vmatprep.subr.mxu0 0.0
  %633 = vmatpush1.msra.mxu0 0.0
  %634 = vmatprep.subr.mxu0 0.0
  %635 = vmatpush1.msra.mxu0 0.0
  %636 = vmatprep.subr.mxu0 0.0
  %637 = vmatpush1.msra.mxu0 0.0
  %638 = vmatprep.subr.mxu0 0.0
  %639 = vmatpush1.msra.mxu0 0.0
  %640 = vmatprep.subr.mxu0 0.0
  %641 = vmatpush1.msra.mxu0 0.0
  %642 = vmatprep.subr.mxu0 0.0
  %643 = vmatpush1.msra.mxu0 0.0
  %644 = vmatprep.subr.mxu0 0.0
  %645 = vmatpush1.msra.mxu0 0.0
  %646 = vmatprep.subr.mxu0 0.0
  %647 = vmatpush1.msra.mxu0 0.0
  %648 = vmatprep.subr.mxu0 0.0
  %649 = vmatpush1.msra.mxu0 0.0
  %650 = vmatprep.subr.mxu0 0.0
  %651 = vmatpush1.msra.mxu0 0.0
  %652 = vmatprep.subr.mxu0 0.0
  %653 = vmatpush1.msra.mxu0 0.0
  %654 = vmatprep.subr.mxu0 0.0
  %655 = vmatpush1.msra.mxu0 0.0
  %656 = vmatprep.subr.mxu0 0.0
  %657 = vmatpush1.msra.mxu0 0.0
  %658 = vmatprep.subr.mxu0 0.0
  %659 = vmatpush1.msra.mxu0 0.0
  %660 = vmatprep.mubr.f32.mxu0 0.0
  %v661 = vand.u32 %v30, 4294901760
  %v662 = vsub.f32 %v30, %v661
  %v663 = vand.u32 %v662, 4294901760
  %v664 = vsub.f32 %v662, %v663
  %v665 = vand.u32 %v664, 4294901760
  %666 = vmatmul.mubr.f32.gmra.mrb[0].mxu0 %v665
  %v667 = vpop.f32.mrb[0].mxu0
  %v668 = vadd.f32 0.0, %v667
  %v669 = vpop.f32.mrb[0].mxu0
  %v670 = vadd.f32 0.0, %v669
  %671 = vdwg.mxu0
  %v672 = vand.u32 %v15, 4294901760
  %v673 = vsub.f32 %v15, %v672
  %v674 = vand.u32 %v673, 4294901760
  %v675 = vsub.f32 %v673, %v674
  %v676 = vand.u32 %v675, 4294901760
  %677 = vmatprep.subr.mxu0 %v676
  %v678 = vand.u32 %v14, 4294901760
  %v679 = vsub.f32 %v14, %v678
  %v680 = vand.u32 %v679, 4294901760
  %v681 = vsub.f32 %v679, %v680
  %v682 = vand.u32 %v681, 4294901760
  %683 = vmatpush1.msra.mxu0 %v682
  %v684 = vand.u32 %v19, 4294901760
  %v685 = vsub.f32 %v19, %v684
  %v686 = vand.u32 %v685, 4294901760
  %v687 = vsub.f32 %v685, %v686
  %v688 = vand.u32 %v687, 4294901760
  %689 = vmatprep.subr.mxu0 %v688
  %v690 = vand.u32 %v18, 4294901760
  %v691 = vsub.f32 %v18, %v690
  %v692 = vand.u32 %v691, 4294901760
  %v693 = vsub.f32 %v691, %v692
  %v694 = vand.u32 %v693, 4294901760
  %695 = vmatpush1.msra.mxu0 %v694
  %v696 = vand.u32 %v23, 4294901760
  %v697 = vsub.f32 %v23, %v696
  %v698 = vand.u32 %v697, 4294901760
  %v699 = vsub.f32 %v697, %v698
  %v700 = vand.u32 %v699, 4294901760
  %701 = vmatprep.subr.mxu0 %v700
  %v702 = vand.u32 %v22, 4294901760
  %v703 = vsub.f32 %v22, %v702
  %v704 = vand.u32 %v703, 4294901760
  %v705 = vsub.f32 %v703, %v704
  %v706 = vand.u32 %v705, 4294901760
  %707 = vmatpush1.msra.mxu0 %v706
  %v708 = vand.u32 %v43, 4294901760
  %v709 = vsub.f32 %v43, %v708
  %v710 = vand.u32 %v709, 4294901760
  %v711 = vsub.f32 %v709, %v710
  %v712 = vand.u32 %v711, 4294901760
  %713 = vmatprep.subr.mxu0 %v712
  %v714 = vand.u32 %v40, 4294901760
  %v715 = vsub.f32 %v40, %v714
  %v716 = vand.u32 %v715, 4294901760
  %v717 = vsub.f32 %v715, %v716
  %v718 = vand.u32 %v717, 4294901760
  %719 = vmatpush1.msra.mxu0 %v718
  %720 = vmatprep.subr.mxu0 0.0
  %721 = vmatpush1.msra.mxu0 0.0
  %722 = vmatprep.subr.mxu0 0.0
  %723 = vmatpush1.msra.mxu0 0.0
  %724 = vmatprep.subr.mxu0 0.0
  %725 = vmatpush1.msra.mxu0 0.0
  %726 = vmatprep.subr.mxu0 0.0
  %727 = vmatpush1.msra.mxu0 0.0
  %728 = vmatprep.subr.mxu0 0.0
  %729 = vmatpush1.msra.mxu0 0.0
  %730 = vmatprep.subr.mxu0 0.0
  %731 = vmatpush1.msra.mxu0 0.0
  %732 = vmatprep.subr.mxu0 0.0
  %733 = vmatpush1.msra.mxu0 0.0
  %734 = vmatprep.subr.mxu0 0.0
  %735 = vmatpush1.msra.mxu0 0.0
  %736 = vmatprep.subr.mxu0 0.0
  %737 = vmatpush1.msra.mxu0 0.0
  %738 = vmatprep.subr.mxu0 0.0
  %739 = vmatpush1.msra.mxu0 0.0
  %740 = vmatprep.subr.mxu0 0.0
  %741 = vmatpush1.msra.mxu0 0.0
  %742 = vmatprep.subr.mxu0 0.0
  %743 = vmatpush1.msra.mxu0 0.0
  %744 = vmatprep.subr.mxu0 0.0
  %745 = vmatpush1.msra.mxu0 0.0
  %746 = vmatprep.subr.mxu0 0.0
  %747 = vmatpush1.msra.mxu0 0.0
  %748 = vmatprep.subr.mxu0 0.0
  %749 = vmatpush1.msra.mxu0 0.0
  %750 = vmatprep.subr.mxu0 0.0
  %751 = vmatpush1.msra.mxu0 0.0
  %752 = vmatprep.subr.mxu0 0.0
  %753 = vmatpush1.msra.mxu0 0.0
  %754 = vmatprep.subr.mxu0 0.0
  %755 = vmatpush1.msra.mxu0 0.0
  %756 = vmatprep.subr.mxu0 0.0
  %757 = vmatpush1.msra.mxu0 0.0
  %758 = vmatprep.subr.mxu0 0.0
  %759 = vmatpush1.msra.mxu0 0.0
  %760 = vmatprep.subr.mxu0 0.0
  %761 = vmatpush1.msra.mxu0 0.0
  %762 = vmatprep.subr.mxu0 0.0
  %763 = vmatpush1.msra.mxu0 0.0
  %764 = vmatprep.subr.mxu0 0.0
  %765 = vmatpush1.msra.mxu0 0.0
  %766 = vmatprep.subr.mxu0 0.0
  %767 = vmatpush1.msra.mxu0 0.0
  %768 = vmatprep.subr.mxu0 0.0
  %769 = vmatpush1.msra.mxu0 0.0
  %770 = vmatprep.subr.mxu0 0.0
  %771 = vmatpush1.msra.mxu0 0.0
  %772 = vmatprep.subr.mxu0 0.0
  %773 = vmatpush1.msra.mxu0 0.0
  %774 = vmatprep.subr.mxu0 0.0
  %775 = vmatpush1.msra.mxu0 0.0
  %776 = vmatprep.mubr.f32.mxu0 0.0
  %v777 = vand.u32 %v30, 4294901760
  %778 = vmatmul.mubr.f32.gmra.mrb[0].mxu0 %v777
  %v779 = vpop.f32.mrb[0].mxu0
  %v780 = vadd.f32 %v668, %v779
  %v781 = vpop.f32.mrb[0].mxu0
  %v782 = vadd.f32 %v670, %v781
  %783 = vdwg.mxu0
  %v784 = vand.u32 %v15, 4294901760
  %v785 = vsub.f32 %v15, %v784
  %786 = vmatprep.subr.mxu0 %v785
  %v787 = vand.u32 %v14, 4294901760
  %v788 = vsub.f32 %v14, %v787
  %789 = vmatpush1.msra.mxu0 %v788
  %v790 = vand.u32 %v19, 4294901760
  %v791 = vsub.f32 %v19, %v790
  %792 = vmatprep.subr.mxu0 %v791
  %v793 = vand.u32 %v18, 4294901760
  %v794 = vsub.f32 %v18, %v793
  %795 = vmatpush1.msra.mxu0 %v794
  %v796 = vand.u32 %v23, 4294901760
  %v797 = vsub.f32 %v23, %v796
  %798 = vmatprep.subr.mxu0 %v797
  %v799 = vand.u32 %v22, 4294901760
  %v800 = vsub.f32 %v22, %v799
  %801 = vmatpush1.msra.mxu0 %v800
  %v802 = vand.u32 %v43, 4294901760
  %v803 = vsub.f32 %v43, %v802
  %804 = vmatprep.subr.mxu0 %v803
  %v805 = vand.u32 %v40, 4294901760
  %v806 = vsub.f32 %v40, %v805
  %807 = vmatpush1.msra.mxu0 %v806
  %808 = vmatprep.subr.mxu0 0.0
  %809 = vmatpush1.msra.mxu0 0.0
  %810 = vmatprep.subr.mxu0 0.0
  %811 = vmatpush1.msra.mxu0 0.0
  %812 = vmatprep.subr.mxu0 0.0
  %813 = vmatpush1.msra.mxu0 0.0
  %814 = vmatprep.subr.mxu0 0.0
  %815 = vmatpush1.msra.mxu0 0.0
  %816 = vmatprep.subr.mxu0 0.0
  %817 = vmatpush1.msra.mxu0 0.0
  %818 = vmatprep.subr.mxu0 0.0
  %819 = vmatpush1.msra.mxu0 0.0
  %820 = vmatprep.subr.mxu0 0.0
  %821 = vmatpush1.msra.mxu0 0.0
  %822 = vmatprep.subr.mxu0 0.0
  %823 = vmatpush1.msra.mxu0 0.0
  %824 = vmatprep.subr.mxu0 0.0
  %825 = vmatpush1.msra.mxu0 0.0
  %826 = vmatprep.subr.mxu0 0.0
  %827 = vmatpush1.msra.mxu0 0.0
  %828 = vmatprep.subr.mxu0 0.0
  %829 = vmatpush1.msra.mxu0 0.0
  %830 = vmatprep.subr.mxu0 0.0
  %831 = vmatpush1.msra.mxu0 0.0
  %832 = vmatprep.subr.mxu0 0.0
  %833 = vmatpush1.msra.mxu0 0.0
  %834 = vmatprep.subr.mxu0 0.0
  %835 = vmatpush1.msra.mxu0 0.0
  %836 = vmatprep.subr.mxu0 0.0
  %837 = vmatpush1.msra.mxu0 0.0
  %838 = vmatprep.subr.mxu0 0.0
  %839 = vmatpush1.msra.mxu0 0.0
  %840 = vmatprep.subr.mxu0 0.0
  %841 = vmatpush1.msra.mxu0 0.0
  %842 = vmatprep.subr.mxu0 0.0
  %843 = vmatpush1.msra.mxu0 0.0
  %844 = vmatprep.subr.mxu0 0.0
  %845 = vmatpush1.msra.mxu0 0.0
  %846 = vmatprep.subr.mxu0 0.0
  %847 = vmatpush1.msra.mxu0 0.0
  %848 = vmatprep.subr.mxu0 0.0
  %849 = vmatpush1.msra.mxu0 0.0
  %850 = vmatprep.subr.mxu0 0.0
  %851 = vmatpush1.msra.mxu0 0.0
  %852 = vmatprep.subr.mxu0 0.0
  %853 = vmatpush1.msra.mxu0 0.0
  %854 = vmatprep.subr.mxu0 0.0
  %855 = vmatpush1.msra.mxu0 0.0
  %856 = vmatprep.subr.mxu0 0.0
  %857 = vmatpush1.msra.mxu0 0.0
  %858 = vmatprep.subr.mxu0 0.0
  %859 = vmatpush1.msra.mxu0 0.0
  %860 = vmatprep.subr.mxu0 0.0
  %861 = vmatpush1.msra.mxu0 0.0
  %862 = vmatprep.subr.mxu0 0.0
  %863 = vmatpush1.msra.mxu0 0.0
  %864 = vmatprep.mubr.f32.mxu0 0.0
  %v865 = vand.u32 %v30, 4294901760
  %v866 = vsub.f32 %v30, %v865
  %867 = vmatmul.mubr.f32.gmra.mrb[0].mxu0 %v866
  %v868 = vpop.f32.mrb[0].mxu0
  %v869 = vadd.f32 %v780, %v868
  %v870 = vpop.f32.mrb[0].mxu0
  %v871 = vadd.f32 %v782, %v870
  %872 = vdwg.mxu0
  %v873 = vand.u32 %v15, 4294901760
  %874 = vmatprep.subr.mxu0 %v873
  %v875 = vand.u32 %v14, 4294901760
  %876 = vmatpush1.msra.mxu0 %v875
  %v877 = vand.u32 %v19, 4294901760
  %878 = vmatprep.subr.mxu0 %v877
  %v879 = vand.u32 %v18, 4294901760
  %880 = vmatpush1.msra.mxu0 %v879
  %v881 = vand.u32 %v23, 4294901760
  %882 = vmatprep.subr.mxu0 %v881
  %v883 = vand.u32 %v22, 4294901760
  %884 = vmatpush1.msra.mxu0 %v883
  %v885 = vand.u32 %v43, 4294901760
  %886 = vmatprep.subr.mxu0 %v885
  %v887 = vand.u32 %v40, 4294901760
  %888 = vmatpush1.msra.mxu0 %v887
  %889 = vmatprep.subr.mxu0 0.0
  %890 = vmatpush1.msra.mxu0 0.0
  %891 = vmatprep.subr.mxu0 0.0
  %892 = vmatpush1.msra.mxu0 0.0
  %893 = vmatprep.subr.mxu0 0.0
  %894 = vmatpush1.msra.mxu0 0.0
  %895 = vmatprep.subr.mxu0 0.0
  %896 = vmatpush1.msra.mxu0 0.0
  %897 = vmatprep.subr.mxu0 0.0
  %898 = vmatpush1.msra.mxu0 0.0
  %899 = vmatprep.subr.mxu0 0.0
  %900 = vmatpush1.msra.mxu0 0.0
  %901 = vmatprep.subr.mxu0 0.0
  %902 = vmatpush1.msra.mxu0 0.0
  %903 = vmatprep.subr.mxu0 0.0
  %904 = vmatpush1.msra.mxu0 0.0
  %905 = vmatprep.subr.mxu0 0.0
  %906 = vmatpush1.msra.mxu0 0.0
  %907 = vmatprep.subr.mxu0 0.0
  %908 = vmatpush1.msra.mxu0 0.0
  %909 = vmatprep.subr.mxu0 0.0
  %910 = vmatpush1.msra.mxu0 0.0
  %911 = vmatprep.subr.mxu0 0.0
  %912 = vmatpush1.msra.mxu0 0.0
  %913 = vmatprep.subr.mxu0 0.0
  %914 = vmatpush1.msra.mxu0 0.0
  %915 = vmatprep.subr.mxu0 0.0
  %916 = vmatpush1.msra.mxu0 0.0
  %917 = vmatprep.subr.mxu0 0.0
  %918 = vmatpush1.msra.mxu0 0.0
  %919 = vmatprep.subr.mxu0 0.0
  %920 = vmatpush1.msra.mxu0 0.0
  %921 = vmatprep.subr.mxu0 0.0
  %922 = vmatpush1.msra.mxu0 0.0
  %923 = vmatprep.subr.mxu0 0.0
  %924 = vmatpush1.msra.mxu0 0.0
  %925 = vmatprep.subr.mxu0 0.0
  %926 = vmatpush1.msra.mxu0 0.0
  %927 = vmatprep.subr.mxu0 0.0
  %928 = vmatpush1.msra.mxu0 0.0
  %929 = vmatprep.subr.mxu0 0.0
  %930 = vmatpush1.msra.mxu0 0.0
  %931 = vmatprep.subr.mxu0 0.0
  %932 = vmatpush1.msra.mxu0 0.0
  %933 = vmatprep.subr.mxu0 0.0
  %934 = vmatpush1.msra.mxu0 0.0
  %935 = vmatprep.subr.mxu0 0.0
  %936 = vmatpush1.msra.mxu0 0.0
  %937 = vmatprep.subr.mxu0 0.0
  %938 = vmatpush1.msra.mxu0 0.0
  %939 = vmatprep.subr.mxu0 0.0
  %940 = vmatpush1.msra.mxu0 0.0
  %941 = vmatprep.subr.mxu0 0.0
  %942 = vmatpush1.msra.mxu0 0.0
  %943 = vmatprep.subr.mxu0 0.0
  %944 = vmatpush1.msra.mxu0 0.0
  %945 = vmatprep.mubr.f32.mxu0 0.0
  %v946 = vand.u32 %v30, 4294901760
  %v947 = vsub.f32 %v30, %v946
  %v948 = vand.u32 %v947, 4294901760
  %949 = vmatmul.mubr.f32.gmra.mrb[0].mxu0 %v948
  %v950 = vpop.f32.mrb[0].mxu0
  %v951 = vadd.f32 %v869, %v950
  %v952 = vpop.f32.mrb[0].mxu0
  %v953 = vadd.f32 %v871, %v952
  %954 = vdwg.mxu0
  %v955 = vand.u32 %v15, 4294901760
  %v956 = vsub.f32 %v15, %v955
  %v957 = vand.u32 %v956, 4294901760
  %958 = vmatprep.subr.mxu0 %v957
  %v959 = vand.u32 %v14, 4294901760
  %v960 = vsub.f32 %v14, %v959
  %v961 = vand.u32 %v960, 4294901760
  %962 = vmatpush1.msra.mxu0 %v961
  %v963 = vand.u32 %v19, 4294901760
  %v964 = vsub.f32 %v19, %v963
  %v965 = vand.u32 %v964, 4294901760
  %966 = vmatprep.subr.mxu0 %v965
  %v967 = vand.u32 %v18, 4294901760
  %v968 = vsub.f32 %v18, %v967
  %v969 = vand.u32 %v968, 4294901760
  %970 = vmatpush1.msra.mxu0 %v969
  %v971 = vand.u32 %v23, 4294901760
  %v972 = vsub.f32 %v23, %v971
  %v973 = vand.u32 %v972, 4294901760
  %974 = vmatprep.subr.mxu0 %v973
  %v975 = vand.u32 %v22, 4294901760
  %v976 = vsub.f32 %v22, %v975
  %v977 = vand.u32 %v976, 4294901760
  %978 = vmatpush1.msra.mxu0 %v977
  %v979 = vand.u32 %v43, 4294901760
  %v980 = vsub.f32 %v43, %v979
  %v981 = vand.u32 %v980, 4294901760
  %982 = vmatprep.subr.mxu0 %v981
  %v983 = vand.u32 %v40, 4294901760
  %v984 = vsub.f32 %v40, %v983
  %v985 = vand.u32 %v984, 4294901760
  %986 = vmatpush1.msra.mxu0 %v985
  %987 = vmatprep.subr.mxu0 0.0
  %988 = vmatpush1.msra.mxu0 0.0
  %989 = vmatprep.subr.mxu0 0.0
  %990 = vmatpush1.msra.mxu0 0.0
  %991 = vmatprep.subr.mxu0 0.0
  %992 = vmatpush1.msra.mxu0 0.0
  %993 = vmatprep.subr.mxu0 0.0
  %994 = vmatpush1.msra.mxu0 0.0
  %995 = vmatprep.subr.mxu0 0.0
  %996 = vmatpush1.msra.mxu0 0.0
  %997 = vmatprep.subr.mxu0 0.0
  %998 = vmatpush1.msra.mxu0 0.0
  %999 = vmatprep.subr.mxu0 0.0
  %1000 = vmatpush1.msra.mxu0 0.0
  %1001 = vmatprep.subr.mxu0 0.0
  %1002 = vmatpush1.msra.mxu0 0.0
  %1003 = vmatprep.subr.mxu0 0.0
  %1004 = vmatpush1.msra.mxu0 0.0
  %1005 = vmatprep.subr.mxu0 0.0
  %1006 = vmatpush1.msra.mxu0 0.0
  %1007 = vmatprep.subr.mxu0 0.0
  %1008 = vmatpush1.msra.mxu0 0.0
  %1009 = vmatprep.subr.mxu0 0.0
  %1010 = vmatpush1.msra.mxu0 0.0
  %1011 = vmatprep.subr.mxu0 0.0
  %1012 = vmatpush1.msra.mxu0 0.0
  %1013 = vmatprep.subr.mxu0 0.0
  %1014 = vmatpush1.msra.mxu0 0.0
  %1015 = vmatprep.subr.mxu0 0.0
  %1016 = vmatpush1.msra.mxu0 0.0
  %1017 = vmatprep.subr.mxu0 0.0
  %1018 = vmatpush1.msra.mxu0 0.0
  %1019 = vmatprep.subr.mxu0 0.0
  %1020 = vmatpush1.msra.mxu0 0.0
  %1021 = vmatprep.subr.mxu0 0.0
  %1022 = vmatpush1.msra.mxu0 0.0
  %1023 = vmatprep.subr.mxu0 0.0
  %1024 = vmatpush1.msra.mxu0 0.0
  %1025 = vmatprep.subr.mxu0 0.0
  %1026 = vmatpush1.msra.mxu0 0.0
  %1027 = vmatprep.subr.mxu0 0.0
  %1028 = vmatpush1.msra.mxu0 0.0
  %1029 = vmatprep.subr.mxu0 0.0
  %1030 = vmatpush1.msra.mxu0 0.0
  %1031 = vmatprep.subr.mxu0 0.0
  %1032 = vmatpush1.msra.mxu0 0.0
  %1033 = vmatprep.subr.mxu0 0.0
  %1034 = vmatpush1.msra.mxu0 0.0
  %1035 = vmatprep.subr.mxu0 0.0
  %1036 = vmatpush1.msra.mxu0 0.0
  %1037 = vmatprep.subr.mxu0 0.0
  %1038 = vmatpush1.msra.mxu0 0.0
  %1039 = vmatprep.subr.mxu0 0.0
  %1040 = vmatpush1.msra.mxu0 0.0
  %1041 = vmatprep.subr.mxu0 0.0
  %1042 = vmatpush1.msra.mxu0 0.0
  %1043 = vmatprep.mubr.f32.mxu0 0.0
  %v1044 = vand.u32 %v30, 4294901760
  %1045 = vmatmul.mubr.f32.gmra.mrb[0].mxu0 %v1044
  %v1046 = vpop.f32.mrb[0].mxu0
  %v1047 = vadd.f32 %v951, %v1046
  %v1048 = vpop.f32.mrb[0].mxu0
  %v1049 = vadd.f32 %v953, %v1048
  %1050 = vdwg.mxu0
  %v1051 = vand.u32 %v15, 4294901760
  %1052 = vmatprep.subr.mxu0 %v1051
  %v1053 = vand.u32 %v14, 4294901760
  %1054 = vmatpush1.msra.mxu0 %v1053
  %v1055 = vand.u32 %v19, 4294901760
  %1056 = vmatprep.subr.mxu0 %v1055
  %v1057 = vand.u32 %v18, 4294901760
  %1058 = vmatpush1.msra.mxu0 %v1057
  %v1059 = vand.u32 %v23, 4294901760
  %1060 = vmatprep.subr.mxu0 %v1059
  %v1061 = vand.u32 %v22, 4294901760
  %1062 = vmatpush1.msra.mxu0 %v1061
  %v1063 = vand.u32 %v43, 4294901760
  %1064 = vmatprep.subr.mxu0 %v1063
  %v1065 = vand.u32 %v40, 4294901760
  %1066 = vmatpush1.msra.mxu0 %v1065
  %1067 = vmatprep.subr.mxu0 0.0
  %1068 = vmatpush1.msra.mxu0 0.0
  %1069 = vmatprep.subr.mxu0 0.0
  %1070 = vmatpush1.msra.mxu0 0.0
  %1071 = vmatprep.subr.mxu0 0.0
  %1072 = vmatpush1.msra.mxu0 0.0
  %1073 = vmatprep.subr.mxu0 0.0
  %1074 = vmatpush1.msra.mxu0 0.0
  %1075 = vmatprep.subr.mxu0 0.0
  %1076 = vmatpush1.msra.mxu0 0.0
  %1077 = vmatprep.subr.mxu0 0.0
  %1078 = vmatpush1.msra.mxu0 0.0
  %1079 = vmatprep.subr.mxu0 0.0
  %1080 = vmatpush1.msra.mxu0 0.0
  %1081 = vmatprep.subr.mxu0 0.0
  %1082 = vmatpush1.msra.mxu0 0.0
  %1083 = vmatprep.subr.mxu0 0.0
  %1084 = vmatpush1.msra.mxu0 0.0
  %1085 = vmatprep.subr.mxu0 0.0
  %1086 = vmatpush1.msra.mxu0 0.0
  %1087 = vmatprep.subr.mxu0 0.0
  %1088 = vmatpush1.msra.mxu0 0.0
  %1089 = vmatprep.subr.mxu0 0.0
  %1090 = vmatpush1.msra.mxu0 0.0
  %1091 = vmatprep.subr.mxu0 0.0
  %1092 = vmatpush1.msra.mxu0 0.0
  %1093 = vmatprep.subr.mxu0 0.0
  %1094 = vmatpush1.msra.mxu0 0.0
  %1095 = vmatprep.subr.mxu0 0.0
  %1096 = vmatpush1.msra.mxu0 0.0
  %1097 = vmatprep.subr.mxu0 0.0
  %1098 = vmatpush1.msra.mxu0 0.0
  %1099 = vmatprep.subr.mxu0 0.0
  %1100 = vmatpush1.msra.mxu0 0.0
  %1101 = vmatprep.subr.mxu0 0.0
  %1102 = vmatpush1.msra.mxu0 0.0
  %1103 = vmatprep.subr.mxu0 0.0
  %1104 = vmatpush1.msra.mxu0 0.0
  %1105 = vmatprep.subr.mxu0 0.0
  %1106 = vmatpush1.msra.mxu0 0.0
  %1107 = vmatprep.subr.mxu0 0.0
  %1108 = vmatpush1.msra.mxu0 0.0
  %1109 = vmatprep.subr.mxu0 0.0
  %1110 = vmatpush1.msra.mxu0 0.0
  %1111 = vmatprep.subr.mxu0 0.0
  %1112 = vmatpush1.msra.mxu0 0.0
  %1113 = vmatprep.subr.mxu0 0.0
  %1114 = vmatpush1.msra.mxu0 0.0
  %1115 = vmatprep.subr.mxu0 0.0
  %1116 = vmatpush1.msra.mxu0 0.0
  %1117 = vmatprep.subr.mxu0 0.0
  %1118 = vmatpush1.msra.mxu0 0.0
  %1119 = vmatprep.subr.mxu0 0.0
  %1120 = vmatpush1.msra.mxu0 0.0
  %1121 = vmatprep.subr.mxu0 0.0
  %1122 = vmatpush1.msra.mxu0 0.0
  %1123 = vmatprep.mubr.f32.mxu0 0.0
  %v1124 = vand.u32 %v30, 4294901760
  %1125 = vmatmul.mubr.f32.gmra.mrb[0].mxu0 %v1124
  %v1126 = vpop.f32.mrb[0].mxu0
  %v1127 = vadd.f32 %v1047, %v1126
  %v1128 = vpop.f32.mrb[0].mxu0
  %v1129 = vadd.f32 %v1049, %v1128
  %1130 = vdwg.mxu0
  %s1131 = scalar_lea.vmem %s0, 128
  %v1132 = vld [vmem:[%s1131] sm:$0xff]
  %v1133 = vld [vmem:[%s1131 + $0x8] sm:$0xff]
  %v1134 = vld [vmem:[%s1131 + $0x10] sm:$0xff]
  %v1135 = vld [vmem:[%s1131 + $0x18] sm:$0xff]
  %v1136 = vld [vmem:[%s1131 + $0x20] sm:$0xff]
  %v1137 = vld [vmem:[%s1131 + $0x28] sm:$0xff]
  %v1138 = vld [vmem:[%s1131 + $0x30] sm:$0xff]
  %v1139 = vld [vmem:[%s1131 + $0x38] sm:$0xff]
  %v1140 = vld [vmem:[%s1131 + $0x40] sm:$0xff]
  %v1141 = vld [vmem:[%s1131 + $0x48] sm:$0xff]
  %v1142 = vld [vmem:[%s1131 + $0x50] sm:$0xff]
  %v1143 = vld [vmem:[%s1131 + $0x58] sm:$0xff]
  %v1144 = vld [vmem:[%s1131 + $0x60] sm:$0x3]
  %v1145 = vld [vmem:[%s1131 + $0x68] sm:$0x3]
  %v1146 = vld [vmem:[%s1131 + $0x70] sm:$0x3]
  %v1147 = vld [vmem:[%s1131 + $0x78] sm:$0x3]
  %v1149 = vsel %vm32, %v1144, 0
  %v1152 = vsel %vm32, %v1145, 0
  %v1155 = vsel %vm32, %v1146, 0
  %v1158 = vsel %vm32, %v1147, 0
  %v1160 = vand.u32 %v1133, 4294901760
  %1161 = vmatprep.subr.mxu0 %v1160
  %v1162 = vand.u32 %v1132, 4294901760
  %1163 = vmatpush1.msra.mxu0 %v1162
  %v1164 = vand.u32 %v1137, 4294901760
  %1165 = vmatprep.subr.mxu0 %v1164
  %v1166 = vand.u32 %v1136, 4294901760
  %1167 = vmatpush1.msra.mxu0 %v1166
  %v1168 = vand.u32 %v1141, 4294901760
  %1169 = vmatprep.subr.mxu0 %v1168
  %v1170 = vand.u32 %v1140, 4294901760
  %1171 = vmatpush1.msra.mxu0 %v1170
  %v1172 = vand.u32 %v1152, 4294901760
  %1173 = vmatprep.subr.mxu0 %v1172
  %v1174 = vand.u32 %v1149, 4294901760
  %1175 = vmatpush1.msra.mxu0 %v1174
  %1176 = vmatprep.subr.mxu0 0.0
  %1177 = vmatpush1.msra.mxu0 0.0
  %1178 = vmatprep.subr.mxu0 0.0
  %1179 = vmatpush1.msra.mxu0 0.0
  %1180 = vmatprep.subr.mxu0 0.0
  %1181 = vmatpush1.msra.mxu0 0.0
  %1182 = vmatprep.subr.mxu0 0.0
  %1183 = vmatpush1.msra.mxu0 0.0
  %1184 = vmatprep.subr.mxu0 0.0
  %1185 = vmatpush1.msra.mxu0 0.0
  %1186 = vmatprep.subr.mxu0 0.0
  %1187 = vmatpush1.msra.mxu0 0.0
  %1188 = vmatprep.subr.mxu0 0.0
  %1189 = vmatpush1.msra.mxu0 0.0
  %1190 = vmatprep.subr.mxu0 0.0
  %1191 = vmatpush1.msra.mxu0 0.0
  %1192 = vmatprep.subr.mxu0 0.0
  %1193 = vmatpush1.msra.mxu0 0.0
  %1194 = vmatprep.subr.mxu0 0.0
  %1195 = vmatpush1.msra.mxu0 0.0
  %1196 = vmatprep.subr.mxu0 0.0
  %1197 = vmatpush1.msra.mxu0 0.0
  %1198 = vmatprep.subr.mxu0 0.0
  %1199 = vmatpush1.msra.mxu0 0.0
  %1200 = vmatprep.subr.mxu0 0.0
  %1201 = vmatpush1.msra.mxu0 0.0
  %1202 = vmatprep.subr.mxu0 0.0
  %1203 = vmatpush1.msra.mxu0 0.0
  %1204 = vmatprep.subr.mxu0 0.0
  %1205 = vmatpush1.msra.mxu0 0.0
  %1206 = vmatprep.subr.mxu0 0.0
  %1207 = vmatpush1.msra.mxu0 0.0
  %1208 = vmatprep.subr.mxu0 0.0
  %1209 = vmatpush1.msra.mxu0 0.0
  %1210 = vmatprep.subr.mxu0 0.0
  %1211 = vmatpush1.msra.mxu0 0.0
  %1212 = vmatprep.subr.mxu0 0.0
  %1213 = vmatpush1.msra.mxu0 0.0
  %1214 = vmatprep.subr.mxu0 0.0
  %1215 = vmatpush1.msra.mxu0 0.0
  %1216 = vmatprep.subr.mxu0 0.0
  %1217 = vmatpush1.msra.mxu0 0.0
  %1218 = vmatprep.subr.mxu0 0.0
  %1219 = vmatpush1.msra.mxu0 0.0
  %1220 = vmatprep.subr.mxu0 0.0
  %1221 = vmatpush1.msra.mxu0 0.0
  %1222 = vmatprep.subr.mxu0 0.0
  %1223 = vmatpush1.msra.mxu0 0.0
  %1224 = vmatprep.subr.mxu0 0.0
  %1225 = vmatpush1.msra.mxu0 0.0
  %1226 = vmatprep.subr.mxu0 0.0
  %1227 = vmatpush1.msra.mxu0 0.0
  %1228 = vmatprep.subr.mxu0 0.0
  %1229 = vmatpush1.msra.mxu0 0.0
  %1230 = vmatprep.subr.mxu0 0.0
  %1231 = vmatpush1.msra.mxu0 0.0
  %1232 = vmatprep.mubr.f32.mxu0 0.0
  %v1233 = vand.u32 %v30, 4294901760
  %v1234 = vsub.f32 %v30, %v1233
  %v1235 = vand.u32 %v1234, 4294901760
  %v1236 = vsub.f32 %v1234, %v1235
  %v1237 = vand.u32 %v1236, 4294901760
  %1238 = vmatmul.mubr.f32.gmra.mrb[0].mxu0 %v1237
  %v1239 = vpop.f32.mrb[0].mxu0
  %v1240 = vadd.f32 0.0, %v1239
  %v1241 = vpop.f32.mrb[0].mxu0
  %v1242 = vadd.f32 0.0, %v1241
  %1243 = vdwg.mxu0
  %v1244 = vand.u32 %v1133, 4294901760
  %v1245 = vsub.f32 %v1133, %v1244
  %v1246 = vand.u32 %v1245, 4294901760
  %v1247 = vsub.f32 %v1245, %v1246
  %v1248 = vand.u32 %v1247, 4294901760
  %1249 = vmatprep.subr.mxu0 %v1248
  %v1250 = vand.u32 %v1132, 4294901760
  %v1251 = vsub.f32 %v1132, %v1250
  %v1252 = vand.u32 %v1251, 4294901760
  %v1253 = vsub.f32 %v1251, %v1252
  %v1254 = vand.u32 %v1253, 4294901760
  %1255 = vmatpush1.msra.mxu0 %v1254
  %v1256 = vand.u32 %v1137, 4294901760
  %v1257 = vsub.f32 %v1137, %v1256
  %v1258 = vand.u32 %v1257, 4294901760
  %v1259 = vsub.f32 %v1257, %v1258
  %v1260 = vand.u32 %v1259, 4294901760
  %1261 = vmatprep.subr.mxu0 %v1260
  %v1262 = vand.u32 %v1136, 4294901760
  %v1263 = vsub.f32 %v1136, %v1262
  %v1264 = vand.u32 %v1263, 4294901760
  %v1265 = vsub.f32 %v1263, %v1264
  %v1266 = vand.u32 %v1265, 4294901760
  %1267 = vmatpush1.msra.mxu0 %v1266
  %v1268 = vand.u32 %v1141, 4294901760
  %v1269 = vsub.f32 %v1141, %v1268
  %v1270 = vand.u32 %v1269, 4294901760
  %v1271 = vsub.f32 %v1269, %v1270
  %v1272 = vand.u32 %v1271, 4294901760
  %1273 = vmatprep.subr.mxu0 %v1272
  %v1274 = vand.u32 %v1140, 4294901760
  %v1275 = vsub.f32 %v1140, %v1274
  %v1276 = vand.u32 %v1275, 4294901760
  %v1277 = vsub.f32 %v1275, %v1276
  %v1278 = vand.u32 %v1277, 4294901760
  %1279 = vmatpush1.msra.mxu0 %v1278
  %v1280 = vand.u32 %v1152, 4294901760
  %v1281 = vsub.f32 %v1152, %v1280
  %v1282 = vand.u32 %v1281, 4294901760
  %v1283 = vsub.f32 %v1281, %v1282
  %v1284 = vand.u32 %v1283, 4294901760
  %1285 = vmatprep.subr.mxu0 %v1284
  %v1286 = vand.u32 %v1149, 4294901760
  %v1287 = vsub.f32 %v1149, %v1286
  %v1288 = vand.u32 %v1287, 4294901760
  %v1289 = vsub.f32 %v1287, %v1288
  %v1290 = vand.u32 %v1289, 4294901760
  %1291 = vmatpush1.msra.mxu0 %v1290
  %1292 = vmatprep.subr.mxu0 0.0
  %1293 = vmatpush1.msra.mxu0 0.0
  %1294 = vmatprep.subr.mxu0 0.0
  %1295 = vmatpush1.msra.mxu0 0.0
  %1296 = vmatprep.subr.mxu0 0.0
  %1297 = vmatpush1.msra.mxu0 0.0
  %1298 = vmatprep.subr.mxu0 0.0
  %1299 = vmatpush1.msra.mxu0 0.0
  %1300 = vmatprep.subr.mxu0 0.0
  %1301 = vmatpush1.msra.mxu0 0.0
  %1302 = vmatprep.subr.mxu0 0.0
  %1303 = vmatpush1.msra.mxu0 0.0
  %1304 = vmatprep.subr.mxu0 0.0
  %1305 = vmatpush1.msra.mxu0 0.0
  %1306 = vmatprep.subr.mxu0 0.0
  %1307 = vmatpush1.msra.mxu0 0.0
  %1308 = vmatprep.subr.mxu0 0.0
  %1309 = vmatpush1.msra.mxu0 0.0
  %1310 = vmatprep.subr.mxu0 0.0
  %1311 = vmatpush1.msra.mxu0 0.0
  %1312 = vmatprep.subr.mxu0 0.0
  %1313 = vmatpush1.msra.mxu0 0.0
  %1314 = vmatprep.subr.mxu0 0.0
  %1315 = vmatpush1.msra.mxu0 0.0
  %1316 = vmatprep.subr.mxu0 0.0
  %1317 = vmatpush1.msra.mxu0 0.0
  %1318 = vmatprep.subr.mxu0 0.0
  %1319 = vmatpush1.msra.mxu0 0.0
  %1320 = vmatprep.subr.mxu0 0.0
  %1321 = vmatpush1.msra.mxu0 0.0
  %1322 = vmatprep.subr.mxu0 0.0
  %1323 = vmatpush1.msra.mxu0 0.0
  %1324 = vmatprep.subr.mxu0 0.0
  %1325 = vmatpush1.msra.mxu0 0.0
  %1326 = vmatprep.subr.mxu0 0.0
  %1327 = vmatpush1.msra.mxu0 0.0
  %1328 = vmatprep.subr.mxu0 0.0
  %1329 = vmatpush1.msra.mxu0 0.0
  %1330 = vmatprep.subr.mxu0 0.0
  %1331 = vmatpush1.msra.mxu0 0.0
  %1332 = vmatprep.subr.mxu0 0.0
  %1333 = vmatpush1.msra.mxu0 0.0
  %1334 = vmatprep.subr.mxu0 0.0
  %1335 = vmatpush1.msra.mxu0 0.0
  %1336 = vmatprep.subr.mxu0 0.0
  %1337 = vmatpush1.msra.mxu0 0.0
  %1338 = vmatprep.subr.mxu0 0.0
  %1339 = vmatpush1.msra.mxu0 0.0
  %1340 = vmatprep.subr.mxu0 0.0
  %1341 = vmatpush1.msra.mxu0 0.0
  %1342 = vmatprep.subr.mxu0 0.0
  %1343 = vmatpush1.msra.mxu0 0.0
  %1344 = vmatprep.subr.mxu0 0.0
  %1345 = vmatpush1.msra.mxu0 0.0
  %1346 = vmatprep.subr.mxu0 0.0
  %1347 = vmatpush1.msra.mxu0 0.0
  %1348 = vmatprep.mubr.f32.mxu0 0.0
  %v1349 = vand.u32 %v30, 4294901760
  %1350 = vmatmul.mubr.f32.gmra.mrb[0].mxu0 %v1349
  %v1351 = vpop.f32.mrb[0].mxu0
  %v1352 = vadd.f32 %v1240, %v1351
  %v1353 = vpop.f32.mrb[0].mxu0
  %v1354 = vadd.f32 %v1242, %v1353
  %1355 = vdwg.mxu0
  %v1356 = vand.u32 %v1133, 4294901760
  %v1357 = vsub.f32 %v1133, %v1356
  %1358 = vmatprep.subr.mxu0 %v1357
  %v1359 = vand.u32 %v1132, 4294901760
  %v1360 = vsub.f32 %v1132, %v1359
  %1361 = vmatpush1.msra.mxu0 %v1360
  %v1362 = vand.u32 %v1137, 4294901760
  %v1363 = vsub.f32 %v1137, %v1362
  %1364 = vmatprep.subr.mxu0 %v1363
  %v1365 = vand.u32 %v1136, 4294901760
  %v1366 = vsub.f32 %v1136, %v1365
  %1367 = vmatpush1.msra.mxu0 %v1366
  %v1368 = vand.u32 %v1141, 4294901760
  %v1369 = vsub.f32 %v1141, %v1368
  %1370 = vmatprep.subr.mxu0 %v1369
  %v1371 = vand.u32 %v1140, 4294901760
  %v1372 = vsub.f32 %v1140, %v1371
  %1373 = vmatpush1.msra.mxu0 %v1372
  %v1374 = vand.u32 %v1152, 4294901760
  %v1375 = vsub.f32 %v1152, %v1374
  %1376 = vmatprep.subr.mxu0 %v1375
  %v1377 = vand.u32 %v1149, 4294901760
  %v1378 = vsub.f32 %v1149, %v1377
  %1379 = vmatpush1.msra.mxu0 %v1378
  %1380 = vmatprep.subr.mxu0 0.0
  %1381 = vmatpush1.msra.mxu0 0.0
  %1382 = vmatprep.subr.mxu0 0.0
  %1383 = vmatpush1.msra.mxu0 0.0
  %1384 = vmatprep.subr.mxu0 0.0
  %1385 = vmatpush1.msra.mxu0 0.0
  %1386 = vmatprep.subr.mxu0 0.0
  %1387 = vmatpush1.msra.mxu0 0.0
  %1388 = vmatprep.subr.mxu0 0.0
  %1389 = vmatpush1.msra.mxu0 0.0
  %1390 = vmatprep.subr.mxu0 0.0
  %1391 = vmatpush1.msra.mxu0 0.0
  %1392 = vmatprep.subr.mxu0 0.0
  %1393 = vmatpush1.msra.mxu0 0.0
  %1394 = vmatprep.subr.mxu0 0.0
  %1395 = vmatpush1.msra.mxu0 0.0
  %1396 = vmatprep.subr.mxu0 0.0
  %1397 = vmatpush1.msra.mxu0 0.0
  %1398 = vmatprep.subr.mxu0 0.0
  %1399 = vmatpush1.msra.mxu0 0.0
  %1400 = vmatprep.subr.mxu0 0.0
  %1401 = vmatpush1.msra.mxu0 0.0
  %1402 = vmatprep.subr.mxu0 0.0
  %1403 = vmatpush1.msra.mxu0 0.0
  %1404 = vmatprep.subr.mxu0 0.0
  %1405 = vmatpush1.msra.mxu0 0.0
  %1406 = vmatprep.subr.mxu0 0.0
  %1407 = vmatpush1.msra.mxu0 0.0
  %1408 = vmatprep.subr.mxu0 0.0
  %1409 = vmatpush1.msra.mxu0 0.0
  %1410 = vmatprep.subr.mxu0 0.0
  %1411 = vmatpush1.msra.mxu0 0.0
  %1412 = vmatprep.subr.mxu0 0.0
  %1413 = vmatpush1.msra.mxu0 0.0
  %1414 = vmatprep.subr.mxu0 0.0
  %1415 = vmatpush1.msra.mxu0 0.0
  %1416 = vmatprep.subr.mxu0 0.0
  %1417 = vmatpush1.msra.mxu0 0.0
  %1418 = vmatprep.subr.mxu0 0.0
  %1419 = vmatpush1.msra.mxu0 0.0
  %1420 = vmatprep.subr.mxu0 0.0
  %1421 = vmatpush1.msra.mxu0 0.0
  %1422 = vmatprep.subr.mxu0 0.0
  %1423 = vmatpush1.msra.mxu0 0.0
  %1424 = vmatprep.subr.mxu0 0.0
  %1425 = vmatpush1.msra.mxu0 0.0
  %1426 = vmatprep.subr.mxu0 0.0
  %1427 = vmatpush1.msra.mxu0 0.0
  %1428 = vmatprep.subr.mxu0 0.0
  %1429 = vmatpush1.msra.mxu0 0.0
  %1430 = vmatprep.subr.mxu0 0.0
  %1431 = vmatpush1.msra.mxu0 0.0
  %1432 = vmatprep.subr.mxu0 0.0
  %1433 = vmatpush1.msra.mxu0 0.0
  %1434 = vmatprep.subr.mxu0 0.0
  %1435 = vmatpush1.msra.mxu0 0.0
  %1436 = vmatprep.mubr.f32.mxu0 0.0
  %v1437 = vand.u32 %v30, 4294901760
  %v1438 = vsub.f32 %v30, %v1437
  %1439 = vmatmul.mubr.f32.gmra.mrb[0].mxu0 %v1438
  %v1440 = vpop.f32.mrb[0].mxu0
  %v1441 = vadd.f32 %v1352, %v1440
  %v1442 = vpop.f32.mrb[0].mxu0
  %v1443 = vadd.f32 %v1354, %v1442
  %1444 = vdwg.mxu0
  %v1445 = vand.u32 %v1133, 4294901760
  %1446 = vmatprep.subr.mxu0 %v1445
  %v1447 = vand.u32 %v1132, 4294901760
  %1448 = vmatpush1.msra.mxu0 %v1447
  %v1449 = vand.u32 %v1137, 4294901760
  %1450 = vmatprep.subr.mxu0 %v1449
  %v1451 = vand.u32 %v1136, 4294901760
  %1452 = vmatpush1.msra.mxu0 %v1451
  %v1453 = vand.u32 %v1141, 4294901760
  %1454 = vmatprep.subr.mxu0 %v1453
  %v1455 = vand.u32 %v1140, 4294901760
  %1456 = vmatpush1.msra.mxu0 %v1455
  %v1457 = vand.u32 %v1152, 4294901760
  %1458 = vmatprep.subr.mxu0 %v1457
  %v1459 = vand.u32 %v1149, 4294901760
  %1460 = vmatpush1.msra.mxu0 %v1459
  %1461 = vmatprep.subr.mxu0 0.0
  %1462 = vmatpush1.msra.mxu0 0.0
  %1463 = vmatprep.subr.mxu0 0.0
  %1464 = vmatpush1.msra.mxu0 0.0
  %1465 = vmatprep.subr.mxu0 0.0
  %1466 = vmatpush1.msra.mxu0 0.0
  %1467 = vmatprep.subr.mxu0 0.0
  %1468 = vmatpush1.msra.mxu0 0.0
  %1469 = vmatprep.subr.mxu0 0.0
  %1470 = vmatpush1.msra.mxu0 0.0
  %1471 = vmatprep.subr.mxu0 0.0
  %1472 = vmatpush1.msra.mxu0 0.0
  %1473 = vmatprep.subr.mxu0 0.0
  %1474 = vmatpush1.msra.mxu0 0.0
  %1475 = vmatprep.subr.mxu0 0.0
  %1476 = vmatpush1.msra.mxu0 0.0
  %1477 = vmatprep.subr.mxu0 0.0
  %1478 = vmatpush1.msra.mxu0 0.0
  %1479 = vmatprep.subr.mxu0 0.0
  %1480 = vmatpush1.msra.mxu0 0.0
  %1481 = vmatprep.subr.mxu0 0.0
  %1482 = vmatpush1.msra.mxu0 0.0
  %1483 = vmatprep.subr.mxu0 0.0
  %1484 = vmatpush1.msra.mxu0 0.0
  %1485 = vmatprep.subr.mxu0 0.0
  %1486 = vmatpush1.msra.mxu0 0.0
  %1487 = vmatprep.subr.mxu0 0.0
  %1488 = vmatpush1.msra.mxu0 0.0
  %1489 = vmatprep.subr.mxu0 0.0
  %1490 = vmatpush1.msra.mxu0 0.0
  %1491 = vmatprep.subr.mxu0 0.0
  %1492 = vmatpush1.msra.mxu0 0.0
  %1493 = vmatprep.subr.mxu0 0.0
  %1494 = vmatpush1.msra.mxu0 0.0
  %1495 = vmatprep.subr.mxu0 0.0
  %1496 = vmatpush1.msra.mxu0 0.0
  %1497 = vmatprep.subr.mxu0 0.0
  %1498 = vmatpush1.msra.mxu0 0.0
  %1499 = vmatprep.subr.mxu0 0.0
  %1500 = vmatpush1.msra.mxu0 0.0
  %1501 = vmatprep.subr.mxu0 0.0
  %1502 = vmatpush1.msra.mxu0 0.0
  %1503 = vmatprep.subr.mxu0 0.0
  %1504 = vmatpush1.msra.mxu0 0.0
  %1505 = vmatprep.subr.mxu0 0.0
  %1506 = vmatpush1.msra.mxu0 0.0
  %1507 = vmatprep.subr.mxu0 0.0
  %1508 = vmatpush1.msra.mxu0 0.0
  %1509 = vmatprep.subr.mxu0 0.0
  %1510 = vmatpush1.msra.mxu0 0.0
  %1511 = vmatprep.subr.mxu0 0.0
  %1512 = vmatpush1.msra.mxu0 0.0
  %1513 = vmatprep.subr.mxu0 0.0
  %1514 = vmatpush1.msra.mxu0 0.0
  %1515 = vmatprep.subr.mxu0 0.0
  %1516 = vmatpush1.msra.mxu0 0.0
  %1517 = vmatprep.mubr.f32.mxu0 0.0
  %v1518 = vand.u32 %v30, 4294901760
  %v1519 = vsub.f32 %v30, %v1518
  %v1520 = vand.u32 %v1519, 4294901760
  %1521 = vmatmul.mubr.f32.gmra.mrb[0].mxu0 %v1520
  %v1522 = vpop.f32.mrb[0].mxu0
  %v1523 = vadd.f32 %v1441, %v1522
  %v1524 = vpop.f32.mrb[0].mxu0
  %v1525 = vadd.f32 %v1443, %v1524
  %1526 = vdwg.mxu0
  %v1527 = vand.u32 %v1133, 4294901760
  %v1528 = vsub.f32 %v1133, %v1527
  %v1529 = vand.u32 %v1528, 4294901760
  %1530 = vmatprep.subr.mxu0 %v1529
  %v1531 = vand.u32 %v1132, 4294901760
  %v1532 = vsub.f32 %v1132, %v1531
  %v1533 = vand.u32 %v1532, 4294901760
  %1534 = vmatpush1.msra.mxu0 %v1533
  %v1535 = vand.u32 %v1137, 4294901760
  %v1536 = vsub.f32 %v1137, %v1535
  %v1537 = vand.u32 %v1536, 4294901760
  %1538 = vmatprep.subr.mxu0 %v1537
  %v1539 = vand.u32 %v1136, 4294901760
  %v1540 = vsub.f32 %v1136, %v1539
  %v1541 = vand.u32 %v1540, 4294901760
  %1542 = vmatpush1.msra.mxu0 %v1541
  %v1543 = vand.u32 %v1141, 4294901760
  %v1544 = vsub.f32 %v1141, %v1543
  %v1545 = vand.u32 %v1544, 4294901760
  %1546 = vmatprep.subr.mxu0 %v1545
  %v1547 = vand.u32 %v1140, 4294901760
  %v1548 = vsub.f32 %v1140, %v1547
  %v1549 = vand.u32 %v1548, 4294901760
  %1550 = vmatpush1.msra.mxu0 %v1549
  %v1551 = vand.u32 %v1152, 4294901760
  %v1552 = vsub.f32 %v1152, %v1551
  %v1553 = vand.u32 %v1552, 4294901760
  %1554 = vmatprep.subr.mxu0 %v1553
  %v1555 = vand.u32 %v1149, 4294901760
  %v1556 = vsub.f32 %v1149, %v1555
  %v1557 = vand.u32 %v1556, 4294901760
  %1558 = vmatpush1.msra.mxu0 %v1557
  %1559 = vmatprep.subr.mxu0 0.0
  %1560 = vmatpush1.msra.mxu0 0.0
  %1561 = vmatprep.subr.mxu0 0.0
  %1562 = vmatpush1.msra.mxu0 0.0
  %1563 = vmatprep.subr.mxu0 0.0
  %1564 = vmatpush1.msra.mxu0 0.0
  %1565 = vmatprep.subr.mxu0 0.0
  %1566 = vmatpush1.msra.mxu0 0.0
  %1567 = vmatprep.subr.mxu0 0.0
  %1568 = vmatpush1.msra.mxu0 0.0
  %1569 = vmatprep.subr.mxu0 0.0
  %1570 = vmatpush1.msra.mxu0 0.0
  %1571 = vmatprep.subr.mxu0 0.0
  %1572 = vmatpush1.msra.mxu0 0.0
  %1573 = vmatprep.subr.mxu0 0.0
  %1574 = vmatpush1.msra.mxu0 0.0
  %1575 = vmatprep.subr.mxu0 0.0
  %1576 = vmatpush1.msra.mxu0 0.0
  %1577 = vmatprep.subr.mxu0 0.0
  %1578 = vmatpush1.msra.mxu0 0.0
  %1579 = vmatprep.subr.mxu0 0.0
  %1580 = vmatpush1.msra.mxu0 0.0
  %1581 = vmatprep.subr.mxu0 0.0
  %1582 = vmatpush1.msra.mxu0 0.0
  %1583 = vmatprep.subr.mxu0 0.0
  %1584 = vmatpush1.msra.mxu0 0.0
  %1585 = vmatprep.subr.mxu0 0.0
  %1586 = vmatpush1.msra.mxu0 0.0
  %1587 = vmatprep.subr.mxu0 0.0
  %1588 = vmatpush1.msra.mxu0 0.0
  %1589 = vmatprep.subr.mxu0 0.0
  %1590 = vmatpush1.msra.mxu0 0.0
  %1591 = vmatprep.subr.mxu0 0.0
  %1592 = vmatpush1.msra.mxu0 0.0
  %1593 = vmatprep.subr.mxu0 0.0
  %1594 = vmatpush1.msra.mxu0 0.0
  %1595 = vmatprep.subr.mxu0 0.0
  %1596 = vmatpush1.msra.mxu0 0.0
  %1597 = vmatprep.subr.mxu0 0.0
  %1598 = vmatpush1.msra.mxu0 0.0
  %1599 = vmatprep.subr.mxu0 0.0
  %1600 = vmatpush1.msra.mxu0 0.0
  %1601 = vmatprep.subr.mxu0 0.0
  %1602 = vmatpush1.msra.mxu0 0.0
  %1603 = vmatprep.subr.mxu0 0.0
  %1604 = vmatpush1.msra.mxu0 0.0
  %1605 = vmatprep.subr.mxu0 0.0
  %1606 = vmatpush1.msra.mxu0 0.0
  %1607 = vmatprep.subr.mxu0 0.0
  %1608 = vmatpush1.msra.mxu0 0.0
  %1609 = vmatprep.subr.mxu0 0.0
  %1610 = vmatpush1.msra.mxu0 0.0
  %1611 = vmatprep.subr.mxu0 0.0
  %1612 = vmatpush1.msra.mxu0 0.0
  %1613 = vmatprep.subr.mxu0 0.0
  %1614 = vmatpush1.msra.mxu0 0.0
  %1615 = vmatprep.mubr.f32.mxu0 0.0
  %v1616 = vand.u32 %v30, 4294901760
  %1617 = vmatmul.mubr.f32.gmra.mrb[0].mxu0 %v1616
  %v1618 = vpop.f32.mrb[0].mxu0
  %v1619 = vadd.f32 %v1523, %v1618
  %v1620 = vpop.f32.mrb[0].mxu0
  %v1621 = vadd.f32 %v1525, %v1620
  %1622 = vdwg.mxu0
  %v1623 = vand.u32 %v1133, 4294901760
  %1624 = vmatprep.subr.mxu0 %v1623
  %v1625 = vand.u32 %v1132, 4294901760
  %1626 = vmatpush1.msra.mxu0 %v1625
  %v1627 = vand.u32 %v1137, 4294901760
  %1628 = vmatprep.subr.mxu0 %v1627
  %v1629 = vand.u32 %v1136, 4294901760
  %1630 = vmatpush1.msra.mxu0 %v1629
  %v1631 = vand.u32 %v1141, 4294901760
  %1632 = vmatprep.subr.mxu0 %v1631
  %v1633 = vand.u32 %v1140, 4294901760
  %1634 = vmatpush1.msra.mxu0 %v1633
  %v1635 = vand.u32 %v1152, 4294901760
  %1636 = vmatprep.subr.mxu0 %v1635
  %v1637 = vand.u32 %v1149, 4294901760
  %1638 = vmatpush1.msra.mxu0 %v1637
  %1639 = vmatprep.subr.mxu0 0.0
  %1640 = vmatpush1.msra.mxu0 0.0
  %1641 = vmatprep.subr.mxu0 0.0
  %1642 = vmatpush1.msra.mxu0 0.0
  %1643 = vmatprep.subr.mxu0 0.0
  %1644 = vmatpush1.msra.mxu0 0.0
  %1645 = vmatprep.subr.mxu0 0.0
  %1646 = vmatpush1.msra.mxu0 0.0
  %1647 = vmatprep.subr.mxu0 0.0
  %1648 = vmatpush1.msra.mxu0 0.0
  %1649 = vmatprep.subr.mxu0 0.0
  %1650 = vmatpush1.msra.mxu0 0.0
  %1651 = vmatprep.subr.mxu0 0.0
  %1652 = vmatpush1.msra.mxu0 0.0
  %1653 = vmatprep.subr.mxu0 0.0
  %1654 = vmatpush1.msra.mxu0 0.0
  %1655 = vmatprep.subr.mxu0 0.0
  %1656 = vmatpush1.msra.mxu0 0.0
  %1657 = vmatprep.subr.mxu0 0.0
  %1658 = vmatpush1.msra.mxu0 0.0
  %1659 = vmatprep.subr.mxu0 0.0
  %1660 = vmatpush1.msra.mxu0 0.0
  %1661 = vmatprep.subr.mxu0 0.0
  %1662 = vmatpush1.msra.mxu0 0.0
  %1663 = vmatprep.subr.mxu0 0.0
  %1664 = vmatpush1.msra.mxu0 0.0
  %1665 = vmatprep.subr.mxu0 0.0
  %1666 = vmatpush1.msra.mxu0 0.0
  %1667 = vmatprep.subr.mxu0 0.0
  %1668 = vmatpush1.msra.mxu0 0.0
  %1669 = vmatprep.subr.mxu0 0.0
  %1670 = vmatpush1.msra.mxu0 0.0
  %1671 = vmatprep.subr.mxu0 0.0
  %1672 = vmatpush1.msra.mxu0 0.0
  %1673 = vmatprep.subr.mxu0 0.0
  %1674 = vmatpush1.msra.mxu0 0.0
  %1675 = vmatprep.subr.mxu0 0.0
  %1676 = vmatpush1.msra.mxu0 0.0
  %1677 = vmatprep.subr.mxu0 0.0
  %1678 = vmatpush1.msra.mxu0 0.0
  %1679 = vmatprep.subr.mxu0 0.0
  %1680 = vmatpush1.msra.mxu0 0.0
  %1681 = vmatprep.subr.mxu0 0.0
  %1682 = vmatpush1.msra.mxu0 0.0
  %1683 = vmatprep.subr.mxu0 0.0
  %1684 = vmatpush1.msra.mxu0 0.0
  %1685 = vmatprep.subr.mxu0 0.0
  %1686 = vmatpush1.msra.mxu0 0.0
  %1687 = vmatprep.subr.mxu0 0.0
  %1688 = vmatpush1.msra.mxu0 0.0
  %1689 = vmatprep.subr.mxu0 0.0
  %1690 = vmatpush1.msra.mxu0 0.0
  %1691 = vmatprep.subr.mxu0 0.0
  %1692 = vmatpush1.msra.mxu0 0.0
  %1693 = vmatprep.subr.mxu0 0.0
  %1694 = vmatpush1.msra.mxu0 0.0
  %1695 = vmatprep.mubr.f32.mxu0 0.0
  %v1696 = vand.u32 %v30, 4294901760
  %1697 = vmatmul.mubr.f32.gmra.mrb[0].mxu0 %v1696
  %v1698 = vpop.f32.mrb[0].mxu0
  %v1699 = vadd.f32 %v1619, %v1698
  %v1700 = vpop.f32.mrb[0].mxu0
  %v1701 = vadd.f32 %v1621, %v1700
  %1702 = vdwg.mxu0
  %v1703 = vand.u32 %v1135, 4294901760
  %1704 = vmatprep.subr.mxu0 %v1703
  %v1705 = vand.u32 %v1134, 4294901760
  %1706 = vmatpush1.msra.mxu0 %v1705
  %v1707 = vand.u32 %v1139, 4294901760
  %1708 = vmatprep.subr.mxu0 %v1707
  %v1709 = vand.u32 %v1138, 4294901760
  %1710 = vmatpush1.msra.mxu0 %v1709
  %v1711 = vand.u32 %v1143, 4294901760
  %1712 = vmatprep.subr.mxu0 %v1711
  %v1713 = vand.u32 %v1142, 4294901760
  %1714 = vmatpush1.msra.mxu0 %v1713
  %v1715 = vand.u32 %v1158, 4294901760
  %1716 = vmatprep.subr.mxu0 %v1715
  %v1717 = vand.u32 %v1155, 4294901760
  %1718 = vmatpush1.msra.mxu0 %v1717
  %1719 = vmatprep.subr.mxu0 0.0
  %1720 = vmatpush1.msra.mxu0 0.0
  %1721 = vmatprep.subr.mxu0 0.0
  %1722 = vmatpush1.msra.mxu0 0.0
  %1723 = vmatprep.subr.mxu0 0.0
  %1724 = vmatpush1.msra.mxu0 0.0
  %1725 = vmatprep.subr.mxu0 0.0
  %1726 = vmatpush1.msra.mxu0 0.0
  %1727 = vmatprep.subr.mxu0 0.0
  %1728 = vmatpush1.msra.mxu0 0.0
  %1729 = vmatprep.subr.mxu0 0.0
  %1730 = vmatpush1.msra.mxu0 0.0
  %1731 = vmatprep.subr.mxu0 0.0
  %1732 = vmatpush1.msra.mxu0 0.0
  %1733 = vmatprep.subr.mxu0 0.0
  %1734 = vmatpush1.msra.mxu0 0.0
  %1735 = vmatprep.subr.mxu0 0.0
  %1736 = vmatpush1.msra.mxu0 0.0
  %1737 = vmatprep.subr.mxu0 0.0
  %1738 = vmatpush1.msra.mxu0 0.0
  %1739 = vmatprep.subr.mxu0 0.0
  %1740 = vmatpush1.msra.mxu0 0.0
  %1741 = vmatprep.subr.mxu0 0.0
  %1742 = vmatpush1.msra.mxu0 0.0
  %1743 = vmatprep.subr.mxu0 0.0
  %1744 = vmatpush1.msra.mxu0 0.0
  %1745 = vmatprep.subr.mxu0 0.0
  %1746 = vmatpush1.msra.mxu0 0.0
  %1747 = vmatprep.subr.mxu0 0.0
  %1748 = vmatpush1.msra.mxu0 0.0
  %1749 = vmatprep.subr.mxu0 0.0
  %1750 = vmatpush1.msra.mxu0 0.0
  %1751 = vmatprep.subr.mxu0 0.0
  %1752 = vmatpush1.msra.mxu0 0.0
  %1753 = vmatprep.subr.mxu0 0.0
  %1754 = vmatpush1.msra.mxu0 0.0
  %1755 = vmatprep.subr.mxu0 0.0
  %1756 = vmatpush1.msra.mxu0 0.0
  %1757 = vmatprep.subr.mxu0 0.0
  %1758 = vmatpush1.msra.mxu0 0.0
  %1759 = vmatprep.subr.mxu0 0.0
  %1760 = vmatpush1.msra.mxu0 0.0
  %1761 = vmatprep.subr.mxu0 0.0
  %1762 = vmatpush1.msra.mxu0 0.0
  %1763 = vmatprep.subr.mxu0 0.0
  %1764 = vmatpush1.msra.mxu0 0.0
  %1765 = vmatprep.subr.mxu0 0.0
  %1766 = vmatpush1.msra.mxu0 0.0
  %1767 = vmatprep.subr.mxu0 0.0
  %1768 = vmatpush1.msra.mxu0 0.0
  %1769 = vmatprep.subr.mxu0 0.0
  %1770 = vmatpush1.msra.mxu0 0.0
  %1771 = vmatprep.subr.mxu0 0.0
  %1772 = vmatpush1.msra.mxu0 0.0
  %1773 = vmatprep.subr.mxu0 0.0
  %1774 = vmatpush1.msra.mxu0 0.0
  %1775 = vmatprep.mubr.f32.mxu0 0.0
  %v1776 = vand.u32 %v30, 4294901760
  %v1777 = vsub.f32 %v30, %v1776
  %v1778 = vand.u32 %v1777, 4294901760
  %v1779 = vsub.f32 %v1777, %v1778
  %v1780 = vand.u32 %v1779, 4294901760
  %1781 = vmatmul.mubr.f32.gmra.mrb[0].mxu0 %v1780
  %v1782 = vpop.f32.mrb[0].mxu0
  %v1783 = vadd.f32 0.0, %v1782
  %v1784 = vpop.f32.mrb[0].mxu0
  %v1785 = vadd.f32 0.0, %v1784
  %1786 = vdwg.mxu0
  %v1787 = vand.u32 %v1135, 4294901760
  %v1788 = vsub.f32 %v1135, %v1787
  %v1789 = vand.u32 %v1788, 4294901760
  %v1790 = vsub.f32 %v1788, %v1789
  %v1791 = vand.u32 %v1790, 4294901760
  %1792 = vmatprep.subr.mxu0 %v1791
  %v1793 = vand.u32 %v1134, 4294901760
  %v1794 = vsub.f32 %v1134, %v1793
  %v1795 = vand.u32 %v1794, 4294901760
  %v1796 = vsub.f32 %v1794, %v1795
  %v1797 = vand.u32 %v1796, 4294901760
  %1798 = vmatpush1.msra.mxu0 %v1797
  %v1799 = vand.u32 %v1139, 4294901760
  %v1800 = vsub.f32 %v1139, %v1799
  %v1801 = vand.u32 %v1800, 4294901760
  %v1802 = vsub.f32 %v1800, %v1801
  %v1803 = vand.u32 %v1802, 4294901760
  %1804 = vmatprep.subr.mxu0 %v1803
  %v1805 = vand.u32 %v1138, 4294901760
  %v1806 = vsub.f32 %v1138, %v1805
  %v1807 = vand.u32 %v1806, 4294901760
  %v1808 = vsub.f32 %v1806, %v1807
  %v1809 = vand.u32 %v1808, 4294901760
  %1810 = vmatpush1.msra.mxu0 %v1809
  %v1811 = vand.u32 %v1143, 4294901760
  %v1812 = vsub.f32 %v1143, %v1811
  %v1813 = vand.u32 %v1812, 4294901760
  %v1814 = vsub.f32 %v1812, %v1813
  %v1815 = vand.u32 %v1814, 4294901760
  %1816 = vmatprep.subr.mxu0 %v1815
  %v1817 = vand.u32 %v1142, 4294901760
  %v1818 = vsub.f32 %v1142, %v1817
  %v1819 = vand.u32 %v1818, 4294901760
  %v1820 = vsub.f32 %v1818, %v1819
  %v1821 = vand.u32 %v1820, 4294901760
  %1822 = vmatpush1.msra.mxu0 %v1821
  %v1823 = vand.u32 %v1158, 4294901760
  %v1824 = vsub.f32 %v1158, %v1823
  %v1825 = vand.u32 %v1824, 4294901760
  %v1826 = vsub.f32 %v1824, %v1825
  %v1827 = vand.u32 %v1826, 4294901760
  %1828 = vmatprep.subr.mxu0 %v1827
  %v1829 = vand.u32 %v1155, 4294901760
  %v1830 = vsub.f32 %v1155, %v1829
  %v1831 = vand.u32 %v1830, 4294901760
  %v1832 = vsub.f32 %v1830, %v1831
  %v1833 = vand.u32 %v1832, 4294901760
  %1834 = vmatpush1.msra.mxu0 %v1833
  %1835 = vmatprep.subr.mxu0 0.0
  %1836 = vmatpush1.msra.mxu0 0.0
  %1837 = vmatprep.subr.mxu0 0.0
  %1838 = vmatpush1.msra.mxu0 0.0
  %1839 = vmatprep.subr.mxu0 0.0
  %1840 = vmatpush1.msra.mxu0 0.0
  %1841 = vmatprep.subr.mxu0 0.0
  %1842 = vmatpush1.msra.mxu0 0.0
  %1843 = vmatprep.subr.mxu0 0.0
  %1844 = vmatpush1.msra.mxu0 0.0
  %1845 = vmatprep.subr.mxu0 0.0
  %1846 = vmatpush1.msra.mxu0 0.0
  %1847 = vmatprep.subr.mxu0 0.0
  %1848 = vmatpush1.msra.mxu0 0.0
  %1849 = vmatprep.subr.mxu0 0.0
  %1850 = vmatpush1.msra.mxu0 0.0
  %1851 = vmatprep.subr.mxu0 0.0
  %1852 = vmatpush1.msra.mxu0 0.0
  %1853 = vmatprep.subr.mxu0 0.0
  %1854 = vmatpush1.msra.mxu0 0.0
  %1855 = vmatprep.subr.mxu0 0.0
  %1856 = vmatpush1.msra.mxu0 0.0
  %1857 = vmatprep.subr.mxu0 0.0
  %1858 = vmatpush1.msra.mxu0 0.0
  %1859 = vmatprep.subr.mxu0 0.0
  %1860 = vmatpush1.msra.mxu0 0.0
  %1861 = vmatprep.subr.mxu0 0.0
  %1862 = vmatpush1.msra.mxu0 0.0
  %1863 = vmatprep.subr.mxu0 0.0
  %1864 = vmatpush1.msra.mxu0 0.0
  %1865 = vmatprep.subr.mxu0 0.0
  %1866 = vmatpush1.msra.mxu0 0.0
  %1867 = vmatprep.subr.mxu0 0.0
  %1868 = vmatpush1.msra.mxu0 0.0
  %1869 = vmatprep.subr.mxu0 0.0
  %1870 = vmatpush1.msra.mxu0 0.0
  %1871 = vmatprep.subr.mxu0 0.0
  %1872 = vmatpush1.msra.mxu0 0.0
  %1873 = vmatprep.subr.mxu0 0.0
  %1874 = vmatpush1.msra.mxu0 0.0
  %1875 = vmatprep.subr.mxu0 0.0
  %1876 = vmatpush1.msra.mxu0 0.0
  %1877 = vmatprep.subr.mxu0 0.0
  %1878 = vmatpush1.msra.mxu0 0.0
  %1879 = vmatprep.subr.mxu0 0.0
  %1880 = vmatpush1.msra.mxu0 0.0
  %1881 = vmatprep.subr.mxu0 0.0
  %1882 = vmatpush1.msra.mxu0 0.0
  %1883 = vmatprep.subr.mxu0 0.0
  %1884 = vmatpush1.msra.mxu0 0.0
  %1885 = vmatprep.subr.mxu0 0.0
  %1886 = vmatpush1.msra.mxu0 0.0
  %1887 = vmatprep.subr.mxu0 0.0
  %1888 = vmatpush1.msra.mxu0 0.0
  %1889 = vmatprep.subr.mxu0 0.0
  %1890 = vmatpush1.msra.mxu0 0.0
  %1891 = vmatprep.mubr.f32.mxu0 0.0
  %v1892 = vand.u32 %v30, 4294901760
  %1893 = vmatmul.mubr.f32.gmra.mrb[0].mxu0 %v1892
  %v1894 = vpop.f32.mrb[0].mxu0
  %v1895 = vadd.f32 %v1783, %v1894
  %v1896 = vpop.f32.mrb[0].mxu0
  %v1897 = vadd.f32 %v1785, %v1896
  %1898 = vdwg.mxu0
  %v1899 = vand.u32 %v1135, 4294901760
  %v1900 = vsub.f32 %v1135, %v1899
  %1901 = vmatprep.subr.mxu0 %v1900
  %v1902 = vand.u32 %v1134, 4294901760
  %v1903 = vsub.f32 %v1134, %v1902
  %1904 = vmatpush1.msra.mxu0 %v1903
  %v1905 = vand.u32 %v1139, 4294901760
  %v1906 = vsub.f32 %v1139, %v1905
  %1907 = vmatprep.subr.mxu0 %v1906
  %v1908 = vand.u32 %v1138, 4294901760
  %v1909 = vsub.f32 %v1138, %v1908
  %1910 = vmatpush1.msra.mxu0 %v1909
  %v1911 = vand.u32 %v1143, 4294901760
  %v1912 = vsub.f32 %v1143, %v1911
  %1913 = vmatprep.subr.mxu0 %v1912
  %v1914 = vand.u32 %v1142, 4294901760
  %v1915 = vsub.f32 %v1142, %v1914
  %1916 = vmatpush1.msra.mxu0 %v1915
  %v1917 = vand.u32 %v1158, 4294901760
  %v1918 = vsub.f32 %v1158, %v1917
  %1919 = vmatprep.subr.mxu0 %v1918
  %v1920 = vand.u32 %v1155, 4294901760
  %v1921 = vsub.f32 %v1155, %v1920
  %1922 = vmatpush1.msra.mxu0 %v1921
  %1923 = vmatprep.subr.mxu0 0.0
  %1924 = vmatpush1.msra.mxu0 0.0
  %1925 = vmatprep.subr.mxu0 0.0
  %1926 = vmatpush1.msra.mxu0 0.0
  %1927 = vmatprep.subr.mxu0 0.0
  %1928 = vmatpush1.msra.mxu0 0.0
  %1929 = vmatprep.subr.mxu0 0.0
  %1930 = vmatpush1.msra.mxu0 0.0
  %1931 = vmatprep.subr.mxu0 0.0
  %1932 = vmatpush1.msra.mxu0 0.0
  %1933 = vmatprep.subr.mxu0 0.0
  %1934 = vmatpush1.msra.mxu0 0.0
  %1935 = vmatprep.subr.mxu0 0.0
  %1936 = vmatpush1.msra.mxu0 0.0
  %1937 = vmatprep.subr.mxu0 0.0
  %1938 = vmatpush1.msra.mxu0 0.0
  %1939 = vmatprep.subr.mxu0 0.0
  %1940 = vmatpush1.msra.mxu0 0.0
  %1941 = vmatprep.subr.mxu0 0.0
  %1942 = vmatpush1.msra.mxu0 0.0
  %1943 = vmatprep.subr.mxu0 0.0
  %1944 = vmatpush1.msra.mxu0 0.0
  %1945 = vmatprep.subr.mxu0 0.0
  %1946 = vmatpush1.msra.mxu0 0.0
  %1947 = vmatprep.subr.mxu0 0.0
  %1948 = vmatpush1.msra.mxu0 0.0
  %1949 = vmatprep.subr.mxu0 0.0
  %1950 = vmatpush1.msra.mxu0 0.0
  %1951 = vmatprep.subr.mxu0 0.0
  %1952 = vmatpush1.msra.mxu0 0.0
  %1953 = vmatprep.subr.mxu0 0.0
  %1954 = vmatpush1.msra.mxu0 0.0
  %1955 = vmatprep.subr.mxu0 0.0
  %1956 = vmatpush1.msra.mxu0 0.0
  %1957 = vmatprep.subr.mxu0 0.0
  %1958 = vmatpush1.msra.mxu0 0.0
  %1959 = vmatprep.subr.mxu0 0.0
  %1960 = vmatpush1.msra.mxu0 0.0
  %1961 = vmatprep.subr.mxu0 0.0
  %1962 = vmatpush1.msra.mxu0 0.0
  %1963 = vmatprep.subr.mxu0 0.0
  %1964 = vmatpush1.msra.mxu0 0.0
  %1965 = vmatprep.subr.mxu0 0.0
  %1966 = vmatpush1.msra.mxu0 0.0
  %1967 = vmatprep.subr.mxu0 0.0
  %1968 = vmatpush1.msra.mxu0 0.0
  %1969 = vmatprep.subr.mxu0 0.0
  %1970 = vmatpush1.msra.mxu0 0.0
  %1971 = vmatprep.subr.mxu0 0.0
  %1972 = vmatpush1.msra.mxu0 0.0
  %1973 = vmatprep.subr.mxu0 0.0
  %1974 = vmatpush1.msra.mxu0 0.0
  %1975 = vmatprep.subr.mxu0 0.0
  %1976 = vmatpush1.msra.mxu0 0.0
  %1977 = vmatprep.subr.mxu0 0.0
  %1978 = vmatpush1.msra.mxu0 0.0
  %1979 = vmatprep.mubr.f32.mxu0 0.0
  %v1980 = vand.u32 %v30, 4294901760
  %v1981 = vsub.f32 %v30, %v1980
  %1982 = vmatmul.mubr.f32.gmra.mrb[0].mxu0 %v1981
  %v1983 = vpop.f32.mrb[0].mxu0
  %v1984 = vadd.f32 %v1895, %v1983
  %v1985 = vpop.f32.mrb[0].mxu0
  %v1986 = vadd.f32 %v1897, %v1985
  %1987 = vdwg.mxu0
  %v1988 = vand.u32 %v1135, 4294901760
  %1989 = vmatprep.subr.mxu0 %v1988
  %v1990 = vand.u32 %v1134, 4294901760
  %1991 = vmatpush1.msra.mxu0 %v1990
  %v1992 = vand.u32 %v1139, 4294901760
  %1993 = vmatprep.subr.mxu0 %v1992
  %v1994 = vand.u32 %v1138, 4294901760
  %1995 = vmatpush1.msra.mxu0 %v1994
  %v1996 = vand.u32 %v1143, 4294901760
  %1997 = vmatprep.subr.mxu0 %v1996
  %v1998 = vand.u32 %v1142, 4294901760
  %1999 = vmatpush1.msra.mxu0 %v1998
  %v2000 = vand.u32 %v1158, 4294901760
  %2001 = vmatprep.subr.mxu0 %v2000
  %v2002 = vand.u32 %v1155, 4294901760
  %2003 = vmatpush1.msra.mxu0 %v2002
  %2004 = vmatprep.subr.mxu0 0.0
  %2005 = vmatpush1.msra.mxu0 0.0
  %2006 = vmatprep.subr.mxu0 0.0
  %2007 = vmatpush1.msra.mxu0 0.0
  %2008 = vmatprep.subr.mxu0 0.0
  %2009 = vmatpush1.msra.mxu0 0.0
  %2010 = vmatprep.subr.mxu0 0.0
  %2011 = vmatpush1.msra.mxu0 0.0
  %2012 = vmatprep.subr.mxu0 0.0
  %2013 = vmatpush1.msra.mxu0 0.0
  %2014 = vmatprep.subr.mxu0 0.0
  %2015 = vmatpush1.msra.mxu0 0.0
  %2016 = vmatprep.subr.mxu0 0.0
  %2017 = vmatpush1.msra.mxu0 0.0
  %2018 = vmatprep.subr.mxu0 0.0
  %2019 = vmatpush1.msra.mxu0 0.0
  %2020 = vmatprep.subr.mxu0 0.0
  %2021 = vmatpush1.msra.mxu0 0.0
  %2022 = vmatprep.subr.mxu0 0.0
  %2023 = vmatpush1.msra.mxu0 0.0
  %2024 = vmatprep.subr.mxu0 0.0
  %2025 = vmatpush1.msra.mxu0 0.0
  %2026 = vmatprep.subr.mxu0 0.0
  %2027 = vmatpush1.msra.mxu0 0.0
  %2028 = vmatprep.subr.mxu0 0.0
  %2029 = vmatpush1.msra.mxu0 0.0
  %2030 = vmatprep.subr.mxu0 0.0
  %2031 = vmatpush1.msra.mxu0 0.0
  %2032 = vmatprep.subr.mxu0 0.0
  %2033 = vmatpush1.msra.mxu0 0.0
  %2034 = vmatprep.subr.mxu0 0.0
  %2035 = vmatpush1.msra.mxu0 0.0
  %2036 = vmatprep.subr.mxu0 0.0
  %2037 = vmatpush1.msra.mxu0 0.0
  %2038 = vmatprep.subr.mxu0 0.0
  %2039 = vmatpush1.msra.mxu0 0.0
  %2040 = vmatprep.subr.mxu0 0.0
  %2041 = vmatpush1.msra.mxu0 0.0
  %2042 = vmatprep.subr.mxu0 0.0
  %2043 = vmatpush1.msra.mxu0 0.0
  %2044 = vmatprep.subr.mxu0 0.0
  %2045 = vmatpush1.msra.mxu0 0.0
  %2046 = vmatprep.subr.mxu0 0.0
  %2047 = vmatpush1.msra.mxu0 0.0
  %2048 = vmatprep.subr.mxu0 0.0
  %2049 = vmatpush1.msra.mxu0 0.0
  %2050 = vmatprep.subr.mxu0 0.0
  %2051 = vmatpush1.msra.mxu0 0.0
  %2052 = vmatprep.subr.mxu0 0.0
  %2053 = vmatpush1.msra.mxu0 0.0
  %2054 = vmatprep.subr.mxu0 0.0
  %2055 = vmatpush1.msra.mxu0 0.0
  %2056 = vmatprep.subr.mxu0 0.0
  %2057 = vmatpush1.msra.mxu0 0.0
  %2058 = vmatprep.subr.mxu0 0.0
  %2059 = vmatpush1.msra.mxu0 0.0
  %2060 = vmatprep.mubr.f32.mxu0 0.0
  %v2061 = vand.u32 %v30, 4294901760
  %v2062 = vsub.f32 %v30, %v2061
  %v2063 = vand.u32 %v2062, 4294901760
  %2064 = vmatmul.mubr.f32.gmra.mrb[0].mxu0 %v2063
  %v2065 = vpop.f32.mrb[0].mxu0
  %v2066 = vadd.f32 %v1984, %v2065
  %v2067 = vpop.f32.mrb[0].mxu0
  %v2068 = vadd.f32 %v1986, %v2067
  %2069 = vdwg.mxu0
  %v2070 = vand.u32 %v1135, 4294901760
  %v2071 = vsub.f32 %v1135, %v2070
  %v2072 = vand.u32 %v2071, 4294901760
  %2073 = vmatprep.subr.mxu0 %v2072
  %v2074 = vand.u32 %v1134, 4294901760
  %v2075 = vsub.f32 %v1134, %v2074
  %v2076 = vand.u32 %v2075, 4294901760
  %2077 = vmatpush1.msra.mxu0 %v2076
  %v2078 = vand.u32 %v1139, 4294901760
  %v2079 = vsub.f32 %v1139, %v2078
  %v2080 = vand.u32 %v2079, 4294901760
  %2081 = vmatprep.subr.mxu0 %v2080
  %v2082 = vand.u32 %v1138, 4294901760
  %v2083 = vsub.f32 %v1138, %v2082
  %v2084 = vand.u32 %v2083, 4294901760
  %2085 = vmatpush1.msra.mxu0 %v2084
  %v2086 = vand.u32 %v1143, 4294901760
  %v2087 = vsub.f32 %v1143, %v2086
  %v2088 = vand.u32 %v2087, 4294901760
  %2089 = vmatprep.subr.mxu0 %v2088
  %v2090 = vand.u32 %v1142, 4294901760
  %v2091 = vsub.f32 %v1142, %v2090
  %v2092 = vand.u32 %v2091, 4294901760
  %2093 = vmatpush1.msra.mxu0 %v2092
  %v2094 = vand.u32 %v1158, 4294901760
  %v2095 = vsub.f32 %v1158, %v2094
  %v2096 = vand.u32 %v2095, 4294901760
  %2097 = vmatprep.subr.mxu0 %v2096
  %v2098 = vand.u32 %v1155, 4294901760
  %v2099 = vsub.f32 %v1155, %v2098
  %v2100 = vand.u32 %v2099, 4294901760
  %2101 = vmatpush1.msra.mxu0 %v2100
  %2102 = vmatprep.subr.mxu0 0.0
  %2103 = vmatpush1.msra.mxu0 0.0
  %2104 = vmatprep.subr.mxu0 0.0
  %2105 = vmatpush1.msra.mxu0 0.0
  %2106 = vmatprep.subr.mxu0 0.0
  %2107 = vmatpush1.msra.mxu0 0.0
  %2108 = vmatprep.subr.mxu0 0.0
  %2109 = vmatpush1.msra.mxu0 0.0
  %2110 = vmatprep.subr.mxu0 0.0
  %2111 = vmatpush1.msra.mxu0 0.0
  %2112 = vmatprep.subr.mxu0 0.0
  %2113 = vmatpush1.msra.mxu0 0.0
  %2114 = vmatprep.subr.mxu0 0.0
  %2115 = vmatpush1.msra.mxu0 0.0
  %2116 = vmatprep.subr.mxu0 0.0
  %2117 = vmatpush1.msra.mxu0 0.0
  %2118 = vmatprep.subr.mxu0 0.0
  %2119 = vmatpush1.msra.mxu0 0.0
  %2120 = vmatprep.subr.mxu0 0.0
  %2121 = vmatpush1.msra.mxu0 0.0
  %2122 = vmatprep.subr.mxu0 0.0
  %2123 = vmatpush1.msra.mxu0 0.0
  %2124 = vmatprep.subr.mxu0 0.0
  %2125 = vmatpush1.msra.mxu0 0.0
  %2126 = vmatprep.subr.mxu0 0.0
  %2127 = vmatpush1.msra.mxu0 0.0
  %2128 = vmatprep.subr.mxu0 0.0
  %2129 = vmatpush1.msra.mxu0 0.0
  %2130 = vmatprep.subr.mxu0 0.0
  %2131 = vmatpush1.msra.mxu0 0.0
  %2132 = vmatprep.subr.mxu0 0.0
  %2133 = vmatpush1.msra.mxu0 0.0
  %2134 = vmatprep.subr.mxu0 0.0
  %2135 = vmatpush1.msra.mxu0 0.0
  %2136 = vmatprep.subr.mxu0 0.0
  %2137 = vmatpush1.msra.mxu0 0.0
  %2138 = vmatprep.subr.mxu0 0.0
  %2139 = vmatpush1.msra.mxu0 0.0
  %2140 = vmatprep.subr.mxu0 0.0
  %2141 = vmatpush1.msra.mxu0 0.0
  %2142 = vmatprep.subr.mxu0 0.0
  %2143 = vmatpush1.msra.mxu0 0.0
  %2144 = vmatprep.subr.mxu0 0.0
  %2145 = vmatpush1.msra.mxu0 0.0
  %2146 = vmatprep.subr.mxu0 0.0
  %2147 = vmatpush1.msra.mxu0 0.0
  %2148 = vmatprep.subr.mxu0 0.0
  %2149 = vmatpush1.msra.mxu0 0.0
  %2150 = vmatprep.subr.mxu0 0.0
  %2151 = vmatpush1.msra.mxu0 0.0
  %2152 = vmatprep.subr.mxu0 0.0
  %2153 = vmatpush1.msra.mxu0 0.0
  %2154 = vmatprep.subr.mxu0 0.0
  %2155 = vmatpush1.msra.mxu0 0.0
  %2156 = vmatprep.subr.mxu0 0.0
  %2157 = vmatpush1.msra.mxu0 0.0
  %2158 = vmatprep.mubr.f32.mxu0 0.0
  %v2159 = vand.u32 %v30, 4294901760
  %2160 = vmatmul.mubr.f32.gmra.mrb[0].mxu0 %v2159
  %v2161 = vpop.f32.mrb[0].mxu0
  %v2162 = vadd.f32 %v2066, %v2161
  %v2163 = vpop.f32.mrb[0].mxu0
  %v2164 = vadd.f32 %v2068, %v2163
  %2165 = vdwg.mxu0
  %v2166 = vand.u32 %v1135, 4294901760
  %2167 = vmatprep.subr.mxu0 %v2166
  %v2168 = vand.u32 %v1134, 4294901760
  %2169 = vmatpush1.msra.mxu0 %v2168
  %v2170 = vand.u32 %v1139, 4294901760
  %2171 = vmatprep.subr.mxu0 %v2170
  %v2172 = vand.u32 %v1138, 4294901760
  %2173 = vmatpush1.msra.mxu0 %v2172
  %v2174 = vand.u32 %v1143, 4294901760
  %2175 = vmatprep.subr.mxu0 %v2174
  %v2176 = vand.u32 %v1142, 4294901760
  %2177 = vmatpush1.msra.mxu0 %v2176
  %v2178 = vand.u32 %v1158, 4294901760
  %2179 = vmatprep.subr.mxu0 %v2178
  %v2180 = vand.u32 %v1155, 4294901760
  %2181 = vmatpush1.msra.mxu0 %v2180
  %2182 = vmatprep.subr.mxu0 0.0
  %2183 = vmatpush1.msra.mxu0 0.0
  %2184 = vmatprep.subr.mxu0 0.0
  %2185 = vmatpush1.msra.mxu0 0.0
  %2186 = vmatprep.subr.mxu0 0.0
  %2187 = vmatpush1.msra.mxu0 0.0
  %2188 = vmatprep.subr.mxu0 0.0
  %2189 = vmatpush1.msra.mxu0 0.0
  %2190 = vmatprep.subr.mxu0 0.0
  %2191 = vmatpush1.msra.mxu0 0.0
  %2192 = vmatprep.subr.mxu0 0.0
  %2193 = vmatpush1.msra.mxu0 0.0
  %2194 = vmatprep.subr.mxu0 0.0
  %2195 = vmatpush1.msra.mxu0 0.0
  %2196 = vmatprep.subr.mxu0 0.0
  %2197 = vmatpush1.msra.mxu0 0.0
  %2198 = vmatprep.subr.mxu0 0.0
  %2199 = vmatpush1.msra.mxu0 0.0
  %2200 = vmatprep.subr.mxu0 0.0
  %2201 = vmatpush1.msra.mxu0 0.0
  %2202 = vmatprep.subr.mxu0 0.0
  %2203 = vmatpush1.msra.mxu0 0.0
  %2204 = vmatprep.subr.mxu0 0.0
  %2205 = vmatpush1.msra.mxu0 0.0
  %2206 = vmatprep.subr.mxu0 0.0
  %2207 = vmatpush1.msra.mxu0 0.0
  %2208 = vmatprep.subr.mxu0 0.0
  %2209 = vmatpush1.msra.mxu0 0.0
  %2210 = vmatprep.subr.mxu0 0.0
  %2211 = vmatpush1.msra.mxu0 0.0
  %2212 = vmatprep.subr.mxu0 0.0
  %2213 = vmatpush1.msra.mxu0 0.0
  %2214 = vmatprep.subr.mxu0 0.0
  %2215 = vmatpush1.msra.mxu0 0.0
  %2216 = vmatprep.subr.mxu0 0.0
  %2217 = vmatpush1.msra.mxu0 0.0
  %2218 = vmatprep.subr.mxu0 0.0
  %2219 = vmatpush1.msra.mxu0 0.0
  %2220 = vmatprep.subr.mxu0 0.0
  %2221 = vmatpush1.msra.mxu0 0.0
  %2222 = vmatprep.subr.mxu0 0.0
  %2223 = vmatpush1.msra.mxu0 0.0
  %2224 = vmatprep.subr.mxu0 0.0
  %2225 = vmatpush1.msra.mxu0 0.0
  %2226 = vmatprep.subr.mxu0 0.0
  %2227 = vmatpush1.msra.mxu0 0.0
  %2228 = vmatprep.subr.mxu0 0.0
  %2229 = vmatpush1.msra.mxu0 0.0
  %2230 = vmatprep.subr.mxu0 0.0
  %2231 = vmatpush1.msra.mxu0 0.0
  %2232 = vmatprep.subr.mxu0 0.0
  %2233 = vmatpush1.msra.mxu0 0.0
  %2234 = vmatprep.subr.mxu0 0.0
  %2235 = vmatpush1.msra.mxu0 0.0
  %2236 = vmatprep.subr.mxu0 0.0
  %2237 = vmatpush1.msra.mxu0 0.0
  %2238 = vmatprep.mubr.f32.mxu0 0.0
  %v2239 = vand.u32 %v30, 4294901760
  %2240 = vmatmul.mubr.f32.gmra.mrb[0].mxu0 %v2239
  %v2241 = vpop.f32.mrb[0].mxu0
  %v2242 = vadd.f32 %v2162, %v2241
  %v2243 = vpop.f32.mrb[0].mxu0
  %v2244 = vadd.f32 %v2164, %v2243
  %2245 = vdwg.mxu0
  %v2246 = vmax.f32 %v584, %v1699
  %v2247 = vmax.f32 %v586, %v1701
  %v2248 = vmax.f32 %v1127, %v2242
  %v2249 = vmax.f32 %v1129, %v2244
  %s2250 = scalar_lea.vmem %s0, 256
  %v2251 = vld [vmem:[%s2250] sm:$0xff]
  %v2252 = vld [vmem:[%s2250 + $0x8] sm:$0xff]
  %v2253 = vld [vmem:[%s2250 + $0x10] sm:$0xff]
  %v2254 = vld [vmem:[%s2250 + $0x18] sm:$0xff]
  %v2255 = vld [vmem:[%s2250 + $0x20] sm:$0xff]
  %v2256 = vld [vmem:[%s2250 + $0x28] sm:$0xff]
  %v2257 = vld [vmem:[%s2250 + $0x30] sm:$0xff]
  %v2258 = vld [vmem:[%s2250 + $0x38] sm:$0xff]
  %v2259 = vld [vmem:[%s2250 + $0x40] sm:$0xff]
  %v2260 = vld [vmem:[%s2250 + $0x48] sm:$0xff]
  %v2261 = vld [vmem:[%s2250 + $0x50] sm:$0xff]
  %v2262 = vld [vmem:[%s2250 + $0x58] sm:$0xff]
  %v2263 = vld [vmem:[%s2250 + $0x60] sm:$0x3]
  %v2264 = vld [vmem:[%s2250 + $0x68] sm:$0x3]
  %v2265 = vld [vmem:[%s2250 + $0x70] sm:$0x3]
  %v2266 = vld [vmem:[%s2250 + $0x78] sm:$0x3]
  %v2268 = vsel %vm32, %v2263, 0
  %v2271 = vsel %vm32, %v2264, 0
  %v2274 = vsel %vm32, %v2265, 0
  %v2277 = vsel %vm32, %v2266, 0
  %v2279 = vand.u32 %v2252, 4294901760
  %2280 = vmatprep.subr.mxu0 %v2279
  %v2281 = vand.u32 %v2251, 4294901760
  %2282 = vmatpush1.msra.mxu0 %v2281
  %v2283 = vand.u32 %v2256, 4294901760
  %2284 = vmatprep.subr.mxu0 %v2283
  %v2285 = vand.u32 %v2255, 4294901760
  %2286 = vmatpush1.msra.mxu0 %v2285
  %v2287 = vand.u32 %v2260, 4294901760
  %2288 = vmatprep.subr.mxu0 %v2287
  %v2289 = vand.u32 %v2259, 4294901760
  %2290 = vmatpush1.msra.mxu0 %v2289
  %v2291 = vand.u32 %v2271, 4294901760
  %2292 = vmatprep.subr.mxu0 %v2291
  %v2293 = vand.u32 %v2268, 4294901760
  %2294 = vmatpush1.msra.mxu0 %v2293
  %2295 = vmatprep.subr.mxu0 0.0
  %2296 = vmatpush1.msra.mxu0 0.0
  %2297 = vmatprep.subr.mxu0 0.0
  %2298 = vmatpush1.msra.mxu0 0.0
  %2299 = vmatprep.subr.mxu0 0.0
  %2300 = vmatpush1.msra.mxu0 0.0
  %2301 = vmatprep.subr.mxu0 0.0
  %2302 = vmatpush1.msra.mxu0 0.0
  %2303 = vmatprep.subr.mxu0 0.0
  %2304 = vmatpush1.msra.mxu0 0.0
  %2305 = vmatprep.subr.mxu0 0.0
  %2306 = vmatpush1.msra.mxu0 0.0
  %2307 = vmatprep.subr.mxu0 0.0
  %2308 = vmatpush1.msra.mxu0 0.0
  %2309 = vmatprep.subr.mxu0 0.0
  %2310 = vmatpush1.msra.mxu0 0.0
  %2311 = vmatprep.subr.mxu0 0.0
  %2312 = vmatpush1.msra.mxu0 0.0
  %2313 = vmatprep.subr.mxu0 0.0
  %2314 = vmatpush1.msra.mxu0 0.0
  %2315 = vmatprep.subr.mxu0 0.0
  %2316 = vmatpush1.msra.mxu0 0.0
  %2317 = vmatprep.subr.mxu0 0.0
  %2318 = vmatpush1.msra.mxu0 0.0
  %2319 = vmatprep.subr.mxu0 0.0
  %2320 = vmatpush1.msra.mxu0 0.0
  %2321 = vmatprep.subr.mxu0 0.0
  %2322 = vmatpush1.msra.mxu0 0.0
  %2323 = vmatprep.subr.mxu0 0.0
  %2324 = vmatpush1.msra.mxu0 0.0
  %2325 = vmatprep.subr.mxu0 0.0
  %2326 = vmatpush1.msra.mxu0 0.0
  %2327 = vmatprep.subr.mxu0 0.0
  %2328 = vmatpush1.msra.mxu0 0.0
  %2329 = vmatprep.subr.mxu0 0.0
  %2330 = vmatpush1.msra.mxu0 0.0
  %2331 = vmatprep.subr.mxu0 0.0
  %2332 = vmatpush1.msra.mxu0 0.0
  %2333 = vmatprep.subr.mxu0 0.0
  %2334 = vmatpush1.msra.mxu0 0.0
  %2335 = vmatprep.subr.mxu0 0.0
  %2336 = vmatpush1.msra.mxu0 0.0
  %2337 = vmatprep.subr.mxu0 0.0
  %2338 = vmatpush1.msra.mxu0 0.0
  %2339 = vmatprep.subr.mxu0 0.0
  %2340 = vmatpush1.msra.mxu0 0.0
  %2341 = vmatprep.subr.mxu0 0.0
  %2342 = vmatpush1.msra.mxu0 0.0
  %2343 = vmatprep.subr.mxu0 0.0
  %2344 = vmatpush1.msra.mxu0 0.0
  %2345 = vmatprep.subr.mxu0 0.0
  %2346 = vmatpush1.msra.mxu0 0.0
  %2347 = vmatprep.subr.mxu0 0.0
  %2348 = vmatpush1.msra.mxu0 0.0
  %2349 = vmatprep.subr.mxu0 0.0
  %2350 = vmatpush1.msra.mxu0 0.0
  %2351 = vmatprep.mubr.f32.mxu0 0.0
  %v2352 = vand.u32 %v30, 4294901760
  %v2353 = vsub.f32 %v30, %v2352
  %v2354 = vand.u32 %v2353, 4294901760
  %v2355 = vsub.f32 %v2353, %v2354
  %v2356 = vand.u32 %v2355, 4294901760
  %2357 = vmatmul.mubr.f32.gmra.mrb[0].mxu0 %v2356
  %v2358 = vpop.f32.mrb[0].mxu0
  %v2359 = vadd.f32 0.0, %v2358
  %v2360 = vpop.f32.mrb[0].mxu0
  %v2361 = vadd.f32 0.0, %v2360
  %2362 = vdwg.mxu0
  %v2363 = vand.u32 %v2252, 4294901760
  %v2364 = vsub.f32 %v2252, %v2363
  %v2365 = vand.u32 %v2364, 4294901760
  %v2366 = vsub.f32 %v2364, %v2365
  %v2367 = vand.u32 %v2366, 4294901760
  %2368 = vmatprep.subr.mxu0 %v2367
  %v2369 = vand.u32 %v2251, 4294901760
  %v2370 = vsub.f32 %v2251, %v2369
  %v2371 = vand.u32 %v2370, 4294901760
  %v2372 = vsub.f32 %v2370, %v2371
  %v2373 = vand.u32 %v2372, 4294901760
  %2374 = vmatpush1.msra.mxu0 %v2373
  %v2375 = vand.u32 %v2256, 4294901760
  %v2376 = vsub.f32 %v2256, %v2375
  %v2377 = vand.u32 %v2376, 4294901760
  %v2378 = vsub.f32 %v2376, %v2377
  %v2379 = vand.u32 %v2378, 4294901760
  %2380 = vmatprep.subr.mxu0 %v2379
  %v2381 = vand.u32 %v2255, 4294901760
  %v2382 = vsub.f32 %v2255, %v2381
  %v2383 = vand.u32 %v2382, 4294901760
  %v2384 = vsub.f32 %v2382, %v2383
  %v2385 = vand.u32 %v2384, 4294901760
  %2386 = vmatpush1.msra.mxu0 %v2385
  %v2387 = vand.u32 %v2260, 4294901760
  %v2388 = vsub.f32 %v2260, %v2387
  %v2389 = vand.u32 %v2388, 4294901760
  %v2390 = vsub.f32 %v2388, %v2389
  %v2391 = vand.u32 %v2390, 4294901760
  %2392 = vmatprep.subr.mxu0 %v2391
  %v2393 = vand.u32 %v2259, 4294901760
  %v2394 = vsub.f32 %v2259, %v2393
  %v2395 = vand.u32 %v2394, 4294901760
  %v2396 = vsub.f32 %v2394, %v2395
  %v2397 = vand.u32 %v2396, 4294901760
  %2398 = vmatpush1.msra.mxu0 %v2397
  %v2399 = vand.u32 %v2271, 4294901760
  %v2400 = vsub.f32 %v2271, %v2399
  %v2401 = vand.u32 %v2400, 4294901760
  %v2402 = vsub.f32 %v2400, %v2401
  %v2403 = vand.u32 %v2402, 4294901760
  %2404 = vmatprep.subr.mxu0 %v2403
  %v2405 = vand.u32 %v2268, 4294901760
  %v2406 = vsub.f32 %v2268, %v2405
  %v2407 = vand.u32 %v2406, 4294901760
  %v2408 = vsub.f32 %v2406, %v2407
  %v2409 = vand.u32 %v2408, 4294901760
  %2410 = vmatpush1.msra.mxu0 %v2409
  %2411 = vmatprep.subr.mxu0 0.0
  %2412 = vmatpush1.msra.mxu0 0.0
  %2413 = vmatprep.subr.mxu0 0.0
  %2414 = vmatpush1.msra.mxu0 0.0
  %2415 = vmatprep.subr.mxu0 0.0
  %2416 = vmatpush1.msra.mxu0 0.0
  %2417 = vmatprep.subr.mxu0 0.0
  %2418 = vmatpush1.msra.mxu0 0.0
  %2419 = vmatprep.subr.mxu0 0.0
  %2420 = vmatpush1.msra.mxu0 0.0
  %2421 = vmatprep.subr.mxu0 0.0
  %2422 = vmatpush1.msra.mxu0 0.0
  %2423 = vmatprep.subr.mxu0 0.0
  %2424 = vmatpush1.msra.mxu0 0.0
  %2425 = vmatprep.subr.mxu0 0.0
  %2426 = vmatpush1.msra.mxu0 0.0
  %2427 = vmatprep.subr.mxu0 0.0
  %2428 = vmatpush1.msra.mxu0 0.0
  %2429 = vmatprep.subr.mxu0 0.0
  %2430 = vmatpush1.msra.mxu0 0.0
  %2431 = vmatprep.subr.mxu0 0.0
  %2432 = vmatpush1.msra.mxu0 0.0
  %2433 = vmatprep.subr.mxu0 0.0
  %2434 = vmatpush1.msra.mxu0 0.0
  %2435 = vmatprep.subr.mxu0 0.0
  %2436 = vmatpush1.msra.mxu0 0.0
  %2437 = vmatprep.subr.mxu0 0.0
  %2438 = vmatpush1.msra.mxu0 0.0
  %2439 = vmatprep.subr.mxu0 0.0
  %2440 = vmatpush1.msra.mxu0 0.0
  %2441 = vmatprep.subr.mxu0 0.0
  %2442 = vmatpush1.msra.mxu0 0.0
  %2443 = vmatprep.subr.mxu0 0.0
  %2444 = vmatpush1.msra.mxu0 0.0
  %2445 = vmatprep.subr.mxu0 0.0
  %2446 = vmatpush1.msra.mxu0 0.0
  %2447 = vmatprep.subr.mxu0 0.0
  %2448 = vmatpush1.msra.mxu0 0.0
  %2449 = vmatprep.subr.mxu0 0.0
  %2450 = vmatpush1.msra.mxu0 0.0
  %2451 = vmatprep.subr.mxu0 0.0
  %2452 = vmatpush1.msra.mxu0 0.0
  %2453 = vmatprep.subr.mxu0 0.0
  %2454 = vmatpush1.msra.mxu0 0.0
  %2455 = vmatprep.subr.mxu0 0.0
  %2456 = vmatpush1.msra.mxu0 0.0
  %2457 = vmatprep.subr.mxu0 0.0
  %2458 = vmatpush1.msra.mxu0 0.0
  %2459 = vmatprep.subr.mxu0 0.0
  %2460 = vmatpush1.msra.mxu0 0.0
  %2461 = vmatprep.subr.mxu0 0.0
  %2462 = vmatpush1.msra.mxu0 0.0
  %2463 = vmatprep.subr.mxu0 0.0
  %2464 = vmatpush1.msra.mxu0 0.0
  %2465 = vmatprep.subr.mxu0 0.0
  %2466 = vmatpush1.msra.mxu0 0.0
  %2467 = vmatprep.mubr.f32.mxu0 0.0
  %v2468 = vand.u32 %v30, 4294901760
  %2469 = vmatmul.mubr.f32.gmra.mrb[0].mxu0 %v2468
  %v2470 = vpop.f32.mrb[0].mxu0
  %v2471 = vadd.f32 %v2359, %v2470
  %v2472 = vpop.f32.mrb[0].mxu0
  %v2473 = vadd.f32 %v2361, %v2472
  %2474 = vdwg.mxu0
  %v2475 = vand.u32 %v2252, 4294901760
  %v2476 = vsub.f32 %v2252, %v2475
  %2477 = vmatprep.subr.mxu0 %v2476
  %v2478 = vand.u32 %v2251, 4294901760
  %v2479 = vsub.f32 %v2251, %v2478
  %2480 = vmatpush1.msra.mxu0 %v2479
  %v2481 = vand.u32 %v2256, 4294901760
  %v2482 = vsub.f32 %v2256, %v2481
  %2483 = vmatprep.subr.mxu0 %v2482
  %v2484 = vand.u32 %v2255, 4294901760
  %v2485 = vsub.f32 %v2255, %v2484
  %2486 = vmatpush1.msra.mxu0 %v2485
  %v2487 = vand.u32 %v2260, 4294901760
  %v2488 = vsub.f32 %v2260, %v2487
  %2489 = vmatprep.subr.mxu0 %v2488
  %v2490 = vand.u32 %v2259, 4294901760
  %v2491 = vsub.f32 %v2259, %v2490
  %2492 = vmatpush1.msra.mxu0 %v2491
  %v2493 = vand.u32 %v2271, 4294901760
  %v2494 = vsub.f32 %v2271, %v2493
  %2495 = vmatprep.subr.mxu0 %v2494
  %v2496 = vand.u32 %v2268, 4294901760
  %v2497 = vsub.f32 %v2268, %v2496
  %2498 = vmatpush1.msra.mxu0 %v2497
  %2499 = vmatprep.subr.mxu0 0.0
  %2500 = vmatpush1.msra.mxu0 0.0
  %2501 = vmatprep.subr.mxu0 0.0
  %2502 = vmatpush1.msra.mxu0 0.0
  %2503 = vmatprep.subr.mxu0 0.0
  %2504 = vmatpush1.msra.mxu0 0.0
  %2505 = vmatprep.subr.mxu0 0.0
  %2506 = vmatpush1.msra.mxu0 0.0
  %2507 = vmatprep.subr.mxu0 0.0
  %2508 = vmatpush1.msra.mxu0 0.0
  %2509 = vmatprep.subr.mxu0 0.0
  %2510 = vmatpush1.msra.mxu0 0.0
  %2511 = vmatprep.subr.mxu0 0.0
  %2512 = vmatpush1.msra.mxu0 0.0
  %2513 = vmatprep.subr.mxu0 0.0
  %2514 = vmatpush1.msra.mxu0 0.0
  %2515 = vmatprep.subr.mxu0 0.0
  %2516 = vmatpush1.msra.mxu0 0.0
  %2517 = vmatprep.subr.mxu0 0.0
  %2518 = vmatpush1.msra.mxu0 0.0
  %2519 = vmatprep.subr.mxu0 0.0
  %2520 = vmatpush1.msra.mxu0 0.0
  %2521 = vmatprep.subr.mxu0 0.0
  %2522 = vmatpush1.msra.mxu0 0.0
  %2523 = vmatprep.subr.mxu0 0.0
  %2524 = vmatpush1.msra.mxu0 0.0
  %2525 = vmatprep.subr.mxu0 0.0
  %2526 = vmatpush1.msra.mxu0 0.0
  %2527 = vmatprep.subr.mxu0 0.0
  %2528 = vmatpush1.msra.mxu0 0.0
  %2529 = vmatprep.subr.mxu0 0.0
  %2530 = vmatpush1.msra.mxu0 0.0
  %2531 = vmatprep.subr.mxu0 0.0
  %2532 = vmatpush1.msra.mxu0 0.0
  %2533 = vmatprep.subr.mxu0 0.0
  %2534 = vmatpush1.msra.mxu0 0.0
  %2535 = vmatprep.subr.mxu0 0.0
  %2536 = vmatpush1.msra.mxu0 0.0
  %2537 = vmatprep.subr.mxu0 0.0
  %2538 = vmatpush1.msra.mxu0 0.0
  %2539 = vmatprep.subr.mxu0 0.0
  %2540 = vmatpush1.msra.mxu0 0.0
  %2541 = vmatprep.subr.mxu0 0.0
  %2542 = vmatpush1.msra.mxu0 0.0
  %2543 = vmatprep.subr.mxu0 0.0
  %2544 = vmatpush1.msra.mxu0 0.0
  %2545 = vmatprep.subr.mxu0 0.0
  %2546 = vmatpush1.msra.mxu0 0.0
  %2547 = vmatprep.subr.mxu0 0.0
  %2548 = vmatpush1.msra.mxu0 0.0
  %2549 = vmatprep.subr.mxu0 0.0
  %2550 = vmatpush1.msra.mxu0 0.0
  %2551 = vmatprep.subr.mxu0 0.0
  %2552 = vmatpush1.msra.mxu0 0.0
  %2553 = vmatprep.subr.mxu0 0.0
  %2554 = vmatpush1.msra.mxu0 0.0
  %2555 = vmatprep.mubr.f32.mxu0 0.0
  %v2556 = vand.u32 %v30, 4294901760
  %v2557 = vsub.f32 %v30, %v2556
  %2558 = vmatmul.mubr.f32.gmra.mrb[0].mxu0 %v2557
  %v2559 = vpop.f32.mrb[0].mxu0
  %v2560 = vadd.f32 %v2471, %v2559
  %v2561 = vpop.f32.mrb[0].mxu0
  %v2562 = vadd.f32 %v2473, %v2561
  %2563 = vdwg.mxu0
  %v2564 = vand.u32 %v2252, 4294901760
  %2565 = vmatprep.subr.mxu0 %v2564
  %v2566 = vand.u32 %v2251, 4294901760
  %2567 = vmatpush1.msra.mxu0 %v2566
  %v2568 = vand.u32 %v2256, 4294901760
  %2569 = vmatprep.subr.mxu0 %v2568
  %v2570 = vand.u32 %v2255, 4294901760
  %2571 = vmatpush1.msra.mxu0 %v2570
  %v2572 = vand.u32 %v2260, 4294901760
  %2573 = vmatprep.subr.mxu0 %v2572
  %v2574 = vand.u32 %v2259, 4294901760
  %2575 = vmatpush1.msra.mxu0 %v2574
  %v2576 = vand.u32 %v2271, 4294901760
  %2577 = vmatprep.subr.mxu0 %v2576
  %v2578 = vand.u32 %v2268, 4294901760
  %2579 = vmatpush1.msra.mxu0 %v2578
  %2580 = vmatprep.subr.mxu0 0.0
  %2581 = vmatpush1.msra.mxu0 0.0
  %2582 = vmatprep.subr.mxu0 0.0
  %2583 = vmatpush1.msra.mxu0 0.0
  %2584 = vmatprep.subr.mxu0 0.0
  %2585 = vmatpush1.msra.mxu0 0.0
  %2586 = vmatprep.subr.mxu0 0.0
  %2587 = vmatpush1.msra.mxu0 0.0
  %2588 = vmatprep.subr.mxu0 0.0
  %2589 = vmatpush1.msra.mxu0 0.0
  %2590 = vmatprep.subr.mxu0 0.0
  %2591 = vmatpush1.msra.mxu0 0.0
  %2592 = vmatprep.subr.mxu0 0.0
  %2593 = vmatpush1.msra.mxu0 0.0
  %2594 = vmatprep.subr.mxu0 0.0
  %2595 = vmatpush1.msra.mxu0 0.0
  %2596 = vmatprep.subr.mxu0 0.0
  %2597 = vmatpush1.msra.mxu0 0.0
  %2598 = vmatprep.subr.mxu0 0.0
  %2599 = vmatpush1.msra.mxu0 0.0
  %2600 = vmatprep.subr.mxu0 0.0
  %2601 = vmatpush1.msra.mxu0 0.0
  %2602 = vmatprep.subr.mxu0 0.0
  %2603 = vmatpush1.msra.mxu0 0.0
  %2604 = vmatprep.subr.mxu0 0.0
  %2605 = vmatpush1.msra.mxu0 0.0
  %2606 = vmatprep.subr.mxu0 0.0
  %2607 = vmatpush1.msra.mxu0 0.0
  %2608 = vmatprep.subr.mxu0 0.0
  %2609 = vmatpush1.msra.mxu0 0.0
  %2610 = vmatprep.subr.mxu0 0.0
  %2611 = vmatpush1.msra.mxu0 0.0
  %2612 = vmatprep.subr.mxu0 0.0
  %2613 = vmatpush1.msra.mxu0 0.0
  %2614 = vmatprep.subr.mxu0 0.0
  %2615 = vmatpush1.msra.mxu0 0.0
  %2616 = vmatprep.subr.mxu0 0.0
  %2617 = vmatpush1.msra.mxu0 0.0
  %2618 = vmatprep.subr.mxu0 0.0
  %2619 = vmatpush1.msra.mxu0 0.0
  %2620 = vmatprep.subr.mxu0 0.0
  %2621 = vmatpush1.msra.mxu0 0.0
  %2622 = vmatprep.subr.mxu0 0.0
  %2623 = vmatpush1.msra.mxu0 0.0
  %2624 = vmatprep.subr.mxu0 0.0
  %2625 = vmatpush1.msra.mxu0 0.0
  %2626 = vmatprep.subr.mxu0 0.0
  %2627 = vmatpush1.msra.mxu0 0.0
  %2628 = vmatprep.subr.mxu0 0.0
  %2629 = vmatpush1.msra.mxu0 0.0
  %2630 = vmatprep.subr.mxu0 0.0
  %2631 = vmatpush1.msra.mxu0 0.0
  %2632 = vmatprep.subr.mxu0 0.0
  %2633 = vmatpush1.msra.mxu0 0.0
  %2634 = vmatprep.subr.mxu0 0.0
  %2635 = vmatpush1.msra.mxu0 0.0
  %2636 = vmatprep.mubr.f32.mxu0 0.0
  %v2637 = vand.u32 %v30, 4294901760
  %v2638 = vsub.f32 %v30, %v2637
  %v2639 = vand.u32 %v2638, 4294901760
  %2640 = vmatmul.mubr.f32.gmra.mrb[0].mxu0 %v2639
  %v2641 = vpop.f32.mrb[0].mxu0
  %v2642 = vadd.f32 %v2560, %v2641
  %v2643 = vpop.f32.mrb[0].mxu0
  %v2644 = vadd.f32 %v2562, %v2643
  %2645 = vdwg.mxu0
  %v2646 = vand.u32 %v2252, 4294901760
  %v2647 = vsub.f32 %v2252, %v2646
  %v2648 = vand.u32 %v2647, 4294901760
  %2649 = vmatprep.subr.mxu0 %v2648
  %v2650 = vand.u32 %v2251, 4294901760
  %v2651 = vsub.f32 %v2251, %v2650
  %v2652 = vand.u32 %v2651, 4294901760
  %2653 = vmatpush1.msra.mxu0 %v2652
  %v2654 = vand.u32 %v2256, 4294901760
  %v2655 = vsub.f32 %v2256, %v2654
  %v2656 = vand.u32 %v2655, 4294901760
  %2657 = vmatprep.subr.mxu0 %v2656
  %v2658 = vand.u32 %v2255, 4294901760
  %v2659 = vsub.f32 %v2255, %v2658
  %v2660 = vand.u32 %v2659, 4294901760
  %2661 = vmatpush1.msra.mxu0 %v2660
  %v2662 = vand.u32 %v2260, 4294901760
  %v2663 = vsub.f32 %v2260, %v2662
  %v2664 = vand.u32 %v2663, 4294901760
  %2665 = vmatprep.subr.mxu0 %v2664
  %v2666 = vand.u32 %v2259, 4294901760
  %v2667 = vsub.f32 %v2259, %v2666
  %v2668 = vand.u32 %v2667, 4294901760
  %2669 = vmatpush1.msra.mxu0 %v2668
  %v2670 = vand.u32 %v2271, 4294901760
  %v2671 = vsub.f32 %v2271, %v2670
  %v2672 = vand.u32 %v2671, 4294901760
  %2673 = vmatprep.subr.mxu0 %v2672
  %v2674 = vand.u32 %v2268, 4294901760
  %v2675 = vsub.f32 %v2268, %v2674
  %v2676 = vand.u32 %v2675, 4294901760
  %2677 = vmatpush1.msra.mxu0 %v2676
  %2678 = vmatprep.subr.mxu0 0.0
  %2679 = vmatpush1.msra.mxu0 0.0
  %2680 = vmatprep.subr.mxu0 0.0
  %2681 = vmatpush1.msra.mxu0 0.0
  %2682 = vmatprep.subr.mxu0 0.0
  %2683 = vmatpush1.msra.mxu0 0.0
  %2684 = vmatprep.subr.mxu0 0.0
  %2685 = vmatpush1.msra.mxu0 0.0
  %2686 = vmatprep.subr.mxu0 0.0
  %2687 = vmatpush1.msra.mxu0 0.0
  %2688 = vmatprep.subr.mxu0 0.0
  %2689 = vmatpush1.msra.mxu0 0.0
  %2690 = vmatprep.subr.mxu0 0.0
  %2691 = vmatpush1.msra.mxu0 0.0
  %2692 = vmatprep.subr.mxu0 0.0
  %2693 = vmatpush1.msra.mxu0 0.0
  %2694 = vmatprep.subr.mxu0 0.0
  %2695 = vmatpush1.msra.mxu0 0.0
  %2696 = vmatprep.subr.mxu0 0.0
  %2697 = vmatpush1.msra.mxu0 0.0
  %2698 = vmatprep.subr.mxu0 0.0
  %2699 = vmatpush1.msra.mxu0 0.0
  %2700 = vmatprep.subr.mxu0 0.0
  %2701 = vmatpush1.msra.mxu0 0.0
  %2702 = vmatprep.subr.mxu0 0.0
  %2703 = vmatpush1.msra.mxu0 0.0
  %2704 = vmatprep.subr.mxu0 0.0
  %2705 = vmatpush1.msra.mxu0 0.0
  %2706 = vmatprep.subr.mxu0 0.0
  %2707 = vmatpush1.msra.mxu0 0.0
  %2708 = vmatprep.subr.mxu0 0.0
  %2709 = vmatpush1.msra.mxu0 0.0
  %2710 = vmatprep.subr.mxu0 0.0
  %2711 = vmatpush1.msra.mxu0 0.0
  %2712 = vmatprep.subr.mxu0 0.0
  %2713 = vmatpush1.msra.mxu0 0.0
  %2714 = vmatprep.subr.mxu0 0.0
  %2715 = vmatpush1.msra.mxu0 0.0
  %2716 = vmatprep.subr.mxu0 0.0
  %2717 = vmatpush1.msra.mxu0 0.0
  %2718 = vmatprep.subr.mxu0 0.0
  %2719 = vmatpush1.msra.mxu0 0.0
  %2720 = vmatprep.subr.mxu0 0.0
  %2721 = vmatpush1.msra.mxu0 0.0
  %2722 = vmatprep.subr.mxu0 0.0
  %2723 = vmatpush1.msra.mxu0 0.0
  %2724 = vmatprep.subr.mxu0 0.0
  %2725 = vmatpush1.msra.mxu0 0.0
  %2726 = vmatprep.subr.mxu0 0.0
  %2727 = vmatpush1.msra.mxu0 0.0
  %2728 = vmatprep.subr.mxu0 0.0
  %2729 = vmatpush1.msra.mxu0 0.0
  %2730 = vmatprep.subr.mxu0 0.0
  %2731 = vmatpush1.msra.mxu0 0.0
  %2732 = vmatprep.subr.mxu0 0.0
  %2733 = vmatpush1.msra.mxu0 0.0
  %2734 = vmatprep.mubr.f32.mxu0 0.0
  %v2735 = vand.u32 %v30, 4294901760
  %2736 = vmatmul.mubr.f32.gmra.mrb[0].mxu0 %v2735
  %v2737 = vpop.f32.mrb[0].mxu0
  %v2738 = vadd.f32 %v2642, %v2737
  %v2739 = vpop.f32.mrb[0].mxu0
  %v2740 = vadd.f32 %v2644, %v2739
  %2741 = vdwg.mxu0
  %v2742 = vand.u32 %v2252, 4294901760
  %2743 = vmatprep.subr.mxu0 %v2742
  %v2744 = vand.u32 %v2251, 4294901760
  %2745 = vmatpush1.msra.mxu0 %v2744
  %v2746 = vand.u32 %v2256, 4294901760
  %2747 = vmatprep.subr.mxu0 %v2746
  %v2748 = vand.u32 %v2255, 4294901760
  %2749 = vmatpush1.msra.mxu0 %v2748
  %v2750 = vand.u32 %v2260, 4294901760
  %2751 = vmatprep.subr.mxu0 %v2750
  %v2752 = vand.u32 %v2259, 4294901760
  %2753 = vmatpush1.msra.mxu0 %v2752
  %v2754 = vand.u32 %v2271, 4294901760
  %2755 = vmatprep.subr.mxu0 %v2754
  %v2756 = vand.u32 %v2268, 4294901760
  %2757 = vmatpush1.msra.mxu0 %v2756
  %2758 = vmatprep.subr.mxu0 0.0
  %2759 = vmatpush1.msra.mxu0 0.0
  %2760 = vmatprep.subr.mxu0 0.0
  %2761 = vmatpush1.msra.mxu0 0.0
  %2762 = vmatprep.subr.mxu0 0.0
  %2763 = vmatpush1.msra.mxu0 0.0
  %2764 = vmatprep.subr.mxu0 0.0
  %2765 = vmatpush1.msra.mxu0 0.0
  %2766 = vmatprep.subr.mxu0 0.0
  %2767 = vmatpush1.msra.mxu0 0.0
  %2768 = vmatprep.subr.mxu0 0.0
  %2769 = vmatpush1.msra.mxu0 0.0
  %2770 = vmatprep.subr.mxu0 0.0
  %2771 = vmatpush1.msra.mxu0 0.0
  %2772 = vmatprep.subr.mxu0 0.0
  %2773 = vmatpush1.msra.mxu0 0.0
  %2774 = vmatprep.subr.mxu0 0.0
  %2775 = vmatpush1.msra.mxu0 0.0
  %2776 = vmatprep.subr.mxu0 0.0
  %2777 = vmatpush1.msra.mxu0 0.0
  %2778 = vmatprep.subr.mxu0 0.0
  %2779 = vmatpush1.msra.mxu0 0.0
  %2780 = vmatprep.subr.mxu0 0.0
  %2781 = vmatpush1.msra.mxu0 0.0
  %2782 = vmatprep.subr.mxu0 0.0
  %2783 = vmatpush1.msra.mxu0 0.0
  %2784 = vmatprep.subr.mxu0 0.0
  %2785 = vmatpush1.msra.mxu0 0.0
  %2786 = vmatprep.subr.mxu0 0.0
  %2787 = vmatpush1.msra.mxu0 0.0
  %2788 = vmatprep.subr.mxu0 0.0
  %2789 = vmatpush1.msra.mxu0 0.0
  %2790 = vmatprep.subr.mxu0 0.0
  %2791 = vmatpush1.msra.mxu0 0.0
  %2792 = vmatprep.subr.mxu0 0.0
  %2793 = vmatpush1.msra.mxu0 0.0
  %2794 = vmatprep.subr.mxu0 0.0
  %2795 = vmatpush1.msra.mxu0 0.0
  %2796 = vmatprep.subr.mxu0 0.0
  %2797 = vmatpush1.msra.mxu0 0.0
  %2798 = vmatprep.subr.mxu0 0.0
  %2799 = vmatpush1.msra.mxu0 0.0
  %2800 = vmatprep.subr.mxu0 0.0
  %2801 = vmatpush1.msra.mxu0 0.0
  %2802 = vmatprep.subr.mxu0 0.0
  %2803 = vmatpush1.msra.mxu0 0.0
  %2804 = vmatprep.subr.mxu0 0.0
  %2805 = vmatpush1.msra.mxu0 0.0
  %2806 = vmatprep.subr.mxu0 0.0
  %2807 = vmatpush1.msra.mxu0 0.0
  %2808 = vmatprep.subr.mxu0 0.0
  %2809 = vmatpush1.msra.mxu0 0.0
  %2810 = vmatprep.subr.mxu0 0.0
  %2811 = vmatpush1.msra.mxu0 0.0
  %2812 = vmatprep.subr.mxu0 0.0
  %2813 = vmatpush1.msra.mxu0 0.0
  %2814 = vmatprep.mubr.f32.mxu0 0.0
  %v2815 = vand.u32 %v30, 4294901760
  %2816 = vmatmul.mubr.f32.gmra.mrb[0].mxu0 %v2815
  %v2817 = vpop.f32.mrb[0].mxu0
  %v2818 = vadd.f32 %v2738, %v2817
  %v2819 = vpop.f32.mrb[0].mxu0
  %v2820 = vadd.f32 %v2740, %v2819
  %2821 = vdwg.mxu0
  %v2822 = vand.u32 %v2254, 4294901760
  %2823 = vmatprep.subr.mxu0 %v2822
  %v2824 = vand.u32 %v2253, 4294901760
  %2825 = vmatpush1.msra.mxu0 %v2824
  %v2826 = vand.u32 %v2258, 4294901760
  %2827 = vmatprep.subr.mxu0 %v2826
  %v2828 = vand.u32 %v2257, 4294901760
  %2829 = vmatpush1.msra.mxu0 %v2828
  %v2830 = vand.u32 %v2262, 4294901760
  %2831 = vmatprep.subr.mxu0 %v2830
  %v2832 = vand.u32 %v2261, 4294901760
  %2833 = vmatpush1.msra.mxu0 %v2832
  %v2834 = vand.u32 %v2277, 4294901760
  %2835 = vmatprep.subr.mxu0 %v2834
  %v2836 = vand.u32 %v2274, 4294901760
  %2837 = vmatpush1.msra.mxu0 %v2836
  %2838 = vmatprep.subr.mxu0 0.0
  %2839 = vmatpush1.msra.mxu0 0.0
  %2840 = vmatprep.subr.mxu0 0.0
  %2841 = vmatpush1.msra.mxu0 0.0
  %2842 = vmatprep.subr.mxu0 0.0
  %2843 = vmatpush1.msra.mxu0 0.0
  %2844 = vmatprep.subr.mxu0 0.0
  %2845 = vmatpush1.msra.mxu0 0.0
  %2846 = vmatprep.subr.mxu0 0.0
  %2847 = vmatpush1.msra.mxu0 0.0
  %2848 = vmatprep.subr.mxu0 0.0
  %2849 = vmatpush1.msra.mxu0 0.0
  %2850 = vmatprep.subr.mxu0 0.0
  %2851 = vmatpush1.msra.mxu0 0.0
  %2852 = vmatprep.subr.mxu0 0.0
  %2853 = vmatpush1.msra.mxu0 0.0
  %2854 = vmatprep.subr.mxu0 0.0
  %2855 = vmatpush1.msra.mxu0 0.0
  %2856 = vmatprep.subr.mxu0 0.0
  %2857 = vmatpush1.msra.mxu0 0.0
  %2858 = vmatprep.subr.mxu0 0.0
  %2859 = vmatpush1.msra.mxu0 0.0
  %2860 = vmatprep.subr.mxu0 0.0
  %2861 = vmatpush1.msra.mxu0 0.0
  %2862 = vmatprep.subr.mxu0 0.0
  %2863 = vmatpush1.msra.mxu0 0.0
  %2864 = vmatprep.subr.mxu0 0.0
  %2865 = vmatpush1.msra.mxu0 0.0
  %2866 = vmatprep.subr.mxu0 0.0
  %2867 = vmatpush1.msra.mxu0 0.0
  %2868 = vmatprep.subr.mxu0 0.0
  %2869 = vmatpush1.msra.mxu0 0.0
  %2870 = vmatprep.subr.mxu0 0.0
  %2871 = vmatpush1.msra.mxu0 0.0
  %2872 = vmatprep.subr.mxu0 0.0
  %2873 = vmatpush1.msra.mxu0 0.0
  %2874 = vmatprep.subr.mxu0 0.0
  %2875 = vmatpush1.msra.mxu0 0.0
  %2876 = vmatprep.subr.mxu0 0.0
  %2877 = vmatpush1.msra.mxu0 0.0
  %2878 = vmatprep.subr.mxu0 0.0
  %2879 = vmatpush1.msra.mxu0 0.0
  %2880 = vmatprep.subr.mxu0 0.0
  %2881 = vmatpush1.msra.mxu0 0.0
  %2882 = vmatprep.subr.mxu0 0.0
  %2883 = vmatpush1.msra.mxu0 0.0
  %2884 = vmatprep.subr.mxu0 0.0
  %2885 = vmatpush1.msra.mxu0 0.0
  %2886 = vmatprep.subr.mxu0 0.0
  %2887 = vmatpush1.msra.mxu0 0.0
  %2888 = vmatprep.subr.mxu0 0.0
  %2889 = vmatpush1.msra.mxu0 0.0
  %2890 = vmatprep.subr.mxu0 0.0
  %2891 = vmatpush1.msra.mxu0 0.0
  %2892 = vmatprep.subr.mxu0 0.0
  %2893 = vmatpush1.msra.mxu0 0.0
  %2894 = vmatprep.mubr.f32.mxu0 0.0
  %v2895 = vand.u32 %v30, 4294901760
  %v2896 = vsub.f32 %v30, %v2895
  %v2897 = vand.u32 %v2896, 4294901760
  %v2898 = vsub.f32 %v2896, %v2897
  %v2899 = vand.u32 %v2898, 4294901760
  %2900 = vmatmul.mubr.f32.gmra.mrb[0].mxu0 %v2899
  %v2901 = vpop.f32.mrb[0].mxu0
  %v2902 = vadd.f32 0.0, %v2901
  %v2903 = vpop.f32.mrb[0].mxu0
  %v2904 = vadd.f32 0.0, %v2903
  %2905 = vdwg.mxu0
  %v2906 = vand.u32 %v2254, 4294901760
  %v2907 = vsub.f32 %v2254, %v2906
  %v2908 = vand.u32 %v2907, 4294901760
  %v2909 = vsub.f32 %v2907, %v2908
  %v2910 = vand.u32 %v2909, 4294901760
  %2911 = vmatprep.subr.mxu0 %v2910
  %v2912 = vand.u32 %v2253, 4294901760
  %v2913 = vsub.f32 %v2253, %v2912
  %v2914 = vand.u32 %v2913, 4294901760
  %v2915 = vsub.f32 %v2913, %v2914
  %v2916 = vand.u32 %v2915, 4294901760
  %2917 = vmatpush1.msra.mxu0 %v2916
  %v2918 = vand.u32 %v2258, 4294901760
  %v2919 = vsub.f32 %v2258, %v2918
  %v2920 = vand.u32 %v2919, 4294901760
  %v2921 = vsub.f32 %v2919, %v2920
  %v2922 = vand.u32 %v2921, 4294901760
  %2923 = vmatprep.subr.mxu0 %v2922
  %v2924 = vand.u32 %v2257, 4294901760
  %v2925 = vsub.f32 %v2257, %v2924
  %v2926 = vand.u32 %v2925, 4294901760
  %v2927 = vsub.f32 %v2925, %v2926
  %v2928 = vand.u32 %v2927, 4294901760
  %2929 = vmatpush1.msra.mxu0 %v2928
  %v2930 = vand.u32 %v2262, 4294901760
  %v2931 = vsub.f32 %v2262, %v2930
  %v2932 = vand.u32 %v2931, 4294901760
  %v2933 = vsub.f32 %v2931, %v2932
  %v2934 = vand.u32 %v2933, 4294901760
  %2935 = vmatprep.subr.mxu0 %v2934
  %v2936 = vand.u32 %v2261, 4294901760
  %v2937 = vsub.f32 %v2261, %v2936
  %v2938 = vand.u32 %v2937, 4294901760
  %v2939 = vsub.f32 %v2937, %v2938
  %v2940 = vand.u32 %v2939, 4294901760
  %2941 = vmatpush1.msra.mxu0 %v2940
  %v2942 = vand.u32 %v2277, 4294901760
  %v2943 = vsub.f32 %v2277, %v2942
  %v2944 = vand.u32 %v2943, 4294901760
  %v2945 = vsub.f32 %v2943, %v2944
  %v2946 = vand.u32 %v2945, 4294901760
  %2947 = vmatprep.subr.mxu0 %v2946
  %v2948 = vand.u32 %v2274, 4294901760
  %v2949 = vsub.f32 %v2274, %v2948
  %v2950 = vand.u32 %v2949, 4294901760
  %v2951 = vsub.f32 %v2949, %v2950
  %v2952 = vand.u32 %v2951, 4294901760
  %2953 = vmatpush1.msra.mxu0 %v2952
  %2954 = vmatprep.subr.mxu0 0.0
  %2955 = vmatpush1.msra.mxu0 0.0
  %2956 = vmatprep.subr.mxu0 0.0
  %2957 = vmatpush1.msra.mxu0 0.0
  %2958 = vmatprep.subr.mxu0 0.0
  %2959 = vmatpush1.msra.mxu0 0.0
  %2960 = vmatprep.subr.mxu0 0.0
  %2961 = vmatpush1.msra.mxu0 0.0
  %2962 = vmatprep.subr.mxu0 0.0
  %2963 = vmatpush1.msra.mxu0 0.0
  %2964 = vmatprep.subr.mxu0 0.0
  %2965 = vmatpush1.msra.mxu0 0.0
  %2966 = vmatprep.subr.mxu0 0.0
  %2967 = vmatpush1.msra.mxu0 0.0
  %2968 = vmatprep.subr.mxu0 0.0
  %2969 = vmatpush1.msra.mxu0 0.0
  %2970 = vmatprep.subr.mxu0 0.0
  %2971 = vmatpush1.msra.mxu0 0.0
  %2972 = vmatprep.subr.mxu0 0.0
  %2973 = vmatpush1.msra.mxu0 0.0
  %2974 = vmatprep.subr.mxu0 0.0
  %2975 = vmatpush1.msra.mxu0 0.0
  %2976 = vmatprep.subr.mxu0 0.0
  %2977 = vmatpush1.msra.mxu0 0.0
  %2978 = vmatprep.subr.mxu0 0.0
  %2979 = vmatpush1.msra.mxu0 0.0
  %2980 = vmatprep.subr.mxu0 0.0
  %2981 = vmatpush1.msra.mxu0 0.0
  %2982 = vmatprep.subr.mxu0 0.0
  %2983 = vmatpush1.msra.mxu0 0.0
  %2984 = vmatprep.subr.mxu0 0.0
  %2985 = vmatpush1.msra.mxu0 0.0
  %2986 = vmatprep.subr.mxu0 0.0
  %2987 = vmatpush1.msra.mxu0 0.0
  %2988 = vmatprep.subr.mxu0 0.0
  %2989 = vmatpush1.msra.mxu0 0.0
  %2990 = vmatprep.subr.mxu0 0.0
  %2991 = vmatpush1.msra.mxu0 0.0
  %2992 = vmatprep.subr.mxu0 0.0
  %2993 = vmatpush1.msra.mxu0 0.0
  %2994 = vmatprep.subr.mxu0 0.0
  %2995 = vmatpush1.msra.mxu0 0.0
  %2996 = vmatprep.subr.mxu0 0.0
  %2997 = vmatpush1.msra.mxu0 0.0
  %2998 = vmatprep.subr.mxu0 0.0
  %2999 = vmatpush1.msra.mxu0 0.0
  %3000 = vmatprep.subr.mxu0 0.0
  %3001 = vmatpush1.msra.mxu0 0.0
  %3002 = vmatprep.subr.mxu0 0.0
  %3003 = vmatpush1.msra.mxu0 0.0
  %3004 = vmatprep.subr.mxu0 0.0
  %3005 = vmatpush1.msra.mxu0 0.0
  %3006 = vmatprep.subr.mxu0 0.0
  %3007 = vmatpush1.msra.mxu0 0.0
  %3008 = vmatprep.subr.mxu0 0.0
  %3009 = vmatpush1.msra.mxu0 0.0
  %3010 = vmatprep.mubr.f32.mxu0 0.0
  %v3011 = vand.u32 %v30, 4294901760
  %3012 = vmatmul.mubr.f32.gmra.mrb[0].mxu0 %v3011
  %v3013 = vpop.f32.mrb[0].mxu0
  %v3014 = vadd.f32 %v2902, %v3013
  %v3015 = vpop.f32.mrb[0].mxu0
  %v3016 = vadd.f32 %v2904, %v3015
  %3017 = vdwg.mxu0
  %v3018 = vand.u32 %v2254, 4294901760
  %v3019 = vsub.f32 %v2254, %v3018
  %3020 = vmatprep.subr.mxu0 %v3019
  %v3021 = vand.u32 %v2253, 4294901760
  %v3022 = vsub.f32 %v2253, %v3021
  %3023 = vmatpush1.msra.mxu0 %v3022
  %v3024 = vand.u32 %v2258, 4294901760
  %v3025 = vsub.f32 %v2258, %v3024
  %3026 = vmatprep.subr.mxu0 %v3025
  %v3027 = vand.u32 %v2257, 4294901760
  %v3028 = vsub.f32 %v2257, %v3027
  %3029 = vmatpush1.msra.mxu0 %v3028
  %v3030 = vand.u32 %v2262, 4294901760
  %v3031 = vsub.f32 %v2262, %v3030
  %3032 = vmatprep.subr.mxu0 %v3031
  %v3033 = vand.u32 %v2261, 4294901760
  %v3034 = vsub.f32 %v2261, %v3033
  %3035 = vmatpush1.msra.mxu0 %v3034
  %v3036 = vand.u32 %v2277, 4294901760
  %v3037 = vsub.f32 %v2277, %v3036
  %3038 = vmatprep.subr.mxu0 %v3037
  %v3039 = vand.u32 %v2274, 4294901760
  %v3040 = vsub.f32 %v2274, %v3039
  %3041 = vmatpush1.msra.mxu0 %v3040
  %3042 = vmatprep.subr.mxu0 0.0
  %3043 = vmatpush1.msra.mxu0 0.0
  %3044 = vmatprep.subr.mxu0 0.0
  %3045 = vmatpush1.msra.mxu0 0.0
  %3046 = vmatprep.subr.mxu0 0.0
  %3047 = vmatpush1.msra.mxu0 0.0
  %3048 = vmatprep.subr.mxu0 0.0
  %3049 = vmatpush1.msra.mxu0 0.0
  %3050 = vmatprep.subr.mxu0 0.0
  %3051 = vmatpush1.msra.mxu0 0.0
  %3052 = vmatprep.subr.mxu0 0.0
  %3053 = vmatpush1.msra.mxu0 0.0
  %3054 = vmatprep.subr.mxu0 0.0
  %3055 = vmatpush1.msra.mxu0 0.0
  %3056 = vmatprep.subr.mxu0 0.0
  %3057 = vmatpush1.msra.mxu0 0.0
  %3058 = vmatprep.subr.mxu0 0.0
  %3059 = vmatpush1.msra.mxu0 0.0
  %3060 = vmatprep.subr.mxu0 0.0
  %3061 = vmatpush1.msra.mxu0 0.0
  %3062 = vmatprep.subr.mxu0 0.0
  %3063 = vmatpush1.msra.mxu0 0.0
  %3064 = vmatprep.subr.mxu0 0.0
  %3065 = vmatpush1.msra.mxu0 0.0
  %3066 = vmatprep.subr.mxu0 0.0
  %3067 = vmatpush1.msra.mxu0 0.0
  %3068 = vmatprep.subr.mxu0 0.0
  %3069 = vmatpush1.msra.mxu0 0.0
  %3070 = vmatprep.subr.mxu0 0.0
  %3071 = vmatpush1.msra.mxu0 0.0
  %3072 = vmatprep.subr.mxu0 0.0
  %3073 = vmatpush1.msra.mxu0 0.0
  %3074 = vmatprep.subr.mxu0 0.0
  %3075 = vmatpush1.msra.mxu0 0.0
  %3076 = vmatprep.subr.mxu0 0.0
  %3077 = vmatpush1.msra.mxu0 0.0
  %3078 = vmatprep.subr.mxu0 0.0
  %3079 = vmatpush1.msra.mxu0 0.0
  %3080 = vmatprep.subr.mxu0 0.0
  %3081 = vmatpush1.msra.mxu0 0.0
  %3082 = vmatprep.subr.mxu0 0.0
  %3083 = vmatpush1.msra.mxu0 0.0
  %3084 = vmatprep.subr.mxu0 0.0
  %3085 = vmatpush1.msra.mxu0 0.0
  %3086 = vmatprep.subr.mxu0 0.0
  %3087 = vmatpush1.msra.mxu0 0.0
  %3088 = vmatprep.subr.mxu0 0.0
  %3089 = vmatpush1.msra.mxu0 0.0
  %3090 = vmatprep.subr.mxu0 0.0
  %3091 = vmatpush1.msra.mxu0 0.0
  %3092 = vmatprep.subr.mxu0 0.0
  %3093 = vmatpush1.msra.mxu0 0.0
  %3094 = vmatprep.subr.mxu0 0.0
  %3095 = vmatpush1.msra.mxu0 0.0
  %3096 = vmatprep.subr.mxu0 0.0
  %3097 = vmatpush1.msra.mxu0 0.0
  %3098 = vmatprep.mubr.f32.mxu0 0.0
  %v3099 = vand.u32 %v30, 4294901760
  %v3100 = vsub.f32 %v30, %v3099
  %3101 = vmatmul.mubr.f32.gmra.mrb[0].mxu0 %v3100
  %v3102 = vpop.f32.mrb[0].mxu0
  %v3103 = vadd.f32 %v3014, %v3102
  %v3104 = vpop.f32.mrb[0].mxu0
  %v3105 = vadd.f32 %v3016, %v3104
  %3106 = vdwg.mxu0
  %v3107 = vand.u32 %v2254, 4294901760
  %3108 = vmatprep.subr.mxu0 %v3107
  %v3109 = vand.u32 %v2253, 4294901760
  %3110 = vmatpush1.msra.mxu0 %v3109
  %v3111 = vand.u32 %v2258, 4294901760
  %3112 = vmatprep.subr.mxu0 %v3111
  %v3113 = vand.u32 %v2257, 4294901760
  %3114 = vmatpush1.msra.mxu0 %v3113
  %v3115 = vand.u32 %v2262, 4294901760
  %3116 = vmatprep.subr.mxu0 %v3115
  %v3117 = vand.u32 %v2261, 4294901760
  %3118 = vmatpush1.msra.mxu0 %v3117
  %v3119 = vand.u32 %v2277, 4294901760
  %3120 = vmatprep.subr.mxu0 %v3119
  %v3121 = vand.u32 %v2274, 4294901760
  %3122 = vmatpush1.msra.mxu0 %v3121
  %3123 = vmatprep.subr.mxu0 0.0
  %3124 = vmatpush1.msra.mxu0 0.0
  %3125 = vmatprep.subr.mxu0 0.0
  %3126 = vmatpush1.msra.mxu0 0.0
  %3127 = vmatprep.subr.mxu0 0.0
  %3128 = vmatpush1.msra.mxu0 0.0
  %3129 = vmatprep.subr.mxu0 0.0
  %3130 = vmatpush1.msra.mxu0 0.0
  %3131 = vmatprep.subr.mxu0 0.0
  %3132 = vmatpush1.msra.mxu0 0.0
  %3133 = vmatprep.subr.mxu0 0.0
  %3134 = vmatpush1.msra.mxu0 0.0
  %3135 = vmatprep.subr.mxu0 0.0
  %3136 = vmatpush1.msra.mxu0 0.0
  %3137 = vmatprep.subr.mxu0 0.0
  %3138 = vmatpush1.msra.mxu0 0.0
  %3139 = vmatprep.subr.mxu0 0.0
  %3140 = vmatpush1.msra.mxu0 0.0
  %3141 = vmatprep.subr.mxu0 0.0
  %3142 = vmatpush1.msra.mxu0 0.0
  %3143 = vmatprep.subr.mxu0 0.0
  %3144 = vmatpush1.msra.mxu0 0.0
  %3145 = vmatprep.subr.mxu0 0.0
  %3146 = vmatpush1.msra.mxu0 0.0
  %3147 = vmatprep.subr.mxu0 0.0
  %3148 = vmatpush1.msra.mxu0 0.0
  %3149 = vmatprep.subr.mxu0 0.0
  %3150 = vmatpush1.msra.mxu0 0.0
  %3151 = vmatprep.subr.mxu0 0.0
  %3152 = vmatpush1.msra.mxu0 0.0
  %3153 = vmatprep.subr.mxu0 0.0
  %3154 = vmatpush1.msra.mxu0 0.0
  %3155 = vmatprep.subr.mxu0 0.0
  %3156 = vmatpush1.msra.mxu0 0.0
  %3157 = vmatprep.subr.mxu0 0.0
  %3158 = vmatpush1.msra.mxu0 0.0
  %3159 = vmatprep.subr.mxu0 0.0
  %3160 = vmatpush1.msra.mxu0 0.0
  %3161 = vmatprep.subr.mxu0 0.0
  %3162 = vmatpush1.msra.mxu0 0.0
  %3163 = vmatprep.subr.mxu0 0.0
  %3164 = vmatpush1.msra.mxu0 0.0
  %3165 = vmatprep.subr.mxu0 0.0
  %3166 = vmatpush1.msra.mxu0 0.0
  %3167 = vmatprep.subr.mxu0 0.0
  %3168 = vmatpush1.msra.mxu0 0.0
  %3169 = vmatprep.subr.mxu0 0.0
  %3170 = vmatpush1.msra.mxu0 0.0
  %3171 = vmatprep.subr.mxu0 0.0
  %3172 = vmatpush1.msra.mxu0 0.0
  %3173 = vmatprep.subr.mxu0 0.0
  %3174 = vmatpush1.msra.mxu0 0.0
  %3175 = vmatprep.subr.mxu0 0.0
  %3176 = vmatpush1.msra.mxu0 0.0
  %3177 = vmatprep.subr.mxu0 0.0
  %3178 = vmatpush1.msra.mxu0 0.0
  %3179 = vmatprep.mubr.f32.mxu0 0.0
  %v3180 = vand.u32 %v30, 4294901760
  %v3181 = vsub.f32 %v30, %v3180
  %v3182 = vand.u32 %v3181, 4294901760
  %3183 = vmatmul.mubr.f32.gmra.mrb[0].mxu0 %v3182
  %v3184 = vpop.f32.mrb[0].mxu0
  %v3185 = vadd.f32 %v3103, %v3184
  %v3186 = vpop.f32.mrb[0].mxu0
  %v3187 = vadd.f32 %v3105, %v3186
  %3188 = vdwg.mxu0
  %v3189 = vand.u32 %v2254, 4294901760
  %v3190 = vsub.f32 %v2254, %v3189
  %v3191 = vand.u32 %v3190, 4294901760
  %3192 = vmatprep.subr.mxu0 %v3191
  %v3193 = vand.u32 %v2253, 4294901760
  %v3194 = vsub.f32 %v2253, %v3193
  %v3195 = vand.u32 %v3194, 4294901760
  %3196 = vmatpush1.msra.mxu0 %v3195
  %v3197 = vand.u32 %v2258, 4294901760
  %v3198 = vsub.f32 %v2258, %v3197
  %v3199 = vand.u32 %v3198, 4294901760
  %3200 = vmatprep.subr.mxu0 %v3199
  %v3201 = vand.u32 %v2257, 4294901760
  %v3202 = vsub.f32 %v2257, %v3201
  %v3203 = vand.u32 %v3202, 4294901760
  %3204 = vmatpush1.msra.mxu0 %v3203
  %v3205 = vand.u32 %v2262, 4294901760
  %v3206 = vsub.f32 %v2262, %v3205
  %v3207 = vand.u32 %v3206, 4294901760
  %3208 = vmatprep.subr.mxu0 %v3207
  %v3209 = vand.u32 %v2261, 4294901760
  %v3210 = vsub.f32 %v2261, %v3209
  %v3211 = vand.u32 %v3210, 4294901760
  %3212 = vmatpush1.msra.mxu0 %v3211
  %v3213 = vand.u32 %v2277, 4294901760
  %v3214 = vsub.f32 %v2277, %v3213
  %v3215 = vand.u32 %v3214, 4294901760
  %3216 = vmatprep.subr.mxu0 %v3215
  %v3217 = vand.u32 %v2274, 4294901760
  %v3218 = vsub.f32 %v2274, %v3217
  %v3219 = vand.u32 %v3218, 4294901760
  %3220 = vmatpush1.msra.mxu0 %v3219
  %3221 = vmatprep.subr.mxu0 0.0
  %3222 = vmatpush1.msra.mxu0 0.0
  %3223 = vmatprep.subr.mxu0 0.0
  %3224 = vmatpush1.msra.mxu0 0.0
  %3225 = vmatprep.subr.mxu0 0.0
  %3226 = vmatpush1.msra.mxu0 0.0
  %3227 = vmatprep.subr.mxu0 0.0
  %3228 = vmatpush1.msra.mxu0 0.0
  %3229 = vmatprep.subr.mxu0 0.0
  %3230 = vmatpush1.msra.mxu0 0.0
  %3231 = vmatprep.subr.mxu0 0.0
  %3232 = vmatpush1.msra.mxu0 0.0
  %3233 = vmatprep.subr.mxu0 0.0
  %3234 = vmatpush1.msra.mxu0 0.0
  %3235 = vmatprep.subr.mxu0 0.0
  %3236 = vmatpush1.msra.mxu0 0.0
  %3237 = vmatprep.subr.mxu0 0.0
  %3238 = vmatpush1.msra.mxu0 0.0
  %3239 = vmatprep.subr.mxu0 0.0
  %3240 = vmatpush1.msra.mxu0 0.0
  %3241 = vmatprep.subr.mxu0 0.0
  %3242 = vmatpush1.msra.mxu0 0.0
  %3243 = vmatprep.subr.mxu0 0.0
  %3244 = vmatpush1.msra.mxu0 0.0
  %3245 = vmatprep.subr.mxu0 0.0
  %3246 = vmatpush1.msra.mxu0 0.0
  %3247 = vmatprep.subr.mxu0 0.0
  %3248 = vmatpush1.msra.mxu0 0.0
  %3249 = vmatprep.subr.mxu0 0.0
  %3250 = vmatpush1.msra.mxu0 0.0
  %3251 = vmatprep.subr.mxu0 0.0
  %3252 = vmatpush1.msra.mxu0 0.0
  %3253 = vmatprep.subr.mxu0 0.0
  %3254 = vmatpush1.msra.mxu0 0.0
  %3255 = vmatprep.subr.mxu0 0.0
  %3256 = vmatpush1.msra.mxu0 0.0
  %3257 = vmatprep.subr.mxu0 0.0
  %3258 = vmatpush1.msra.mxu0 0.0
  %3259 = vmatprep.subr.mxu0 0.0
  %3260 = vmatpush1.msra.mxu0 0.0
  %3261 = vmatprep.subr.mxu0 0.0
  %3262 = vmatpush1.msra.mxu0 0.0
  %3263 = vmatprep.subr.mxu0 0.0
  %3264 = vmatpush1.msra.mxu0 0.0
  %3265 = vmatprep.subr.mxu0 0.0
  %3266 = vmatpush1.msra.mxu0 0.0
  %3267 = vmatprep.subr.mxu0 0.0
  %3268 = vmatpush1.msra.mxu0 0.0
  %3269 = vmatprep.subr.mxu0 0.0
  %3270 = vmatpush1.msra.mxu0 0.0
  %3271 = vmatprep.subr.mxu0 0.0
  %3272 = vmatpush1.msra.mxu0 0.0
  %3273 = vmatprep.subr.mxu0 0.0
  %3274 = vmatpush1.msra.mxu0 0.0
  %3275 = vmatprep.subr.mxu0 0.0
  %3276 = vmatpush1.msra.mxu0 0.0
  %3277 = vmatprep.mubr.f32.mxu0 0.0
  %v3278 = vand.u32 %v30, 4294901760
  %3279 = vmatmul.mubr.f32.gmra.mrb[0].mxu0 %v3278
  %v3280 = vpop.f32.mrb[0].mxu0
  %v3281 = vadd.f32 %v3185, %v3280
  %v3282 = vpop.f32.mrb[0].mxu0
  %v3283 = vadd.f32 %v3187, %v3282
  %3284 = vdwg.mxu0
  %v3285 = vand.u32 %v2254, 4294901760
  %3286 = vmatprep.subr.mxu0 %v3285
  %v3287 = vand.u32 %v2253, 4294901760
  %3288 = vmatpush1.msra.mxu0 %v3287
  %v3289 = vand.u32 %v2258, 4294901760
  %3290 = vmatprep.subr.mxu0 %v3289
  %v3291 = vand.u32 %v2257, 4294901760
  %3292 = vmatpush1.msra.mxu0 %v3291
  %v3293 = vand.u32 %v2262, 4294901760
  %3294 = vmatprep.subr.mxu0 %v3293
  %v3295 = vand.u32 %v2261, 4294901760
  %3296 = vmatpush1.msra.mxu0 %v3295
  %v3297 = vand.u32 %v2277, 4294901760
  %3298 = vmatprep.subr.mxu0 %v3297
  %v3299 = vand.u32 %v2274, 4294901760
  %3300 = vmatpush1.msra.mxu0 %v3299
  %3301 = vmatprep.subr.mxu0 0.0
  %3302 = vmatpush1.msra.mxu0 0.0
  %3303 = vmatprep.subr.mxu0 0.0
  %3304 = vmatpush1.msra.mxu0 0.0
  %3305 = vmatprep.subr.mxu0 0.0
  %3306 = vmatpush1.msra.mxu0 0.0
  %3307 = vmatprep.subr.mxu0 0.0
  %3308 = vmatpush1.msra.mxu0 0.0
  %3309 = vmatprep.subr.mxu0 0.0
  %3310 = vmatpush1.msra.mxu0 0.0
  %3311 = vmatprep.subr.mxu0 0.0
  %3312 = vmatpush1.msra.mxu0 0.0
  %3313 = vmatprep.subr.mxu0 0.0
  %3314 = vmatpush1.msra.mxu0 0.0
  %3315 = vmatprep.subr.mxu0 0.0
  %3316 = vmatpush1.msra.mxu0 0.0
  %3317 = vmatprep.subr.mxu0 0.0
  %3318 = vmatpush1.msra.mxu0 0.0
  %3319 = vmatprep.subr.mxu0 0.0
  %3320 = vmatpush1.msra.mxu0 0.0
  %3321 = vmatprep.subr.mxu0 0.0
  %3322 = vmatpush1.msra.mxu0 0.0
  %3323 = vmatprep.subr.mxu0 0.0
  %3324 = vmatpush1.msra.mxu0 0.0
  %3325 = vmatprep.subr.mxu0 0.0
  %3326 = vmatpush1.msra.mxu0 0.0
  %3327 = vmatprep.subr.mxu0 0.0
  %3328 = vmatpush1.msra.mxu0 0.0
  %3329 = vmatprep.subr.mxu0 0.0
  %3330 = vmatpush1.msra.mxu0 0.0
  %3331 = vmatprep.subr.mxu0 0.0
  %3332 = vmatpush1.msra.mxu0 0.0
  %3333 = vmatprep.subr.mxu0 0.0
  %3334 = vmatpush1.msra.mxu0 0.0
  %3335 = vmatprep.subr.mxu0 0.0
  %3336 = vmatpush1.msra.mxu0 0.0
  %3337 = vmatprep.subr.mxu0 0.0
  %3338 = vmatpush1.msra.mxu0 0.0
  %3339 = vmatprep.subr.mxu0 0.0
  %3340 = vmatpush1.msra.mxu0 0.0
  %3341 = vmatprep.subr.mxu0 0.0
  %3342 = vmatpush1.msra.mxu0 0.0
  %3343 = vmatprep.subr.mxu0 0.0
  %3344 = vmatpush1.msra.mxu0 0.0
  %3345 = vmatprep.subr.mxu0 0.0
  %3346 = vmatpush1.msra.mxu0 0.0
  %3347 = vmatprep.subr.mxu0 0.0
  %3348 = vmatpush1.msra.mxu0 0.0
  %3349 = vmatprep.subr.mxu0 0.0
  %3350 = vmatpush1.msra.mxu0 0.0
  %3351 = vmatprep.subr.mxu0 0.0
  %3352 = vmatpush1.msra.mxu0 0.0
  %3353 = vmatprep.subr.mxu0 0.0
  %3354 = vmatpush1.msra.mxu0 0.0
  %3355 = vmatprep.subr.mxu0 0.0
  %3356 = vmatpush1.msra.mxu0 0.0
  %3357 = vmatprep.mubr.f32.mxu0 0.0
  %v3358 = vand.u32 %v30, 4294901760
  %3359 = vmatmul.mubr.f32.gmra.mrb[0].mxu0 %v3358
  %v3360 = vpop.f32.mrb[0].mxu0
  %v3361 = vadd.f32 %v3281, %v3360
  %v3362 = vpop.f32.mrb[0].mxu0
  %v3363 = vadd.f32 %v3283, %v3362
  %3364 = vdwg.mxu0
  %v3365 = vmax.f32 %v2246, %v2818
  %v3366 = vmax.f32 %v2247, %v2820
  %v3367 = vmax.f32 %v2248, %v3361
  %v3368 = vmax.f32 %v2249, %v3363
  %s3369 = scalar_lea.vmem %s0, 384
  %v3370 = vld [vmem:[%s3369] sm:$0xff]
  %v3371 = vld [vmem:[%s3369 + $0x8] sm:$0xff]
  %v3372 = vld [vmem:[%s3369 + $0x10] sm:$0xff]
  %v3373 = vld [vmem:[%s3369 + $0x18] sm:$0xff]
  %v3374 = vld [vmem:[%s3369 + $0x20] sm:$0xff]
  %v3375 = vld [vmem:[%s3369 + $0x28] sm:$0xff]
  %v3376 = vld [vmem:[%s3369 + $0x30] sm:$0xff]
  %v3377 = vld [vmem:[%s3369 + $0x38] sm:$0xff]
  %v3378 = vld [vmem:[%s3369 + $0x40] sm:$0xff]
  %v3379 = vld [vmem:[%s3369 + $0x48] sm:$0xff]
  %v3380 = vld [vmem:[%s3369 + $0x50] sm:$0xff]
  %v3381 = vld [vmem:[%s3369 + $0x58] sm:$0xff]
  %v3382 = vld [vmem:[%s3369 + $0x60] sm:$0x3]
  %v3383 = vld [vmem:[%s3369 + $0x68] sm:$0x3]
  %v3384 = vld [vmem:[%s3369 + $0x70] sm:$0x3]
  %v3385 = vld [vmem:[%s3369 + $0x78] sm:$0x3]
  %v3387 = vsel %vm32, %v3382, 0
  %v3390 = vsel %vm32, %v3383, 0
  %v3393 = vsel %vm32, %v3384, 0
  %v3396 = vsel %vm32, %v3385, 0
  %v3398 = vand.u32 %v3371, 4294901760
  %3399 = vmatprep.subr.mxu0 %v3398
  %v3400 = vand.u32 %v3370, 4294901760
  %3401 = vmatpush1.msra.mxu0 %v3400
  %v3402 = vand.u32 %v3375, 4294901760
  %3403 = vmatprep.subr.mxu0 %v3402
  %v3404 = vand.u32 %v3374, 4294901760
  %3405 = vmatpush1.msra.mxu0 %v3404
  %v3406 = vand.u32 %v3379, 4294901760
  %3407 = vmatprep.subr.mxu0 %v3406
  %v3408 = vand.u32 %v3378, 4294901760
  %3409 = vmatpush1.msra.mxu0 %v3408
  %v3410 = vand.u32 %v3390, 4294901760
  %3411 = vmatprep.subr.mxu0 %v3410
  %v3412 = vand.u32 %v3387, 4294901760
  %3413 = vmatpush1.msra.mxu0 %v3412
  %3414 = vmatprep.subr.mxu0 0.0
  %3415 = vmatpush1.msra.mxu0 0.0
  %3416 = vmatprep.subr.mxu0 0.0
  %3417 = vmatpush1.msra.mxu0 0.0
  %3418 = vmatprep.subr.mxu0 0.0
  %3419 = vmatpush1.msra.mxu0 0.0
  %3420 = vmatprep.subr.mxu0 0.0
  %3421 = vmatpush1.msra.mxu0 0.0
  %3422 = vmatprep.subr.mxu0 0.0
  %3423 = vmatpush1.msra.mxu0 0.0
  %3424 = vmatprep.subr.mxu0 0.0
  %3425 = vmatpush1.msra.mxu0 0.0
  %3426 = vmatprep.subr.mxu0 0.0
  %3427 = vmatpush1.msra.mxu0 0.0
  %3428 = vmatprep.subr.mxu0 0.0
  %3429 = vmatpush1.msra.mxu0 0.0
  %3430 = vmatprep.subr.mxu0 0.0
  %3431 = vmatpush1.msra.mxu0 0.0
  %3432 = vmatprep.subr.mxu0 0.0
  %3433 = vmatpush1.msra.mxu0 0.0
  %3434 = vmatprep.subr.mxu0 0.0
  %3435 = vmatpush1.msra.mxu0 0.0
  %3436 = vmatprep.subr.mxu0 0.0
  %3437 = vmatpush1.msra.mxu0 0.0
  %3438 = vmatprep.subr.mxu0 0.0
  %3439 = vmatpush1.msra.mxu0 0.0
  %3440 = vmatprep.subr.mxu0 0.0
  %3441 = vmatpush1.msra.mxu0 0.0
  %3442 = vmatprep.subr.mxu0 0.0
  %3443 = vmatpush1.msra.mxu0 0.0
  %3444 = vmatprep.subr.mxu0 0.0
  %3445 = vmatpush1.msra.mxu0 0.0
  %3446 = vmatprep.subr.mxu0 0.0
  %3447 = vmatpush1.msra.mxu0 0.0
  %3448 = vmatprep.subr.mxu0 0.0
  %3449 = vmatpush1.msra.mxu0 0.0
  %3450 = vmatprep.subr.mxu0 0.0
  %3451 = vmatpush1.msra.mxu0 0.0
  %3452 = vmatprep.subr.mxu0 0.0
  %3453 = vmatpush1.msra.mxu0 0.0
  %3454 = vmatprep.subr.mxu0 0.0
  %3455 = vmatpush1.msra.mxu0 0.0
  %3456 = vmatprep.subr.mxu0 0.0
  %3457 = vmatpush1.msra.mxu0 0.0
  %3458 = vmatprep.subr.mxu0 0.0
  %3459 = vmatpush1.msra.mxu0 0.0
  %3460 = vmatprep.subr.mxu0 0.0
  %3461 = vmatpush1.msra.mxu0 0.0
  %3462 = vmatprep.subr.mxu0 0.0
  %3463 = vmatpush1.msra.mxu0 0.0
  %3464 = vmatprep.subr.mxu0 0.0
  %3465 = vmatpush1.msra.mxu0 0.0
  %3466 = vmatprep.subr.mxu0 0.0
  %3467 = vmatpush1.msra.mxu0 0.0
  %3468 = vmatprep.subr.mxu0 0.0
  %3469 = vmatpush1.msra.mxu0 0.0
  %3470 = vmatprep.mubr.f32.mxu0 0.0
  %v3471 = vand.u32 %v30, 4294901760
  %v3472 = vsub.f32 %v30, %v3471
  %v3473 = vand.u32 %v3472, 4294901760
  %v3474 = vsub.f32 %v3472, %v3473
  %v3475 = vand.u32 %v3474, 4294901760
  %3476 = vmatmul.mubr.f32.gmra.mrb[0].mxu0 %v3475
  %v3477 = vpop.f32.mrb[0].mxu0
  %v3478 = vadd.f32 0.0, %v3477
  %v3479 = vpop.f32.mrb[0].mxu0
  %v3480 = vadd.f32 0.0, %v3479
  %3481 = vdwg.mxu0
  %v3482 = vand.u32 %v3371, 4294901760
  %v3483 = vsub.f32 %v3371, %v3482
  %v3484 = vand.u32 %v3483, 4294901760
  %v3485 = vsub.f32 %v3483, %v3484
  %v3486 = vand.u32 %v3485, 4294901760
  %3487 = vmatprep.subr.mxu0 %v3486
  %v3488 = vand.u32 %v3370, 4294901760
  %v3489 = vsub.f32 %v3370, %v3488
  %v3490 = vand.u32 %v3489, 4294901760
  %v3491 = vsub.f32 %v3489, %v3490
  %v3492 = vand.u32 %v3491, 4294901760
  %3493 = vmatpush1.msra.mxu0 %v3492
  %v3494 = vand.u32 %v3375, 4294901760
  %v3495 = vsub.f32 %v3375, %v3494
  %v3496 = vand.u32 %v3495, 4294901760
  %v3497 = vsub.f32 %v3495, %v3496
  %v3498 = vand.u32 %v3497, 4294901760
  %3499 = vmatprep.subr.mxu0 %v3498
  %v3500 = vand.u32 %v3374, 4294901760
  %v3501 = vsub.f32 %v3374, %v3500
  %v3502 = vand.u32 %v3501, 4294901760
  %v3503 = vsub.f32 %v3501, %v3502
  %v3504 = vand.u32 %v3503, 4294901760
  %3505 = vmatpush1.msra.mxu0 %v3504
  %v3506 = vand.u32 %v3379, 4294901760
  %v3507 = vsub.f32 %v3379, %v3506
  %v3508 = vand.u32 %v3507, 4294901760
  %v3509 = vsub.f32 %v3507, %v3508
  %v3510 = vand.u32 %v3509, 4294901760
  %3511 = vmatprep.subr.mxu0 %v3510
  %v3512 = vand.u32 %v3378, 4294901760
  %v3513 = vsub.f32 %v3378, %v3512
  %v3514 = vand.u32 %v3513, 4294901760
  %v3515 = vsub.f32 %v3513, %v3514
  %v3516 = vand.u32 %v3515, 4294901760
  %3517 = vmatpush1.msra.mxu0 %v3516
  %v3518 = vand.u32 %v3390, 4294901760
  %v3519 = vsub.f32 %v3390, %v3518
  %v3520 = vand.u32 %v3519, 4294901760
  %v3521 = vsub.f32 %v3519, %v3520
  %v3522 = vand.u32 %v3521, 4294901760
  %3523 = vmatprep.subr.mxu0 %v3522
  %v3524 = vand.u32 %v3387, 4294901760
  %v3525 = vsub.f32 %v3387, %v3524
  %v3526 = vand.u32 %v3525, 4294901760
  %v3527 = vsub.f32 %v3525, %v3526
  %v3528 = vand.u32 %v3527, 4294901760
  %3529 = vmatpush1.msra.mxu0 %v3528
  %3530 = vmatprep.subr.mxu0 0.0
  %3531 = vmatpush1.msra.mxu0 0.0
  %3532 = vmatprep.subr.mxu0 0.0
  %3533 = vmatpush1.msra.mxu0 0.0
  %3534 = vmatprep.subr.mxu0 0.0
  %3535 = vmatpush1.msra.mxu0 0.0
  %3536 = vmatprep.subr.mxu0 0.0
  %3537 = vmatpush1.msra.mxu0 0.0
  %3538 = vmatprep.subr.mxu0 0.0
  %3539 = vmatpush1.msra.mxu0 0.0
  %3540 = vmatprep.subr.mxu0 0.0
  %3541 = vmatpush1.msra.mxu0 0.0
  %3542 = vmatprep.subr.mxu0 0.0
  %3543 = vmatpush1.msra.mxu0 0.0
  %3544 = vmatprep.subr.mxu0 0.0
  %3545 = vmatpush1.msra.mxu0 0.0
  %3546 = vmatprep.subr.mxu0 0.0
  %3547 = vmatpush1.msra.mxu0 0.0
  %3548 = vmatprep.subr.mxu0 0.0
  %3549 = vmatpush1.msra.mxu0 0.0
  %3550 = vmatprep.subr.mxu0 0.0
  %3551 = vmatpush1.msra.mxu0 0.0
  %3552 = vmatprep.subr.mxu0 0.0
  %3553 = vmatpush1.msra.mxu0 0.0
  %3554 = vmatprep.subr.mxu0 0.0
  %3555 = vmatpush1.msra.mxu0 0.0
  %3556 = vmatprep.subr.mxu0 0.0
  %3557 = vmatpush1.msra.mxu0 0.0
  %3558 = vmatprep.subr.mxu0 0.0
  %3559 = vmatpush1.msra.mxu0 0.0
  %3560 = vmatprep.subr.mxu0 0.0
  %3561 = vmatpush1.msra.mxu0 0.0
  %3562 = vmatprep.subr.mxu0 0.0
  %3563 = vmatpush1.msra.mxu0 0.0
  %3564 = vmatprep.subr.mxu0 0.0
  %3565 = vmatpush1.msra.mxu0 0.0
  %3566 = vmatprep.subr.mxu0 0.0
  %3567 = vmatpush1.msra.mxu0 0.0
  %3568 = vmatprep.subr.mxu0 0.0
  %3569 = vmatpush1.msra.mxu0 0.0
  %3570 = vmatprep.subr.mxu0 0.0
  %3571 = vmatpush1.msra.mxu0 0.0
  %3572 = vmatprep.subr.mxu0 0.0
  %3573 = vmatpush1.msra.mxu0 0.0
  %3574 = vmatprep.subr.mxu0 0.0
  %3575 = vmatpush1.msra.mxu0 0.0
  %3576 = vmatprep.subr.mxu0 0.0
  %3577 = vmatpush1.msra.mxu0 0.0
  %3578 = vmatprep.subr.mxu0 0.0
  %3579 = vmatpush1.msra.mxu0 0.0
  %3580 = vmatprep.subr.mxu0 0.0
  %3581 = vmatpush1.msra.mxu0 0.0
  %3582 = vmatprep.subr.mxu0 0.0
  %3583 = vmatpush1.msra.mxu0 0.0
  %3584 = vmatprep.subr.mxu0 0.0
  %3585 = vmatpush1.msra.mxu0 0.0
  %3586 = vmatprep.mubr.f32.mxu0 0.0
  %v3587 = vand.u32 %v30, 4294901760
  %3588 = vmatmul.mubr.f32.gmra.mrb[0].mxu0 %v3587
  %v3589 = vpop.f32.mrb[0].mxu0
  %v3590 = vadd.f32 %v3478, %v3589
  %v3591 = vpop.f32.mrb[0].mxu0
  %v3592 = vadd.f32 %v3480, %v3591
  %3593 = vdwg.mxu0
  %v3594 = vand.u32 %v3371, 4294901760
  %v3595 = vsub.f32 %v3371, %v3594
  %3596 = vmatprep.subr.mxu0 %v3595
  %v3597 = vand.u32 %v3370, 4294901760
  %v3598 = vsub.f32 %v3370, %v3597
  %3599 = vmatpush1.msra.mxu0 %v3598
  %v3600 = vand.u32 %v3375, 4294901760
  %v3601 = vsub.f32 %v3375, %v3600
  %3602 = vmatprep.subr.mxu0 %v3601
  %v3603 = vand.u32 %v3374, 4294901760
  %v3604 = vsub.f32 %v3374, %v3603
  %3605 = vmatpush1.msra.mxu0 %v3604
  %v3606 = vand.u32 %v3379, 4294901760
  %v3607 = vsub.f32 %v3379, %v3606
  %3608 = vmatprep.subr.mxu0 %v3607
  %v3609 = vand.u32 %v3378, 4294901760
  %v3610 = vsub.f32 %v3378, %v3609
  %3611 = vmatpush1.msra.mxu0 %v3610
  %v3612 = vand.u32 %v3390, 4294901760
  %v3613 = vsub.f32 %v3390, %v3612
  %3614 = vmatprep.subr.mxu0 %v3613
  %v3615 = vand.u32 %v3387, 4294901760
  %v3616 = vsub.f32 %v3387, %v3615
  %3617 = vmatpush1.msra.mxu0 %v3616
  %3618 = vmatprep.subr.mxu0 0.0
  %3619 = vmatpush1.msra.mxu0 0.0
  %3620 = vmatprep.subr.mxu0 0.0
  %3621 = vmatpush1.msra.mxu0 0.0
  %3622 = vmatprep.subr.mxu0 0.0
  %3623 = vmatpush1.msra.mxu0 0.0
  %3624 = vmatprep.subr.mxu0 0.0
  %3625 = vmatpush1.msra.mxu0 0.0
  %3626 = vmatprep.subr.mxu0 0.0
  %3627 = vmatpush1.msra.mxu0 0.0
  %3628 = vmatprep.subr.mxu0 0.0
  %3629 = vmatpush1.msra.mxu0 0.0
  %3630 = vmatprep.subr.mxu0 0.0
  %3631 = vmatpush1.msra.mxu0 0.0
  %3632 = vmatprep.subr.mxu0 0.0
  %3633 = vmatpush1.msra.mxu0 0.0
  %3634 = vmatprep.subr.mxu0 0.0
  %3635 = vmatpush1.msra.mxu0 0.0
  %3636 = vmatprep.subr.mxu0 0.0
  %3637 = vmatpush1.msra.mxu0 0.0
  %3638 = vmatprep.subr.mxu0 0.0
  %3639 = vmatpush1.msra.mxu0 0.0
  %3640 = vmatprep.subr.mxu0 0.0
  %3641 = vmatpush1.msra.mxu0 0.0
  %3642 = vmatprep.subr.mxu0 0.0
  %3643 = vmatpush1.msra.mxu0 0.0
  %3644 = vmatprep.subr.mxu0 0.0
  %3645 = vmatpush1.msra.mxu0 0.0
  %3646 = vmatprep.subr.mxu0 0.0
  %3647 = vmatpush1.msra.mxu0 0.0
  %3648 = vmatprep.subr.mxu0 0.0
  %3649 = vmatpush1.msra.mxu0 0.0
  %3650 = vmatprep.subr.mxu0 0.0
  %3651 = vmatpush1.msra.mxu0 0.0
  %3652 = vmatprep.subr.mxu0 0.0
  %3653 = vmatpush1.msra.mxu0 0.0
  %3654 = vmatprep.subr.mxu0 0.0
  %3655 = vmatpush1.msra.mxu0 0.0
  %3656 = vmatprep.subr.mxu0 0.0
  %3657 = vmatpush1.msra.mxu0 0.0
  %3658 = vmatprep.subr.mxu0 0.0
  %3659 = vmatpush1.msra.mxu0 0.0
  %3660 = vmatprep.subr.mxu0 0.0
  %3661 = vmatpush1.msra.mxu0 0.0
  %3662 = vmatprep.subr.mxu0 0.0
  %3663 = vmatpush1.msra.mxu0 0.0
  %3664 = vmatprep.subr.mxu0 0.0
  %3665 = vmatpush1.msra.mxu0 0.0
  %3666 = vmatprep.subr.mxu0 0.0
  %3667 = vmatpush1.msra.mxu0 0.0
  %3668 = vmatprep.subr.mxu0 0.0
  %3669 = vmatpush1.msra.mxu0 0.0
  %3670 = vmatprep.subr.mxu0 0.0
  %3671 = vmatpush1.msra.mxu0 0.0
  %3672 = vmatprep.subr.mxu0 0.0
  %3673 = vmatpush1.msra.mxu0 0.0
  %3674 = vmatprep.mubr.f32.mxu0 0.0
  %v3675 = vand.u32 %v30, 4294901760
  %v3676 = vsub.f32 %v30, %v3675
  %3677 = vmatmul.mubr.f32.gmra.mrb[0].mxu0 %v3676
  %v3678 = vpop.f32.mrb[0].mxu0
  %v3679 = vadd.f32 %v3590, %v3678
  %v3680 = vpop.f32.mrb[0].mxu0
  %v3681 = vadd.f32 %v3592, %v3680
  %3682 = vdwg.mxu0
  %v3683 = vand.u32 %v3371, 4294901760
  %3684 = vmatprep.subr.mxu0 %v3683
  %v3685 = vand.u32 %v3370, 4294901760
  %3686 = vmatpush1.msra.mxu0 %v3685
  %v3687 = vand.u32 %v3375, 4294901760
  %3688 = vmatprep.subr.mxu0 %v3687
  %v3689 = vand.u32 %v3374, 4294901760
  %3690 = vmatpush1.msra.mxu0 %v3689
  %v3691 = vand.u32 %v3379, 4294901760
  %3692 = vmatprep.subr.mxu0 %v3691
  %v3693 = vand.u32 %v3378, 4294901760
  %3694 = vmatpush1.msra.mxu0 %v3693
  %v3695 = vand.u32 %v3390, 4294901760
  %3696 = vmatprep.subr.mxu0 %v3695
  %v3697 = vand.u32 %v3387, 4294901760
  %3698 = vmatpush1.msra.mxu0 %v3697
  %3699 = vmatprep.subr.mxu0 0.0
  %3700 = vmatpush1.msra.mxu0 0.0
  %3701 = vmatprep.subr.mxu0 0.0
  %3702 = vmatpush1.msra.mxu0 0.0
  %3703 = vmatprep.subr.mxu0 0.0
  %3704 = vmatpush1.msra.mxu0 0.0
  %3705 = vmatprep.subr.mxu0 0.0
  %3706 = vmatpush1.msra.mxu0 0.0
  %3707 = vmatprep.subr.mxu0 0.0
  %3708 = vmatpush1.msra.mxu0 0.0
  %3709 = vmatprep.subr.mxu0 0.0
  %3710 = vmatpush1.msra.mxu0 0.0
  %3711 = vmatprep.subr.mxu0 0.0
  %3712 = vmatpush1.msra.mxu0 0.0
  %3713 = vmatprep.subr.mxu0 0.0
  %3714 = vmatpush1.msra.mxu0 0.0
  %3715 = vmatprep.subr.mxu0 0.0
  %3716 = vmatpush1.msra.mxu0 0.0
  %3717 = vmatprep.subr.mxu0 0.0
  %3718 = vmatpush1.msra.mxu0 0.0
  %3719 = vmatprep.subr.mxu0 0.0
  %3720 = vmatpush1.msra.mxu0 0.0
  %3721 = vmatprep.subr.mxu0 0.0
  %3722 = vmatpush1.msra.mxu0 0.0
  %3723 = vmatprep.subr.mxu0 0.0
  %3724 = vmatpush1.msra.mxu0 0.0
  %3725 = vmatprep.subr.mxu0 0.0
  %3726 = vmatpush1.msra.mxu0 0.0
  %3727 = vmatprep.subr.mxu0 0.0
  %3728 = vmatpush1.msra.mxu0 0.0
  %3729 = vmatprep.subr.mxu0 0.0
  %3730 = vmatpush1.msra.mxu0 0.0
  %3731 = vmatprep.subr.mxu0 0.0
  %3732 = vmatpush1.msra.mxu0 0.0
  %3733 = vmatprep.subr.mxu0 0.0
  %3734 = vmatpush1.msra.mxu0 0.0
  %3735 = vmatprep.subr.mxu0 0.0
  %3736 = vmatpush1.msra.mxu0 0.0
  %3737 = vmatprep.subr.mxu0 0.0
  %3738 = vmatpush1.msra.mxu0 0.0
  %3739 = vmatprep.subr.mxu0 0.0
  %3740 = vmatpush1.msra.mxu0 0.0
  %3741 = vmatprep.subr.mxu0 0.0
  %3742 = vmatpush1.msra.mxu0 0.0
  %3743 = vmatprep.subr.mxu0 0.0
  %3744 = vmatpush1.msra.mxu0 0.0
  %3745 = vmatprep.subr.mxu0 0.0
  %3746 = vmatpush1.msra.mxu0 0.0
  %3747 = vmatprep.subr.mxu0 0.0
  %3748 = vmatpush1.msra.mxu0 0.0
  %3749 = vmatprep.subr.mxu0 0.0
  %3750 = vmatpush1.msra.mxu0 0.0
  %3751 = vmatprep.subr.mxu0 0.0
  %3752 = vmatpush1.msra.mxu0 0.0
  %3753 = vmatprep.subr.mxu0 0.0
  %3754 = vmatpush1.msra.mxu0 0.0
  %3755 = vmatprep.mubr.f32.mxu0 0.0
  %v3756 = vand.u32 %v30, 4294901760
  %v3757 = vsub.f32 %v30, %v3756
  %v3758 = vand.u32 %v3757, 4294901760
  %3759 = vmatmul.mubr.f32.gmra.mrb[0].mxu0 %v3758
  %v3760 = vpop.f32.mrb[0].mxu0
  %v3761 = vadd.f32 %v3679, %v3760
  %v3762 = vpop.f32.mrb[0].mxu0
  %v3763 = vadd.f32 %v3681, %v3762
  %3764 = vdwg.mxu0
  %v3765 = vand.u32 %v3371, 4294901760
  %v3766 = vsub.f32 %v3371, %v3765
  %v3767 = vand.u32 %v3766, 4294901760
  %3768 = vmatprep.subr.mxu0 %v3767
  %v3769 = vand.u32 %v3370, 4294901760
  %v3770 = vsub.f32 %v3370, %v3769
  %v3771 = vand.u32 %v3770, 4294901760
  %3772 = vmatpush1.msra.mxu0 %v3771
  %v3773 = vand.u32 %v3375, 4294901760
  %v3774 = vsub.f32 %v3375, %v3773
  %v3775 = vand.u32 %v3774, 4294901760
  %3776 = vmatprep.subr.mxu0 %v3775
  %v3777 = vand.u32 %v3374, 4294901760
  %v3778 = vsub.f32 %v3374, %v3777
  %v3779 = vand.u32 %v3778, 4294901760
  %3780 = vmatpush1.msra.mxu0 %v3779
  %v3781 = vand.u32 %v3379, 4294901760
  %v3782 = vsub.f32 %v3379, %v3781
  %v3783 = vand.u32 %v3782, 4294901760
  %3784 = vmatprep.subr.mxu0 %v3783
  %v3785 = vand.u32 %v3378, 4294901760
  %v3786 = vsub.f32 %v3378, %v3785
  %v3787 = vand.u32 %v3786, 4294901760
  %3788 = vmatpush1.msra.mxu0 %v3787
  %v3789 = vand.u32 %v3390, 4294901760
  %v3790 = vsub.f32 %v3390, %v3789
  %v3791 = vand.u32 %v3790, 4294901760
  %3792 = vmatprep.subr.mxu0 %v3791
  %v3793 = vand.u32 %v3387, 4294901760
  %v3794 = vsub.f32 %v3387, %v3793
  %v3795 = vand.u32 %v3794, 4294901760
  %3796 = vmatpush1.msra.mxu0 %v3795
  %3797 = vmatprep.subr.mxu0 0.0
  %3798 = vmatpush1.msra.mxu0 0.0
  %3799 = vmatprep.subr.mxu0 0.0
  %3800 = vmatpush1.msra.mxu0 0.0
  %3801 = vmatprep.subr.mxu0 0.0
  %3802 = vmatpush1.msra.mxu0 0.0
  %3803 = vmatprep.subr.mxu0 0.0
  %3804 = vmatpush1.msra.mxu0 0.0
  %3805 = vmatprep.subr.mxu0 0.0
  %3806 = vmatpush1.msra.mxu0 0.0
  %3807 = vmatprep.subr.mxu0 0.0
  %3808 = vmatpush1.msra.mxu0 0.0
  %3809 = vmatprep.subr.mxu0 0.0
  %3810 = vmatpush1.msra.mxu0 0.0
  %3811 = vmatprep.subr.mxu0 0.0
  %3812 = vmatpush1.msra.mxu0 0.0
  %3813 = vmatprep.subr.mxu0 0.0
  %3814 = vmatpush1.msra.mxu0 0.0
  %3815 = vmatprep.subr.mxu0 0.0
  %3816 = vmatpush1.msra.mxu0 0.0
  %3817 = vmatprep.subr.mxu0 0.0
  %3818 = vmatpush1.msra.mxu0 0.0
  %3819 = vmatprep.subr.mxu0 0.0
  %3820 = vmatpush1.msra.mxu0 0.0
  %3821 = vmatprep.subr.mxu0 0.0
  %3822 = vmatpush1.msra.mxu0 0.0
  %3823 = vmatprep.subr.mxu0 0.0
  %3824 = vmatpush1.msra.mxu0 0.0
  %3825 = vmatprep.subr.mxu0 0.0
  %3826 = vmatpush1.msra.mxu0 0.0
  %3827 = vmatprep.subr.mxu0 0.0
  %3828 = vmatpush1.msra.mxu0 0.0
  %3829 = vmatprep.subr.mxu0 0.0
  %3830 = vmatpush1.msra.mxu0 0.0
  %3831 = vmatprep.subr.mxu0 0.0
  %3832 = vmatpush1.msra.mxu0 0.0
  %3833 = vmatprep.subr.mxu0 0.0
  %3834 = vmatpush1.msra.mxu0 0.0
  %3835 = vmatprep.subr.mxu0 0.0
  %3836 = vmatpush1.msra.mxu0 0.0
  %3837 = vmatprep.subr.mxu0 0.0
  %3838 = vmatpush1.msra.mxu0 0.0
  %3839 = vmatprep.subr.mxu0 0.0
  %3840 = vmatpush1.msra.mxu0 0.0
  %3841 = vmatprep.subr.mxu0 0.0
  %3842 = vmatpush1.msra.mxu0 0.0
  %3843 = vmatprep.subr.mxu0 0.0
  %3844 = vmatpush1.msra.mxu0 0.0
  %3845 = vmatprep.subr.mxu0 0.0
  %3846 = vmatpush1.msra.mxu0 0.0
  %3847 = vmatprep.subr.mxu0 0.0
  %3848 = vmatpush1.msra.mxu0 0.0
  %3849 = vmatprep.subr.mxu0 0.0
  %3850 = vmatpush1.msra.mxu0 0.0
  %3851 = vmatprep.subr.mxu0 0.0
  %3852 = vmatpush1.msra.mxu0 0.0
  %3853 = vmatprep.mubr.f32.mxu0 0.0
  %v3854 = vand.u32 %v30, 4294901760
  %3855 = vmatmul.mubr.f32.gmra.mrb[0].mxu0 %v3854
  %v3856 = vpop.f32.mrb[0].mxu0
  %v3857 = vadd.f32 %v3761, %v3856
  %v3858 = vpop.f32.mrb[0].mxu0
  %v3859 = vadd.f32 %v3763, %v3858
  %3860 = vdwg.mxu0
  %v3861 = vand.u32 %v3371, 4294901760
  %3862 = vmatprep.subr.mxu0 %v3861
  %v3863 = vand.u32 %v3370, 4294901760
  %3864 = vmatpush1.msra.mxu0 %v3863
  %v3865 = vand.u32 %v3375, 4294901760
  %3866 = vmatprep.subr.mxu0 %v3865
  %v3867 = vand.u32 %v3374, 4294901760
  %3868 = vmatpush1.msra.mxu0 %v3867
  %v3869 = vand.u32 %v3379, 4294901760
  %3870 = vmatprep.subr.mxu0 %v3869
  %v3871 = vand.u32 %v3378, 4294901760
  %3872 = vmatpush1.msra.mxu0 %v3871
  %v3873 = vand.u32 %v3390, 4294901760
  %3874 = vmatprep.subr.mxu0 %v3873
  %v3875 = vand.u32 %v3387, 4294901760
  %3876 = vmatpush1.msra.mxu0 %v3875
  %3877 = vmatprep.subr.mxu0 0.0
  %3878 = vmatpush1.msra.mxu0 0.0
  %3879 = vmatprep.subr.mxu0 0.0
  %3880 = vmatpush1.msra.mxu0 0.0
  %3881 = vmatprep.subr.mxu0 0.0
  %3882 = vmatpush1.msra.mxu0 0.0
  %3883 = vmatprep.subr.mxu0 0.0
  %3884 = vmatpush1.msra.mxu0 0.0
  %3885 = vmatprep.subr.mxu0 0.0
  %3886 = vmatpush1.msra.mxu0 0.0
  %3887 = vmatprep.subr.mxu0 0.0
  %3888 = vmatpush1.msra.mxu0 0.0
  %3889 = vmatprep.subr.mxu0 0.0
  %3890 = vmatpush1.msra.mxu0 0.0
  %3891 = vmatprep.subr.mxu0 0.0
  %3892 = vmatpush1.msra.mxu0 0.0
  %3893 = vmatprep.subr.mxu0 0.0
  %3894 = vmatpush1.msra.mxu0 0.0
  %3895 = vmatprep.subr.mxu0 0.0
  %3896 = vmatpush1.msra.mxu0 0.0
  %3897 = vmatprep.subr.mxu0 0.0
  %3898 = vmatpush1.msra.mxu0 0.0
  %3899 = vmatprep.subr.mxu0 0.0
  %3900 = vmatpush1.msra.mxu0 0.0
  %3901 = vmatprep.subr.mxu0 0.0
  %3902 = vmatpush1.msra.mxu0 0.0
  %3903 = vmatprep.subr.mxu0 0.0
  %3904 = vmatpush1.msra.mxu0 0.0
  %3905 = vmatprep.subr.mxu0 0.0
  %3906 = vmatpush1.msra.mxu0 0.0
  %3907 = vmatprep.subr.mxu0 0.0
  %3908 = vmatpush1.msra.mxu0 0.0
  %3909 = vmatprep.subr.mxu0 0.0
  %3910 = vmatpush1.msra.mxu0 0.0
  %3911 = vmatprep.subr.mxu0 0.0
  %3912 = vmatpush1.msra.mxu0 0.0
  %3913 = vmatprep.subr.mxu0 0.0
  %3914 = vmatpush1.msra.mxu0 0.0
  %3915 = vmatprep.subr.mxu0 0.0
  %3916 = vmatpush1.msra.mxu0 0.0
  %3917 = vmatprep.subr.mxu0 0.0
  %3918 = vmatpush1.msra.mxu0 0.0
  %3919 = vmatprep.subr.mxu0 0.0
  %3920 = vmatpush1.msra.mxu0 0.0
  %3921 = vmatprep.subr.mxu0 0.0
  %3922 = vmatpush1.msra.mxu0 0.0
  %3923 = vmatprep.subr.mxu0 0.0
  %3924 = vmatpush1.msra.mxu0 0.0
  %3925 = vmatprep.subr.mxu0 0.0
  %3926 = vmatpush1.msra.mxu0 0.0
  %3927 = vmatprep.subr.mxu0 0.0
  %3928 = vmatpush1.msra.mxu0 0.0
  %3929 = vmatprep.subr.mxu0 0.0
  %3930 = vmatpush1.msra.mxu0 0.0
  %3931 = vmatprep.subr.mxu0 0.0
  %3932 = vmatpush1.msra.mxu0 0.0
  %3933 = vmatprep.mubr.f32.mxu0 0.0
  %v3934 = vand.u32 %v30, 4294901760
  %3935 = vmatmul.mubr.f32.gmra.mrb[0].mxu0 %v3934
  %v3936 = vpop.f32.mrb[0].mxu0
  %v3937 = vadd.f32 %v3857, %v3936
  %v3938 = vpop.f32.mrb[0].mxu0
  %v3939 = vadd.f32 %v3859, %v3938
  %3940 = vdwg.mxu0
  %v3941 = vand.u32 %v3373, 4294901760
  %3942 = vmatprep.subr.mxu0 %v3941
  %v3943 = vand.u32 %v3372, 4294901760
  %3944 = vmatpush1.msra.mxu0 %v3943
  %v3945 = vand.u32 %v3377, 4294901760
  %3946 = vmatprep.subr.mxu0 %v3945
  %v3947 = vand.u32 %v3376, 4294901760
  %3948 = vmatpush1.msra.mxu0 %v3947
  %v3949 = vand.u32 %v3381, 4294901760
  %3950 = vmatprep.subr.mxu0 %v3949
  %v3951 = vand.u32 %v3380, 4294901760
  %3952 = vmatpush1.msra.mxu0 %v3951
  %v3953 = vand.u32 %v3396, 4294901760
  %3954 = vmatprep.subr.mxu0 %v3953
  %v3955 = vand.u32 %v3393, 4294901760
  %3956 = vmatpush1.msra.mxu0 %v3955
  %3957 = vmatprep.subr.mxu0 0.0
  %3958 = vmatpush1.msra.mxu0 0.0
  %3959 = vmatprep.subr.mxu0 0.0
  %3960 = vmatpush1.msra.mxu0 0.0
  %3961 = vmatprep.subr.mxu0 0.0
  %3962 = vmatpush1.msra.mxu0 0.0
  %3963 = vmatprep.subr.mxu0 0.0
  %3964 = vmatpush1.msra.mxu0 0.0
  %3965 = vmatprep.subr.mxu0 0.0
  %3966 = vmatpush1.msra.mxu0 0.0
  %3967 = vmatprep.subr.mxu0 0.0
  %3968 = vmatpush1.msra.mxu0 0.0
  %3969 = vmatprep.subr.mxu0 0.0
  %3970 = vmatpush1.msra.mxu0 0.0
  %3971 = vmatprep.subr.mxu0 0.0
  %3972 = vmatpush1.msra.mxu0 0.0
  %3973 = vmatprep.subr.mxu0 0.0
  %3974 = vmatpush1.msra.mxu0 0.0
  %3975 = vmatprep.subr.mxu0 0.0
  %3976 = vmatpush1.msra.mxu0 0.0
  %3977 = vmatprep.subr.mxu0 0.0
  %3978 = vmatpush1.msra.mxu0 0.0
  %3979 = vmatprep.subr.mxu0 0.0
  %3980 = vmatpush1.msra.mxu0 0.0
  %3981 = vmatprep.subr.mxu0 0.0
  %3982 = vmatpush1.msra.mxu0 0.0
  %3983 = vmatprep.subr.mxu0 0.0
  %3984 = vmatpush1.msra.mxu0 0.0
  %3985 = vmatprep.subr.mxu0 0.0
  %3986 = vmatpush1.msra.mxu0 0.0
  %3987 = vmatprep.subr.mxu0 0.0
  %3988 = vmatpush1.msra.mxu0 0.0
  %3989 = vmatprep.subr.mxu0 0.0
  %3990 = vmatpush1.msra.mxu0 0.0
  %3991 = vmatprep.subr.mxu0 0.0
  %3992 = vmatpush1.msra.mxu0 0.0
  %3993 = vmatprep.subr.mxu0 0.0
  %3994 = vmatpush1.msra.mxu0 0.0
  %3995 = vmatprep.subr.mxu0 0.0
  %3996 = vmatpush1.msra.mxu0 0.0
  %3997 = vmatprep.subr.mxu0 0.0
  %3998 = vmatpush1.msra.mxu0 0.0
  %3999 = vmatprep.subr.mxu0 0.0
  %4000 = vmatpush1.msra.mxu0 0.0
  %4001 = vmatprep.subr.mxu0 0.0
  %4002 = vmatpush1.msra.mxu0 0.0
  %4003 = vmatprep.subr.mxu0 0.0
  %4004 = vmatpush1.msra.mxu0 0.0
  %4005 = vmatprep.subr.mxu0 0.0
  %4006 = vmatpush1.msra.mxu0 0.0
  %4007 = vmatprep.subr.mxu0 0.0
  %4008 = vmatpush1.msra.mxu0 0.0
  %4009 = vmatprep.subr.mxu0 0.0
  %4010 = vmatpush1.msra.mxu0 0.0
  %4011 = vmatprep.subr.mxu0 0.0
  %4012 = vmatpush1.msra.mxu0 0.0
  %4013 = vmatprep.mubr.f32.mxu0 0.0
  %v4014 = vand.u32 %v30, 4294901760
  %v4015 = vsub.f32 %v30, %v4014
  %v4016 = vand.u32 %v4015, 4294901760
  %v4017 = vsub.f32 %v4015, %v4016
  %v4018 = vand.u32 %v4017, 4294901760
  %4019 = vmatmul.mubr.f32.gmra.mrb[0].mxu0 %v4018
  %v4020 = vpop.f32.mrb[0].mxu0
  %v4021 = vadd.f32 0.0, %v4020
  %v4022 = vpop.f32.mrb[0].mxu0
  %v4023 = vadd.f32 0.0, %v4022
  %4024 = vdwg.mxu0
  %v4025 = vand.u32 %v3373, 4294901760
  %v4026 = vsub.f32 %v3373, %v4025
  %v4027 = vand.u32 %v4026, 4294901760
  %v4028 = vsub.f32 %v4026, %v4027
  %v4029 = vand.u32 %v4028, 4294901760
  %4030 = vmatprep.subr.mxu0 %v4029
  %v4031 = vand.u32 %v3372, 4294901760
  %v4032 = vsub.f32 %v3372, %v4031
  %v4033 = vand.u32 %v4032, 4294901760
  %v4034 = vsub.f32 %v4032, %v4033
  %v4035 = vand.u32 %v4034, 4294901760
  %4036 = vmatpush1.msra.mxu0 %v4035
  %v4037 = vand.u32 %v3377, 4294901760
  %v4038 = vsub.f32 %v3377, %v4037
  %v4039 = vand.u32 %v4038, 4294901760
  %v4040 = vsub.f32 %v4038, %v4039
  %v4041 = vand.u32 %v4040, 4294901760
  %4042 = vmatprep.subr.mxu0 %v4041
  %v4043 = vand.u32 %v3376, 4294901760
  %v4044 = vsub.f32 %v3376, %v4043
  %v4045 = vand.u32 %v4044, 4294901760
  %v4046 = vsub.f32 %v4044, %v4045
  %v4047 = vand.u32 %v4046, 4294901760
  %4048 = vmatpush1.msra.mxu0 %v4047
  %v4049 = vand.u32 %v3381, 4294901760
  %v4050 = vsub.f32 %v3381, %v4049
  %v4051 = vand.u32 %v4050, 4294901760
  %v4052 = vsub.f32 %v4050, %v4051
  %v4053 = vand.u32 %v4052, 4294901760
  %4054 = vmatprep.subr.mxu0 %v4053
  %v4055 = vand.u32 %v3380, 4294901760
  %v4056 = vsub.f32 %v3380, %v4055
  %v4057 = vand.u32 %v4056, 4294901760
  %v4058 = vsub.f32 %v4056, %v4057
  %v4059 = vand.u32 %v4058, 4294901760
  %4060 = vmatpush1.msra.mxu0 %v4059
  %v4061 = vand.u32 %v3396, 4294901760
  %v4062 = vsub.f32 %v3396, %v4061
  %v4063 = vand.u32 %v4062, 4294901760
  %v4064 = vsub.f32 %v4062, %v4063
  %v4065 = vand.u32 %v4064, 4294901760
  %4066 = vmatprep.subr.mxu0 %v4065
  %v4067 = vand.u32 %v3393, 4294901760
  %v4068 = vsub.f32 %v3393, %v4067
  %v4069 = vand.u32 %v4068, 4294901760
  %v4070 = vsub.f32 %v4068, %v4069
  %v4071 = vand.u32 %v4070, 4294901760
  %4072 = vmatpush1.msra.mxu0 %v4071
  %4073 = vmatprep.subr.mxu0 0.0
  %4074 = vmatpush1.msra.mxu0 0.0
  %4075 = vmatprep.subr.mxu0 0.0
  %4076 = vmatpush1.msra.mxu0 0.0
  %4077 = vmatprep.subr.mxu0 0.0
  %4078 = vmatpush1.msra.mxu0 0.0
  %4079 = vmatprep.subr.mxu0 0.0
  %4080 = vmatpush1.msra.mxu0 0.0
  %4081 = vmatprep.subr.mxu0 0.0
  %4082 = vmatpush1.msra.mxu0 0.0
  %4083 = vmatprep.subr.mxu0 0.0
  %4084 = vmatpush1.msra.mxu0 0.0
  %4085 = vmatprep.subr.mxu0 0.0
  %4086 = vmatpush1.msra.mxu0 0.0
  %4087 = vmatprep.subr.mxu0 0.0
  %4088 = vmatpush1.msra.mxu0 0.0
  %4089 = vmatprep.subr.mxu0 0.0
  %4090 = vmatpush1.msra.mxu0 0.0
  %4091 = vmatprep.subr.mxu0 0.0
  %4092 = vmatpush1.msra.mxu0 0.0
  %4093 = vmatprep.subr.mxu0 0.0
  %4094 = vmatpush1.msra.mxu0 0.0
  %4095 = vmatprep.subr.mxu0 0.0
  %4096 = vmatpush1.msra.mxu0 0.0
  %4097 = vmatprep.subr.mxu0 0.0
  %4098 = vmatpush1.msra.mxu0 0.0
  %4099 = vmatprep.subr.mxu0 0.0
  %4100 = vmatpush1.msra.mxu0 0.0
  %4101 = vmatprep.subr.mxu0 0.0
  %4102 = vmatpush1.msra.mxu0 0.0
  %4103 = vmatprep.subr.mxu0 0.0
  %4104 = vmatpush1.msra.mxu0 0.0
  %4105 = vmatprep.subr.mxu0 0.0
  %4106 = vmatpush1.msra.mxu0 0.0
  %4107 = vmatprep.subr.mxu0 0.0
  %4108 = vmatpush1.msra.mxu0 0.0
  %4109 = vmatprep.subr.mxu0 0.0
  %4110 = vmatpush1.msra.mxu0 0.0
  %4111 = vmatprep.subr.mxu0 0.0
  %4112 = vmatpush1.msra.mxu0 0.0
  %4113 = vmatprep.subr.mxu0 0.0
  %4114 = vmatpush1.msra.mxu0 0.0
  %4115 = vmatprep.subr.mxu0 0.0
  %4116 = vmatpush1.msra.mxu0 0.0
  %4117 = vmatprep.subr.mxu0 0.0
  %4118 = vmatpush1.msra.mxu0 0.0
  %4119 = vmatprep.subr.mxu0 0.0
  %4120 = vmatpush1.msra.mxu0 0.0
  %4121 = vmatprep.subr.mxu0 0.0
  %4122 = vmatpush1.msra.mxu0 0.0
  %4123 = vmatprep.subr.mxu0 0.0
  %4124 = vmatpush1.msra.mxu0 0.0
  %4125 = vmatprep.subr.mxu0 0.0
  %4126 = vmatpush1.msra.mxu0 0.0
  %4127 = vmatprep.subr.mxu0 0.0
  %4128 = vmatpush1.msra.mxu0 0.0
  %4129 = vmatprep.mubr.f32.mxu0 0.0
  %v4130 = vand.u32 %v30, 4294901760
  %4131 = vmatmul.mubr.f32.gmra.mrb[0].mxu0 %v4130
  %v4132 = vpop.f32.mrb[0].mxu0
  %v4133 = vadd.f32 %v4021, %v4132
  %v4134 = vpop.f32.mrb[0].mxu0
  %v4135 = vadd.f32 %v4023, %v4134
  %4136 = vdwg.mxu0
  %v4137 = vand.u32 %v3373, 4294901760
  %v4138 = vsub.f32 %v3373, %v4137
  %4139 = vmatprep.subr.mxu0 %v4138
  %v4140 = vand.u32 %v3372, 4294901760
  %v4141 = vsub.f32 %v3372, %v4140
  %4142 = vmatpush1.msra.mxu0 %v4141
  %v4143 = vand.u32 %v3377, 4294901760
  %v4144 = vsub.f32 %v3377, %v4143
  %4145 = vmatprep.subr.mxu0 %v4144
  %v4146 = vand.u32 %v3376, 4294901760
  %v4147 = vsub.f32 %v3376, %v4146
  %4148 = vmatpush1.msra.mxu0 %v4147
  %v4149 = vand.u32 %v3381, 4294901760
  %v4150 = vsub.f32 %v3381, %v4149
  %4151 = vmatprep.subr.mxu0 %v4150
  %v4152 = vand.u32 %v3380, 4294901760
  %v4153 = vsub.f32 %v3380, %v4152
  %4154 = vmatpush1.msra.mxu0 %v4153
  %v4155 = vand.u32 %v3396, 4294901760
  %v4156 = vsub.f32 %v3396, %v4155
  %4157 = vmatprep.subr.mxu0 %v4156
  %v4158 = vand.u32 %v3393, 4294901760
  %v4159 = vsub.f32 %v3393, %v4158
  %4160 = vmatpush1.msra.mxu0 %v4159
  %4161 = vmatprep.subr.mxu0 0.0
  %4162 = vmatpush1.msra.mxu0 0.0
  %4163 = vmatprep.subr.mxu0 0.0
  %4164 = vmatpush1.msra.mxu0 0.0
  %4165 = vmatprep.subr.mxu0 0.0
  %4166 = vmatpush1.msra.mxu0 0.0
  %4167 = vmatprep.subr.mxu0 0.0
  %4168 = vmatpush1.msra.mxu0 0.0
  %4169 = vmatprep.subr.mxu0 0.0
  %4170 = vmatpush1.msra.mxu0 0.0
  %4171 = vmatprep.subr.mxu0 0.0
  %4172 = vmatpush1.msra.mxu0 0.0
  %4173 = vmatprep.subr.mxu0 0.0
  %4174 = vmatpush1.msra.mxu0 0.0
  %4175 = vmatprep.subr.mxu0 0.0
  %4176 = vmatpush1.msra.mxu0 0.0
  %4177 = vmatprep.subr.mxu0 0.0
  %4178 = vmatpush1.msra.mxu0 0.0
  %4179 = vmatprep.subr.mxu0 0.0
  %4180 = vmatpush1.msra.mxu0 0.0
  %4181 = vmatprep.subr.mxu0 0.0
  %4182 = vmatpush1.msra.mxu0 0.0
  %4183 = vmatprep.subr.mxu0 0.0
  %4184 = vmatpush1.msra.mxu0 0.0
  %4185 = vmatprep.subr.mxu0 0.0
  %4186 = vmatpush1.msra.mxu0 0.0
  %4187 = vmatprep.subr.mxu0 0.0
  %4188 = vmatpush1.msra.mxu0 0.0
  %4189 = vmatprep.subr.mxu0 0.0
  %4190 = vmatpush1.msra.mxu0 0.0
  %4191 = vmatprep.subr.mxu0 0.0
  %4192 = vmatpush1.msra.mxu0 0.0
  %4193 = vmatprep.subr.mxu0 0.0
  %4194 = vmatpush1.msra.mxu0 0.0
  %4195 = vmatprep.subr.mxu0 0.0
  %4196 = vmatpush1.msra.mxu0 0.0
  %4197 = vmatprep.subr.mxu0 0.0
  %4198 = vmatpush1.msra.mxu0 0.0
  %4199 = vmatprep.subr.mxu0 0.0
  %4200 = vmatpush1.msra.mxu0 0.0
  %4201 = vmatprep.subr.mxu0 0.0
  %4202 = vmatpush1.msra.mxu0 0.0
  %4203 = vmatprep.subr.mxu0 0.0
  %4204 = vmatpush1.msra.mxu0 0.0
  %4205 = vmatprep.subr.mxu0 0.0
  %4206 = vmatpush1.msra.mxu0 0.0
  %4207 = vmatprep.subr.mxu0 0.0
  %4208 = vmatpush1.msra.mxu0 0.0
  %4209 = vmatprep.subr.mxu0 0.0
  %4210 = vmatpush1.msra.mxu0 0.0
  %4211 = vmatprep.subr.mxu0 0.0
  %4212 = vmatpush1.msra.mxu0 0.0
  %4213 = vmatprep.subr.mxu0 0.0
  %4214 = vmatpush1.msra.mxu0 0.0
  %4215 = vmatprep.subr.mxu0 0.0
  %4216 = vmatpush1.msra.mxu0 0.0
  %4217 = vmatprep.mubr.f32.mxu0 0.0
  %v4218 = vand.u32 %v30, 4294901760
  %v4219 = vsub.f32 %v30, %v4218
  %4220 = vmatmul.mubr.f32.gmra.mrb[0].mxu0 %v4219
  %v4221 = vpop.f32.mrb[0].mxu0
  %v4222 = vadd.f32 %v4133, %v4221
  %v4223 = vpop.f32.mrb[0].mxu0
  %v4224 = vadd.f32 %v4135, %v4223
  %4225 = vdwg.mxu0
  %v4226 = vand.u32 %v3373, 4294901760
  %4227 = vmatprep.subr.mxu0 %v4226
  %v4228 = vand.u32 %v3372, 4294901760
  %4229 = vmatpush1.msra.mxu0 %v4228
  %v4230 = vand.u32 %v3377, 4294901760
  %4231 = vmatprep.subr.mxu0 %v4230
  %v4232 = vand.u32 %v3376, 4294901760
  %4233 = vmatpush1.msra.mxu0 %v4232
  %v4234 = vand.u32 %v3381, 4294901760
  %4235 = vmatprep.subr.mxu0 %v4234
  %v4236 = vand.u32 %v3380, 4294901760
  %4237 = vmatpush1.msra.mxu0 %v4236
  %v4238 = vand.u32 %v3396, 4294901760
  %4239 = vmatprep.subr.mxu0 %v4238
  %v4240 = vand.u32 %v3393, 4294901760
  %4241 = vmatpush1.msra.mxu0 %v4240
  %4242 = vmatprep.subr.mxu0 0.0
  %4243 = vmatpush1.msra.mxu0 0.0
  %4244 = vmatprep.subr.mxu0 0.0
  %4245 = vmatpush1.msra.mxu0 0.0
  %4246 = vmatprep.subr.mxu0 0.0
  %4247 = vmatpush1.msra.mxu0 0.0
  %4248 = vmatprep.subr.mxu0 0.0
  %4249 = vmatpush1.msra.mxu0 0.0
  %4250 = vmatprep.subr.mxu0 0.0
  %4251 = vmatpush1.msra.mxu0 0.0
  %4252 = vmatprep.subr.mxu0 0.0
  %4253 = vmatpush1.msra.mxu0 0.0
  %4254 = vmatprep.subr.mxu0 0.0
  %4255 = vmatpush1.msra.mxu0 0.0
  %4256 = vmatprep.subr.mxu0 0.0
  %4257 = vmatpush1.msra.mxu0 0.0
  %4258 = vmatprep.subr.mxu0 0.0
  %4259 = vmatpush1.msra.mxu0 0.0
  %4260 = vmatprep.subr.mxu0 0.0
  %4261 = vmatpush1.msra.mxu0 0.0
  %4262 = vmatprep.subr.mxu0 0.0
  %4263 = vmatpush1.msra.mxu0 0.0
  %4264 = vmatprep.subr.mxu0 0.0
  %4265 = vmatpush1.msra.mxu0 0.0
  %4266 = vmatprep.subr.mxu0 0.0
  %4267 = vmatpush1.msra.mxu0 0.0
  %4268 = vmatprep.subr.mxu0 0.0
  %4269 = vmatpush1.msra.mxu0 0.0
  %4270 = vmatprep.subr.mxu0 0.0
  %4271 = vmatpush1.msra.mxu0 0.0
  %4272 = vmatprep.subr.mxu0 0.0
  %4273 = vmatpush1.msra.mxu0 0.0
  %4274 = vmatprep.subr.mxu0 0.0
  %4275 = vmatpush1.msra.mxu0 0.0
  %4276 = vmatprep.subr.mxu0 0.0
  %4277 = vmatpush1.msra.mxu0 0.0
  %4278 = vmatprep.subr.mxu0 0.0
  %4279 = vmatpush1.msra.mxu0 0.0
  %4280 = vmatprep.subr.mxu0 0.0
  %4281 = vmatpush1.msra.mxu0 0.0
  %4282 = vmatprep.subr.mxu0 0.0
  %4283 = vmatpush1.msra.mxu0 0.0
  %4284 = vmatprep.subr.mxu0 0.0
  %4285 = vmatpush1.msra.mxu0 0.0
  %4286 = vmatprep.subr.mxu0 0.0
  %4287 = vmatpush1.msra.mxu0 0.0
  %4288 = vmatprep.subr.mxu0 0.0
  %4289 = vmatpush1.msra.mxu0 0.0
  %4290 = vmatprep.subr.mxu0 0.0
  %4291 = vmatpush1.msra.mxu0 0.0
  %4292 = vmatprep.subr.mxu0 0.0
  %4293 = vmatpush1.msra.mxu0 0.0
  %4294 = vmatprep.subr.mxu0 0.0
  %4295 = vmatpush1.msra.mxu0 0.0
  %4296 = vmatprep.subr.mxu0 0.0
  %4297 = vmatpush1.msra.mxu0 0.0
  %4298 = vmatprep.mubr.f32.mxu0 0.0
  %v4299 = vand.u32 %v30, 4294901760
  %v4300 = vsub.f32 %v30, %v4299
  %v4301 = vand.u32 %v4300, 4294901760
  %4302 = vmatmul.mubr.f32.gmra.mrb[0].mxu0 %v4301
  %v4303 = vpop.f32.mrb[0].mxu0
  %v4304 = vadd.f32 %v4222, %v4303
  %v4305 = vpop.f32.mrb[0].mxu0
  %v4306 = vadd.f32 %v4224, %v4305
  %4307 = vdwg.mxu0
  %v4308 = vand.u32 %v3373, 4294901760
  %v4309 = vsub.f32 %v3373, %v4308
  %v4310 = vand.u32 %v4309, 4294901760
  %4311 = vmatprep.subr.mxu0 %v4310
  %v4312 = vand.u32 %v3372, 4294901760
  %v4313 = vsub.f32 %v3372, %v4312
  %v4314 = vand.u32 %v4313, 4294901760
  %4315 = vmatpush1.msra.mxu0 %v4314
  %v4316 = vand.u32 %v3377, 4294901760
  %v4317 = vsub.f32 %v3377, %v4316
  %v4318 = vand.u32 %v4317, 4294901760
  %4319 = vmatprep.subr.mxu0 %v4318
  %v4320 = vand.u32 %v3376, 4294901760
  %v4321 = vsub.f32 %v3376, %v4320
  %v4322 = vand.u32 %v4321, 4294901760
  %4323 = vmatpush1.msra.mxu0 %v4322
  %v4324 = vand.u32 %v3381, 4294901760
  %v4325 = vsub.f32 %v3381, %v4324
  %v4326 = vand.u32 %v4325, 4294901760
  %4327 = vmatprep.subr.mxu0 %v4326
  %v4328 = vand.u32 %v3380, 4294901760
  %v4329 = vsub.f32 %v3380, %v4328
  %v4330 = vand.u32 %v4329, 4294901760
  %4331 = vmatpush1.msra.mxu0 %v4330
  %v4332 = vand.u32 %v3396, 4294901760
  %v4333 = vsub.f32 %v3396, %v4332
  %v4334 = vand.u32 %v4333, 4294901760
  %4335 = vmatprep.subr.mxu0 %v4334
  %v4336 = vand.u32 %v3393, 4294901760
  %v4337 = vsub.f32 %v3393, %v4336
  %v4338 = vand.u32 %v4337, 4294901760
  %4339 = vmatpush1.msra.mxu0 %v4338
  %4340 = vmatprep.subr.mxu0 0.0
  %4341 = vmatpush1.msra.mxu0 0.0
  %4342 = vmatprep.subr.mxu0 0.0
  %4343 = vmatpush1.msra.mxu0 0.0
  %4344 = vmatprep.subr.mxu0 0.0
  %4345 = vmatpush1.msra.mxu0 0.0
  %4346 = vmatprep.subr.mxu0 0.0
  %4347 = vmatpush1.msra.mxu0 0.0
  %4348 = vmatprep.subr.mxu0 0.0
  %4349 = vmatpush1.msra.mxu0 0.0
  %4350 = vmatprep.subr.mxu0 0.0
  %4351 = vmatpush1.msra.mxu0 0.0
  %4352 = vmatprep.subr.mxu0 0.0
  %4353 = vmatpush1.msra.mxu0 0.0
  %4354 = vmatprep.subr.mxu0 0.0
  %4355 = vmatpush1.msra.mxu0 0.0
  %4356 = vmatprep.subr.mxu0 0.0
  %4357 = vmatpush1.msra.mxu0 0.0
  %4358 = vmatprep.subr.mxu0 0.0
  %4359 = vmatpush1.msra.mxu0 0.0
  %4360 = vmatprep.subr.mxu0 0.0
  %4361 = vmatpush1.msra.mxu0 0.0
  %4362 = vmatprep.subr.mxu0 0.0
  %4363 = vmatpush1.msra.mxu0 0.0
  %4364 = vmatprep.subr.mxu0 0.0
  %4365 = vmatpush1.msra.mxu0 0.0
  %4366 = vmatprep.subr.mxu0 0.0
  %4367 = vmatpush1.msra.mxu0 0.0
  %4368 = vmatprep.subr.mxu0 0.0
  %4369 = vmatpush1.msra.mxu0 0.0
  %4370 = vmatprep.subr.mxu0 0.0
  %4371 = vmatpush1.msra.mxu0 0.0
  %4372 = vmatprep.subr.mxu0 0.0
  %4373 = vmatpush1.msra.mxu0 0.0
  %4374 = vmatprep.subr.mxu0 0.0
  %4375 = vmatpush1.msra.mxu0 0.0
  %4376 = vmatprep.subr.mxu0 0.0
  %4377 = vmatpush1.msra.mxu0 0.0
  %4378 = vmatprep.subr.mxu0 0.0
  %4379 = vmatpush1.msra.mxu0 0.0
  %4380 = vmatprep.subr.mxu0 0.0
  %4381 = vmatpush1.msra.mxu0 0.0
  %4382 = vmatprep.subr.mxu0 0.0
  %4383 = vmatpush1.msra.mxu0 0.0
  %4384 = vmatprep.subr.mxu0 0.0
  %4385 = vmatpush1.msra.mxu0 0.0
  %4386 = vmatprep.subr.mxu0 0.0
  %4387 = vmatpush1.msra.mxu0 0.0
  %4388 = vmatprep.subr.mxu0 0.0
  %4389 = vmatpush1.msra.mxu0 0.0
  %4390 = vmatprep.subr.mxu0 0.0
  %4391 = vmatpush1.msra.mxu0 0.0
  %4392 = vmatprep.subr.mxu0 0.0
  %4393 = vmatpush1.msra.mxu0 0.0
  %4394 = vmatprep.subr.mxu0 0.0
  %4395 = vmatpush1.msra.mxu0 0.0
  %4396 = vmatprep.mubr.f32.mxu0 0.0
  %v4397 = vand.u32 %v30, 4294901760
  %4398 = vmatmul.mubr.f32.gmra.mrb[0].mxu0 %v4397
  %v4399 = vpop.f32.mrb[0].mxu0
  %v4400 = vadd.f32 %v4304, %v4399
  %v4401 = vpop.f32.mrb[0].mxu0
  %v4402 = vadd.f32 %v4306, %v4401
  %4403 = vdwg.mxu0
  %v4404 = vand.u32 %v3373, 4294901760
  %4405 = vmatprep.subr.mxu0 %v4404
  %v4406 = vand.u32 %v3372, 4294901760
  %4407 = vmatpush1.msra.mxu0 %v4406
  %v4408 = vand.u32 %v3377, 4294901760
  %4409 = vmatprep.subr.mxu0 %v4408
  %v4410 = vand.u32 %v3376, 4294901760
  %4411 = vmatpush1.msra.mxu0 %v4410
  %v4412 = vand.u32 %v3381, 4294901760
  %4413 = vmatprep.subr.mxu0 %v4412
  %v4414 = vand.u32 %v3380, 4294901760
  %4415 = vmatpush1.msra.mxu0 %v4414
  %v4416 = vand.u32 %v3396, 4294901760
  %4417 = vmatprep.subr.mxu0 %v4416
  %v4418 = vand.u32 %v3393, 4294901760
  %4419 = vmatpush1.msra.mxu0 %v4418
  %4420 = vmatprep.subr.mxu0 0.0
  %4421 = vmatpush1.msra.mxu0 0.0
  %4422 = vmatprep.subr.mxu0 0.0
  %4423 = vmatpush1.msra.mxu0 0.0
  %4424 = vmatprep.subr.mxu0 0.0
  %4425 = vmatpush1.msra.mxu0 0.0
  %4426 = vmatprep.subr.mxu0 0.0
  %4427 = vmatpush1.msra.mxu0 0.0
  %4428 = vmatprep.subr.mxu0 0.0
  %4429 = vmatpush1.msra.mxu0 0.0
  %4430 = vmatprep.subr.mxu0 0.0
  %4431 = vmatpush1.msra.mxu0 0.0
  %4432 = vmatprep.subr.mxu0 0.0
  %4433 = vmatpush1.msra.mxu0 0.0
  %4434 = vmatprep.subr.mxu0 0.0
  %4435 = vmatpush1.msra.mxu0 0.0
  %4436 = vmatprep.subr.mxu0 0.0
  %4437 = vmatpush1.msra.mxu0 0.0
  %4438 = vmatprep.subr.mxu0 0.0
  %4439 = vmatpush1.msra.mxu0 0.0
  %4440 = vmatprep.subr.mxu0 0.0
  %4441 = vmatpush1.msra.mxu0 0.0
  %4442 = vmatprep.subr.mxu0 0.0
  %4443 = vmatpush1.msra.mxu0 0.0
  %4444 = vmatprep.subr.mxu0 0.0
  %4445 = vmatpush1.msra.mxu0 0.0
  %4446 = vmatprep.subr.mxu0 0.0
  %4447 = vmatpush1.msra.mxu0 0.0
  %4448 = vmatprep.subr.mxu0 0.0
  %4449 = vmatpush1.msra.mxu0 0.0
  %4450 = vmatprep.subr.mxu0 0.0
  %4451 = vmatpush1.msra.mxu0 0.0
  %4452 = vmatprep.subr.mxu0 0.0
  %4453 = vmatpush1.msra.mxu0 0.0
  %4454 = vmatprep.subr.mxu0 0.0
  %4455 = vmatpush1.msra.mxu0 0.0
  %4456 = vmatprep.subr.mxu0 0.0
  %4457 = vmatpush1.msra.mxu0 0.0
  %4458 = vmatprep.subr.mxu0 0.0
  %4459 = vmatpush1.msra.mxu0 0.0
  %4460 = vmatprep.subr.mxu0 0.0
  %4461 = vmatpush1.msra.mxu0 0.0
  %4462 = vmatprep.subr.mxu0 0.0
  %4463 = vmatpush1.msra.mxu0 0.0
  %4464 = vmatprep.subr.mxu0 0.0
  %4465 = vmatpush1.msra.mxu0 0.0
  %4466 = vmatprep.subr.mxu0 0.0
  %4467 = vmatpush1.msra.mxu0 0.0
  %4468 = vmatprep.subr.mxu0 0.0
  %4469 = vmatpush1.msra.mxu0 0.0
  %4470 = vmatprep.subr.mxu0 0.0
  %4471 = vmatpush1.msra.mxu0 0.0
  %4472 = vmatprep.subr.mxu0 0.0
  %4473 = vmatpush1.msra.mxu0 0.0
  %4474 = vmatprep.subr.mxu0 0.0
  %4475 = vmatpush1.msra.mxu0 0.0
  %4476 = vmatprep.mubr.f32.mxu0 0.0
  %v4477 = vand.u32 %v30, 4294901760
  %4478 = vmatmul.mubr.f32.gmra.mrb[0].mxu0 %v4477
  %v4479 = vpop.f32.mrb[0].mxu0
  %v4480 = vadd.f32 %v4400, %v4479
  %v4481 = vpop.f32.mrb[0].mxu0
  %v4482 = vadd.f32 %v4402, %v4481
  %4483 = vdwg.mxu0
  %v4484 = vmax.f32 %v3365, %v3937
  %v4485 = vmax.f32 %v3366, %v3939
  %v4486 = vmax.f32 %v3367, %v4480
  %v4487 = vmax.f32 %v3368, %v4482
  %v4488 = vmax.f32 %v4484, 0.0
  %v4489 = vmax.f32 %v4485, 0.0
  %v4490 = vmax.f32 %v4486, 0.0
  %v4491 = vmax.f32 %v4487, 0.0
  %4492 = vst [vmem:[%s2] sm:$0x3f] %v4488
  %4493 = vst [vmem:[%s2 + $0x8] sm:$0x3f] %v4489
  %4494 = vst [vmem:[%s2 + $0x10] sm:$0x3f] %v4490
  %vm4495 = vcmask 62464
  %4496 = vst.msk [vmem:[%s2 + $0x18] sm:$0x3f] %vm4495, %v4491
  // Predicated region
  $region10: #{net_forward.3} parent=0 // pred_check
    _
  $region11: #{net_forward.3} parent=0 // pred_check_branch
    %4498 = sbr.rel (0) target = $region13
  $region12: #{net_forward.3} parent=0 // pred_region
    _
  $region13: #{net_forward.3} parent=0 // pred_fallthru
    _
  // Predicated region
  $region14: #{net_forward.3} parent=0 // pred_check
    _
  $region15: #{net_forward.3} parent=0 // pred_check_branch
    %4500 = sbr.rel (0) target = $region17
  $region16: #{net_forward.3} parent=0 // pred_region
    _
  $region17: #{net_forward.3} parent=0 // pred_fallthru
    _

// kernel: net_forward.4
$region0: #{net_forward.4}
  #allocation0 [shape = 'u32[]', space=smem, size = 0x4, offset = 0x4, fixed_abs, tag = 'smem constant byte address 0x4 - core index']
  #allocation1 [shape = 'u32[144,128]{1,0:T(1,128)}', space=vmem, size = 0x12000, scoped, tag = 'internal scratch']
  %s0 = inlined_call_operand.vmem [shape: f32[1,4,151,50], index: 0, kind: input, shape index: {}]
  %s1 = inlined_call_operand.vmem [shape: f32[16,151], index: 1, kind: input, shape index: {}]
  %s2 = inlined_call_operand.vmem [shape: f32[1,16,50], index: 2, kind: output, shape index: {}]
  %s3 = sld [smem:[#allocation0]]
  $region18: #{net_forward.4} parent=0
    _
  %s5 = ssub.s32 1, %s3
  %s6 = scalar_select 0, %s5, %s3
  // Predicated region
  $region2: #{net_forward.4} parent=0 // pred_check
    _
  $region3: #{net_forward.4} parent=0 // pred_check_branch
    %8 = sbr.rel (0) target = $region5
  $region4: #{net_forward.4} parent=0 // pred_region
    _
  $region5: #{net_forward.4} parent=0 // pred_fallthru
    _
  // Predicated region
  $region6: #{net_forward.4} parent=0 // pred_check
    _
  $region7: #{net_forward.4} parent=0 // pred_check_branch
    %10 = sbr.rel (0) target = $region9
  $region8: #{net_forward.4} parent=0 // pred_region
    _
  $region9: #{net_forward.4} parent=0 // pred_fallthru
    _
  %v11 = vld [vmem:[%s1] sm:$0xff]
  %v12 = vld [vmem:[%s1 + $0x8] sm:$0xff]
  %v13 = vld [vmem:[%s1 + $0x10] sm:$0xff]
  %v14 = vld [vmem:[%s1 + $0x18] sm:$0xff]
  %v15 = vld [vmem:[%s0] sm:$0xff]
  %v16 = vld [vmem:[%s0 + $0x8] sm:$0xff]
  %v17 = vld [vmem:[%s0 + $0x10] sm:$0xff]
  %v18 = vld [vmem:[%s0 + $0x18] sm:$0xff]
  %v19 = vld [vmem:[%s0 + $0x20] sm:$0xff]
  %v20 = vld [vmem:[%s0 + $0x28] sm:$0xff]
  %v21 = vld [vmem:[%s0 + $0x30] sm:$0xff]
  %v22 = vld [vmem:[%s0 + $0x38] sm:$0xff]
  %v23 = vld [vmem:[%s0 + $0x40] sm:$0xff]
  %v24 = vld [vmem:[%s0 + $0x48] sm:$0xff]
  %v25 = vld [vmem:[%s0 + $0x50] sm:$0xff]
  %v26 = vld [vmem:[%s0 + $0x58] sm:$0xff]
  %v27 = vld [vmem:[%s0 + $0x60] sm:$0xff]
  %v28 = vld [vmem:[%s0 + $0x68] sm:$0xff]
  %v29 = vld [vmem:[%s0 + $0x70] sm:$0xff]
  %v30 = vld [vmem:[%s0 + $0x78] sm:$0xff]
  %v31 = vld [vmem:[%s0 + $0x80] sm:$0xff]
  %v32 = vld [vmem:[%s0 + $0x88] sm:$0xff]
  %v33 = vld [vmem:[%s0 + $0x90] sm:$0x7f]
  %vm34 = vcmask 187392
  %v36 = vsel %vm34, %v12, 0
  %v39 = vsel %vm34, %v14, 0
  %vm41 = vcmask 1046528
  %v43 = vsel %vm41, %v33, 0
  %45 = vmatprep.subr.mxu0 0.0
  %v46 = vand.u32 %v15, 4294901760
  %47 = vmatpush1.msra.mxu0 %v46
  %48 = vmatprep.subr.mxu0 0.0
  %v49 = vand.u32 %v16, 4294901760
  %50 = vmatpush1.msra.mxu0 %v49
  %51 = vmatprep.subr.mxu0 0.0
  %v52 = vand.u32 %v17, 4294901760
  %53 = vmatpush1.msra.mxu0 %v52
  %54 = vmatprep.subr.mxu0 0.0
  %v55 = vand.u32 %v18, 4294901760
  %56 = vmatpush1.msra.mxu0 %v55
  %57 = vmatprep.subr.mxu0 0.0
  %v58 = vand.u32 %v19, 4294901760
  %59 = vmatpush1.msra.mxu0 %v58
  %60 = vmatprep.subr.mxu0 0.0
  %v61 = vand.u32 %v20, 4294901760
  %62 = vmatpush1.msra.mxu0 %v61
  %63 = vmatprep.subr.mxu0 0.0
  %v64 = vand.u32 %v21, 4294901760
  %65 = vmatpush1.msra.mxu0 %v64
  %66 = vmatprep.subr.mxu0 0.0
  %v67 = vand.u32 %v22, 4294901760
  %68 = vmatpush1.msra.mxu0 %v67
  %69 = vmatprep.subr.mxu0 0.0
  %v70 = vand.u32 %v23, 4294901760
  %71 = vmatpush1.msra.mxu0 %v70
  %72 = vmatprep.subr.mxu0 0.0
  %v73 = vand.u32 %v24, 4294901760
  %74 = vmatpush1.msra.mxu0 %v73
  %75 = vmatprep.subr.mxu0 0.0
  %v76 = vand.u32 %v25, 4294901760
  %77 = vmatpush1.msra.mxu0 %v76
  %78 = vmatprep.subr.mxu0 0.0
  %v79 = vand.u32 %v26, 4294901760
  %80 = vmatpush1.msra.mxu0 %v79
  %81 = vmatprep.subr.mxu0 0.0
  %v82 = vand.u32 %v27, 4294901760
  %83 = vmatpush1.msra.mxu0 %v82
  %84 = vmatprep.subr.mxu0 0.0
  %v85 = vand.u32 %v28, 4294901760
  %86 = vmatpush1.msra.mxu0 %v85
  %87 = vmatprep.subr.mxu0 0.0
  %v88 = vand.u32 %v29, 4294901760
  %89 = vmatpush1.msra.mxu0 %v88
  %90 = vmatprep.subr.mxu0 0.0
  %v91 = vand.u32 %v30, 4294901760
  %92 = vmatpush1.msra.mxu0 %v91
  %93 = vmatprep.subr.mxu0 0.0
  %v94 = vand.u32 %v31, 4294901760
  %95 = vmatpush1.msra.mxu0 %v94
  %96 = vmatprep.subr.mxu0 0.0
  %v97 = vand.u32 %v32, 4294901760
  %98 = vmatpush1.msra.mxu0 %v97
  %99 = vmatprep.subr.mxu0 0.0
  %v100 = vand.u32 %v43, 4294901760
  %101 = vmatpush1.msra.mxu0 %v100
  %102 = vmatprep.subr.mxu0 0.0
  %103 = vmatpush1.msra.mxu0 0.0
  %104 = vmatprep.subr.mxu0 0.0
  %105 = vmatpush1.msra.mxu0 0.0
  %106 = vmatprep.subr.mxu0 0.0
  %107 = vmatpush1.msra.mxu0 0.0
  %108 = vmatprep.subr.mxu0 0.0
  %109 = vmatpush1.msra.mxu0 0.0
  %110 = vmatprep.subr.mxu0 0.0
  %111 = vmatpush1.msra.mxu0 0.0
  %112 = vmatprep.subr.mxu0 0.0
  %113 = vmatpush1.msra.mxu0 0.0
  %114 = vmatprep.subr.mxu0 0.0
  %115 = vmatpush1.msra.mxu0 0.0
  %116 = vmatprep.subr.mxu0 0.0
  %117 = vmatpush1.msra.mxu0 0.0
  %118 = vmatprep.subr.mxu0 0.0
  %119 = vmatpush1.msra.mxu0 0.0
  %120 = vmatprep.subr.mxu0 0.0
  %121 = vmatpush1.msra.mxu0 0.0
  %122 = vmatprep.subr.mxu0 0.0
  %123 = vmatpush1.msra.mxu0 0.0
  %124 = vmatprep.subr.mxu0 0.0
  %125 = vmatpush1.msra.mxu0 0.0
  %126 = vmatprep.subr.mxu0 0.0
  %127 = vmatpush1.msra.mxu0 0.0
  %v128 = vand.u32 %v36, 4294901760
  %v129 = vsub.f32 %v36, %v128
  %v130 = vand.u32 %v129, 4294901760
  %v131 = vsub.f32 %v129, %v130
  %v132 = vand.u32 %v131, 4294901760
  %133 = vmatprep.mubr.f32.mxu0 %v132
  %v134 = vand.u32 %v11, 4294901760
  %v135 = vsub.f32 %v11, %v134
  %v136 = vand.u32 %v135, 4294901760
  %v137 = vsub.f32 %v135, %v136
  %v138 = vand.u32 %v137, 4294901760
  %139 = vmatmul.mubr.f32.gmra.mrb[0].mxu0 %v138
  %v140 = vpop.f32.mrb[0].mxu0
  %v141 = vadd.f32 0.0, %v140
  %v142 = vpop.f32.mrb[0].mxu0
  %v143 = vand.u32 %v39, 4294901760
  %v144 = vsub.f32 %v39, %v143
  %v145 = vand.u32 %v144, 4294901760
  %v146 = vsub.f32 %v144, %v145
  %v147 = vand.u32 %v146, 4294901760
  %148 = vmatprep.mubr.f32.mxu0 %v147
  %v149 = vand.u32 %v13, 4294901760
  %v150 = vsub.f32 %v13, %v149
  %v151 = vand.u32 %v150, 4294901760
  %v152 = vsub.f32 %v150, %v151
  %v153 = vand.u32 %v152, 4294901760
  %154 = vmatmul.mubr.f32.gmra.mrb[0].mxu0 %v153
  %v155 = vpop.f32.mrb[0].mxu0
  %v156 = vadd.f32 0.0, %v155
  %v157 = vpop.f32.mrb[0].mxu0
  %158 = vdwg.mxu0
  %159 = vmatprep.subr.mxu0 0.0
  %v160 = vand.u32 %v15, 4294901760
  %v161 = vsub.f32 %v15, %v160
  %v162 = vand.u32 %v161, 4294901760
  %v163 = vsub.f32 %v161, %v162
  %v164 = vand.u32 %v163, 4294901760
  %165 = vmatpush1.msra.mxu0 %v164
  %166 = vmatprep.subr.mxu0 0.0
  %v167 = vand.u32 %v16, 4294901760
  %v168 = vsub.f32 %v16, %v167
  %v169 = vand.u32 %v168, 4294901760
  %v170 = vsub.f32 %v168, %v169
  %v171 = vand.u32 %v170, 4294901760
  %172 = vmatpush1.msra.mxu0 %v171
  %173 = vmatprep.subr.mxu0 0.0
  %v174 = vand.u32 %v17, 4294901760
  %v175 = vsub.f32 %v17, %v174
  %v176 = vand.u32 %v175, 4294901760
  %v177 = vsub.f32 %v175, %v176
  %v178 = vand.u32 %v177, 4294901760
  %179 = vmatpush1.msra.mxu0 %v178
  %180 = vmatprep.subr.mxu0 0.0
  %v181 = vand.u32 %v18, 4294901760
  %v182 = vsub.f32 %v18, %v181
  %v183 = vand.u32 %v182, 4294901760
  %v184 = vsub.f32 %v182, %v183
  %v185 = vand.u32 %v184, 4294901760
  %186 = vmatpush1.msra.mxu0 %v185
  %187 = vmatprep.subr.mxu0 0.0
  %v188 = vand.u32 %v19, 4294901760
  %v189 = vsub.f32 %v19, %v188
  %v190 = vand.u32 %v189, 4294901760
  %v191 = vsub.f32 %v189, %v190
  %v192 = vand.u32 %v191, 4294901760
  %193 = vmatpush1.msra.mxu0 %v192
  %194 = vmatprep.subr.mxu0 0.0
  %v195 = vand.u32 %v20, 4294901760
  %v196 = vsub.f32 %v20, %v195
  %v197 = vand.u32 %v196, 4294901760
  %v198 = vsub.f32 %v196, %v197
  %v199 = vand.u32 %v198, 4294901760
  %200 = vmatpush1.msra.mxu0 %v199
  %201 = vmatprep.subr.mxu0 0.0
  %v202 = vand.u32 %v21, 4294901760
  %v203 = vsub.f32 %v21, %v202
  %v204 = vand.u32 %v203, 4294901760
  %v205 = vsub.f32 %v203, %v204
  %v206 = vand.u32 %v205, 4294901760
  %207 = vmatpush1.msra.mxu0 %v206
  %208 = vmatprep.subr.mxu0 0.0
  %v209 = vand.u32 %v22, 4294901760
  %v210 = vsub.f32 %v22, %v209
  %v211 = vand.u32 %v210, 4294901760
  %v212 = vsub.f32 %v210, %v211
  %v213 = vand.u32 %v212, 4294901760
  %214 = vmatpush1.msra.mxu0 %v213
  %215 = vmatprep.subr.mxu0 0.0
  %v216 = vand.u32 %v23, 4294901760
  %v217 = vsub.f32 %v23, %v216
  %v218 = vand.u32 %v217, 4294901760
  %v219 = vsub.f32 %v217, %v218
  %v220 = vand.u32 %v219, 4294901760
  %221 = vmatpush1.msra.mxu0 %v220
  %222 = vmatprep.subr.mxu0 0.0
  %v223 = vand.u32 %v24, 4294901760
  %v224 = vsub.f32 %v24, %v223
  %v225 = vand.u32 %v224, 4294901760
  %v226 = vsub.f32 %v224, %v225
  %v227 = vand.u32 %v226, 4294901760
  %228 = vmatpush1.msra.mxu0 %v227
  %229 = vmatprep.subr.mxu0 0.0
  %v230 = vand.u32 %v25, 4294901760
  %v231 = vsub.f32 %v25, %v230
  %v232 = vand.u32 %v231, 4294901760
  %v233 = vsub.f32 %v231, %v232
  %v234 = vand.u32 %v233, 4294901760
  %235 = vmatpush1.msra.mxu0 %v234
  %236 = vmatprep.subr.mxu0 0.0
  %v237 = vand.u32 %v26, 4294901760
  %v238 = vsub.f32 %v26, %v237
  %v239 = vand.u32 %v238, 4294901760
  %v240 = vsub.f32 %v238, %v239
  %v241 = vand.u32 %v240, 4294901760
  %242 = vmatpush1.msra.mxu0 %v241
  %243 = vmatprep.subr.mxu0 0.0
  %v244 = vand.u32 %v27, 4294901760
  %v245 = vsub.f32 %v27, %v244
  %v246 = vand.u32 %v245, 4294901760
  %v247 = vsub.f32 %v245, %v246
  %v248 = vand.u32 %v247, 4294901760
  %249 = vmatpush1.msra.mxu0 %v248
  %250 = vmatprep.subr.mxu0 0.0
  %v251 = vand.u32 %v28, 4294901760
  %v252 = vsub.f32 %v28, %v251
  %v253 = vand.u32 %v252, 4294901760
  %v254 = vsub.f32 %v252, %v253
  %v255 = vand.u32 %v254, 4294901760
  %256 = vmatpush1.msra.mxu0 %v255
  %257 = vmatprep.subr.mxu0 0.0
  %v258 = vand.u32 %v29, 4294901760
  %v259 = vsub.f32 %v29, %v258
  %v260 = vand.u32 %v259, 4294901760
  %v261 = vsub.f32 %v259, %v260
  %v262 = vand.u32 %v261, 4294901760
  %263 = vmatpush1.msra.mxu0 %v262
  %264 = vmatprep.subr.mxu0 0.0
  %v265 = vand.u32 %v30, 4294901760
  %v266 = vsub.f32 %v30, %v265
  %v267 = vand.u32 %v266, 4294901760
  %v268 = vsub.f32 %v266, %v267
  %v269 = vand.u32 %v268, 4294901760
  %270 = vmatpush1.msra.mxu0 %v269
  %271 = vmatprep.subr.mxu0 0.0
  %v272 = vand.u32 %v31, 4294901760
  %v273 = vsub.f32 %v31, %v272
  %v274 = vand.u32 %v273, 4294901760
  %v275 = vsub.f32 %v273, %v274
  %v276 = vand.u32 %v275, 4294901760
  %277 = vmatpush1.msra.mxu0 %v276
  %278 = vmatprep.subr.mxu0 0.0
  %v279 = vand.u32 %v32, 4294901760
  %v280 = vsub.f32 %v32, %v279
  %v281 = vand.u32 %v280, 4294901760
  %v282 = vsub.f32 %v280, %v281
  %v283 = vand.u32 %v282, 4294901760
  %284 = vmatpush1.msra.mxu0 %v283
  %285 = vmatprep.subr.mxu0 0.0
  %v286 = vand.u32 %v43, 4294901760
  %v287 = vsub.f32 %v43, %v286
  %v288 = vand.u32 %v287, 4294901760
  %v289 = vsub.f32 %v287, %v288
  %v290 = vand.u32 %v289, 4294901760
  %291 = vmatpush1.msra.mxu0 %v290
  %292 = vmatprep.subr.mxu0 0.0
  %293 = vmatpush1.msra.mxu0 0.0
  %294 = vmatprep.subr.mxu0 0.0
  %295 = vmatpush1.msra.mxu0 0.0
  %296 = vmatprep.subr.mxu0 0.0
  %297 = vmatpush1.msra.mxu0 0.0
  %298 = vmatprep.subr.mxu0 0.0
  %299 = vmatpush1.msra.mxu0 0.0
  %300 = vmatprep.subr.mxu0 0.0
  %301 = vmatpush1.msra.mxu0 0.0
  %302 = vmatprep.subr.mxu0 0.0
  %303 = vmatpush1.msra.mxu0 0.0
  %304 = vmatprep.subr.mxu0 0.0
  %305 = vmatpush1.msra.mxu0 0.0
  %306 = vmatprep.subr.mxu0 0.0
  %307 = vmatpush1.msra.mxu0 0.0
  %308 = vmatprep.subr.mxu0 0.0
  %309 = vmatpush1.msra.mxu0 0.0
  %310 = vmatprep.subr.mxu0 0.0
  %311 = vmatpush1.msra.mxu0 0.0
  %312 = vmatprep.subr.mxu0 0.0
  %313 = vmatpush1.msra.mxu0 0.0
  %314 = vmatprep.subr.mxu0 0.0
  %315 = vmatpush1.msra.mxu0 0.0
  %316 = vmatprep.subr.mxu0 0.0
  %317 = vmatpush1.msra.mxu0 0.0
  %v318 = vand.u32 %v36, 4294901760
  %319 = vmatprep.mubr.f32.mxu0 %v318
  %v320 = vand.u32 %v11, 4294901760
  %321 = vmatmul.mubr.f32.gmra.mrb[0].mxu0 %v320
  %v322 = vpop.f32.mrb[0].mxu0
  %v323 = vadd.f32 %v141, %v322
  %v324 = vpop.f32.mrb[0].mxu0
  %v325 = vand.u32 %v39, 4294901760
  %326 = vmatprep.mubr.f32.mxu0 %v325
  %v327 = vand.u32 %v13, 4294901760
  %328 = vmatmul.mubr.f32.gmra.mrb[0].mxu0 %v327
  %v329 = vpop.f32.mrb[0].mxu0
  %v330 = vadd.f32 %v156, %v329
  %v331 = vpop.f32.mrb[0].mxu0
  %332 = vdwg.mxu0
  %333 = vmatprep.subr.mxu0 0.0
  %v334 = vand.u32 %v15, 4294901760
  %v335 = vsub.f32 %v15, %v334
  %336 = vmatpush1.msra.mxu0 %v335
  %337 = vmatprep.subr.mxu0 0.0
  %v338 = vand.u32 %v16, 4294901760
  %v339 = vsub.f32 %v16, %v338
  %340 = vmatpush1.msra.mxu0 %v339
  %341 = vmatprep.subr.mxu0 0.0
  %v342 = vand.u32 %v17, 4294901760
  %v343 = vsub.f32 %v17, %v342
  %344 = vmatpush1.msra.mxu0 %v343
  %345 = vmatprep.subr.mxu0 0.0
  %v346 = vand.u32 %v18, 4294901760
  %v347 = vsub.f32 %v18, %v346
  %348 = vmatpush1.msra.mxu0 %v347
  %349 = vmatprep.subr.mxu0 0.0
  %v350 = vand.u32 %v19, 4294901760
  %v351 = vsub.f32 %v19, %v350
  %352 = vmatpush1.msra.mxu0 %v351
  %353 = vmatprep.subr.mxu0 0.0
  %v354 = vand.u32 %v20, 4294901760
  %v355 = vsub.f32 %v20, %v354
  %356 = vmatpush1.msra.mxu0 %v355
  %357 = vmatprep.subr.mxu0 0.0
  %v358 = vand.u32 %v21, 4294901760
  %v359 = vsub.f32 %v21, %v358
  %360 = vmatpush1.msra.mxu0 %v359
  %361 = vmatprep.subr.mxu0 0.0
  %v362 = vand.u32 %v22, 4294901760
  %v363 = vsub.f32 %v22, %v362
  %364 = vmatpush1.msra.mxu0 %v363
  %365 = vmatprep.subr.mxu0 0.0
  %v366 = vand.u32 %v23, 4294901760
  %v367 = vsub.f32 %v23, %v366
  %368 = vmatpush1.msra.mxu0 %v367
  %369 = vmatprep.subr.mxu0 0.0
  %v370 = vand.u32 %v24, 4294901760
  %v371 = vsub.f32 %v24, %v370
  %372 = vmatpush1.msra.mxu0 %v371
  %373 = vmatprep.subr.mxu0 0.0
  %v374 = vand.u32 %v25, 4294901760
  %v375 = vsub.f32 %v25, %v374
  %376 = vmatpush1.msra.mxu0 %v375
  %377 = vmatprep.subr.mxu0 0.0
  %v378 = vand.u32 %v26, 4294901760
  %v379 = vsub.f32 %v26, %v378
  %380 = vmatpush1.msra.mxu0 %v379
  %381 = vmatprep.subr.mxu0 0.0
  %v382 = vand.u32 %v27, 4294901760
  %v383 = vsub.f32 %v27, %v382
  %384 = vmatpush1.msra.mxu0 %v383
  %385 = vmatprep.subr.mxu0 0.0
  %v386 = vand.u32 %v28, 4294901760
  %v387 = vsub.f32 %v28, %v386
  %388 = vmatpush1.msra.mxu0 %v387
  %389 = vmatprep.subr.mxu0 0.0
  %v390 = vand.u32 %v29, 4294901760
  %v391 = vsub.f32 %v29, %v390
  %392 = vmatpush1.msra.mxu0 %v391
  %393 = vmatprep.subr.mxu0 0.0
  %v394 = vand.u32 %v30, 4294901760
  %v395 = vsub.f32 %v30, %v394
  %396 = vmatpush1.msra.mxu0 %v395
  %397 = vmatprep.subr.mxu0 0.0
  %v398 = vand.u32 %v31, 4294901760
  %v399 = vsub.f32 %v31, %v398
  %400 = vmatpush1.msra.mxu0 %v399
  %401 = vmatprep.subr.mxu0 0.0
  %v402 = vand.u32 %v32, 4294901760
  %v403 = vsub.f32 %v32, %v402
  %404 = vmatpush1.msra.mxu0 %v403
  %405 = vmatprep.subr.mxu0 0.0
  %v406 = vand.u32 %v43, 4294901760
  %v407 = vsub.f32 %v43, %v406
  %408 = vmatpush1.msra.mxu0 %v407
  %409 = vmatprep.subr.mxu0 0.0
  %410 = vmatpush1.msra.mxu0 0.0
  %411 = vmatprep.subr.mxu0 0.0
  %412 = vmatpush1.msra.mxu0 0.0
  %413 = vmatprep.subr.mxu0 0.0
  %414 = vmatpush1.msra.mxu0 0.0
  %415 = vmatprep.subr.mxu0 0.0
  %416 = vmatpush1.msra.mxu0 0.0
  %417 = vmatprep.subr.mxu0 0.0
  %418 = vmatpush1.msra.mxu0 0.0
  %419 = vmatprep.subr.mxu0 0.0
  %420 = vmatpush1.msra.mxu0 0.0
  %421 = vmatprep.subr.mxu0 0.0
  %422 = vmatpush1.msra.mxu0 0.0
  %423 = vmatprep.subr.mxu0 0.0
  %424 = vmatpush1.msra.mxu0 0.0
  %425 = vmatprep.subr.mxu0 0.0
  %426 = vmatpush1.msra.mxu0 0.0
  %427 = vmatprep.subr.mxu0 0.0
  %428 = vmatpush1.msra.mxu0 0.0
  %429 = vmatprep.subr.mxu0 0.0
  %430 = vmatpush1.msra.mxu0 0.0
  %431 = vmatprep.subr.mxu0 0.0
  %432 = vmatpush1.msra.mxu0 0.0
  %433 = vmatprep.subr.mxu0 0.0
  %434 = vmatpush1.msra.mxu0 0.0
  %v435 = vand.u32 %v36, 4294901760
  %v436 = vsub.f32 %v36, %v435
  %437 = vmatprep.mubr.f32.mxu0 %v436
  %v438 = vand.u32 %v11, 4294901760
  %v439 = vsub.f32 %v11, %v438
  %440 = vmatmul.mubr.f32.gmra.mrb[0].mxu0 %v439
  %v441 = vpop.f32.mrb[0].mxu0
  %v442 = vadd.f32 %v323, %v441
  %v443 = vpop.f32.mrb[0].mxu0
  %v444 = vand.u32 %v39, 4294901760
  %v445 = vsub.f32 %v39, %v444
  %446 = vmatprep.mubr.f32.mxu0 %v445
  %v447 = vand.u32 %v13, 4294901760
  %v448 = vsub.f32 %v13, %v447
  %449 = vmatmul.mubr.f32.gmra.mrb[0].mxu0 %v448
  %v450 = vpop.f32.mrb[0].mxu0
  %v451 = vadd.f32 %v330, %v450
  %v452 = vpop.f32.mrb[0].mxu0
  %453 = vdwg.mxu0
  %454 = vmatprep.subr.mxu0 0.0
  %v455 = vand.u32 %v15, 4294901760
  %456 = vmatpush1.msra.mxu0 %v455
  %457 = vmatprep.subr.mxu0 0.0
  %v458 = vand.u32 %v16, 4294901760
  %459 = vmatpush1.msra.mxu0 %v458
  %460 = vmatprep.subr.mxu0 0.0
  %v461 = vand.u32 %v17, 4294901760
  %462 = vmatpush1.msra.mxu0 %v461
  %463 = vmatprep.subr.mxu0 0.0
  %v464 = vand.u32 %v18, 4294901760
  %465 = vmatpush1.msra.mxu0 %v464
  %466 = vmatprep.subr.mxu0 0.0
  %v467 = vand.u32 %v19, 4294901760
  %468 = vmatpush1.msra.mxu0 %v467
  %469 = vmatprep.subr.mxu0 0.0
  %v470 = vand.u32 %v20, 4294901760
  %471 = vmatpush1.msra.mxu0 %v470
  %472 = vmatprep.subr.mxu0 0.0
  %v473 = vand.u32 %v21, 4294901760
  %474 = vmatpush1.msra.mxu0 %v473
  %475 = vmatprep.subr.mxu0 0.0
  %v476 = vand.u32 %v22, 4294901760
  %477 = vmatpush1.msra.mxu0 %v476
  %478 = vmatprep.subr.mxu0 0.0
  %v479 = vand.u32 %v23, 4294901760
  %480 = vmatpush1.msra.mxu0 %v479
  %481 = vmatprep.subr.mxu0 0.0
  %v482 = vand.u32 %v24, 4294901760
  %483 = vmatpush1.msra.mxu0 %v482
  %484 = vmatprep.subr.mxu0 0.0
  %v485 = vand.u32 %v25, 4294901760
  %486 = vmatpush1.msra.mxu0 %v485
  %487 = vmatprep.subr.mxu0 0.0
  %v488 = vand.u32 %v26, 4294901760
  %489 = vmatpush1.msra.mxu0 %v488
  %490 = vmatprep.subr.mxu0 0.0
  %v491 = vand.u32 %v27, 4294901760
  %492 = vmatpush1.msra.mxu0 %v491
  %493 = vmatprep.subr.mxu0 0.0
  %v494 = vand.u32 %v28, 4294901760
  %495 = vmatpush1.msra.mxu0 %v494
  %496 = vmatprep.subr.mxu0 0.0
  %v497 = vand.u32 %v29, 4294901760
  %498 = vmatpush1.msra.mxu0 %v497
  %499 = vmatprep.subr.mxu0 0.0
  %v500 = vand.u32 %v30, 4294901760
  %501 = vmatpush1.msra.mxu0 %v500
  %502 = vmatprep.subr.mxu0 0.0
  %v503 = vand.u32 %v31, 4294901760
  %504 = vmatpush1.msra.mxu0 %v503
  %505 = vmatprep.subr.mxu0 0.0
  %v506 = vand.u32 %v32, 4294901760
  %507 = vmatpush1.msra.mxu0 %v506
  %508 = vmatprep.subr.mxu0 0.0
  %v509 = vand.u32 %v43, 4294901760
  %510 = vmatpush1.msra.mxu0 %v509
  %511 = vmatprep.subr.mxu0 0.0
  %512 = vmatpush1.msra.mxu0 0.0
  %513 = vmatprep.subr.mxu0 0.0
  %514 = vmatpush1.msra.mxu0 0.0
  %515 = vmatprep.subr.mxu0 0.0
  %516 = vmatpush1.msra.mxu0 0.0
  %517 = vmatprep.subr.mxu0 0.0
  %518 = vmatpush1.msra.mxu0 0.0
  %519 = vmatprep.subr.mxu0 0.0
  %520 = vmatpush1.msra.mxu0 0.0
  %521 = vmatprep.subr.mxu0 0.0
  %522 = vmatpush1.msra.mxu0 0.0
  %523 = vmatprep.subr.mxu0 0.0
  %524 = vmatpush1.msra.mxu0 0.0
  %525 = vmatprep.subr.mxu0 0.0
  %526 = vmatpush1.msra.mxu0 0.0
  %527 = vmatprep.subr.mxu0 0.0
  %528 = vmatpush1.msra.mxu0 0.0
  %529 = vmatprep.subr.mxu0 0.0
  %530 = vmatpush1.msra.mxu0 0.0
  %531 = vmatprep.subr.mxu0 0.0
  %532 = vmatpush1.msra.mxu0 0.0
  %533 = vmatprep.subr.mxu0 0.0
  %534 = vmatpush1.msra.mxu0 0.0
  %535 = vmatprep.subr.mxu0 0.0
  %536 = vmatpush1.msra.mxu0 0.0
  %v537 = vand.u32 %v36, 4294901760
  %v538 = vsub.f32 %v36, %v537
  %v539 = vand.u32 %v538, 4294901760
  %540 = vmatprep.mubr.f32.mxu0 %v539
  %v541 = vand.u32 %v11, 4294901760
  %v542 = vsub.f32 %v11, %v541
  %v543 = vand.u32 %v542, 4294901760
  %544 = vmatmul.mubr.f32.gmra.mrb[0].mxu0 %v543
  %v545 = vpop.f32.mrb[0].mxu0
  %v546 = vadd.f32 %v442, %v545
  %v547 = vpop.f32.mrb[0].mxu0
  %v548 = vand.u32 %v39, 4294901760
  %v549 = vsub.f32 %v39, %v548
  %v550 = vand.u32 %v549, 4294901760
  %551 = vmatprep.mubr.f32.mxu0 %v550
  %v552 = vand.u32 %v13, 4294901760
  %v553 = vsub.f32 %v13, %v552
  %v554 = vand.u32 %v553, 4294901760
  %555 = vmatmul.mubr.f32.gmra.mrb[0].mxu0 %v554
  %v556 = vpop.f32.mrb[0].mxu0
  %v557 = vadd.f32 %v451, %v556
  %v558 = vpop.f32.mrb[0].mxu0
  %559 = vdwg.mxu0
  %560 = vmatprep.subr.mxu0 0.0
  %v561 = vand.u32 %v15, 4294901760
  %v562 = vsub.f32 %v15, %v561
  %v563 = vand.u32 %v562, 4294901760
  %564 = vmatpush1.msra.mxu0 %v563
  %565 = vmatprep.subr.mxu0 0.0
  %v566 = vand.u32 %v16, 4294901760
  %v567 = vsub.f32 %v16, %v566
  %v568 = vand.u32 %v567, 4294901760
  %569 = vmatpush1.msra.mxu0 %v568
  %570 = vmatprep.subr.mxu0 0.0
  %v571 = vand.u32 %v17, 4294901760
  %v572 = vsub.f32 %v17, %v571
  %v573 = vand.u32 %v572, 4294901760
  %574 = vmatpush1.msra.mxu0 %v573
  %575 = vmatprep.subr.mxu0 0.0
  %v576 = vand.u32 %v18, 4294901760
  %v577 = vsub.f32 %v18, %v576
  %v578 = vand.u32 %v577, 4294901760
  %579 = vmatpush1.msra.mxu0 %v578
  %580 = vmatprep.subr.mxu0 0.0
  %v581 = vand.u32 %v19, 4294901760
  %v582 = vsub.f32 %v19, %v581
  %v583 = vand.u32 %v582, 4294901760
  %584 = vmatpush1.msra.mxu0 %v583
  %585 = vmatprep.subr.mxu0 0.0
  %v586 = vand.u32 %v20, 4294901760
  %v587 = vsub.f32 %v20, %v586
  %v588 = vand.u32 %v587, 4294901760
  %589 = vmatpush1.msra.mxu0 %v588
  %590 = vmatprep.subr.mxu0 0.0
  %v591 = vand.u32 %v21, 4294901760
  %v592 = vsub.f32 %v21, %v591
  %v593 = vand.u32 %v592, 4294901760
  %594 = vmatpush1.msra.mxu0 %v593
  %595 = vmatprep.subr.mxu0 0.0
  %v596 = vand.u32 %v22, 4294901760
  %v597 = vsub.f32 %v22, %v596
  %v598 = vand.u32 %v597, 4294901760
  %599 = vmatpush1.msra.mxu0 %v598
  %600 = vmatprep.subr.mxu0 0.0
  %v601 = vand.u32 %v23, 4294901760
  %v602 = vsub.f32 %v23, %v601
  %v603 = vand.u32 %v602, 4294901760
  %604 = vmatpush1.msra.mxu0 %v603
  %605 = vmatprep.subr.mxu0 0.0
  %v606 = vand.u32 %v24, 4294901760
  %v607 = vsub.f32 %v24, %v606
  %v608 = vand.u32 %v607, 4294901760
  %609 = vmatpush1.msra.mxu0 %v608
  %610 = vmatprep.subr.mxu0 0.0
  %v611 = vand.u32 %v25, 4294901760
  %v612 = vsub.f32 %v25, %v611
  %v613 = vand.u32 %v612, 4294901760
  %614 = vmatpush1.msra.mxu0 %v613
  %615 = vmatprep.subr.mxu0 0.0
  %v616 = vand.u32 %v26, 4294901760
  %v617 = vsub.f32 %v26, %v616
  %v618 = vand.u32 %v617, 4294901760
  %619 = vmatpush1.msra.mxu0 %v618
  %620 = vmatprep.subr.mxu0 0.0
  %v621 = vand.u32 %v27, 4294901760
  %v622 = vsub.f32 %v27, %v621
  %v623 = vand.u32 %v622, 4294901760
  %624 = vmatpush1.msra.mxu0 %v623
  %625 = vmatprep.subr.mxu0 0.0
  %v626 = vand.u32 %v28, 4294901760
  %v627 = vsub.f32 %v28, %v626
  %v628 = vand.u32 %v627, 4294901760
  %629 = vmatpush1.msra.mxu0 %v628
  %630 = vmatprep.subr.mxu0 0.0
  %v631 = vand.u32 %v29, 4294901760
  %v632 = vsub.f32 %v29, %v631
  %v633 = vand.u32 %v632, 4294901760
  %634 = vmatpush1.msra.mxu0 %v633
  %635 = vmatprep.subr.mxu0 0.0
  %v636 = vand.u32 %v30, 4294901760
  %v637 = vsub.f32 %v30, %v636
  %v638 = vand.u32 %v637, 4294901760
  %639 = vmatpush1.msra.mxu0 %v638
  %640 = vmatprep.subr.mxu0 0.0
  %v641 = vand.u32 %v31, 4294901760
  %v642 = vsub.f32 %v31, %v641
  %v643 = vand.u32 %v642, 4294901760
  %644 = vmatpush1.msra.mxu0 %v643
  %645 = vmatprep.subr.mxu0 0.0
  %v646 = vand.u32 %v32, 4294901760
  %v647 = vsub.f32 %v32, %v646
  %v648 = vand.u32 %v647, 4294901760
  %649 = vmatpush1.msra.mxu0 %v648
  %650 = vmatprep.subr.mxu0 0.0
  %v651 = vand.u32 %v43, 4294901760
  %v652 = vsub.f32 %v43, %v651
  %v653 = vand.u32 %v652, 4294901760
  %654 = vmatpush1.msra.mxu0 %v653
  %655 = vmatprep.subr.mxu0 0.0
  %656 = vmatpush1.msra.mxu0 0.0
  %657 = vmatprep.subr.mxu0 0.0
  %658 = vmatpush1.msra.mxu0 0.0
  %659 = vmatprep.subr.mxu0 0.0
  %660 = vmatpush1.msra.mxu0 0.0
  %661 = vmatprep.subr.mxu0 0.0
  %662 = vmatpush1.msra.mxu0 0.0
  %663 = vmatprep.subr.mxu0 0.0
  %664 = vmatpush1.msra.mxu0 0.0
  %665 = vmatprep.subr.mxu0 0.0
  %666 = vmatpush1.msra.mxu0 0.0
  %667 = vmatprep.subr.mxu0 0.0
  %668 = vmatpush1.msra.mxu0 0.0
  %669 = vmatprep.subr.mxu0 0.0
  %670 = vmatpush1.msra.mxu0 0.0
  %671 = vmatprep.subr.mxu0 0.0
  %672 = vmatpush1.msra.mxu0 0.0
  %673 = vmatprep.subr.mxu0 0.0
  %674 = vmatpush1.msra.mxu0 0.0
  %675 = vmatprep.subr.mxu0 0.0
  %676 = vmatpush1.msra.mxu0 0.0
  %677 = vmatprep.subr.mxu0 0.0
  %678 = vmatpush1.msra.mxu0 0.0
  %679 = vmatprep.subr.mxu0 0.0
  %680 = vmatpush1.msra.mxu0 0.0
  %v681 = vand.u32 %v36, 4294901760
  %682 = vmatprep.mubr.f32.mxu0 %v681
  %v683 = vand.u32 %v11, 4294901760
  %684 = vmatmul.mubr.f32.gmra.mrb[0].mxu0 %v683
  %v685 = vpop.f32.mrb[0].mxu0
  %v686 = vadd.f32 %v546, %v685
  %v687 = vpop.f32.mrb[0].mxu0
  %v688 = vand.u32 %v39, 4294901760
  %689 = vmatprep.mubr.f32.mxu0 %v688
  %v690 = vand.u32 %v13, 4294901760
  %691 = vmatmul.mubr.f32.gmra.mrb[0].mxu0 %v690
  %v692 = vpop.f32.mrb[0].mxu0
  %v693 = vadd.f32 %v557, %v692
  %v694 = vpop.f32.mrb[0].mxu0
  %695 = vdwg.mxu0
  %696 = vmatprep.subr.mxu0 0.0
  %v697 = vand.u32 %v15, 4294901760
  %698 = vmatpush1.msra.mxu0 %v697
  %699 = vmatprep.subr.mxu0 0.0
  %v700 = vand.u32 %v16, 4294901760
  %701 = vmatpush1.msra.mxu0 %v700
  %702 = vmatprep.subr.mxu0 0.0
  %v703 = vand.u32 %v17, 4294901760
  %704 = vmatpush1.msra.mxu0 %v703
  %705 = vmatprep.subr.mxu0 0.0
  %v706 = vand.u32 %v18, 4294901760
  %707 = vmatpush1.msra.mxu0 %v706
  %708 = vmatprep.subr.mxu0 0.0
  %v709 = vand.u32 %v19, 4294901760
  %710 = vmatpush1.msra.mxu0 %v709
  %711 = vmatprep.subr.mxu0 0.0
  %v712 = vand.u32 %v20, 4294901760
  %713 = vmatpush1.msra.mxu0 %v712
  %714 = vmatprep.subr.mxu0 0.0
  %v715 = vand.u32 %v21, 4294901760
  %716 = vmatpush1.msra.mxu0 %v715
  %717 = vmatprep.subr.mxu0 0.0
  %v718 = vand.u32 %v22, 4294901760
  %719 = vmatpush1.msra.mxu0 %v718
  %720 = vmatprep.subr.mxu0 0.0
  %v721 = vand.u32 %v23, 4294901760
  %722 = vmatpush1.msra.mxu0 %v721
  %723 = vmatprep.subr.mxu0 0.0
  %v724 = vand.u32 %v24, 4294901760
  %725 = vmatpush1.msra.mxu0 %v724
  %726 = vmatprep.subr.mxu0 0.0
  %v727 = vand.u32 %v25, 4294901760
  %728 = vmatpush1.msra.mxu0 %v727
  %729 = vmatprep.subr.mxu0 0.0
  %v730 = vand.u32 %v26, 4294901760
  %731 = vmatpush1.msra.mxu0 %v730
  %732 = vmatprep.subr.mxu0 0.0
  %v733 = vand.u32 %v27, 4294901760
  %734 = vmatpush1.msra.mxu0 %v733
  %735 = vmatprep.subr.mxu0 0.0
  %v736 = vand.u32 %v28, 4294901760
  %737 = vmatpush1.msra.mxu0 %v736
  %738 = vmatprep.subr.mxu0 0.0
  %v739 = vand.u32 %v29, 4294901760
  %740 = vmatpush1.msra.mxu0 %v739
  %741 = vmatprep.subr.mxu0 0.0
  %v742 = vand.u32 %v30, 4294901760
  %743 = vmatpush1.msra.mxu0 %v742
  %744 = vmatprep.subr.mxu0 0.0
  %v745 = vand.u32 %v31, 4294901760
  %746 = vmatpush1.msra.mxu0 %v745
  %747 = vmatprep.subr.mxu0 0.0
  %v748 = vand.u32 %v32, 4294901760
  %749 = vmatpush1.msra.mxu0 %v748
  %750 = vmatprep.subr.mxu0 0.0
  %v751 = vand.u32 %v43, 4294901760
  %752 = vmatpush1.msra.mxu0 %v751
  %753 = vmatprep.subr.mxu0 0.0
  %754 = vmatpush1.msra.mxu0 0.0
  %755 = vmatprep.subr.mxu0 0.0
  %756 = vmatpush1.msra.mxu0 0.0
  %757 = vmatprep.subr.mxu0 0.0
  %758 = vmatpush1.msra.mxu0 0.0
  %759 = vmatprep.subr.mxu0 0.0
  %760 = vmatpush1.msra.mxu0 0.0
  %761 = vmatprep.subr.mxu0 0.0
  %762 = vmatpush1.msra.mxu0 0.0
  %763 = vmatprep.subr.mxu0 0.0
  %764 = vmatpush1.msra.mxu0 0.0
  %765 = vmatprep.subr.mxu0 0.0
  %766 = vmatpush1.msra.mxu0 0.0
  %767 = vmatprep.subr.mxu0 0.0
  %768 = vmatpush1.msra.mxu0 0.0
  %769 = vmatprep.subr.mxu0 0.0
  %770 = vmatpush1.msra.mxu0 0.0
  %771 = vmatprep.subr.mxu0 0.0
  %772 = vmatpush1.msra.mxu0 0.0
  %773 = vmatprep.subr.mxu0 0.0
  %774 = vmatpush1.msra.mxu0 0.0
  %775 = vmatprep.subr.mxu0 0.0
  %776 = vmatpush1.msra.mxu0 0.0
  %777 = vmatprep.subr.mxu0 0.0
  %778 = vmatpush1.msra.mxu0 0.0
  %v779 = vand.u32 %v36, 4294901760
  %780 = vmatprep.mubr.f32.mxu0 %v779
  %v781 = vand.u32 %v11, 4294901760
  %782 = vmatmul.mubr.f32.gmra.mrb[0].mxu0 %v781
  %v783 = vpop.f32.mrb[0].mxu0
  %v784 = vadd.f32 %v686, %v783
  %v785 = vpop.f32.mrb[0].mxu0
  %v786 = vand.u32 %v39, 4294901760
  %787 = vmatprep.mubr.f32.mxu0 %v786
  %v788 = vand.u32 %v13, 4294901760
  %789 = vmatmul.mubr.f32.gmra.mrb[0].mxu0 %v788
  %v790 = vpop.f32.mrb[0].mxu0
  %v791 = vadd.f32 %v693, %v790
  %v792 = vpop.f32.mrb[0].mxu0
  %793 = vdwg.mxu0
  %s794 = scalar_lea.vmem %s0, 152
  %v795 = vld [vmem:[%s794] sm:$0xff]
  %v796 = vld [vmem:[%s794 + $0x8] sm:$0xff]
  %v797 = vld [vmem:[%s794 + $0x10] sm:$0xff]
  %v798 = vld [vmem:[%s794 + $0x18] sm:$0xff]
  %v799 = vld [vmem:[%s794 + $0x20] sm:$0xff]
  %v800 = vld [vmem:[%s794 + $0x28] sm:$0xff]
  %v801 = vld [vmem:[%s794 + $0x30] sm:$0xff]
  %v802 = vld [vmem:[%s794 + $0x38] sm:$0xff]
  %v803 = vld [vmem:[%s794 + $0x40] sm:$0xff]
  %v804 = vld [vmem:[%s794 + $0x48] sm:$0xff]
  %v805 = vld [vmem:[%s794 + $0x50] sm:$0xff]
  %v806 = vld [vmem:[%s794 + $0x58] sm:$0xff]
  %v807 = vld [vmem:[%s794 + $0x60] sm:$0xff]
  %v808 = vld [vmem:[%s794 + $0x68] sm:$0xff]
  %v809 = vld [vmem:[%s794 + $0x70] sm:$0xff]
  %v810 = vld [vmem:[%s794 + $0x78] sm:$0xff]
  %v811 = vld [vmem:[%s794 + $0x80] sm:$0xff]
  %v812 = vld [vmem:[%s794 + $0x88] sm:$0xff]
  %v813 = vld [vmem:[%s794 + $0x90] sm:$0x7f]
  %v815 = vsel %vm41, %v813, 0
  %817 = vmatprep.subr.mxu0 0.0
  %v818 = vand.u32 %v795, 4294901760
  %819 = vmatpush1.msra.mxu0 %v818
  %820 = vmatprep.subr.mxu0 0.0
  %v821 = vand.u32 %v796, 4294901760
  %822 = vmatpush1.msra.mxu0 %v821
  %823 = vmatprep.subr.mxu0 0.0
  %v824 = vand.u32 %v797, 4294901760
  %825 = vmatpush1.msra.mxu0 %v824
  %826 = vmatprep.subr.mxu0 0.0
  %v827 = vand.u32 %v798, 4294901760
  %828 = vmatpush1.msra.mxu0 %v827
  %829 = vmatprep.subr.mxu0 0.0
  %v830 = vand.u32 %v799, 4294901760
  %831 = vmatpush1.msra.mxu0 %v830
  %832 = vmatprep.subr.mxu0 0.0
  %v833 = vand.u32 %v800, 4294901760
  %834 = vmatpush1.msra.mxu0 %v833
  %835 = vmatprep.subr.mxu0 0.0
  %v836 = vand.u32 %v801, 4294901760
  %837 = vmatpush1.msra.mxu0 %v836
  %838 = vmatprep.subr.mxu0 0.0
  %v839 = vand.u32 %v802, 4294901760
  %840 = vmatpush1.msra.mxu0 %v839
  %841 = vmatprep.subr.mxu0 0.0
  %v842 = vand.u32 %v803, 4294901760
  %843 = vmatpush1.msra.mxu0 %v842
  %844 = vmatprep.subr.mxu0 0.0
  %v845 = vand.u32 %v804, 4294901760
  %846 = vmatpush1.msra.mxu0 %v845
  %847 = vmatprep.subr.mxu0 0.0
  %v848 = vand.u32 %v805, 4294901760
  %849 = vmatpush1.msra.mxu0 %v848
  %850 = vmatprep.subr.mxu0 0.0
  %v851 = vand.u32 %v806, 4294901760
  %852 = vmatpush1.msra.mxu0 %v851
  %853 = vmatprep.subr.mxu0 0.0
  %v854 = vand.u32 %v807, 4294901760
  %855 = vmatpush1.msra.mxu0 %v854
  %856 = vmatprep.subr.mxu0 0.0
  %v857 = vand.u32 %v808, 4294901760
  %858 = vmatpush1.msra.mxu0 %v857
  %859 = vmatprep.subr.mxu0 0.0
  %v860 = vand.u32 %v809, 4294901760
  %861 = vmatpush1.msra.mxu0 %v860
  %862 = vmatprep.subr.mxu0 0.0
  %v863 = vand.u32 %v810, 4294901760
  %864 = vmatpush1.msra.mxu0 %v863
  %865 = vmatprep.subr.mxu0 0.0
  %v866 = vand.u32 %v811, 4294901760
  %867 = vmatpush1.msra.mxu0 %v866
  %868 = vmatprep.subr.mxu0 0.0
  %v869 = vand.u32 %v812, 4294901760
  %870 = vmatpush1.msra.mxu0 %v869
  %871 = vmatprep.subr.mxu0 0.0
  %v872 = vand.u32 %v815, 4294901760
  %873 = vmatpush1.msra.mxu0 %v872
  %874 = vmatprep.subr.mxu0 0.0
  %875 = vmatpush1.msra.mxu0 0.0
  %876 = vmatprep.subr.mxu0 0.0
  %877 = vmatpush1.msra.mxu0 0.0
  %878 = vmatprep.subr.mxu0 0.0
  %879 = vmatpush1.msra.mxu0 0.0
  %880 = vmatprep.subr.mxu0 0.0
  %881 = vmatpush1.msra.mxu0 0.0
  %882 = vmatprep.subr.mxu0 0.0
  %883 = vmatpush1.msra.mxu0 0.0
  %884 = vmatprep.subr.mxu0 0.0
  %885 = vmatpush1.msra.mxu0 0.0
  %886 = vmatprep.subr.mxu0 0.0
  %887 = vmatpush1.msra.mxu0 0.0
  %888 = vmatprep.subr.mxu0 0.0
  %889 = vmatpush1.msra.mxu0 0.0
  %890 = vmatprep.subr.mxu0 0.0
  %891 = vmatpush1.msra.mxu0 0.0
  %892 = vmatprep.subr.mxu0 0.0
  %893 = vmatpush1.msra.mxu0 0.0
  %894 = vmatprep.subr.mxu0 0.0
  %895 = vmatpush1.msra.mxu0 0.0
  %896 = vmatprep.subr.mxu0 0.0
  %897 = vmatpush1.msra.mxu0 0.0
  %898 = vmatprep.subr.mxu0 0.0
  %899 = vmatpush1.msra.mxu0 0.0
  %v900 = vand.u32 %v36, 4294901760
  %v901 = vsub.f32 %v36, %v900
  %v902 = vand.u32 %v901, 4294901760
  %v903 = vsub.f32 %v901, %v902
  %v904 = vand.u32 %v903, 4294901760
  %905 = vmatprep.mubr.f32.mxu0 %v904
  %v906 = vand.u32 %v11, 4294901760
  %v907 = vsub.f32 %v11, %v906
  %v908 = vand.u32 %v907, 4294901760
  %v909 = vsub.f32 %v907, %v908
  %v910 = vand.u32 %v909, 4294901760
  %911 = vmatmul.mubr.f32.gmra.mrb[0].mxu0 %v910
  %v912 = vpop.f32.mrb[0].mxu0
  %v913 = vadd.f32 0.0, %v912
  %v914 = vpop.f32.mrb[0].mxu0
  %v915 = vand.u32 %v39, 4294901760
  %v916 = vsub.f32 %v39, %v915
  %v917 = vand.u32 %v916, 4294901760
  %v918 = vsub.f32 %v916, %v917
  %v919 = vand.u32 %v918, 4294901760
  %920 = vmatprep.mubr.f32.mxu0 %v919
  %v921 = vand.u32 %v13, 4294901760
  %v922 = vsub.f32 %v13, %v921
  %v923 = vand.u32 %v922, 4294901760
  %v924 = vsub.f32 %v922, %v923
  %v925 = vand.u32 %v924, 4294901760
  %926 = vmatmul.mubr.f32.gmra.mrb[0].mxu0 %v925
  %v927 = vpop.f32.mrb[0].mxu0
  %v928 = vadd.f32 0.0, %v927
  %v929 = vpop.f32.mrb[0].mxu0
  %930 = vdwg.mxu0
  %931 = vmatprep.subr.mxu0 0.0
  %v932 = vand.u32 %v795, 4294901760
  %v933 = vsub.f32 %v795, %v932
  %v934 = vand.u32 %v933, 4294901760
  %v935 = vsub.f32 %v933, %v934
  %v936 = vand.u32 %v935, 4294901760
  %937 = vmatpush1.msra.mxu0 %v936
  %938 = vmatprep.subr.mxu0 0.0
  %v939 = vand.u32 %v796, 4294901760
  %v940 = vsub.f32 %v796, %v939
  %v941 = vand.u32 %v940, 4294901760
  %v942 = vsub.f32 %v940, %v941
  %v943 = vand.u32 %v942, 4294901760
  %944 = vmatpush1.msra.mxu0 %v943
  %945 = vmatprep.subr.mxu0 0.0
  %v946 = vand.u32 %v797, 4294901760
  %v947 = vsub.f32 %v797, %v946
  %v948 = vand.u32 %v947, 4294901760
  %v949 = vsub.f32 %v947, %v948
  %v950 = vand.u32 %v949, 4294901760
  %951 = vmatpush1.msra.mxu0 %v950
  %952 = vmatprep.subr.mxu0 0.0
  %v953 = vand.u32 %v798, 4294901760
  %v954 = vsub.f32 %v798, %v953
  %v955 = vand.u32 %v954, 4294901760
  %v956 = vsub.f32 %v954, %v955
  %v957 = vand.u32 %v956, 4294901760
  %958 = vmatpush1.msra.mxu0 %v957
  %959 = vmatprep.subr.mxu0 0.0
  %v960 = vand.u32 %v799, 4294901760
  %v961 = vsub.f32 %v799, %v960
  %v962 = vand.u32 %v961, 4294901760
  %v963 = vsub.f32 %v961, %v962
  %v964 = vand.u32 %v963, 4294901760
  %965 = vmatpush1.msra.mxu0 %v964
  %966 = vmatprep.subr.mxu0 0.0
  %v967 = vand.u32 %v800, 4294901760
  %v968 = vsub.f32 %v800, %v967
  %v969 = vand.u32 %v968, 4294901760
  %v970 = vsub.f32 %v968, %v969
  %v971 = vand.u32 %v970, 4294901760
  %972 = vmatpush1.msra.mxu0 %v971
  %973 = vmatprep.subr.mxu0 0.0
  %v974 = vand.u32 %v801, 4294901760
  %v975 = vsub.f32 %v801, %v974
  %v976 = vand.u32 %v975, 4294901760
  %v977 = vsub.f32 %v975, %v976
  %v978 = vand.u32 %v977, 4294901760
  %979 = vmatpush1.msra.mxu0 %v978
  %980 = vmatprep.subr.mxu0 0.0
  %v981 = vand.u32 %v802, 4294901760
  %v982 = vsub.f32 %v802, %v981
  %v983 = vand.u32 %v982, 4294901760
  %v984 = vsub.f32 %v982, %v983
  %v985 = vand.u32 %v984, 4294901760
  %986 = vmatpush1.msra.mxu0 %v985
  %987 = vmatprep.subr.mxu0 0.0
  %v988 = vand.u32 %v803, 4294901760
  %v989 = vsub.f32 %v803, %v988
  %v990 = vand.u32 %v989, 4294901760
  %v991 = vsub.f32 %v989, %v990
  %v992 = vand.u32 %v991, 4294901760
  %993 = vmatpush1.msra.mxu0 %v992
  %994 = vmatprep.subr.mxu0 0.0
  %v995 = vand.u32 %v804, 4294901760
  %v996 = vsub.f32 %v804, %v995
  %v997 = vand.u32 %v996, 4294901760
  %v998 = vsub.f32 %v996, %v997
  %v999 = vand.u32 %v998, 4294901760
  %1000 = vmatpush1.msra.mxu0 %v999
  %1001 = vmatprep.subr.mxu0 0.0
  %v1002 = vand.u32 %v805, 4294901760
  %v1003 = vsub.f32 %v805, %v1002
  %v1004 = vand.u32 %v1003, 4294901760
  %v1005 = vsub.f32 %v1003, %v1004
  %v1006 = vand.u32 %v1005, 4294901760
  %1007 = vmatpush1.msra.mxu0 %v1006
  %1008 = vmatprep.subr.mxu0 0.0
  %v1009 = vand.u32 %v806, 4294901760
  %v1010 = vsub.f32 %v806, %v1009
  %v1011 = vand.u32 %v1010, 4294901760
  %v1012 = vsub.f32 %v1010, %v1011
  %v1013 = vand.u32 %v1012, 4294901760
  %1014 = vmatpush1.msra.mxu0 %v1013
  %1015 = vmatprep.subr.mxu0 0.0
  %v1016 = vand.u32 %v807, 4294901760
  %v1017 = vsub.f32 %v807, %v1016
  %v1018 = vand.u32 %v1017, 4294901760
  %v1019 = vsub.f32 %v1017, %v1018
  %v1020 = vand.u32 %v1019, 4294901760
  %1021 = vmatpush1.msra.mxu0 %v1020
  %1022 = vmatprep.subr.mxu0 0.0
  %v1023 = vand.u32 %v808, 4294901760
  %v1024 = vsub.f32 %v808, %v1023
  %v1025 = vand.u32 %v1024, 4294901760
  %v1026 = vsub.f32 %v1024, %v1025
  %v1027 = vand.u32 %v1026, 4294901760
  %1028 = vmatpush1.msra.mxu0 %v1027
  %1029 = vmatprep.subr.mxu0 0.0
  %v1030 = vand.u32 %v809, 4294901760
  %v1031 = vsub.f32 %v809, %v1030
  %v1032 = vand.u32 %v1031, 4294901760
  %v1033 = vsub.f32 %v1031, %v1032
  %v1034 = vand.u32 %v1033, 4294901760
  %1035 = vmatpush1.msra.mxu0 %v1034
  %1036 = vmatprep.subr.mxu0 0.0
  %v1037 = vand.u32 %v810, 4294901760
  %v1038 = vsub.f32 %v810, %v1037
  %v1039 = vand.u32 %v1038, 4294901760
  %v1040 = vsub.f32 %v1038, %v1039
  %v1041 = vand.u32 %v1040, 4294901760
  %1042 = vmatpush1.msra.mxu0 %v1041
  %1043 = vmatprep.subr.mxu0 0.0
  %v1044 = vand.u32 %v811, 4294901760
  %v1045 = vsub.f32 %v811, %v1044
  %v1046 = vand.u32 %v1045, 4294901760
  %v1047 = vsub.f32 %v1045, %v1046
  %v1048 = vand.u32 %v1047, 4294901760
  %1049 = vmatpush1.msra.mxu0 %v1048
  %1050 = vmatprep.subr.mxu0 0.0
  %v1051 = vand.u32 %v812, 4294901760
  %v1052 = vsub.f32 %v812, %v1051
  %v1053 = vand.u32 %v1052, 4294901760
  %v1054 = vsub.f32 %v1052, %v1053
  %v1055 = vand.u32 %v1054, 4294901760
  %1056 = vmatpush1.msra.mxu0 %v1055
  %1057 = vmatprep.subr.mxu0 0.0
  %v1058 = vand.u32 %v815, 4294901760
  %v1059 = vsub.f32 %v815, %v1058
  %v1060 = vand.u32 %v1059, 4294901760
  %v1061 = vsub.f32 %v1059, %v1060
  %v1062 = vand.u32 %v1061, 4294901760
  %1063 = vmatpush1.msra.mxu0 %v1062
  %1064 = vmatprep.subr.mxu0 0.0
  %1065 = vmatpush1.msra.mxu0 0.0
  %1066 = vmatprep.subr.mxu0 0.0
  %1067 = vmatpush1.msra.mxu0 0.0
  %1068 = vmatprep.subr.mxu0 0.0
  %1069 = vmatpush1.msra.mxu0 0.0
  %1070 = vmatprep.subr.mxu0 0.0
  %1071 = vmatpush1.msra.mxu0 0.0
  %1072 = vmatprep.subr.mxu0 0.0
  %1073 = vmatpush1.msra.mxu0 0.0
  %1074 = vmatprep.subr.mxu0 0.0
  %1075 = vmatpush1.msra.mxu0 0.0
  %1076 = vmatprep.subr.mxu0 0.0
  %1077 = vmatpush1.msra.mxu0 0.0
  %1078 = vmatprep.subr.mxu0 0.0
  %1079 = vmatpush1.msra.mxu0 0.0
  %1080 = vmatprep.subr.mxu0 0.0
  %1081 = vmatpush1.msra.mxu0 0.0
  %1082 = vmatprep.subr.mxu0 0.0
  %1083 = vmatpush1.msra.mxu0 0.0
  %1084 = vmatprep.subr.mxu0 0.0
  %1085 = vmatpush1.msra.mxu0 0.0
  %1086 = vmatprep.subr.mxu0 0.0
  %1087 = vmatpush1.msra.mxu0 0.0
  %1088 = vmatprep.subr.mxu0 0.0
  %1089 = vmatpush1.msra.mxu0 0.0
  %v1090 = vand.u32 %v36, 4294901760
  %1091 = vmatprep.mubr.f32.mxu0 %v1090
  %v1092 = vand.u32 %v11, 4294901760
  %1093 = vmatmul.mubr.f32.gmra.mrb[0].mxu0 %v1092
  %v1094 = vpop.f32.mrb[0].mxu0
  %v1095 = vadd.f32 %v913, %v1094
  %v1096 = vpop.f32.mrb[0].mxu0
  %v1097 = vand.u32 %v39, 4294901760
  %1098 = vmatprep.mubr.f32.mxu0 %v1097
  %v1099 = vand.u32 %v13, 4294901760
  %1100 = vmatmul.mubr.f32.gmra.mrb[0].mxu0 %v1099
  %v1101 = vpop.f32.mrb[0].mxu0
  %v1102 = vadd.f32 %v928, %v1101
  %v1103 = vpop.f32.mrb[0].mxu0
  %1104 = vdwg.mxu0
  %1105 = vmatprep.subr.mxu0 0.0
  %v1106 = vand.u32 %v795, 4294901760
  %v1107 = vsub.f32 %v795, %v1106
  %1108 = vmatpush1.msra.mxu0 %v1107
  %1109 = vmatprep.subr.mxu0 0.0
  %v1110 = vand.u32 %v796, 4294901760
  %v1111 = vsub.f32 %v796, %v1110
  %1112 = vmatpush1.msra.mxu0 %v1111
  %1113 = vmatprep.subr.mxu0 0.0
  %v1114 = vand.u32 %v797, 4294901760
  %v1115 = vsub.f32 %v797, %v1114
  %1116 = vmatpush1.msra.mxu0 %v1115
  %1117 = vmatprep.subr.mxu0 0.0
  %v1118 = vand.u32 %v798, 4294901760
  %v1119 = vsub.f32 %v798, %v1118
  %1120 = vmatpush1.msra.mxu0 %v1119
  %1121 = vmatprep.subr.mxu0 0.0
  %v1122 = vand.u32 %v799, 4294901760
  %v1123 = vsub.f32 %v799, %v1122
  %1124 = vmatpush1.msra.mxu0 %v1123
  %1125 = vmatprep.subr.mxu0 0.0
  %v1126 = vand.u32 %v800, 4294901760
  %v1127 = vsub.f32 %v800, %v1126
  %1128 = vmatpush1.msra.mxu0 %v1127
  %1129 = vmatprep.subr.mxu0 0.0
  %v1130 = vand.u32 %v801, 4294901760
  %v1131 = vsub.f32 %v801, %v1130
  %1132 = vmatpush1.msra.mxu0 %v1131
  %1133 = vmatprep.subr.mxu0 0.0
  %v1134 = vand.u32 %v802, 4294901760
  %v1135 = vsub.f32 %v802, %v1134
  %1136 = vmatpush1.msra.mxu0 %v1135
  %1137 = vmatprep.subr.mxu0 0.0
  %v1138 = vand.u32 %v803, 4294901760
  %v1139 = vsub.f32 %v803, %v1138
  %1140 = vmatpush1.msra.mxu0 %v1139
  %1141 = vmatprep.subr.mxu0 0.0
  %v1142 = vand.u32 %v804, 4294901760
  %v1143 = vsub.f32 %v804, %v1142
  %1144 = vmatpush1.msra.mxu0 %v1143
  %1145 = vmatprep.subr.mxu0 0.0
  %v1146 = vand.u32 %v805, 4294901760
  %v1147 = vsub.f32 %v805, %v1146
  %1148 = vmatpush1.msra.mxu0 %v1147
  %1149 = vmatprep.subr.mxu0 0.0
  %v1150 = vand.u32 %v806, 4294901760
  %v1151 = vsub.f32 %v806, %v1150
  %1152 = vmatpush1.msra.mxu0 %v1151
  %1153 = vmatprep.subr.mxu0 0.0
  %v1154 = vand.u32 %v807, 4294901760
  %v1155 = vsub.f32 %v807, %v1154
  %1156 = vmatpush1.msra.mxu0 %v1155
  %1157 = vmatprep.subr.mxu0 0.0
  %v1158 = vand.u32 %v808, 4294901760
  %v1159 = vsub.f32 %v808, %v1158
  %1160 = vmatpush1.msra.mxu0 %v1159
  %1161 = vmatprep.subr.mxu0 0.0
  %v1162 = vand.u32 %v809, 4294901760
  %v1163 = vsub.f32 %v809, %v1162
  %1164 = vmatpush1.msra.mxu0 %v1163
  %1165 = vmatprep.subr.mxu0 0.0
  %v1166 = vand.u32 %v810, 4294901760
  %v1167 = vsub.f32 %v810, %v1166
  %1168 = vmatpush1.msra.mxu0 %v1167
  %1169 = vmatprep.subr.mxu0 0.0
  %v1170 = vand.u32 %v811, 4294901760
  %v1171 = vsub.f32 %v811, %v1170
  %1172 = vmatpush1.msra.mxu0 %v1171
  %1173 = vmatprep.subr.mxu0 0.0
  %v1174 = vand.u32 %v812, 4294901760
  %v1175 = vsub.f32 %v812, %v1174
  %1176 = vmatpush1.msra.mxu0 %v1175
  %1177 = vmatprep.subr.mxu0 0.0
  %v1178 = vand.u32 %v815, 4294901760
  %v1179 = vsub.f32 %v815, %v1178
  %1180 = vmatpush1.msra.mxu0 %v1179
  %1181 = vmatprep.subr.mxu0 0.0
  %1182 = vmatpush1.msra.mxu0 0.0
  %1183 = vmatprep.subr.mxu0 0.0
  %1184 = vmatpush1.msra.mxu0 0.0
  %1185 = vmatprep.subr.mxu0 0.0
  %1186 = vmatpush1.msra.mxu0 0.0
  %1187 = vmatprep.subr.mxu0 0.0
  %1188 = vmatpush1.msra.mxu0 0.0
  %1189 = vmatprep.subr.mxu0 0.0
  %1190 = vmatpush1.msra.mxu0 0.0
  %1191 = vmatprep.subr.mxu0 0.0
  %1192 = vmatpush1.msra.mxu0 0.0
  %1193 = vmatprep.subr.mxu0 0.0
  %1194 = vmatpush1.msra.mxu0 0.0
  %1195 = vmatprep.subr.mxu0 0.0
  %1196 = vmatpush1.msra.mxu0 0.0
  %1197 = vmatprep.subr.mxu0 0.0
  %1198 = vmatpush1.msra.mxu0 0.0
  %1199 = vmatprep.subr.mxu0 0.0
  %1200 = vmatpush1.msra.mxu0 0.0
  %1201 = vmatprep.subr.mxu0 0.0
  %1202 = vmatpush1.msra.mxu0 0.0
  %1203 = vmatprep.subr.mxu0 0.0
  %1204 = vmatpush1.msra.mxu0 0.0
  %1205 = vmatprep.subr.mxu0 0.0
  %1206 = vmatpush1.msra.mxu0 0.0
  %v1207 = vand.u32 %v36, 4294901760
  %v1208 = vsub.f32 %v36, %v1207
  %1209 = vmatprep.mubr.f32.mxu0 %v1208
  %v1210 = vand.u32 %v11, 4294901760
  %v1211 = vsub.f32 %v11, %v1210
  %1212 = vmatmul.mubr.f32.gmra.mrb[0].mxu0 %v1211
  %v1213 = vpop.f32.mrb[0].mxu0
  %v1214 = vadd.f32 %v1095, %v1213
  %v1215 = vpop.f32.mrb[0].mxu0
  %v1216 = vand.u32 %v39, 4294901760
  %v1217 = vsub.f32 %v39, %v1216
  %1218 = vmatprep.mubr.f32.mxu0 %v1217
  %v1219 = vand.u32 %v13, 4294901760
  %v1220 = vsub.f32 %v13, %v1219
  %1221 = vmatmul.mubr.f32.gmra.mrb[0].mxu0 %v1220
  %v1222 = vpop.f32.mrb[0].mxu0
  %v1223 = vadd.f32 %v1102, %v1222
  %v1224 = vpop.f32.mrb[0].mxu0
  %1225 = vdwg.mxu0
  %1226 = vmatprep.subr.mxu0 0.0
  %v1227 = vand.u32 %v795, 4294901760
  %1228 = vmatpush1.msra.mxu0 %v1227
  %1229 = vmatprep.subr.mxu0 0.0
  %v1230 = vand.u32 %v796, 4294901760
  %1231 = vmatpush1.msra.mxu0 %v1230
  %1232 = vmatprep.subr.mxu0 0.0
  %v1233 = vand.u32 %v797, 4294901760
  %1234 = vmatpush1.msra.mxu0 %v1233
  %1235 = vmatprep.subr.mxu0 0.0
  %v1236 = vand.u32 %v798, 4294901760
  %1237 = vmatpush1.msra.mxu0 %v1236
  %1238 = vmatprep.subr.mxu0 0.0
  %v1239 = vand.u32 %v799, 4294901760
  %1240 = vmatpush1.msra.mxu0 %v1239
  %1241 = vmatprep.subr.mxu0 0.0
  %v1242 = vand.u32 %v800, 4294901760
  %1243 = vmatpush1.msra.mxu0 %v1242
  %1244 = vmatprep.subr.mxu0 0.0
  %v1245 = vand.u32 %v801, 4294901760
  %1246 = vmatpush1.msra.mxu0 %v1245
  %1247 = vmatprep.subr.mxu0 0.0
  %v1248 = vand.u32 %v802, 4294901760
  %1249 = vmatpush1.msra.mxu0 %v1248
  %1250 = vmatprep.subr.mxu0 0.0
  %v1251 = vand.u32 %v803, 4294901760
  %1252 = vmatpush1.msra.mxu0 %v1251
  %1253 = vmatprep.subr.mxu0 0.0
  %v1254 = vand.u32 %v804, 4294901760
  %1255 = vmatpush1.msra.mxu0 %v1254
  %1256 = vmatprep.subr.mxu0 0.0
  %v1257 = vand.u32 %v805, 4294901760
  %1258 = vmatpush1.msra.mxu0 %v1257
  %1259 = vmatprep.subr.mxu0 0.0
  %v1260 = vand.u32 %v806, 4294901760
  %1261 = vmatpush1.msra.mxu0 %v1260
  %1262 = vmatprep.subr.mxu0 0.0
  %v1263 = vand.u32 %v807, 4294901760
  %1264 = vmatpush1.msra.mxu0 %v1263
  %1265 = vmatprep.subr.mxu0 0.0
  %v1266 = vand.u32 %v808, 4294901760
  %1267 = vmatpush1.msra.mxu0 %v1266
  %1268 = vmatprep.subr.mxu0 0.0
  %v1269 = vand.u32 %v809, 4294901760
  %1270 = vmatpush1.msra.mxu0 %v1269
  %1271 = vmatprep.subr.mxu0 0.0
  %v1272 = vand.u32 %v810, 4294901760
  %1273 = vmatpush1.msra.mxu0 %v1272
  %1274 = vmatprep.subr.mxu0 0.0
  %v1275 = vand.u32 %v811, 4294901760
  %1276 = vmatpush1.msra.mxu0 %v1275
  %1277 = vmatprep.subr.mxu0 0.0
  %v1278 = vand.u32 %v812, 4294901760
  %1279 = vmatpush1.msra.mxu0 %v1278
  %1280 = vmatprep.subr.mxu0 0.0
  %v1281 = vand.u32 %v815, 4294901760
  %1282 = vmatpush1.msra.mxu0 %v1281
  %1283 = vmatprep.subr.mxu0 0.0
  %1284 = vmatpush1.msra.mxu0 0.0
  %1285 = vmatprep.subr.mxu0 0.0
  %1286 = vmatpush1.msra.mxu0 0.0
  %1287 = vmatprep.subr.mxu0 0.0
  %1288 = vmatpush1.msra.mxu0 0.0
  %1289 = vmatprep.subr.mxu0 0.0
  %1290 = vmatpush1.msra.mxu0 0.0
  %1291 = vmatprep.subr.mxu0 0.0
  %1292 = vmatpush1.msra.mxu0 0.0
  %1293 = vmatprep.subr.mxu0 0.0
  %1294 = vmatpush1.msra.mxu0 0.0
  %1295 = vmatprep.subr.mxu0 0.0
  %1296 = vmatpush1.msra.mxu0 0.0
  %1297 = vmatprep.subr.mxu0 0.0
  %1298 = vmatpush1.msra.mxu0 0.0
  %1299 = vmatprep.subr.mxu0 0.0
  %1300 = vmatpush1.msra.mxu0 0.0
  %1301 = vmatprep.subr.mxu0 0.0
  %1302 = vmatpush1.msra.mxu0 0.0
  %1303 = vmatprep.subr.mxu0 0.0
  %1304 = vmatpush1.msra.mxu0 0.0
  %1305 = vmatprep.subr.mxu0 0.0
  %1306 = vmatpush1.msra.mxu0 0.0
  %1307 = vmatprep.subr.mxu0 0.0
  %1308 = vmatpush1.msra.mxu0 0.0
  %v1309 = vand.u32 %v36, 4294901760
  %v1310 = vsub.f32 %v36, %v1309
  %v1311 = vand.u32 %v1310, 4294901760
  %1312 = vmatprep.mubr.f32.mxu0 %v1311
  %v1313 = vand.u32 %v11, 4294901760
  %v1314 = vsub.f32 %v11, %v1313
  %v1315 = vand.u32 %v1314, 4294901760
  %1316 = vmatmul.mubr.f32.gmra.mrb[0].mxu0 %v1315
  %v1317 = vpop.f32.mrb[0].mxu0
  %v1318 = vadd.f32 %v1214, %v1317
  %v1319 = vpop.f32.mrb[0].mxu0
  %v1320 = vand.u32 %v39, 4294901760
  %v1321 = vsub.f32 %v39, %v1320
  %v1322 = vand.u32 %v1321, 4294901760
  %1323 = vmatprep.mubr.f32.mxu0 %v1322
  %v1324 = vand.u32 %v13, 4294901760
  %v1325 = vsub.f32 %v13, %v1324
  %v1326 = vand.u32 %v1325, 4294901760
  %1327 = vmatmul.mubr.f32.gmra.mrb[0].mxu0 %v1326
  %v1328 = vpop.f32.mrb[0].mxu0
  %v1329 = vadd.f32 %v1223, %v1328
  %v1330 = vpop.f32.mrb[0].mxu0
  %1331 = vdwg.mxu0
  %1332 = vmatprep.subr.mxu0 0.0
  %v1333 = vand.u32 %v795, 4294901760
  %v1334 = vsub.f32 %v795, %v1333
  %v1335 = vand.u32 %v1334, 4294901760
  %1336 = vmatpush1.msra.mxu0 %v1335
  %1337 = vmatprep.subr.mxu0 0.0
  %v1338 = vand.u32 %v796, 4294901760
  %v1339 = vsub.f32 %v796, %v1338
  %v1340 = vand.u32 %v1339, 4294901760
  %1341 = vmatpush1.msra.mxu0 %v1340
  %1342 = vmatprep.subr.mxu0 0.0
  %v1343 = vand.u32 %v797, 4294901760
  %v1344 = vsub.f32 %v797, %v1343
  %v1345 = vand.u32 %v1344, 4294901760
  %1346 = vmatpush1.msra.mxu0 %v1345
  %1347 = vmatprep.subr.mxu0 0.0
  %v1348 = vand.u32 %v798, 4294901760
  %v1349 = vsub.f32 %v798, %v1348
  %v1350 = vand.u32 %v1349, 4294901760
  %1351 = vmatpush1.msra.mxu0 %v1350
  %1352 = vmatprep.subr.mxu0 0.0
  %v1353 = vand.u32 %v799, 4294901760
  %v1354 = vsub.f32 %v799, %v1353
  %v1355 = vand.u32 %v1354, 4294901760
  %1356 = vmatpush1.msra.mxu0 %v1355
  %1357 = vmatprep.subr.mxu0 0.0
  %v1358 = vand.u32 %v800, 4294901760
  %v1359 = vsub.f32 %v800, %v1358
  %v1360 = vand.u32 %v1359, 4294901760
  %1361 = vmatpush1.msra.mxu0 %v1360
  %1362 = vmatprep.subr.mxu0 0.0
  %v1363 = vand.u32 %v801, 4294901760
  %v1364 = vsub.f32 %v801, %v1363
  %v1365 = vand.u32 %v1364, 4294901760
  %1366 = vmatpush1.msra.mxu0 %v1365
  %1367 = vmatprep.subr.mxu0 0.0
  %v1368 = vand.u32 %v802, 4294901760
  %v1369 = vsub.f32 %v802, %v1368
  %v1370 = vand.u32 %v1369, 4294901760
  %1371 = vmatpush1.msra.mxu0 %v1370
  %1372 = vmatprep.subr.mxu0 0.0
  %v1373 = vand.u32 %v803, 4294901760
  %v1374 = vsub.f32 %v803, %v1373
  %v1375 = vand.u32 %v1374, 4294901760
  %1376 = vmatpush1.msra.mxu0 %v1375
  %1377 = vmatprep.subr.mxu0 0.0
  %v1378 = vand.u32 %v804, 4294901760
  %v1379 = vsub.f32 %v804, %v1378
  %v1380 = vand.u32 %v1379, 4294901760
  %1381 = vmatpush1.msra.mxu0 %v1380
  %1382 = vmatprep.subr.mxu0 0.0
  %v1383 = vand.u32 %v805, 4294901760
  %v1384 = vsub.f32 %v805, %v1383
  %v1385 = vand.u32 %v1384, 4294901760
  %1386 = vmatpush1.msra.mxu0 %v1385
  %1387 = vmatprep.subr.mxu0 0.0
  %v1388 = vand.u32 %v806, 4294901760
  %v1389 = vsub.f32 %v806, %v1388
  %v1390 = vand.u32 %v1389, 4294901760
  %1391 = vmatpush1.msra.mxu0 %v1390
  %1392 = vmatprep.subr.mxu0 0.0
  %v1393 = vand.u32 %v807, 4294901760
  %v1394 = vsub.f32 %v807, %v1393
  %v1395 = vand.u32 %v1394, 4294901760
  %1396 = vmatpush1.msra.mxu0 %v1395
  %1397 = vmatprep.subr.mxu0 0.0
  %v1398 = vand.u32 %v808, 4294901760
  %v1399 = vsub.f32 %v808, %v1398
  %v1400 = vand.u32 %v1399, 4294901760
  %1401 = vmatpush1.msra.mxu0 %v1400
  %1402 = vmatprep.subr.mxu0 0.0
  %v1403 = vand.u32 %v809, 4294901760
  %v1404 = vsub.f32 %v809, %v1403
  %v1405 = vand.u32 %v1404, 4294901760
  %1406 = vmatpush1.msra.mxu0 %v1405
  %1407 = vmatprep.subr.mxu0 0.0
  %v1408 = vand.u32 %v810, 4294901760
  %v1409 = vsub.f32 %v810, %v1408
  %v1410 = vand.u32 %v1409, 4294901760
  %1411 = vmatpush1.msra.mxu0 %v1410
  %1412 = vmatprep.subr.mxu0 0.0
  %v1413 = vand.u32 %v811, 4294901760
  %v1414 = vsub.f32 %v811, %v1413
  %v1415 = vand.u32 %v1414, 4294901760
  %1416 = vmatpush1.msra.mxu0 %v1415
  %1417 = vmatprep.subr.mxu0 0.0
  %v1418 = vand.u32 %v812, 4294901760
  %v1419 = vsub.f32 %v812, %v1418
  %v1420 = vand.u32 %v1419, 4294901760
  %1421 = vmatpush1.msra.mxu0 %v1420
  %1422 = vmatprep.subr.mxu0 0.0
  %v1423 = vand.u32 %v815, 4294901760
  %v1424 = vsub.f32 %v815, %v1423
  %v1425 = vand.u32 %v1424, 4294901760
  %1426 = vmatpush1.msra.mxu0 %v1425
  %1427 = vmatprep.subr.mxu0 0.0
  %1428 = vmatpush1.msra.mxu0 0.0
  %1429 = vmatprep.subr.mxu0 0.0
  %1430 = vmatpush1.msra.mxu0 0.0
  %1431 = vmatprep.subr.mxu0 0.0
  %1432 = vmatpush1.msra.mxu0 0.0
  %1433 = vmatprep.subr.mxu0 0.0
  %1434 = vmatpush1.msra.mxu0 0.0
  %1435 = vmatprep.subr.mxu0 0.0
  %1436 = vmatpush1.msra.mxu0 0.0
  %1437 = vmatprep.subr.mxu0 0.0
  %1438 = vmatpush1.msra.mxu0 0.0
  %1439 = vmatprep.subr.mxu0 0.0
  %1440 = vmatpush1.msra.mxu0 0.0
  %1441 = vmatprep.subr.mxu0 0.0
  %1442 = vmatpush1.msra.mxu0 0.0
  %1443 = vmatprep.subr.mxu0 0.0
  %1444 = vmatpush1.msra.mxu0 0.0
  %1445 = vmatprep.subr.mxu0 0.0
  %1446 = vmatpush1.msra.mxu0 0.0
  %1447 = vmatprep.subr.mxu0 0.0
  %1448 = vmatpush1.msra.mxu0 0.0
  %1449 = vmatprep.subr.mxu0 0.0
  %1450 = vmatpush1.msra.mxu0 0.0
  %1451 = vmatprep.subr.mxu0 0.0
  %1452 = vmatpush1.msra.mxu0 0.0
  %v1453 = vand.u32 %v36, 4294901760
  %1454 = vmatprep.mubr.f32.mxu0 %v1453
  %v1455 = vand.u32 %v11, 4294901760
  %1456 = vmatmul.mubr.f32.gmra.mrb[0].mxu0 %v1455
  %v1457 = vpop.f32.mrb[0].mxu0
  %v1458 = vadd.f32 %v1318, %v1457
  %v1459 = vpop.f32.mrb[0].mxu0
  %v1460 = vand.u32 %v39, 4294901760
  %1461 = vmatprep.mubr.f32.mxu0 %v1460
  %v1462 = vand.u32 %v13, 4294901760
  %1463 = vmatmul.mubr.f32.gmra.mrb[0].mxu0 %v1462
  %v1464 = vpop.f32.mrb[0].mxu0
  %v1465 = vadd.f32 %v1329, %v1464
  %v1466 = vpop.f32.mrb[0].mxu0
  %1467 = vdwg.mxu0
  %1468 = vmatprep.subr.mxu0 0.0
  %v1469 = vand.u32 %v795, 4294901760
  %1470 = vmatpush1.msra.mxu0 %v1469
  %1471 = vmatprep.subr.mxu0 0.0
  %v1472 = vand.u32 %v796, 4294901760
  %1473 = vmatpush1.msra.mxu0 %v1472
  %1474 = vmatprep.subr.mxu0 0.0
  %v1475 = vand.u32 %v797, 4294901760
  %1476 = vmatpush1.msra.mxu0 %v1475
  %1477 = vmatprep.subr.mxu0 0.0
  %v1478 = vand.u32 %v798, 4294901760
  %1479 = vmatpush1.msra.mxu0 %v1478
  %1480 = vmatprep.subr.mxu0 0.0
  %v1481 = vand.u32 %v799, 4294901760
  %1482 = vmatpush1.msra.mxu0 %v1481
  %1483 = vmatprep.subr.mxu0 0.0
  %v1484 = vand.u32 %v800, 4294901760
  %1485 = vmatpush1.msra.mxu0 %v1484
  %1486 = vmatprep.subr.mxu0 0.0
  %v1487 = vand.u32 %v801, 4294901760
  %1488 = vmatpush1.msra.mxu0 %v1487
  %1489 = vmatprep.subr.mxu0 0.0
  %v1490 = vand.u32 %v802, 4294901760
  %1491 = vmatpush1.msra.mxu0 %v1490
  %1492 = vmatprep.subr.mxu0 0.0
  %v1493 = vand.u32 %v803, 4294901760
  %1494 = vmatpush1.msra.mxu0 %v1493
  %1495 = vmatprep.subr.mxu0 0.0
  %v1496 = vand.u32 %v804, 4294901760
  %1497 = vmatpush1.msra.mxu0 %v1496
  %1498 = vmatprep.subr.mxu0 0.0
  %v1499 = vand.u32 %v805, 4294901760
  %1500 = vmatpush1.msra.mxu0 %v1499
  %1501 = vmatprep.subr.mxu0 0.0
  %v1502 = vand.u32 %v806, 4294901760
  %1503 = vmatpush1.msra.mxu0 %v1502
  %1504 = vmatprep.subr.mxu0 0.0
  %v1505 = vand.u32 %v807, 4294901760
  %1506 = vmatpush1.msra.mxu0 %v1505
  %1507 = vmatprep.subr.mxu0 0.0
  %v1508 = vand.u32 %v808, 4294901760
  %1509 = vmatpush1.msra.mxu0 %v1508
  %1510 = vmatprep.subr.mxu0 0.0
  %v1511 = vand.u32 %v809, 4294901760
  %1512 = vmatpush1.msra.mxu0 %v1511
  %1513 = vmatprep.subr.mxu0 0.0
  %v1514 = vand.u32 %v810, 4294901760
  %1515 = vmatpush1.msra.mxu0 %v1514
  %1516 = vmatprep.subr.mxu0 0.0
  %v1517 = vand.u32 %v811, 4294901760
  %1518 = vmatpush1.msra.mxu0 %v1517
  %1519 = vmatprep.subr.mxu0 0.0
  %v1520 = vand.u32 %v812, 4294901760
  %1521 = vmatpush1.msra.mxu0 %v1520
  %1522 = vmatprep.subr.mxu0 0.0
  %v1523 = vand.u32 %v815, 4294901760
  %1524 = vmatpush1.msra.mxu0 %v1523
  %1525 = vmatprep.subr.mxu0 0.0
  %1526 = vmatpush1.msra.mxu0 0.0
  %1527 = vmatprep.subr.mxu0 0.0
  %1528 = vmatpush1.msra.mxu0 0.0
  %1529 = vmatprep.subr.mxu0 0.0
  %1530 = vmatpush1.msra.mxu0 0.0
  %1531 = vmatprep.subr.mxu0 0.0
  %1532 = vmatpush1.msra.mxu0 0.0
  %1533 = vmatprep.subr.mxu0 0.0
  %1534 = vmatpush1.msra.mxu0 0.0
  %1535 = vmatprep.subr.mxu0 0.0
  %1536 = vmatpush1.msra.mxu0 0.0
  %1537 = vmatprep.subr.mxu0 0.0
  %1538 = vmatpush1.msra.mxu0 0.0
  %1539 = vmatprep.subr.mxu0 0.0
  %1540 = vmatpush1.msra.mxu0 0.0
  %1541 = vmatprep.subr.mxu0 0.0
  %1542 = vmatpush1.msra.mxu0 0.0
  %1543 = vmatprep.subr.mxu0 0.0
  %1544 = vmatpush1.msra.mxu0 0.0
  %1545 = vmatprep.subr.mxu0 0.0
  %1546 = vmatpush1.msra.mxu0 0.0
  %1547 = vmatprep.subr.mxu0 0.0
  %1548 = vmatpush1.msra.mxu0 0.0
  %1549 = vmatprep.subr.mxu0 0.0
  %1550 = vmatpush1.msra.mxu0 0.0
  %v1551 = vand.u32 %v36, 4294901760
  %1552 = vmatprep.mubr.f32.mxu0 %v1551
  %v1553 = vand.u32 %v11, 4294901760
  %1554 = vmatmul.mubr.f32.gmra.mrb[0].mxu0 %v1553
  %v1555 = vpop.f32.mrb[0].mxu0
  %v1556 = vadd.f32 %v1458, %v1555
  %v1557 = vpop.f32.mrb[0].mxu0
  %v1558 = vand.u32 %v39, 4294901760
  %1559 = vmatprep.mubr.f32.mxu0 %v1558
  %v1560 = vand.u32 %v13, 4294901760
  %1561 = vmatmul.mubr.f32.gmra.mrb[0].mxu0 %v1560
  %v1562 = vpop.f32.mrb[0].mxu0
  %v1563 = vadd.f32 %v1465, %v1562
  %v1564 = vpop.f32.mrb[0].mxu0
  %1565 = vdwg.mxu0
  %v1566 = vmax.f32 %v784, %v1556
  %v1567 = vmax.f32 %v791, %v1563
  %s1568 = scalar_lea.vmem %s0, 304
  %v1569 = vld [vmem:[%s1568] sm:$0xff]
  %v1570 = vld [vmem:[%s1568 + $0x8] sm:$0xff]
  %v1571 = vld [vmem:[%s1568 + $0x10] sm:$0xff]
  %v1572 = vld [vmem:[%s1568 + $0x18] sm:$0xff]
  %v1573 = vld [vmem:[%s1568 + $0x20] sm:$0xff]
  %v1574 = vld [vmem:[%s1568 + $0x28] sm:$0xff]
  %v1575 = vld [vmem:[%s1568 + $0x30] sm:$0xff]
  %v1576 = vld [vmem:[%s1568 + $0x38] sm:$0xff]
  %v1577 = vld [vmem:[%s1568 + $0x40] sm:$0xff]
  %v1578 = vld [vmem:[%s1568 + $0x48] sm:$0xff]
  %v1579 = vld [vmem:[%s1568 + $0x50] sm:$0xff]
  %v1580 = vld [vmem:[%s1568 + $0x58] sm:$0xff]
  %v1581 = vld [vmem:[%s1568 + $0x60] sm:$0xff]
  %v1582 = vld [vmem:[%s1568 + $0x68] sm:$0xff]
  %v1583 = vld [vmem:[%s1568 + $0x70] sm:$0xff]
  %v1584 = vld [vmem:[%s1568 + $0x78] sm:$0xff]
  %v1585 = vld [vmem:[%s1568 + $0x80] sm:$0xff]
  %v1586 = vld [vmem:[%s1568 + $0x88] sm:$0xff]
  %v1587 = vld [vmem:[%s1568 + $0x90] sm:$0x7f]
  %v1589 = vsel %vm41, %v1587, 0
  %1591 = vmatprep.subr.mxu0 0.0
  %v1592 = vand.u32 %v1569, 4294901760
  %1593 = vmatpush1.msra.mxu0 %v1592
  %1594 = vmatprep.subr.mxu0 0.0
  %v1595 = vand.u32 %v1570, 4294901760
  %1596 = vmatpush1.msra.mxu0 %v1595
  %1597 = vmatprep.subr.mxu0 0.0
  %v1598 = vand.u32 %v1571, 4294901760
  %1599 = vmatpush1.msra.mxu0 %v1598
  %1600 = vmatprep.subr.mxu0 0.0
  %v1601 = vand.u32 %v1572, 4294901760
  %1602 = vmatpush1.msra.mxu0 %v1601
  %1603 = vmatprep.subr.mxu0 0.0
  %v1604 = vand.u32 %v1573, 4294901760
  %1605 = vmatpush1.msra.mxu0 %v1604
  %1606 = vmatprep.subr.mxu0 0.0
  %v1607 = vand.u32 %v1574, 4294901760
  %1608 = vmatpush1.msra.mxu0 %v1607
  %1609 = vmatprep.subr.mxu0 0.0
  %v1610 = vand.u32 %v1575, 4294901760
  %1611 = vmatpush1.msra.mxu0 %v1610
  %1612 = vmatprep.subr.mxu0 0.0
  %v1613 = vand.u32 %v1576, 4294901760
  %1614 = vmatpush1.msra.mxu0 %v1613
  %1615 = vmatprep.subr.mxu0 0.0
  %v1616 = vand.u32 %v1577, 4294901760
  %1617 = vmatpush1.msra.mxu0 %v1616
  %1618 = vmatprep.subr.mxu0 0.0
  %v1619 = vand.u32 %v1578, 4294901760
  %1620 = vmatpush1.msra.mxu0 %v1619
  %1621 = vmatprep.subr.mxu0 0.0
  %v1622 = vand.u32 %v1579, 4294901760
  %1623 = vmatpush1.msra.mxu0 %v1622
  %1624 = vmatprep.subr.mxu0 0.0
  %v1625 = vand.u32 %v1580, 4294901760
  %1626 = vmatpush1.msra.mxu0 %v1625
  %1627 = vmatprep.subr.mxu0 0.0
  %v1628 = vand.u32 %v1581, 4294901760
  %1629 = vmatpush1.msra.mxu0 %v1628
  %1630 = vmatprep.subr.mxu0 0.0
  %v1631 = vand.u32 %v1582, 4294901760
  %1632 = vmatpush1.msra.mxu0 %v1631
  %1633 = vmatprep.subr.mxu0 0.0
  %v1634 = vand.u32 %v1583, 4294901760
  %1635 = vmatpush1.msra.mxu0 %v1634
  %1636 = vmatprep.subr.mxu0 0.0
  %v1637 = vand.u32 %v1584, 4294901760
  %1638 = vmatpush1.msra.mxu0 %v1637
  %1639 = vmatprep.subr.mxu0 0.0
  %v1640 = vand.u32 %v1585, 4294901760
  %1641 = vmatpush1.msra.mxu0 %v1640
  %1642 = vmatprep.subr.mxu0 0.0
  %v1643 = vand.u32 %v1586, 4294901760
  %1644 = vmatpush1.msra.mxu0 %v1643
  %1645 = vmatprep.subr.mxu0 0.0
  %v1646 = vand.u32 %v1589, 4294901760
  %1647 = vmatpush1.msra.mxu0 %v1646
  %1648 = vmatprep.subr.mxu0 0.0
  %1649 = vmatpush1.msra.mxu0 0.0
  %1650 = vmatprep.subr.mxu0 0.0
  %1651 = vmatpush1.msra.mxu0 0.0
  %1652 = vmatprep.subr.mxu0 0.0
  %1653 = vmatpush1.msra.mxu0 0.0
  %1654 = vmatprep.subr.mxu0 0.0
  %1655 = vmatpush1.msra.mxu0 0.0
  %1656 = vmatprep.subr.mxu0 0.0
  %1657 = vmatpush1.msra.mxu0 0.0
  %1658 = vmatprep.subr.mxu0 0.0
  %1659 = vmatpush1.msra.mxu0 0.0
  %1660 = vmatprep.subr.mxu0 0.0
  %1661 = vmatpush1.msra.mxu0 0.0
  %1662 = vmatprep.subr.mxu0 0.0
  %1663 = vmatpush1.msra.mxu0 0.0
  %1664 = vmatprep.subr.mxu0 0.0
  %1665 = vmatpush1.msra.mxu0 0.0
  %1666 = vmatprep.subr.mxu0 0.0
  %1667 = vmatpush1.msra.mxu0 0.0
  %1668 = vmatprep.subr.mxu0 0.0
  %1669 = vmatpush1.msra.mxu0 0.0
  %1670 = vmatprep.subr.mxu0 0.0
  %1671 = vmatpush1.msra.mxu0 0.0
  %1672 = vmatprep.subr.mxu0 0.0
  %1673 = vmatpush1.msra.mxu0 0.0
  %v1674 = vand.u32 %v36, 4294901760
  %v1675 = vsub.f32 %v36, %v1674
  %v1676 = vand.u32 %v1675, 4294901760
  %v1677 = vsub.f32 %v1675, %v1676
  %v1678 = vand.u32 %v1677, 4294901760
  %1679 = vmatprep.mubr.f32.mxu0 %v1678
  %v1680 = vand.u32 %v11, 4294901760
  %v1681 = vsub.f32 %v11, %v1680
  %v1682 = vand.u32 %v1681, 4294901760
  %v1683 = vsub.f32 %v1681, %v1682
  %v1684 = vand.u32 %v1683, 4294901760
  %1685 = vmatmul.mubr.f32.gmra.mrb[0].mxu0 %v1684
  %v1686 = vpop.f32.mrb[0].mxu0
  %v1687 = vadd.f32 0.0, %v1686
  %v1688 = vpop.f32.mrb[0].mxu0
  %v1689 = vand.u32 %v39, 4294901760
  %v1690 = vsub.f32 %v39, %v1689
  %v1691 = vand.u32 %v1690, 4294901760
  %v1692 = vsub.f32 %v1690, %v1691
  %v1693 = vand.u32 %v1692, 4294901760
  %1694 = vmatprep.mubr.f32.mxu0 %v1693
  %v1695 = vand.u32 %v13, 4294901760
  %v1696 = vsub.f32 %v13, %v1695
  %v1697 = vand.u32 %v1696, 4294901760
  %v1698 = vsub.f32 %v1696, %v1697
  %v1699 = vand.u32 %v1698, 4294901760
  %1700 = vmatmul.mubr.f32.gmra.mrb[0].mxu0 %v1699
  %v1701 = vpop.f32.mrb[0].mxu0
  %v1702 = vadd.f32 0.0, %v1701
  %v1703 = vpop.f32.mrb[0].mxu0
  %1704 = vdwg.mxu0
  %1705 = vmatprep.subr.mxu0 0.0
  %v1706 = vand.u32 %v1569, 4294901760
  %v1707 = vsub.f32 %v1569, %v1706
  %v1708 = vand.u32 %v1707, 4294901760
  %v1709 = vsub.f32 %v1707, %v1708
  %v1710 = vand.u32 %v1709, 4294901760
  %1711 = vmatpush1.msra.mxu0 %v1710
  %1712 = vmatprep.subr.mxu0 0.0
  %v1713 = vand.u32 %v1570, 4294901760
  %v1714 = vsub.f32 %v1570, %v1713
  %v1715 = vand.u32 %v1714, 4294901760
  %v1716 = vsub.f32 %v1714, %v1715
  %v1717 = vand.u32 %v1716, 4294901760
  %1718 = vmatpush1.msra.mxu0 %v1717
  %1719 = vmatprep.subr.mxu0 0.0
  %v1720 = vand.u32 %v1571, 4294901760
  %v1721 = vsub.f32 %v1571, %v1720
  %v1722 = vand.u32 %v1721, 4294901760
  %v1723 = vsub.f32 %v1721, %v1722
  %v1724 = vand.u32 %v1723, 4294901760
  %1725 = vmatpush1.msra.mxu0 %v1724
  %1726 = vmatprep.subr.mxu0 0.0
  %v1727 = vand.u32 %v1572, 4294901760
  %v1728 = vsub.f32 %v1572, %v1727
  %v1729 = vand.u32 %v1728, 4294901760
  %v1730 = vsub.f32 %v1728, %v1729
  %v1731 = vand.u32 %v1730, 4294901760
  %1732 = vmatpush1.msra.mxu0 %v1731
  %1733 = vmatprep.subr.mxu0 0.0
  %v1734 = vand.u32 %v1573, 4294901760
  %v1735 = vsub.f32 %v1573, %v1734
  %v1736 = vand.u32 %v1735, 4294901760
  %v1737 = vsub.f32 %v1735, %v1736
  %v1738 = vand.u32 %v1737, 4294901760
  %1739 = vmatpush1.msra.mxu0 %v1738
  %1740 = vmatprep.subr.mxu0 0.0
  %v1741 = vand.u32 %v1574, 4294901760
  %v1742 = vsub.f32 %v1574, %v1741
  %v1743 = vand.u32 %v1742, 4294901760
  %v1744 = vsub.f32 %v1742, %v1743
  %v1745 = vand.u32 %v1744, 4294901760
  %1746 = vmatpush1.msra.mxu0 %v1745
  %1747 = vmatprep.subr.mxu0 0.0
  %v1748 = vand.u32 %v1575, 4294901760
  %v1749 = vsub.f32 %v1575, %v1748
  %v1750 = vand.u32 %v1749, 4294901760
  %v1751 = vsub.f32 %v1749, %v1750
  %v1752 = vand.u32 %v1751, 4294901760
  %1753 = vmatpush1.msra.mxu0 %v1752
  %1754 = vmatprep.subr.mxu0 0.0
  %v1755 = vand.u32 %v1576, 4294901760
  %v1756 = vsub.f32 %v1576, %v1755
  %v1757 = vand.u32 %v1756, 4294901760
  %v1758 = vsub.f32 %v1756, %v1757
  %v1759 = vand.u32 %v1758, 4294901760
  %1760 = vmatpush1.msra.mxu0 %v1759
  %1761 = vmatprep.subr.mxu0 0.0
  %v1762 = vand.u32 %v1577, 4294901760
  %v1763 = vsub.f32 %v1577, %v1762
  %v1764 = vand.u32 %v1763, 4294901760
  %v1765 = vsub.f32 %v1763, %v1764
  %v1766 = vand.u32 %v1765, 4294901760
  %1767 = vmatpush1.msra.mxu0 %v1766
  %1768 = vmatprep.subr.mxu0 0.0
  %v1769 = vand.u32 %v1578, 4294901760
  %v1770 = vsub.f32 %v1578, %v1769
  %v1771 = vand.u32 %v1770, 4294901760
  %v1772 = vsub.f32 %v1770, %v1771
  %v1773 = vand.u32 %v1772, 4294901760
  %1774 = vmatpush1.msra.mxu0 %v1773
  %1775 = vmatprep.subr.mxu0 0.0
  %v1776 = vand.u32 %v1579, 4294901760
  %v1777 = vsub.f32 %v1579, %v1776
  %v1778 = vand.u32 %v1777, 4294901760
  %v1779 = vsub.f32 %v1777, %v1778
  %v1780 = vand.u32 %v1779, 4294901760
  %1781 = vmatpush1.msra.mxu0 %v1780
  %1782 = vmatprep.subr.mxu0 0.0
  %v1783 = vand.u32 %v1580, 4294901760
  %v1784 = vsub.f32 %v1580, %v1783
  %v1785 = vand.u32 %v1784, 4294901760
  %v1786 = vsub.f32 %v1784, %v1785
  %v1787 = vand.u32 %v1786, 4294901760
  %1788 = vmatpush1.msra.mxu0 %v1787
  %1789 = vmatprep.subr.mxu0 0.0
  %v1790 = vand.u32 %v1581, 4294901760
  %v1791 = vsub.f32 %v1581, %v1790
  %v1792 = vand.u32 %v1791, 4294901760
  %v1793 = vsub.f32 %v1791, %v1792
  %v1794 = vand.u32 %v1793, 4294901760
  %1795 = vmatpush1.msra.mxu0 %v1794
  %1796 = vmatprep.subr.mxu0 0.0
  %v1797 = vand.u32 %v1582, 4294901760
  %v1798 = vsub.f32 %v1582, %v1797
  %v1799 = vand.u32 %v1798, 4294901760
  %v1800 = vsub.f32 %v1798, %v1799
  %v1801 = vand.u32 %v1800, 4294901760
  %1802 = vmatpush1.msra.mxu0 %v1801
  %1803 = vmatprep.subr.mxu0 0.0
  %v1804 = vand.u32 %v1583, 4294901760
  %v1805 = vsub.f32 %v1583, %v1804
  %v1806 = vand.u32 %v1805, 4294901760
  %v1807 = vsub.f32 %v1805, %v1806
  %v1808 = vand.u32 %v1807, 4294901760
  %1809 = vmatpush1.msra.mxu0 %v1808
  %1810 = vmatprep.subr.mxu0 0.0
  %v1811 = vand.u32 %v1584, 4294901760
  %v1812 = vsub.f32 %v1584, %v1811
  %v1813 = vand.u32 %v1812, 4294901760
  %v1814 = vsub.f32 %v1812, %v1813
  %v1815 = vand.u32 %v1814, 4294901760
  %1816 = vmatpush1.msra.mxu0 %v1815
  %1817 = vmatprep.subr.mxu0 0.0
  %v1818 = vand.u32 %v1585, 4294901760
  %v1819 = vsub.f32 %v1585, %v1818
  %v1820 = vand.u32 %v1819, 4294901760
  %v1821 = vsub.f32 %v1819, %v1820
  %v1822 = vand.u32 %v1821, 4294901760
  %1823 = vmatpush1.msra.mxu0 %v1822
  %1824 = vmatprep.subr.mxu0 0.0
  %v1825 = vand.u32 %v1586, 4294901760
  %v1826 = vsub.f32 %v1586, %v1825
  %v1827 = vand.u32 %v1826, 4294901760
  %v1828 = vsub.f32 %v1826, %v1827
  %v1829 = vand.u32 %v1828, 4294901760
  %1830 = vmatpush1.msra.mxu0 %v1829
  %1831 = vmatprep.subr.mxu0 0.0
  %v1832 = vand.u32 %v1589, 4294901760
  %v1833 = vsub.f32 %v1589, %v1832
  %v1834 = vand.u32 %v1833, 4294901760
  %v1835 = vsub.f32 %v1833, %v1834
  %v1836 = vand.u32 %v1835, 4294901760
  %1837 = vmatpush1.msra.mxu0 %v1836
  %1838 = vmatprep.subr.mxu0 0.0
  %1839 = vmatpush1.msra.mxu0 0.0
  %1840 = vmatprep.subr.mxu0 0.0
  %1841 = vmatpush1.msra.mxu0 0.0
  %1842 = vmatprep.subr.mxu0 0.0
  %1843 = vmatpush1.msra.mxu0 0.0
  %1844 = vmatprep.subr.mxu0 0.0
  %1845 = vmatpush1.msra.mxu0 0.0
  %1846 = vmatprep.subr.mxu0 0.0
  %1847 = vmatpush1.msra.mxu0 0.0
  %1848 = vmatprep.subr.mxu0 0.0
  %1849 = vmatpush1.msra.mxu0 0.0
  %1850 = vmatprep.subr.mxu0 0.0
  %1851 = vmatpush1.msra.mxu0 0.0
  %1852 = vmatprep.subr.mxu0 0.0
  %1853 = vmatpush1.msra.mxu0 0.0
  %1854 = vmatprep.subr.mxu0 0.0
  %1855 = vmatpush1.msra.mxu0 0.0
  %1856 = vmatprep.subr.mxu0 0.0
  %1857 = vmatpush1.msra.mxu0 0.0
  %1858 = vmatprep.subr.mxu0 0.0
  %1859 = vmatpush1.msra.mxu0 0.0
  %1860 = vmatprep.subr.mxu0 0.0
  %1861 = vmatpush1.msra.mxu0 0.0
  %1862 = vmatprep.subr.mxu0 0.0
  %1863 = vmatpush1.msra.mxu0 0.0
  %v1864 = vand.u32 %v36, 4294901760
  %1865 = vmatprep.mubr.f32.mxu0 %v1864
  %v1866 = vand.u32 %v11, 4294901760
  %1867 = vmatmul.mubr.f32.gmra.mrb[0].mxu0 %v1866
  %v1868 = vpop.f32.mrb[0].mxu0
  %v1869 = vadd.f32 %v1687, %v1868
  %v1870 = vpop.f32.mrb[0].mxu0
  %v1871 = vand.u32 %v39, 4294901760
  %1872 = vmatprep.mubr.f32.mxu0 %v1871
  %v1873 = vand.u32 %v13, 4294901760
  %1874 = vmatmul.mubr.f32.gmra.mrb[0].mxu0 %v1873
  %v1875 = vpop.f32.mrb[0].mxu0
  %v1876 = vadd.f32 %v1702, %v1875
  %v1877 = vpop.f32.mrb[0].mxu0
  %1878 = vdwg.mxu0
  %1879 = vmatprep.subr.mxu0 0.0
  %v1880 = vand.u32 %v1569, 4294901760
  %v1881 = vsub.f32 %v1569, %v1880
  %1882 = vmatpush1.msra.mxu0 %v1881
  %1883 = vmatprep.subr.mxu0 0.0
  %v1884 = vand.u32 %v1570, 4294901760
  %v1885 = vsub.f32 %v1570, %v1884
  %1886 = vmatpush1.msra.mxu0 %v1885
  %1887 = vmatprep.subr.mxu0 0.0
  %v1888 = vand.u32 %v1571, 4294901760
  %v1889 = vsub.f32 %v1571, %v1888
  %1890 = vmatpush1.msra.mxu0 %v1889
  %1891 = vmatprep.subr.mxu0 0.0
  %v1892 = vand.u32 %v1572, 4294901760
  %v1893 = vsub.f32 %v1572, %v1892
  %1894 = vmatpush1.msra.mxu0 %v1893
  %1895 = vmatprep.subr.mxu0 0.0
  %v1896 = vand.u32 %v1573, 4294901760
  %v1897 = vsub.f32 %v1573, %v1896
  %1898 = vmatpush1.msra.mxu0 %v1897
  %1899 = vmatprep.subr.mxu0 0.0
  %v1900 = vand.u32 %v1574, 4294901760
  %v1901 = vsub.f32 %v1574, %v1900
  %1902 = vmatpush1.msra.mxu0 %v1901
  %1903 = vmatprep.subr.mxu0 0.0
  %v1904 = vand.u32 %v1575, 4294901760
  %v1905 = vsub.f32 %v1575, %v1904
  %1906 = vmatpush1.msra.mxu0 %v1905
  %1907 = vmatprep.subr.mxu0 0.0
  %v1908 = vand.u32 %v1576, 4294901760
  %v1909 = vsub.f32 %v1576, %v1908
  %1910 = vmatpush1.msra.mxu0 %v1909
  %1911 = vmatprep.subr.mxu0 0.0
  %v1912 = vand.u32 %v1577, 4294901760
  %v1913 = vsub.f32 %v1577, %v1912
  %1914 = vmatpush1.msra.mxu0 %v1913
  %1915 = vmatprep.subr.mxu0 0.0
  %v1916 = vand.u32 %v1578, 4294901760
  %v1917 = vsub.f32 %v1578, %v1916
  %1918 = vmatpush1.msra.mxu0 %v1917
  %1919 = vmatprep.subr.mxu0 0.0
  %v1920 = vand.u32 %v1579, 4294901760
  %v1921 = vsub.f32 %v1579, %v1920
  %1922 = vmatpush1.msra.mxu0 %v1921
  %1923 = vmatprep.subr.mxu0 0.0
  %v1924 = vand.u32 %v1580, 4294901760
  %v1925 = vsub.f32 %v1580, %v1924
  %1926 = vmatpush1.msra.mxu0 %v1925
  %1927 = vmatprep.subr.mxu0 0.0
  %v1928 = vand.u32 %v1581, 4294901760
  %v1929 = vsub.f32 %v1581, %v1928
  %1930 = vmatpush1.msra.mxu0 %v1929
  %1931 = vmatprep.subr.mxu0 0.0
  %v1932 = vand.u32 %v1582, 4294901760
  %v1933 = vsub.f32 %v1582, %v1932
  %1934 = vmatpush1.msra.mxu0 %v1933
  %1935 = vmatprep.subr.mxu0 0.0
  %v1936 = vand.u32 %v1583, 4294901760
  %v1937 = vsub.f32 %v1583, %v1936
  %1938 = vmatpush1.msra.mxu0 %v1937
  %1939 = vmatprep.subr.mxu0 0.0
  %v1940 = vand.u32 %v1584, 4294901760
  %v1941 = vsub.f32 %v1584, %v1940
  %1942 = vmatpush1.msra.mxu0 %v1941
  %1943 = vmatprep.subr.mxu0 0.0
  %v1944 = vand.u32 %v1585, 4294901760
  %v1945 = vsub.f32 %v1585, %v1944
  %1946 = vmatpush1.msra.mxu0 %v1945
  %1947 = vmatprep.subr.mxu0 0.0
  %v1948 = vand.u32 %v1586, 4294901760
  %v1949 = vsub.f32 %v1586, %v1948
  %1950 = vmatpush1.msra.mxu0 %v1949
  %1951 = vmatprep.subr.mxu0 0.0
  %v1952 = vand.u32 %v1589, 4294901760
  %v1953 = vsub.f32 %v1589, %v1952
  %1954 = vmatpush1.msra.mxu0 %v1953
  %1955 = vmatprep.subr.mxu0 0.0
  %1956 = vmatpush1.msra.mxu0 0.0
  %1957 = vmatprep.subr.mxu0 0.0
  %1958 = vmatpush1.msra.mxu0 0.0
  %1959 = vmatprep.subr.mxu0 0.0
  %1960 = vmatpush1.msra.mxu0 0.0
  %1961 = vmatprep.subr.mxu0 0.0
  %1962 = vmatpush1.msra.mxu0 0.0
  %1963 = vmatprep.subr.mxu0 0.0
  %1964 = vmatpush1.msra.mxu0 0.0
  %1965 = vmatprep.subr.mxu0 0.0
  %1966 = vmatpush1.msra.mxu0 0.0
  %1967 = vmatprep.subr.mxu0 0.0
  %1968 = vmatpush1.msra.mxu0 0.0
  %1969 = vmatprep.subr.mxu0 0.0
  %1970 = vmatpush1.msra.mxu0 0.0
  %1971 = vmatprep.subr.mxu0 0.0
  %1972 = vmatpush1.msra.mxu0 0.0
  %1973 = vmatprep.subr.mxu0 0.0
  %1974 = vmatpush1.msra.mxu0 0.0
  %1975 = vmatprep.subr.mxu0 0.0
  %1976 = vmatpush1.msra.mxu0 0.0
  %1977 = vmatprep.subr.mxu0 0.0
  %1978 = vmatpush1.msra.mxu0 0.0
  %1979 = vmatprep.subr.mxu0 0.0
  %1980 = vmatpush1.msra.mxu0 0.0
  %v1981 = vand.u32 %v36, 4294901760
  %v1982 = vsub.f32 %v36, %v1981
  %1983 = vmatprep.mubr.f32.mxu0 %v1982
  %v1984 = vand.u32 %v11, 4294901760
  %v1985 = vsub.f32 %v11, %v1984
  %1986 = vmatmul.mubr.f32.gmra.mrb[0].mxu0 %v1985
  %v1987 = vpop.f32.mrb[0].mxu0
  %v1988 = vadd.f32 %v1869, %v1987
  %v1989 = vpop.f32.mrb[0].mxu0
  %v1990 = vand.u32 %v39, 4294901760
  %v1991 = vsub.f32 %v39, %v1990
  %1992 = vmatprep.mubr.f32.mxu0 %v1991
  %v1993 = vand.u32 %v13, 4294901760
  %v1994 = vsub.f32 %v13, %v1993
  %1995 = vmatmul.mubr.f32.gmra.mrb[0].mxu0 %v1994
  %v1996 = vpop.f32.mrb[0].mxu0
  %v1997 = vadd.f32 %v1876, %v1996
  %v1998 = vpop.f32.mrb[0].mxu0
  %1999 = vdwg.mxu0
  %2000 = vmatprep.subr.mxu0 0.0
  %v2001 = vand.u32 %v1569, 4294901760
  %2002 = vmatpush1.msra.mxu0 %v2001
  %2003 = vmatprep.subr.mxu0 0.0
  %v2004 = vand.u32 %v1570, 4294901760
  %2005 = vmatpush1.msra.mxu0 %v2004
  %2006 = vmatprep.subr.mxu0 0.0
  %v2007 = vand.u32 %v1571, 4294901760
  %2008 = vmatpush1.msra.mxu0 %v2007
  %2009 = vmatprep.subr.mxu0 0.0
  %v2010 = vand.u32 %v1572, 4294901760
  %2011 = vmatpush1.msra.mxu0 %v2010
  %2012 = vmatprep.subr.mxu0 0.0
  %v2013 = vand.u32 %v1573, 4294901760
  %2014 = vmatpush1.msra.mxu0 %v2013
  %2015 = vmatprep.subr.mxu0 0.0
  %v2016 = vand.u32 %v1574, 4294901760
  %2017 = vmatpush1.msra.mxu0 %v2016
  %2018 = vmatprep.subr.mxu0 0.0
  %v2019 = vand.u32 %v1575, 4294901760
  %2020 = vmatpush1.msra.mxu0 %v2019
  %2021 = vmatprep.subr.mxu0 0.0
  %v2022 = vand.u32 %v1576, 4294901760
  %2023 = vmatpush1.msra.mxu0 %v2022
  %2024 = vmatprep.subr.mxu0 0.0
  %v2025 = vand.u32 %v1577, 4294901760
  %2026 = vmatpush1.msra.mxu0 %v2025
  %2027 = vmatprep.subr.mxu0 0.0
  %v2028 = vand.u32 %v1578, 4294901760
  %2029 = vmatpush1.msra.mxu0 %v2028
  %2030 = vmatprep.subr.mxu0 0.0
  %v2031 = vand.u32 %v1579, 4294901760
  %2032 = vmatpush1.msra.mxu0 %v2031
  %2033 = vmatprep.subr.mxu0 0.0
  %v2034 = vand.u32 %v1580, 4294901760
  %2035 = vmatpush1.msra.mxu0 %v2034
  %2036 = vmatprep.subr.mxu0 0.0
  %v2037 = vand.u32 %v1581, 4294901760
  %2038 = vmatpush1.msra.mxu0 %v2037
  %2039 = vmatprep.subr.mxu0 0.0
  %v2040 = vand.u32 %v1582, 4294901760
  %2041 = vmatpush1.msra.mxu0 %v2040
  %2042 = vmatprep.subr.mxu0 0.0
  %v2043 = vand.u32 %v1583, 4294901760
  %2044 = vmatpush1.msra.mxu0 %v2043
  %2045 = vmatprep.subr.mxu0 0.0
  %v2046 = vand.u32 %v1584, 4294901760
  %2047 = vmatpush1.msra.mxu0 %v2046
  %2048 = vmatprep.subr.mxu0 0.0
  %v2049 = vand.u32 %v1585, 4294901760
  %2050 = vmatpush1.msra.mxu0 %v2049
  %2051 = vmatprep.subr.mxu0 0.0
  %v2052 = vand.u32 %v1586, 4294901760
  %2053 = vmatpush1.msra.mxu0 %v2052
  %2054 = vmatprep.subr.mxu0 0.0
  %v2055 = vand.u32 %v1589, 4294901760
  %2056 = vmatpush1.msra.mxu0 %v2055
  %2057 = vmatprep.subr.mxu0 0.0
  %2058 = vmatpush1.msra.mxu0 0.0
  %2059 = vmatprep.subr.mxu0 0.0
  %2060 = vmatpush1.msra.mxu0 0.0
  %2061 = vmatprep.subr.mxu0 0.0
  %2062 = vmatpush1.msra.mxu0 0.0
  %2063 = vmatprep.subr.mxu0 0.0
  %2064 = vmatpush1.msra.mxu0 0.0
  %2065 = vmatprep.subr.mxu0 0.0
  %2066 = vmatpush1.msra.mxu0 0.0
  %2067 = vmatprep.subr.mxu0 0.0
  %2068 = vmatpush1.msra.mxu0 0.0
  %2069 = vmatprep.subr.mxu0 0.0
  %2070 = vmatpush1.msra.mxu0 0.0
  %2071 = vmatprep.subr.mxu0 0.0
  %2072 = vmatpush1.msra.mxu0 0.0
  %2073 = vmatprep.subr.mxu0 0.0
  %2074 = vmatpush1.msra.mxu0 0.0
  %2075 = vmatprep.subr.mxu0 0.0
  %2076 = vmatpush1.msra.mxu0 0.0
  %2077 = vmatprep.subr.mxu0 0.0
  %2078 = vmatpush1.msra.mxu0 0.0
  %2079 = vmatprep.subr.mxu0 0.0
  %2080 = vmatpush1.msra.mxu0 0.0
  %2081 = vmatprep.subr.mxu0 0.0
  %2082 = vmatpush1.msra.mxu0 0.0
  %v2083 = vand.u32 %v36, 4294901760
  %v2084 = vsub.f32 %v36, %v2083
  %v2085 = vand.u32 %v2084, 4294901760
  %2086 = vmatprep.mubr.f32.mxu0 %v2085
  %v2087 = vand.u32 %v11, 4294901760
  %v2088 = vsub.f32 %v11, %v2087
  %v2089 = vand.u32 %v2088, 4294901760
  %2090 = vmatmul.mubr.f32.gmra.mrb[0].mxu0 %v2089
  %v2091 = vpop.f32.mrb[0].mxu0
  %v2092 = vadd.f32 %v1988, %v2091
  %v2093 = vpop.f32.mrb[0].mxu0
  %v2094 = vand.u32 %v39, 4294901760
  %v2095 = vsub.f32 %v39, %v2094
  %v2096 = vand.u32 %v2095, 4294901760
  %2097 = vmatprep.mubr.f32.mxu0 %v2096
  %v2098 = vand.u32 %v13, 4294901760
  %v2099 = vsub.f32 %v13, %v2098
  %v2100 = vand.u32 %v2099, 4294901760
  %2101 = vmatmul.mubr.f32.gmra.mrb[0].mxu0 %v2100
  %v2102 = vpop.f32.mrb[0].mxu0
  %v2103 = vadd.f32 %v1997, %v2102
  %v2104 = vpop.f32.mrb[0].mxu0
  %2105 = vdwg.mxu0
  %2106 = vmatprep.subr.mxu0 0.0
  %v2107 = vand.u32 %v1569, 4294901760
  %v2108 = vsub.f32 %v1569, %v2107
  %v2109 = vand.u32 %v2108, 4294901760
  %2110 = vmatpush1.msra.mxu0 %v2109
  %2111 = vmatprep.subr.mxu0 0.0
  %v2112 = vand.u32 %v1570, 4294901760
  %v2113 = vsub.f32 %v1570, %v2112
  %v2114 = vand.u32 %v2113, 4294901760
  %2115 = vmatpush1.msra.mxu0 %v2114
  %2116 = vmatprep.subr.mxu0 0.0
  %v2117 = vand.u32 %v1571, 4294901760
  %v2118 = vsub.f32 %v1571, %v2117
  %v2119 = vand.u32 %v2118, 4294901760
  %2120 = vmatpush1.msra.mxu0 %v2119
  %2121 = vmatprep.subr.mxu0 0.0
  %v2122 = vand.u32 %v1572, 4294901760
  %v2123 = vsub.f32 %v1572, %v2122
  %v2124 = vand.u32 %v2123, 4294901760
  %2125 = vmatpush1.msra.mxu0 %v2124
  %2126 = vmatprep.subr.mxu0 0.0
  %v2127 = vand.u32 %v1573, 4294901760
  %v2128 = vsub.f32 %v1573, %v2127
  %v2129 = vand.u32 %v2128, 4294901760
  %2130 = vmatpush1.msra.mxu0 %v2129
  %2131 = vmatprep.subr.mxu0 0.0
  %v2132 = vand.u32 %v1574, 4294901760
  %v2133 = vsub.f32 %v1574, %v2132
  %v2134 = vand.u32 %v2133, 4294901760
  %2135 = vmatpush1.msra.mxu0 %v2134
  %2136 = vmatprep.subr.mxu0 0.0
  %v2137 = vand.u32 %v1575, 4294901760
  %v2138 = vsub.f32 %v1575, %v2137
  %v2139 = vand.u32 %v2138, 4294901760
  %2140 = vmatpush1.msra.mxu0 %v2139
  %2141 = vmatprep.subr.mxu0 0.0
  %v2142 = vand.u32 %v1576, 4294901760
  %v2143 = vsub.f32 %v1576, %v2142
  %v2144 = vand.u32 %v2143, 4294901760
  %2145 = vmatpush1.msra.mxu0 %v2144
  %2146 = vmatprep.subr.mxu0 0.0
  %v2147 = vand.u32 %v1577, 4294901760
  %v2148 = vsub.f32 %v1577, %v2147
  %v2149 = vand.u32 %v2148, 4294901760
  %2150 = vmatpush1.msra.mxu0 %v2149
  %2151 = vmatprep.subr.mxu0 0.0
  %v2152 = vand.u32 %v1578, 4294901760
  %v2153 = vsub.f32 %v1578, %v2152
  %v2154 = vand.u32 %v2153, 4294901760
  %2155 = vmatpush1.msra.mxu0 %v2154
  %2156 = vmatprep.subr.mxu0 0.0
  %v2157 = vand.u32 %v1579, 4294901760
  %v2158 = vsub.f32 %v1579, %v2157
  %v2159 = vand.u32 %v2158, 4294901760
  %2160 = vmatpush1.msra.mxu0 %v2159
  %2161 = vmatprep.subr.mxu0 0.0
  %v2162 = vand.u32 %v1580, 4294901760
  %v2163 = vsub.f32 %v1580, %v2162
  %v2164 = vand.u32 %v2163, 4294901760
  %2165 = vmatpush1.msra.mxu0 %v2164
  %2166 = vmatprep.subr.mxu0 0.0
  %v2167 = vand.u32 %v1581, 4294901760
  %v2168 = vsub.f32 %v1581, %v2167
  %v2169 = vand.u32 %v2168, 4294901760
  %2170 = vmatpush1.msra.mxu0 %v2169
  %2171 = vmatprep.subr.mxu0 0.0
  %v2172 = vand.u32 %v1582, 4294901760
  %v2173 = vsub.f32 %v1582, %v2172
  %v2174 = vand.u32 %v2173, 4294901760
  %2175 = vmatpush1.msra.mxu0 %v2174
  %2176 = vmatprep.subr.mxu0 0.0
  %v2177 = vand.u32 %v1583, 4294901760
  %v2178 = vsub.f32 %v1583, %v2177
  %v2179 = vand.u32 %v2178, 4294901760
  %2180 = vmatpush1.msra.mxu0 %v2179
  %2181 = vmatprep.subr.mxu0 0.0
  %v2182 = vand.u32 %v1584, 4294901760
  %v2183 = vsub.f32 %v1584, %v2182
  %v2184 = vand.u32 %v2183, 4294901760
  %2185 = vmatpush1.msra.mxu0 %v2184
  %2186 = vmatprep.subr.mxu0 0.0
  %v2187 = vand.u32 %v1585, 4294901760
  %v2188 = vsub.f32 %v1585, %v2187
  %v2189 = vand.u32 %v2188, 4294901760
  %2190 = vmatpush1.msra.mxu0 %v2189
  %2191 = vmatprep.subr.mxu0 0.0
  %v2192 = vand.u32 %v1586, 4294901760
  %v2193 = vsub.f32 %v1586, %v2192
  %v2194 = vand.u32 %v2193, 4294901760
  %2195 = vmatpush1.msra.mxu0 %v2194
  %2196 = vmatprep.subr.mxu0 0.0
  %v2197 = vand.u32 %v1589, 4294901760
  %v2198 = vsub.f32 %v1589, %v2197
  %v2199 = vand.u32 %v2198, 4294901760
  %2200 = vmatpush1.msra.mxu0 %v2199
  %2201 = vmatprep.subr.mxu0 0.0
  %2202 = vmatpush1.msra.mxu0 0.0
  %2203 = vmatprep.subr.mxu0 0.0
  %2204 = vmatpush1.msra.mxu0 0.0
  %2205 = vmatprep.subr.mxu0 0.0
  %2206 = vmatpush1.msra.mxu0 0.0
  %2207 = vmatprep.subr.mxu0 0.0
  %2208 = vmatpush1.msra.mxu0 0.0
  %2209 = vmatprep.subr.mxu0 0.0
  %2210 = vmatpush1.msra.mxu0 0.0
  %2211 = vmatprep.subr.mxu0 0.0
  %2212 = vmatpush1.msra.mxu0 0.0
  %2213 = vmatprep.subr.mxu0 0.0
  %2214 = vmatpush1.msra.mxu0 0.0
  %2215 = vmatprep.subr.mxu0 0.0
  %2216 = vmatpush1.msra.mxu0 0.0
  %2217 = vmatprep.subr.mxu0 0.0
  %2218 = vmatpush1.msra.mxu0 0.0
  %2219 = vmatprep.subr.mxu0 0.0
  %2220 = vmatpush1.msra.mxu0 0.0
  %2221 = vmatprep.subr.mxu0 0.0
  %2222 = vmatpush1.msra.mxu0 0.0
  %2223 = vmatprep.subr.mxu0 0.0
  %2224 = vmatpush1.msra.mxu0 0.0
  %2225 = vmatprep.subr.mxu0 0.0
  %2226 = vmatpush1.msra.mxu0 0.0
  %v2227 = vand.u32 %v36, 4294901760
  %2228 = vmatprep.mubr.f32.mxu0 %v2227
  %v2229 = vand.u32 %v11, 4294901760
  %2230 = vmatmul.mubr.f32.gmra.mrb[0].mxu0 %v2229
  %v2231 = vpop.f32.mrb[0].mxu0
  %v2232 = vadd.f32 %v2092, %v2231
  %v2233 = vpop.f32.mrb[0].mxu0
  %v2234 = vand.u32 %v39, 4294901760
  %2235 = vmatprep.mubr.f32.mxu0 %v2234
  %v2236 = vand.u32 %v13, 4294901760
  %2237 = vmatmul.mubr.f32.gmra.mrb[0].mxu0 %v2236
  %v2238 = vpop.f32.mrb[0].mxu0
  %v2239 = vadd.f32 %v2103, %v2238
  %v2240 = vpop.f32.mrb[0].mxu0
  %2241 = vdwg.mxu0
  %2242 = vmatprep.subr.mxu0 0.0
  %v2243 = vand.u32 %v1569, 4294901760
  %2244 = vmatpush1.msra.mxu0 %v2243
  %2245 = vmatprep.subr.mxu0 0.0
  %v2246 = vand.u32 %v1570, 4294901760
  %2247 = vmatpush1.msra.mxu0 %v2246
  %2248 = vmatprep.subr.mxu0 0.0
  %v2249 = vand.u32 %v1571, 4294901760
  %2250 = vmatpush1.msra.mxu0 %v2249
  %2251 = vmatprep.subr.mxu0 0.0
  %v2252 = vand.u32 %v1572, 4294901760
  %2253 = vmatpush1.msra.mxu0 %v2252
  %2254 = vmatprep.subr.mxu0 0.0
  %v2255 = vand.u32 %v1573, 4294901760
  %2256 = vmatpush1.msra.mxu0 %v2255
  %2257 = vmatprep.subr.mxu0 0.0
  %v2258 = vand.u32 %v1574, 4294901760
  %2259 = vmatpush1.msra.mxu0 %v2258
  %2260 = vmatprep.subr.mxu0 0.0
  %v2261 = vand.u32 %v1575, 4294901760
  %2262 = vmatpush1.msra.mxu0 %v2261
  %2263 = vmatprep.subr.mxu0 0.0
  %v2264 = vand.u32 %v1576, 4294901760
  %2265 = vmatpush1.msra.mxu0 %v2264
  %2266 = vmatprep.subr.mxu0 0.0
  %v2267 = vand.u32 %v1577, 4294901760
  %2268 = vmatpush1.msra.mxu0 %v2267
  %2269 = vmatprep.subr.mxu0 0.0
  %v2270 = vand.u32 %v1578, 4294901760
  %2271 = vmatpush1.msra.mxu0 %v2270
  %2272 = vmatprep.subr.mxu0 0.0
  %v2273 = vand.u32 %v1579, 4294901760
  %2274 = vmatpush1.msra.mxu0 %v2273
  %2275 = vmatprep.subr.mxu0 0.0
  %v2276 = vand.u32 %v1580, 4294901760
  %2277 = vmatpush1.msra.mxu0 %v2276
  %2278 = vmatprep.subr.mxu0 0.0
  %v2279 = vand.u32 %v1581, 4294901760
  %2280 = vmatpush1.msra.mxu0 %v2279
  %2281 = vmatprep.subr.mxu0 0.0
  %v2282 = vand.u32 %v1582, 4294901760
  %2283 = vmatpush1.msra.mxu0 %v2282
  %2284 = vmatprep.subr.mxu0 0.0
  %v2285 = vand.u32 %v1583, 4294901760
  %2286 = vmatpush1.msra.mxu0 %v2285
  %2287 = vmatprep.subr.mxu0 0.0
  %v2288 = vand.u32 %v1584, 4294901760
  %2289 = vmatpush1.msra.mxu0 %v2288
  %2290 = vmatprep.subr.mxu0 0.0
  %v2291 = vand.u32 %v1585, 4294901760
  %2292 = vmatpush1.msra.mxu0 %v2291
  %2293 = vmatprep.subr.mxu0 0.0
  %v2294 = vand.u32 %v1586, 4294901760
  %2295 = vmatpush1.msra.mxu0 %v2294
  %2296 = vmatprep.subr.mxu0 0.0
  %v2297 = vand.u32 %v1589, 4294901760
  %2298 = vmatpush1.msra.mxu0 %v2297
  %2299 = vmatprep.subr.mxu0 0.0
  %2300 = vmatpush1.msra.mxu0 0.0
  %2301 = vmatprep.subr.mxu0 0.0
  %2302 = vmatpush1.msra.mxu0 0.0
  %2303 = vmatprep.subr.mxu0 0.0
  %2304 = vmatpush1.msra.mxu0 0.0
  %2305 = vmatprep.subr.mxu0 0.0
  %2306 = vmatpush1.msra.mxu0 0.0
  %2307 = vmatprep.subr.mxu0 0.0
  %2308 = vmatpush1.msra.mxu0 0.0
  %2309 = vmatprep.subr.mxu0 0.0
  %2310 = vmatpush1.msra.mxu0 0.0
  %2311 = vmatprep.subr.mxu0 0.0
  %2312 = vmatpush1.msra.mxu0 0.0
  %2313 = vmatprep.subr.mxu0 0.0
  %2314 = vmatpush1.msra.mxu0 0.0
  %2315 = vmatprep.subr.mxu0 0.0
  %2316 = vmatpush1.msra.mxu0 0.0
  %2317 = vmatprep.subr.mxu0 0.0
  %2318 = vmatpush1.msra.mxu0 0.0
  %2319 = vmatprep.subr.mxu0 0.0
  %2320 = vmatpush1.msra.mxu0 0.0
  %2321 = vmatprep.subr.mxu0 0.0
  %2322 = vmatpush1.msra.mxu0 0.0
  %2323 = vmatprep.subr.mxu0 0.0
  %2324 = vmatpush1.msra.mxu0 0.0
  %v2325 = vand.u32 %v36, 4294901760
  %2326 = vmatprep.mubr.f32.mxu0 %v2325
  %v2327 = vand.u32 %v11, 4294901760
  %2328 = vmatmul.mubr.f32.gmra.mrb[0].mxu0 %v2327
  %v2329 = vpop.f32.mrb[0].mxu0
  %v2330 = vadd.f32 %v2232, %v2329
  %v2331 = vpop.f32.mrb[0].mxu0
  %v2332 = vand.u32 %v39, 4294901760
  %2333 = vmatprep.mubr.f32.mxu0 %v2332
  %v2334 = vand.u32 %v13, 4294901760
  %2335 = vmatmul.mubr.f32.gmra.mrb[0].mxu0 %v2334
  %v2336 = vpop.f32.mrb[0].mxu0
  %v2337 = vadd.f32 %v2239, %v2336
  %v2338 = vpop.f32.mrb[0].mxu0
  %2339 = vdwg.mxu0
  %v2340 = vmax.f32 %v1566, %v2330
  %v2341 = vmax.f32 %v1567, %v2337
  %s2342 = scalar_lea.vmem %s0, 456
  %v2343 = vld [vmem:[%s2342] sm:$0xff]
  %v2344 = vld [vmem:[%s2342 + $0x8] sm:$0xff]
  %v2345 = vld [vmem:[%s2342 + $0x10] sm:$0xff]
  %v2346 = vld [vmem:[%s2342 + $0x18] sm:$0xff]
  %v2347 = vld [vmem:[%s2342 + $0x20] sm:$0xff]
  %v2348 = vld [vmem:[%s2342 + $0x28] sm:$0xff]
  %v2349 = vld [vmem:[%s2342 + $0x30] sm:$0xff]
  %v2350 = vld [vmem:[%s2342 + $0x38] sm:$0xff]
  %v2351 = vld [vmem:[%s2342 + $0x40] sm:$0xff]
  %v2352 = vld [vmem:[%s2342 + $0x48] sm:$0xff]
  %v2353 = vld [vmem:[%s2342 + $0x50] sm:$0xff]
  %v2354 = vld [vmem:[%s2342 + $0x58] sm:$0xff]
  %v2355 = vld [vmem:[%s2342 + $0x60] sm:$0xff]
  %v2356 = vld [vmem:[%s2342 + $0x68] sm:$0xff]
  %v2357 = vld [vmem:[%s2342 + $0x70] sm:$0xff]
  %v2358 = vld [vmem:[%s2342 + $0x78] sm:$0xff]
  %v2359 = vld [vmem:[%s2342 + $0x80] sm:$0xff]
  %v2360 = vld [vmem:[%s2342 + $0x88] sm:$0xff]
  %v2361 = vld [vmem:[%s2342 + $0x90] sm:$0x7f]
  %v2363 = vsel %vm41, %v2361, 0
  %2365 = vmatprep.subr.mxu0 0.0
  %v2366 = vand.u32 %v2343, 4294901760
  %2367 = vmatpush1.msra.mxu0 %v2366
  %2368 = vmatprep.subr.mxu0 0.0
  %v2369 = vand.u32 %v2344, 4294901760
  %2370 = vmatpush1.msra.mxu0 %v2369
  %2371 = vmatprep.subr.mxu0 0.0
  %v2372 = vand.u32 %v2345, 4294901760
  %2373 = vmatpush1.msra.mxu0 %v2372
  %2374 = vmatprep.subr.mxu0 0.0
  %v2375 = vand.u32 %v2346, 4294901760
  %2376 = vmatpush1.msra.mxu0 %v2375
  %2377 = vmatprep.subr.mxu0 0.0
  %v2378 = vand.u32 %v2347, 4294901760
  %2379 = vmatpush1.msra.mxu0 %v2378
  %2380 = vmatprep.subr.mxu0 0.0
  %v2381 = vand.u32 %v2348, 4294901760
  %2382 = vmatpush1.msra.mxu0 %v2381
  %2383 = vmatprep.subr.mxu0 0.0
  %v2384 = vand.u32 %v2349, 4294901760
  %2385 = vmatpush1.msra.mxu0 %v2384
  %2386 = vmatprep.subr.mxu0 0.0
  %v2387 = vand.u32 %v2350, 4294901760
  %2388 = vmatpush1.msra.mxu0 %v2387
  %2389 = vmatprep.subr.mxu0 0.0
  %v2390 = vand.u32 %v2351, 4294901760
  %2391 = vmatpush1.msra.mxu0 %v2390
  %2392 = vmatprep.subr.mxu0 0.0
  %v2393 = vand.u32 %v2352, 4294901760
  %2394 = vmatpush1.msra.mxu0 %v2393
  %2395 = vmatprep.subr.mxu0 0.0
  %v2396 = vand.u32 %v2353, 4294901760
  %2397 = vmatpush1.msra.mxu0 %v2396
  %2398 = vmatprep.subr.mxu0 0.0
  %v2399 = vand.u32 %v2354, 4294901760
  %2400 = vmatpush1.msra.mxu0 %v2399
  %2401 = vmatprep.subr.mxu0 0.0
  %v2402 = vand.u32 %v2355, 4294901760
  %2403 = vmatpush1.msra.mxu0 %v2402
  %2404 = vmatprep.subr.mxu0 0.0
  %v2405 = vand.u32 %v2356, 4294901760
  %2406 = vmatpush1.msra.mxu0 %v2405
  %2407 = vmatprep.subr.mxu0 0.0
  %v2408 = vand.u32 %v2357, 4294901760
  %2409 = vmatpush1.msra.mxu0 %v2408
  %2410 = vmatprep.subr.mxu0 0.0
  %v2411 = vand.u32 %v2358, 4294901760
  %2412 = vmatpush1.msra.mxu0 %v2411
  %2413 = vmatprep.subr.mxu0 0.0
  %v2414 = vand.u32 %v2359, 4294901760
  %2415 = vmatpush1.msra.mxu0 %v2414
  %2416 = vmatprep.subr.mxu0 0.0
  %v2417 = vand.u32 %v2360, 4294901760
  %2418 = vmatpush1.msra.mxu0 %v2417
  %2419 = vmatprep.subr.mxu0 0.0
  %v2420 = vand.u32 %v2363, 4294901760
  %2421 = vmatpush1.msra.mxu0 %v2420
  %2422 = vmatprep.subr.mxu0 0.0
  %2423 = vmatpush1.msra.mxu0 0.0
  %2424 = vmatprep.subr.mxu0 0.0
  %2425 = vmatpush1.msra.mxu0 0.0
  %2426 = vmatprep.subr.mxu0 0.0
  %2427 = vmatpush1.msra.mxu0 0.0
  %2428 = vmatprep.subr.mxu0 0.0
  %2429 = vmatpush1.msra.mxu0 0.0
  %2430 = vmatprep.subr.mxu0 0.0
  %2431 = vmatpush1.msra.mxu0 0.0
  %2432 = vmatprep.subr.mxu0 0.0
  %2433 = vmatpush1.msra.mxu0 0.0
  %2434 = vmatprep.subr.mxu0 0.0
  %2435 = vmatpush1.msra.mxu0 0.0
  %2436 = vmatprep.subr.mxu0 0.0
  %2437 = vmatpush1.msra.mxu0 0.0
  %2438 = vmatprep.subr.mxu0 0.0
  %2439 = vmatpush1.msra.mxu0 0.0
  %2440 = vmatprep.subr.mxu0 0.0
  %2441 = vmatpush1.msra.mxu0 0.0
  %2442 = vmatprep.subr.mxu0 0.0
  %2443 = vmatpush1.msra.mxu0 0.0
  %2444 = vmatprep.subr.mxu0 0.0
  %2445 = vmatpush1.msra.mxu0 0.0
  %2446 = vmatprep.subr.mxu0 0.0
  %2447 = vmatpush1.msra.mxu0 0.0
  %v2448 = vand.u32 %v36, 4294901760
  %v2449 = vsub.f32 %v36, %v2448
  %v2450 = vand.u32 %v2449, 4294901760
  %v2451 = vsub.f32 %v2449, %v2450
  %v2452 = vand.u32 %v2451, 4294901760
  %2453 = vmatprep.mubr.f32.mxu0 %v2452
  %v2454 = vand.u32 %v11, 4294901760
  %v2455 = vsub.f32 %v11, %v2454
  %v2456 = vand.u32 %v2455, 4294901760
  %v2457 = vsub.f32 %v2455, %v2456
  %v2458 = vand.u32 %v2457, 4294901760
  %2459 = vmatmul.mubr.f32.gmra.mrb[0].mxu0 %v2458
  %v2460 = vpop.f32.mrb[0].mxu0
  %v2461 = vadd.f32 0.0, %v2460
  %v2462 = vpop.f32.mrb[0].mxu0
  %v2463 = vand.u32 %v39, 4294901760
  %v2464 = vsub.f32 %v39, %v2463
  %v2465 = vand.u32 %v2464, 4294901760
  %v2466 = vsub.f32 %v2464, %v2465
  %v2467 = vand.u32 %v2466, 4294901760
  %2468 = vmatprep.mubr.f32.mxu0 %v2467
  %v2469 = vand.u32 %v13, 4294901760
  %v2470 = vsub.f32 %v13, %v2469
  %v2471 = vand.u32 %v2470, 4294901760
  %v2472 = vsub.f32 %v2470, %v2471
  %v2473 = vand.u32 %v2472, 4294901760
  %2474 = vmatmul.mubr.f32.gmra.mrb[0].mxu0 %v2473
  %v2475 = vpop.f32.mrb[0].mxu0
  %v2476 = vadd.f32 0.0, %v2475
  %v2477 = vpop.f32.mrb[0].mxu0
  %2478 = vdwg.mxu0
  %2479 = vmatprep.subr.mxu0 0.0
  %v2480 = vand.u32 %v2343, 4294901760
  %v2481 = vsub.f32 %v2343, %v2480
  %v2482 = vand.u32 %v2481, 4294901760
  %v2483 = vsub.f32 %v2481, %v2482
  %v2484 = vand.u32 %v2483, 4294901760
  %2485 = vmatpush1.msra.mxu0 %v2484
  %2486 = vmatprep.subr.mxu0 0.0
  %v2487 = vand.u32 %v2344, 4294901760
  %v2488 = vsub.f32 %v2344, %v2487
  %v2489 = vand.u32 %v2488, 4294901760
  %v2490 = vsub.f32 %v2488, %v2489
  %v2491 = vand.u32 %v2490, 4294901760
  %2492 = vmatpush1.msra.mxu0 %v2491
  %2493 = vmatprep.subr.mxu0 0.0
  %v2494 = vand.u32 %v2345, 4294901760
  %v2495 = vsub.f32 %v2345, %v2494
  %v2496 = vand.u32 %v2495, 4294901760
  %v2497 = vsub.f32 %v2495, %v2496
  %v2498 = vand.u32 %v2497, 4294901760
  %2499 = vmatpush1.msra.mxu0 %v2498
  %2500 = vmatprep.subr.mxu0 0.0
  %v2501 = vand.u32 %v2346, 4294901760
  %v2502 = vsub.f32 %v2346, %v2501
  %v2503 = vand.u32 %v2502, 4294901760
  %v2504 = vsub.f32 %v2502, %v2503
  %v2505 = vand.u32 %v2504, 4294901760
  %2506 = vmatpush1.msra.mxu0 %v2505
  %2507 = vmatprep.subr.mxu0 0.0
  %v2508 = vand.u32 %v2347, 4294901760
  %v2509 = vsub.f32 %v2347, %v2508
  %v2510 = vand.u32 %v2509, 4294901760
  %v2511 = vsub.f32 %v2509, %v2510
  %v2512 = vand.u32 %v2511, 4294901760
  %2513 = vmatpush1.msra.mxu0 %v2512
  %2514 = vmatprep.subr.mxu0 0.0
  %v2515 = vand.u32 %v2348, 4294901760
  %v2516 = vsub.f32 %v2348, %v2515
  %v2517 = vand.u32 %v2516, 4294901760
  %v2518 = vsub.f32 %v2516, %v2517
  %v2519 = vand.u32 %v2518, 4294901760
  %2520 = vmatpush1.msra.mxu0 %v2519
  %2521 = vmatprep.subr.mxu0 0.0
  %v2522 = vand.u32 %v2349, 4294901760
  %v2523 = vsub.f32 %v2349, %v2522
  %v2524 = vand.u32 %v2523, 4294901760
  %v2525 = vsub.f32 %v2523, %v2524
  %v2526 = vand.u32 %v2525, 4294901760
  %2527 = vmatpush1.msra.mxu0 %v2526
  %2528 = vmatprep.subr.mxu0 0.0
  %v2529 = vand.u32 %v2350, 4294901760
  %v2530 = vsub.f32 %v2350, %v2529
  %v2531 = vand.u32 %v2530, 4294901760
  %v2532 = vsub.f32 %v2530, %v2531
  %v2533 = vand.u32 %v2532, 4294901760
  %2534 = vmatpush1.msra.mxu0 %v2533
  %2535 = vmatprep.subr.mxu0 0.0
  %v2536 = vand.u32 %v2351, 4294901760
  %v2537 = vsub.f32 %v2351, %v2536
  %v2538 = vand.u32 %v2537, 4294901760
  %v2539 = vsub.f32 %v2537, %v2538
  %v2540 = vand.u32 %v2539, 4294901760
  %2541 = vmatpush1.msra.mxu0 %v2540
  %2542 = vmatprep.subr.mxu0 0.0
  %v2543 = vand.u32 %v2352, 4294901760
  %v2544 = vsub.f32 %v2352, %v2543
  %v2545 = vand.u32 %v2544, 4294901760
  %v2546 = vsub.f32 %v2544, %v2545
  %v2547 = vand.u32 %v2546, 4294901760
  %2548 = vmatpush1.msra.mxu0 %v2547
  %2549 = vmatprep.subr.mxu0 0.0
  %v2550 = vand.u32 %v2353, 4294901760
  %v2551 = vsub.f32 %v2353, %v2550
  %v2552 = vand.u32 %v2551, 4294901760
  %v2553 = vsub.f32 %v2551, %v2552
  %v2554 = vand.u32 %v2553, 4294901760
  %2555 = vmatpush1.msra.mxu0 %v2554
  %2556 = vmatprep.subr.mxu0 0.0
  %v2557 = vand.u32 %v2354, 4294901760
  %v2558 = vsub.f32 %v2354, %v2557
  %v2559 = vand.u32 %v2558, 4294901760
  %v2560 = vsub.f32 %v2558, %v2559
  %v2561 = vand.u32 %v2560, 4294901760
  %2562 = vmatpush1.msra.mxu0 %v2561
  %2563 = vmatprep.subr.mxu0 0.0
  %v2564 = vand.u32 %v2355, 4294901760
  %v2565 = vsub.f32 %v2355, %v2564
  %v2566 = vand.u32 %v2565, 4294901760
  %v2567 = vsub.f32 %v2565, %v2566
  %v2568 = vand.u32 %v2567, 4294901760
  %2569 = vmatpush1.msra.mxu0 %v2568
  %2570 = vmatprep.subr.mxu0 0.0
  %v2571 = vand.u32 %v2356, 4294901760
  %v2572 = vsub.f32 %v2356, %v2571
  %v2573 = vand.u32 %v2572, 4294901760
  %v2574 = vsub.f32 %v2572, %v2573
  %v2575 = vand.u32 %v2574, 4294901760
  %2576 = vmatpush1.msra.mxu0 %v2575
  %2577 = vmatprep.subr.mxu0 0.0
  %v2578 = vand.u32 %v2357, 4294901760
  %v2579 = vsub.f32 %v2357, %v2578
  %v2580 = vand.u32 %v2579, 4294901760
  %v2581 = vsub.f32 %v2579, %v2580
  %v2582 = vand.u32 %v2581, 4294901760
  %2583 = vmatpush1.msra.mxu0 %v2582
  %2584 = vmatprep.subr.mxu0 0.0
  %v2585 = vand.u32 %v2358, 4294901760
  %v2586 = vsub.f32 %v2358, %v2585
  %v2587 = vand.u32 %v2586, 4294901760
  %v2588 = vsub.f32 %v2586, %v2587
  %v2589 = vand.u32 %v2588, 4294901760
  %2590 = vmatpush1.msra.mxu0 %v2589
  %2591 = vmatprep.subr.mxu0 0.0
  %v2592 = vand.u32 %v2359, 4294901760
  %v2593 = vsub.f32 %v2359, %v2592
  %v2594 = vand.u32 %v2593, 4294901760
  %v2595 = vsub.f32 %v2593, %v2594
  %v2596 = vand.u32 %v2595, 4294901760
  %2597 = vmatpush1.msra.mxu0 %v2596
  %2598 = vmatprep.subr.mxu0 0.0
  %v2599 = vand.u32 %v2360, 4294901760
  %v2600 = vsub.f32 %v2360, %v2599
  %v2601 = vand.u32 %v2600, 4294901760
  %v2602 = vsub.f32 %v2600, %v2601
  %v2603 = vand.u32 %v2602, 4294901760
  %2604 = vmatpush1.msra.mxu0 %v2603
  %2605 = vmatprep.subr.mxu0 0.0
  %v2606 = vand.u32 %v2363, 4294901760
  %v2607 = vsub.f32 %v2363, %v2606
  %v2608 = vand.u32 %v2607, 4294901760
  %v2609 = vsub.f32 %v2607, %v2608
  %v2610 = vand.u32 %v2609, 4294901760
  %2611 = vmatpush1.msra.mxu0 %v2610
  %2612 = vmatprep.subr.mxu0 0.0
  %2613 = vmatpush1.msra.mxu0 0.0
  %2614 = vmatprep.subr.mxu0 0.0
  %2615 = vmatpush1.msra.mxu0 0.0
  %2616 = vmatprep.subr.mxu0 0.0
  %2617 = vmatpush1.msra.mxu0 0.0
  %2618 = vmatprep.subr.mxu0 0.0
  %2619 = vmatpush1.msra.mxu0 0.0
  %2620 = vmatprep.subr.mxu0 0.0
  %2621 = vmatpush1.msra.mxu0 0.0
  %2622 = vmatprep.subr.mxu0 0.0
  %2623 = vmatpush1.msra.mxu0 0.0
  %2624 = vmatprep.subr.mxu0 0.0
  %2625 = vmatpush1.msra.mxu0 0.0
  %2626 = vmatprep.subr.mxu0 0.0
  %2627 = vmatpush1.msra.mxu0 0.0
  %2628 = vmatprep.subr.mxu0 0.0
  %2629 = vmatpush1.msra.mxu0 0.0
  %2630 = vmatprep.subr.mxu0 0.0
  %2631 = vmatpush1.msra.mxu0 0.0
  %2632 = vmatprep.subr.mxu0 0.0
  %2633 = vmatpush1.msra.mxu0 0.0
  %2634 = vmatprep.subr.mxu0 0.0
  %2635 = vmatpush1.msra.mxu0 0.0
  %2636 = vmatprep.subr.mxu0 0.0
  %2637 = vmatpush1.msra.mxu0 0.0
  %v2638 = vand.u32 %v36, 4294901760
  %2639 = vmatprep.mubr.f32.mxu0 %v2638
  %v2640 = vand.u32 %v11, 4294901760
  %2641 = vmatmul.mubr.f32.gmra.mrb[0].mxu0 %v2640
  %v2642 = vpop.f32.mrb[0].mxu0
  %v2643 = vadd.f32 %v2461, %v2642
  %v2644 = vpop.f32.mrb[0].mxu0
  %v2645 = vand.u32 %v39, 4294901760
  %2646 = vmatprep.mubr.f32.mxu0 %v2645
  %v2647 = vand.u32 %v13, 4294901760
  %2648 = vmatmul.mubr.f32.gmra.mrb[0].mxu0 %v2647
  %v2649 = vpop.f32.mrb[0].mxu0
  %v2650 = vadd.f32 %v2476, %v2649
  %v2651 = vpop.f32.mrb[0].mxu0
  %2652 = vdwg.mxu0
  %2653 = vmatprep.subr.mxu0 0.0
  %v2654 = vand.u32 %v2343, 4294901760
  %v2655 = vsub.f32 %v2343, %v2654
  %2656 = vmatpush1.msra.mxu0 %v2655
  %2657 = vmatprep.subr.mxu0 0.0
  %v2658 = vand.u32 %v2344, 4294901760
  %v2659 = vsub.f32 %v2344, %v2658
  %2660 = vmatpush1.msra.mxu0 %v2659
  %2661 = vmatprep.subr.mxu0 0.0
  %v2662 = vand.u32 %v2345, 4294901760
  %v2663 = vsub.f32 %v2345, %v2662
  %2664 = vmatpush1.msra.mxu0 %v2663
  %2665 = vmatprep.subr.mxu0 0.0
  %v2666 = vand.u32 %v2346, 4294901760
  %v2667 = vsub.f32 %v2346, %v2666
  %2668 = vmatpush1.msra.mxu0 %v2667
  %2669 = vmatprep.subr.mxu0 0.0
  %v2670 = vand.u32 %v2347, 4294901760
  %v2671 = vsub.f32 %v2347, %v2670
  %2672 = vmatpush1.msra.mxu0 %v2671
  %2673 = vmatprep.subr.mxu0 0.0
  %v2674 = vand.u32 %v2348, 4294901760
  %v2675 = vsub.f32 %v2348, %v2674
  %2676 = vmatpush1.msra.mxu0 %v2675
  %2677 = vmatprep.subr.mxu0 0.0
  %v2678 = vand.u32 %v2349, 4294901760
  %v2679 = vsub.f32 %v2349, %v2678
  %2680 = vmatpush1.msra.mxu0 %v2679
  %2681 = vmatprep.subr.mxu0 0.0
  %v2682 = vand.u32 %v2350, 4294901760
  %v2683 = vsub.f32 %v2350, %v2682
  %2684 = vmatpush1.msra.mxu0 %v2683
  %2685 = vmatprep.subr.mxu0 0.0
  %v2686 = vand.u32 %v2351, 4294901760
  %v2687 = vsub.f32 %v2351, %v2686
  %2688 = vmatpush1.msra.mxu0 %v2687
  %2689 = vmatprep.subr.mxu0 0.0
  %v2690 = vand.u32 %v2352, 4294901760
  %v2691 = vsub.f32 %v2352, %v2690
  %2692 = vmatpush1.msra.mxu0 %v2691
  %2693 = vmatprep.subr.mxu0 0.0
  %v2694 = vand.u32 %v2353, 4294901760
  %v2695 = vsub.f32 %v2353, %v2694
  %2696 = vmatpush1.msra.mxu0 %v2695
  %2697 = vmatprep.subr.mxu0 0.0
  %v2698 = vand.u32 %v2354, 4294901760
  %v2699 = vsub.f32 %v2354, %v2698
  %2700 = vmatpush1.msra.mxu0 %v2699
  %2701 = vmatprep.subr.mxu0 0.0
  %v2702 = vand.u32 %v2355, 4294901760
  %v2703 = vsub.f32 %v2355, %v2702
  %2704 = vmatpush1.msra.mxu0 %v2703
  %2705 = vmatprep.subr.mxu0 0.0
  %v2706 = vand.u32 %v2356, 4294901760
  %v2707 = vsub.f32 %v2356, %v2706
  %2708 = vmatpush1.msra.mxu0 %v2707
  %2709 = vmatprep.subr.mxu0 0.0
  %v2710 = vand.u32 %v2357, 4294901760
  %v2711 = vsub.f32 %v2357, %v2710
  %2712 = vmatpush1.msra.mxu0 %v2711
  %2713 = vmatprep.subr.mxu0 0.0
  %v2714 = vand.u32 %v2358, 4294901760
  %v2715 = vsub.f32 %v2358, %v2714
  %2716 = vmatpush1.msra.mxu0 %v2715
  %2717 = vmatprep.subr.mxu0 0.0
  %v2718 = vand.u32 %v2359, 4294901760
  %v2719 = vsub.f32 %v2359, %v2718
  %2720 = vmatpush1.msra.mxu0 %v2719
  %2721 = vmatprep.subr.mxu0 0.0
  %v2722 = vand.u32 %v2360, 4294901760
  %v2723 = vsub.f32 %v2360, %v2722
  %2724 = vmatpush1.msra.mxu0 %v2723
  %2725 = vmatprep.subr.mxu0 0.0
  %v2726 = vand.u32 %v2363, 4294901760
  %v2727 = vsub.f32 %v2363, %v2726
  %2728 = vmatpush1.msra.mxu0 %v2727
  %2729 = vmatprep.subr.mxu0 0.0
  %2730 = vmatpush1.msra.mxu0 0.0
  %2731 = vmatprep.subr.mxu0 0.0
  %2732 = vmatpush1.msra.mxu0 0.0
  %2733 = vmatprep.subr.mxu0 0.0
  %2734 = vmatpush1.msra.mxu0 0.0
  %2735 = vmatprep.subr.mxu0 0.0
  %2736 = vmatpush1.msra.mxu0 0.0
  %2737 = vmatprep.subr.mxu0 0.0
  %2738 = vmatpush1.msra.mxu0 0.0
  %2739 = vmatprep.subr.mxu0 0.0
  %2740 = vmatpush1.msra.mxu0 0.0
  %2741 = vmatprep.subr.mxu0 0.0
  %2742 = vmatpush1.msra.mxu0 0.0
  %2743 = vmatprep.subr.mxu0 0.0
  %2744 = vmatpush1.msra.mxu0 0.0
  %2745 = vmatprep.subr.mxu0 0.0
  %2746 = vmatpush1.msra.mxu0 0.0
  %2747 = vmatprep.subr.mxu0 0.0
  %2748 = vmatpush1.msra.mxu0 0.0
  %2749 = vmatprep.subr.mxu0 0.0
  %2750 = vmatpush1.msra.mxu0 0.0
  %2751 = vmatprep.subr.mxu0 0.0
  %2752 = vmatpush1.msra.mxu0 0.0
  %2753 = vmatprep.subr.mxu0 0.0
  %2754 = vmatpush1.msra.mxu0 0.0
  %v2755 = vand.u32 %v36, 4294901760
  %v2756 = vsub.f32 %v36, %v2755
  %2757 = vmatprep.mubr.f32.mxu0 %v2756
  %v2758 = vand.u32 %v11, 4294901760
  %v2759 = vsub.f32 %v11, %v2758
  %2760 = vmatmul.mubr.f32.gmra.mrb[0].mxu0 %v2759
  %v2761 = vpop.f32.mrb[0].mxu0
  %v2762 = vadd.f32 %v2643, %v2761
  %v2763 = vpop.f32.mrb[0].mxu0
  %v2764 = vand.u32 %v39, 4294901760
  %v2765 = vsub.f32 %v39, %v2764
  %2766 = vmatprep.mubr.f32.mxu0 %v2765
  %v2767 = vand.u32 %v13, 4294901760
  %v2768 = vsub.f32 %v13, %v2767
  %2769 = vmatmul.mubr.f32.gmra.mrb[0].mxu0 %v2768
  %v2770 = vpop.f32.mrb[0].mxu0
  %v2771 = vadd.f32 %v2650, %v2770
  %v2772 = vpop.f32.mrb[0].mxu0
  %2773 = vdwg.mxu0
  %2774 = vmatprep.subr.mxu0 0.0
  %v2775 = vand.u32 %v2343, 4294901760
  %2776 = vmatpush1.msra.mxu0 %v2775
  %2777 = vmatprep.subr.mxu0 0.0
  %v2778 = vand.u32 %v2344, 4294901760
  %2779 = vmatpush1.msra.mxu0 %v2778
  %2780 = vmatprep.subr.mxu0 0.0
  %v2781 = vand.u32 %v2345, 4294901760
  %2782 = vmatpush1.msra.mxu0 %v2781
  %2783 = vmatprep.subr.mxu0 0.0
  %v2784 = vand.u32 %v2346, 4294901760
  %2785 = vmatpush1.msra.mxu0 %v2784
  %2786 = vmatprep.subr.mxu0 0.0
  %v2787 = vand.u32 %v2347, 4294901760
  %2788 = vmatpush1.msra.mxu0 %v2787
  %2789 = vmatprep.subr.mxu0 0.0
  %v2790 = vand.u32 %v2348, 4294901760
  %2791 = vmatpush1.msra.mxu0 %v2790
  %2792 = vmatprep.subr.mxu0 0.0
  %v2793 = vand.u32 %v2349, 4294901760
  %2794 = vmatpush1.msra.mxu0 %v2793
  %2795 = vmatprep.subr.mxu0 0.0
  %v2796 = vand.u32 %v2350, 4294901760
  %2797 = vmatpush1.msra.mxu0 %v2796
  %2798 = vmatprep.subr.mxu0 0.0
  %v2799 = vand.u32 %v2351, 4294901760
  %2800 = vmatpush1.msra.mxu0 %v2799
  %2801 = vmatprep.subr.mxu0 0.0
  %v2802 = vand.u32 %v2352, 4294901760
  %2803 = vmatpush1.msra.mxu0 %v2802
  %2804 = vmatprep.subr.mxu0 0.0
  %v2805 = vand.u32 %v2353, 4294901760
  %2806 = vmatpush1.msra.mxu0 %v2805
  %2807 = vmatprep.subr.mxu0 0.0
  %v2808 = vand.u32 %v2354, 4294901760
  %2809 = vmatpush1.msra.mxu0 %v2808
  %2810 = vmatprep.subr.mxu0 0.0
  %v2811 = vand.u32 %v2355, 4294901760
  %2812 = vmatpush1.msra.mxu0 %v2811
  %2813 = vmatprep.subr.mxu0 0.0
  %v2814 = vand.u32 %v2356, 4294901760
  %2815 = vmatpush1.msra.mxu0 %v2814
  %2816 = vmatprep.subr.mxu0 0.0
  %v2817 = vand.u32 %v2357, 4294901760
  %2818 = vmatpush1.msra.mxu0 %v2817
  %2819 = vmatprep.subr.mxu0 0.0
  %v2820 = vand.u32 %v2358, 4294901760
  %2821 = vmatpush1.msra.mxu0 %v2820
  %2822 = vmatprep.subr.mxu0 0.0
  %v2823 = vand.u32 %v2359, 4294901760
  %2824 = vmatpush1.msra.mxu0 %v2823
  %2825 = vmatprep.subr.mxu0 0.0
  %v2826 = vand.u32 %v2360, 4294901760
  %2827 = vmatpush1.msra.mxu0 %v2826
  %2828 = vmatprep.subr.mxu0 0.0
  %v2829 = vand.u32 %v2363, 4294901760
  %2830 = vmatpush1.msra.mxu0 %v2829
  %2831 = vmatprep.subr.mxu0 0.0
  %2832 = vmatpush1.msra.mxu0 0.0
  %2833 = vmatprep.subr.mxu0 0.0
  %2834 = vmatpush1.msra.mxu0 0.0
  %2835 = vmatprep.subr.mxu0 0.0
  %2836 = vmatpush1.msra.mxu0 0.0
  %2837 = vmatprep.subr.mxu0 0.0
  %2838 = vmatpush1.msra.mxu0 0.0
  %2839 = vmatprep.subr.mxu0 0.0
  %2840 = vmatpush1.msra.mxu0 0.0
  %2841 = vmatprep.subr.mxu0 0.0
  %2842 = vmatpush1.msra.mxu0 0.0
  %2843 = vmatprep.subr.mxu0 0.0
  %2844 = vmatpush1.msra.mxu0 0.0
  %2845 = vmatprep.subr.mxu0 0.0
  %2846 = vmatpush1.msra.mxu0 0.0
  %2847 = vmatprep.subr.mxu0 0.0
  %2848 = vmatpush1.msra.mxu0 0.0
  %2849 = vmatprep.subr.mxu0 0.0
  %2850 = vmatpush1.msra.mxu0 0.0
  %2851 = vmatprep.subr.mxu0 0.0
  %2852 = vmatpush1.msra.mxu0 0.0
  %2853 = vmatprep.subr.mxu0 0.0
  %2854 = vmatpush1.msra.mxu0 0.0
  %2855 = vmatprep.subr.mxu0 0.0
  %2856 = vmatpush1.msra.mxu0 0.0
  %v2857 = vand.u32 %v36, 4294901760
  %v2858 = vsub.f32 %v36, %v2857
  %v2859 = vand.u32 %v2858, 4294901760
  %2860 = vmatprep.mubr.f32.mxu0 %v2859
  %v2861 = vand.u32 %v11, 4294901760
  %v2862 = vsub.f32 %v11, %v2861
  %v2863 = vand.u32 %v2862, 4294901760
  %2864 = vmatmul.mubr.f32.gmra.mrb[0].mxu0 %v2863
  %v2865 = vpop.f32.mrb[0].mxu0
  %v2866 = vadd.f32 %v2762, %v2865
  %v2867 = vpop.f32.mrb[0].mxu0
  %v2868 = vand.u32 %v39, 4294901760
  %v2869 = vsub.f32 %v39, %v2868
  %v2870 = vand.u32 %v2869, 4294901760
  %2871 = vmatprep.mubr.f32.mxu0 %v2870
  %v2872 = vand.u32 %v13, 4294901760
  %v2873 = vsub.f32 %v13, %v2872
  %v2874 = vand.u32 %v2873, 4294901760
  %2875 = vmatmul.mubr.f32.gmra.mrb[0].mxu0 %v2874
  %v2876 = vpop.f32.mrb[0].mxu0
  %v2877 = vadd.f32 %v2771, %v2876
  %v2878 = vpop.f32.mrb[0].mxu0
  %2879 = vdwg.mxu0
  %2880 = vmatprep.subr.mxu0 0.0
  %v2881 = vand.u32 %v2343, 4294901760
  %v2882 = vsub.f32 %v2343, %v2881
  %v2883 = vand.u32 %v2882, 4294901760
  %2884 = vmatpush1.msra.mxu0 %v2883
  %2885 = vmatprep.subr.mxu0 0.0
  %v2886 = vand.u32 %v2344, 4294901760
  %v2887 = vsub.f32 %v2344, %v2886
  %v2888 = vand.u32 %v2887, 4294901760
  %2889 = vmatpush1.msra.mxu0 %v2888
  %2890 = vmatprep.subr.mxu0 0.0
  %v2891 = vand.u32 %v2345, 4294901760
  %v2892 = vsub.f32 %v2345, %v2891
  %v2893 = vand.u32 %v2892, 4294901760
  %2894 = vmatpush1.msra.mxu0 %v2893
  %2895 = vmatprep.subr.mxu0 0.0
  %v2896 = vand.u32 %v2346, 4294901760
  %v2897 = vsub.f32 %v2346, %v2896
  %v2898 = vand.u32 %v2897, 4294901760
  %2899 = vmatpush1.msra.mxu0 %v2898
  %2900 = vmatprep.subr.mxu0 0.0
  %v2901 = vand.u32 %v2347, 4294901760
  %v2902 = vsub.f32 %v2347, %v2901
  %v2903 = vand.u32 %v2902, 4294901760
  %2904 = vmatpush1.msra.mxu0 %v2903
  %2905 = vmatprep.subr.mxu0 0.0
  %v2906 = vand.u32 %v2348, 4294901760
  %v2907 = vsub.f32 %v2348, %v2906
  %v2908 = vand.u32 %v2907, 4294901760
  %2909 = vmatpush1.msra.mxu0 %v2908
  %2910 = vmatprep.subr.mxu0 0.0
  %v2911 = vand.u32 %v2349, 4294901760
  %v2912 = vsub.f32 %v2349, %v2911
  %v2913 = vand.u32 %v2912, 4294901760
  %2914 = vmatpush1.msra.mxu0 %v2913
  %2915 = vmatprep.subr.mxu0 0.0
  %v2916 = vand.u32 %v2350, 4294901760
  %v2917 = vsub.f32 %v2350, %v2916
  %v2918 = vand.u32 %v2917, 4294901760
  %2919 = vmatpush1.msra.mxu0 %v2918
  %2920 = vmatprep.subr.mxu0 0.0
  %v2921 = vand.u32 %v2351, 4294901760
  %v2922 = vsub.f32 %v2351, %v2921
  %v2923 = vand.u32 %v2922, 4294901760
  %2924 = vmatpush1.msra.mxu0 %v2923
  %2925 = vmatprep.subr.mxu0 0.0
  %v2926 = vand.u32 %v2352, 4294901760
  %v2927 = vsub.f32 %v2352, %v2926
  %v2928 = vand.u32 %v2927, 4294901760
  %2929 = vmatpush1.msra.mxu0 %v2928
  %2930 = vmatprep.subr.mxu0 0.0
  %v2931 = vand.u32 %v2353, 4294901760
  %v2932 = vsub.f32 %v2353, %v2931
  %v2933 = vand.u32 %v2932, 4294901760
  %2934 = vmatpush1.msra.mxu0 %v2933
  %2935 = vmatprep.subr.mxu0 0.0
  %v2936 = vand.u32 %v2354, 4294901760
  %v2937 = vsub.f32 %v2354, %v2936
  %v2938 = vand.u32 %v2937, 4294901760
  %2939 = vmatpush1.msra.mxu0 %v2938
  %2940 = vmatprep.subr.mxu0 0.0
  %v2941 = vand.u32 %v2355, 4294901760
  %v2942 = vsub.f32 %v2355, %v2941
  %v2943 = vand.u32 %v2942, 4294901760
  %2944 = vmatpush1.msra.mxu0 %v2943
  %2945 = vmatprep.subr.mxu0 0.0
  %v2946 = vand.u32 %v2356, 4294901760
  %v2947 = vsub.f32 %v2356, %v2946
  %v2948 = vand.u32 %v2947, 4294901760
  %2949 = vmatpush1.msra.mxu0 %v2948
  %2950 = vmatprep.subr.mxu0 0.0
  %v2951 = vand.u32 %v2357, 4294901760
  %v2952 = vsub.f32 %v2357, %v2951
  %v2953 = vand.u32 %v2952, 4294901760
  %2954 = vmatpush1.msra.mxu0 %v2953
  %2955 = vmatprep.subr.mxu0 0.0
  %v2956 = vand.u32 %v2358, 4294901760
  %v2957 = vsub.f32 %v2358, %v2956
  %v2958 = vand.u32 %v2957, 4294901760
  %2959 = vmatpush1.msra.mxu0 %v2958
  %2960 = vmatprep.subr.mxu0 0.0
  %v2961 = vand.u32 %v2359, 4294901760
  %v2962 = vsub.f32 %v2359, %v2961
  %v2963 = vand.u32 %v2962, 4294901760
  %2964 = vmatpush1.msra.mxu0 %v2963
  %2965 = vmatprep.subr.mxu0 0.0
  %v2966 = vand.u32 %v2360, 4294901760
  %v2967 = vsub.f32 %v2360, %v2966
  %v2968 = vand.u32 %v2967, 4294901760
  %2969 = vmatpush1.msra.mxu0 %v2968
  %2970 = vmatprep.subr.mxu0 0.0
  %v2971 = vand.u32 %v2363, 4294901760
  %v2972 = vsub.f32 %v2363, %v2971
  %v2973 = vand.u32 %v2972, 4294901760
  %2974 = vmatpush1.msra.mxu0 %v2973
  %2975 = vmatprep.subr.mxu0 0.0
  %2976 = vmatpush1.msra.mxu0 0.0
  %2977 = vmatprep.subr.mxu0 0.0
  %2978 = vmatpush1.msra.mxu0 0.0
  %2979 = vmatprep.subr.mxu0 0.0
  %2980 = vmatpush1.msra.mxu0 0.0
  %2981 = vmatprep.subr.mxu0 0.0
  %2982 = vmatpush1.msra.mxu0 0.0
  %2983 = vmatprep.subr.mxu0 0.0
  %2984 = vmatpush1.msra.mxu0 0.0
  %2985 = vmatprep.subr.mxu0 0.0
  %2986 = vmatpush1.msra.mxu0 0.0
  %2987 = vmatprep.subr.mxu0 0.0
  %2988 = vmatpush1.msra.mxu0 0.0
  %2989 = vmatprep.subr.mxu0 0.0
  %2990 = vmatpush1.msra.mxu0 0.0
  %2991 = vmatprep.subr.mxu0 0.0
  %2992 = vmatpush1.msra.mxu0 0.0
  %2993 = vmatprep.subr.mxu0 0.0
  %2994 = vmatpush1.msra.mxu0 0.0
  %2995 = vmatprep.subr.mxu0 0.0
  %2996 = vmatpush1.msra.mxu0 0.0
  %2997 = vmatprep.subr.mxu0 0.0
  %2998 = vmatpush1.msra.mxu0 0.0
  %2999 = vmatprep.subr.mxu0 0.0
  %3000 = vmatpush1.msra.mxu0 0.0
  %v3001 = vand.u32 %v36, 4294901760
  %3002 = vmatprep.mubr.f32.mxu0 %v3001
  %v3003 = vand.u32 %v11, 4294901760
  %3004 = vmatmul.mubr.f32.gmra.mrb[0].mxu0 %v3003
  %v3005 = vpop.f32.mrb[0].mxu0
  %v3006 = vadd.f32 %v2866, %v3005
  %v3007 = vpop.f32.mrb[0].mxu0
  %v3008 = vand.u32 %v39, 4294901760
  %3009 = vmatprep.mubr.f32.mxu0 %v3008
  %v3010 = vand.u32 %v13, 4294901760
  %3011 = vmatmul.mubr.f32.gmra.mrb[0].mxu0 %v3010
  %v3012 = vpop.f32.mrb[0].mxu0
  %v3013 = vadd.f32 %v2877, %v3012
  %v3014 = vpop.f32.mrb[0].mxu0
  %3015 = vdwg.mxu0
  %3016 = vmatprep.subr.mxu0 0.0
  %v3017 = vand.u32 %v2343, 4294901760
  %3018 = vmatpush1.msra.mxu0 %v3017
  %3019 = vmatprep.subr.mxu0 0.0
  %v3020 = vand.u32 %v2344, 4294901760
  %3021 = vmatpush1.msra.mxu0 %v3020
  %3022 = vmatprep.subr.mxu0 0.0
  %v3023 = vand.u32 %v2345, 4294901760
  %3024 = vmatpush1.msra.mxu0 %v3023
  %3025 = vmatprep.subr.mxu0 0.0
  %v3026 = vand.u32 %v2346, 4294901760
  %3027 = vmatpush1.msra.mxu0 %v3026
  %3028 = vmatprep.subr.mxu0 0.0
  %v3029 = vand.u32 %v2347, 4294901760
  %3030 = vmatpush1.msra.mxu0 %v3029
  %3031 = vmatprep.subr.mxu0 0.0
  %v3032 = vand.u32 %v2348, 4294901760
  %3033 = vmatpush1.msra.mxu0 %v3032
  %3034 = vmatprep.subr.mxu0 0.0
  %v3035 = vand.u32 %v2349, 4294901760
  %3036 = vmatpush1.msra.mxu0 %v3035
  %3037 = vmatprep.subr.mxu0 0.0
  %v3038 = vand.u32 %v2350, 4294901760
  %3039 = vmatpush1.msra.mxu0 %v3038
  %3040 = vmatprep.subr.mxu0 0.0
  %v3041 = vand.u32 %v2351, 4294901760
  %3042 = vmatpush1.msra.mxu0 %v3041
  %3043 = vmatprep.subr.mxu0 0.0
  %v3044 = vand.u32 %v2352, 4294901760
  %3045 = vmatpush1.msra.mxu0 %v3044
  %3046 = vmatprep.subr.mxu0 0.0
  %v3047 = vand.u32 %v2353, 4294901760
  %3048 = vmatpush1.msra.mxu0 %v3047
  %3049 = vmatprep.subr.mxu0 0.0
  %v3050 = vand.u32 %v2354, 4294901760
  %3051 = vmatpush1.msra.mxu0 %v3050
  %3052 = vmatprep.subr.mxu0 0.0
  %v3053 = vand.u32 %v2355, 4294901760
  %3054 = vmatpush1.msra.mxu0 %v3053
  %3055 = vmatprep.subr.mxu0 0.0
  %v3056 = vand.u32 %v2356, 4294901760
  %3057 = vmatpush1.msra.mxu0 %v3056
  %3058 = vmatprep.subr.mxu0 0.0
  %v3059 = vand.u32 %v2357, 4294901760
  %3060 = vmatpush1.msra.mxu0 %v3059
  %3061 = vmatprep.subr.mxu0 0.0
  %v3062 = vand.u32 %v2358, 4294901760
  %3063 = vmatpush1.msra.mxu0 %v3062
  %3064 = vmatprep.subr.mxu0 0.0
  %v3065 = vand.u32 %v2359, 4294901760
  %3066 = vmatpush1.msra.mxu0 %v3065
  %3067 = vmatprep.subr.mxu0 0.0
  %v3068 = vand.u32 %v2360, 4294901760
  %3069 = vmatpush1.msra.mxu0 %v3068
  %3070 = vmatprep.subr.mxu0 0.0
  %v3071 = vand.u32 %v2363, 4294901760
  %3072 = vmatpush1.msra.mxu0 %v3071
  %3073 = vmatprep.subr.mxu0 0.0
  %3074 = vmatpush1.msra.mxu0 0.0
  %3075 = vmatprep.subr.mxu0 0.0
  %3076 = vmatpush1.msra.mxu0 0.0
  %3077 = vmatprep.subr.mxu0 0.0
  %3078 = vmatpush1.msra.mxu0 0.0
  %3079 = vmatprep.subr.mxu0 0.0
  %3080 = vmatpush1.msra.mxu0 0.0
  %3081 = vmatprep.subr.mxu0 0.0
  %3082 = vmatpush1.msra.mxu0 0.0
  %3083 = vmatprep.subr.mxu0 0.0
  %3084 = vmatpush1.msra.mxu0 0.0
  %3085 = vmatprep.subr.mxu0 0.0
  %3086 = vmatpush1.msra.mxu0 0.0
  %3087 = vmatprep.subr.mxu0 0.0
  %3088 = vmatpush1.msra.mxu0 0.0
  %3089 = vmatprep.subr.mxu0 0.0
  %3090 = vmatpush1.msra.mxu0 0.0
  %3091 = vmatprep.subr.mxu0 0.0
  %3092 = vmatpush1.msra.mxu0 0.0
  %3093 = vmatprep.subr.mxu0 0.0
  %3094 = vmatpush1.msra.mxu0 0.0
  %3095 = vmatprep.subr.mxu0 0.0
  %3096 = vmatpush1.msra.mxu0 0.0
  %3097 = vmatprep.subr.mxu0 0.0
  %3098 = vmatpush1.msra.mxu0 0.0
  %v3099 = vand.u32 %v36, 4294901760
  %3100 = vmatprep.mubr.f32.mxu0 %v3099
  %v3101 = vand.u32 %v11, 4294901760
  %3102 = vmatmul.mubr.f32.gmra.mrb[0].mxu0 %v3101
  %v3103 = vpop.f32.mrb[0].mxu0
  %v3104 = vadd.f32 %v3006, %v3103
  %v3105 = vpop.f32.mrb[0].mxu0
  %v3106 = vand.u32 %v39, 4294901760
  %3107 = vmatprep.mubr.f32.mxu0 %v3106
  %v3108 = vand.u32 %v13, 4294901760
  %3109 = vmatmul.mubr.f32.gmra.mrb[0].mxu0 %v3108
  %v3110 = vpop.f32.mrb[0].mxu0
  %v3111 = vadd.f32 %v3013, %v3110
  %v3112 = vpop.f32.mrb[0].mxu0
  %3113 = vdwg.mxu0
  %v3114 = vmax.f32 %v2340, %v3104
  %v3115 = vmax.f32 %v2341, %v3111
  %v3116 = vmax.f32 %v3114, 0.0
  %v3117 = vmax.f32 %v3115, 0.0
  %vm3118 = vcmask 408576
  %3119 = vst.msk [vmem:[%s2] sm:$0xff] %vm3118, %v3116
  %3120 = vst.msk [vmem:[%s2 + $0x8] sm:$0xff] %vm3118, %v3117
  // Predicated region
  $region10: #{net_forward.4} parent=0 // pred_check
    _
  $region11: #{net_forward.4} parent=0 // pred_check_branch
    %3122 = sbr.rel (0) target = $region13
  $region12: #{net_forward.4} parent=0 // pred_region
    _
  $region13: #{net_forward.4} parent=0 // pred_fallthru
    _
  // Predicated region
  $region14: #{net_forward.4} parent=0 // pred_check
    _
  $region15: #{net_forward.4} parent=0 // pred_check_branch
    %3124 = sbr.rel (0) target = $region17
  $region16: #{net_forward.4} parent=0 // pred_region
    _
  $region17: #{net_forward.4} parent=0 // pred_fallthru
    _

// kernel: net_forward.5
$region0: #{net_forward.5}
  #allocation0 [shape = 'u32[]', space=smem, size = 0x4, offset = 0x4, fixed_abs, tag = 'smem constant byte address 0x4 - core index']
  #allocation1 [shape = 'u32[144,128]{1,0:T(1,128)}', space=vmem, size = 0x12000, scoped, tag = 'internal scratch']
  %s0 = inlined_call_operand.vmem [shape: f32[2,400], index: 0, kind: input, shape index: {}]
  %s1 = inlined_call_operand.vmem [shape: f32[400,120], index: 1, kind: input, shape index: {}]
  %s2 = inlined_call_operand.vmem [shape: f32[1,120], index: 2, kind: input, shape index: {}]
  %s3 = inlined_call_operand.vmem [shape: f32[120,84], index: 3, kind: input, shape index: {}]
  %s4 = inlined_call_operand.vmem [shape: f32[1,84], index: 4, kind: input, shape index: {}]
  %s5 = inlined_call_operand.vmem [shape: f32[84,10], index: 5, kind: input, shape index: {}]
  %s6 = inlined_call_operand.vmem [shape: f32[1,10], index: 6, kind: input, shape index: {}]
  %s7 = inlined_call_operand.hbm [shape: f32[2,10], index: 7, kind: output, shape index: {}]
  %s8 = sld [smem:[#allocation0]]
  $region38: #{net_forward.5} parent=0
    _
  %s10 = ssub.s32 1, %s8
  %s11 = scalar_select 0, %s10, %s8
  $region1: #{net_forward.5} parent=0
    #allocation2 [shape = 'u8[1024]{0}', space=vmem, size = 0x400, scoped, tag = 'output window, operand 0, single buffered']
    #allocation3 [shape = 's32[1]{0}', space=sflag, size = 0x4, scoped, tag = 'scoped memory for net_forward.5']
    %12 = vsyncpa [#allocation3], 0
    // Predicated region
    $region2: #{net_forward.5} parent=1 // pred_check
      _
    $region3: #{net_forward.5} parent=1 // pred_check_branch
      %14 = sbr.rel (0) target = $region5
    $region4: #{net_forward.5} parent=1 // pred_region
      _
    $region5: #{net_forward.5} parent=1 // pred_fallthru
      _
    // Predicated region
    $region6: #{net_forward.5} parent=1 // pred_check
      _
    $region7: #{net_forward.5} parent=1 // pred_check_branch
      %16 = sbr.rel (0) target = $region9
    $region8: #{net_forward.5} parent=1 // pred_region
      _
    $region9: #{net_forward.5} parent=1 // pred_fallthru
      _
    // Predicated region
    $region10: #{net_forward.5} parent=1 // pred_check
      _
    $region11: #{net_forward.5} parent=1 // pred_check_branch
      %18 = sbr.rel (0) target = $region13
    $region12: #{net_forward.5} parent=1 // pred_region
      _
    $region13: #{net_forward.5} parent=1 // pred_fallthru
      _
    // Predicated region
    $region14: #{net_forward.5} parent=1 // pred_check
      _
    $region15: #{net_forward.5} parent=1 // pred_check_branch
      %20 = sbr.rel (0) target = $region17
    $region16: #{net_forward.5} parent=1 // pred_region
      _
    $region17: #{net_forward.5} parent=1 // pred_fallthru
      _
    // Predicated region
    $region18: #{net_forward.5} parent=1 // pred_check
      _
    $region19: #{net_forward.5} parent=1 // pred_check_branch
      %22 = sbr.rel (0) target = $region21
    $region20: #{net_forward.5} parent=1 // pred_region
      _
    $region21: #{net_forward.5} parent=1 // pred_fallthru
      _
    // Predicated region
    $region22: #{net_forward.5} parent=1 // pred_check
      _
    $region23: #{net_forward.5} parent=1 // pred_check_branch
      %24 = sbr.rel (0) target = $region25
    $region24: #{net_forward.5} parent=1 // pred_region
      _
    $region25: #{net_forward.5} parent=1 // pred_fallthru
      _
    // Predicated region
    $region26: #{net_forward.5} parent=1 // pred_check
      _
    $region27: #{net_forward.5} parent=1 // pred_check_branch
      %26 = sbr.rel (0) target = $region29
    $region28: #{net_forward.5} parent=1 // pred_region
      _
    $region29: #{net_forward.5} parent=1 // pred_fallthru
      _
    %v27 = vld [vmem:[%s0] sm:$0xff]
    %v28 = vld [vmem:[%s1] sm:$0xff]
    %v29 = vld [vmem:[%s1 + $0x8] sm:$0xff]
    %v30 = vld [vmem:[%s1 + $0x10] sm:$0xff]
    %v31 = vld [vmem:[%s1 + $0x18] sm:$0xff]
    %v32 = vld [vmem:[%s1 + $0x20] sm:$0xff]
    %v33 = vld [vmem:[%s1 + $0x28] sm:$0xff]
    %v34 = vld [vmem:[%s1 + $0x30] sm:$0xff]
    %v35 = vld [vmem:[%s1 + $0x38] sm:$0xff]
    %v36 = vld [vmem:[%s1 + $0x40] sm:$0xff]
    %v37 = vld [vmem:[%s1 + $0x48] sm:$0xff]
    %v38 = vld [vmem:[%s1 + $0x50] sm:$0xff]
    %v39 = vld [vmem:[%s1 + $0x58] sm:$0xff]
    %v40 = vld [vmem:[%s1 + $0x60] sm:$0xff]
    %v41 = vld [vmem:[%s1 + $0x68] sm:$0xff]
    %v42 = vld [vmem:[%s1 + $0x70] sm:$0xff]
    %v43 = vld [vmem:[%s1 + $0x78] sm:$0xff]
    %v44 = vld [vmem:[%s1 + $0x80] sm:$0xff]
    %v45 = vld [vmem:[%s1 + $0x88] sm:$0xff]
    %v46 = vld [vmem:[%s1 + $0x90] sm:$0xff]
    %v47 = vld [vmem:[%s1 + $0x98] sm:$0xff]
    %v48 = vld [vmem:[%s1 + $0xa0] sm:$0xff]
    %v49 = vld [vmem:[%s1 + $0xa8] sm:$0xff]
    %v50 = vld [vmem:[%s1 + $0xb0] sm:$0xff]
    %v51 = vld [vmem:[%s1 + $0xb8] sm:$0xff]
    %v52 = vld [vmem:[%s1 + $0xc0] sm:$0xff]
    %v53 = vld [vmem:[%s1 + $0xc8] sm:$0xff]
    %v54 = vld [vmem:[%s1 + $0xd0] sm:$0xff]
    %v55 = vld [vmem:[%s1 + $0xd8] sm:$0xff]
    %v56 = vld [vmem:[%s1 + $0xe0] sm:$0xff]
    %v57 = vld [vmem:[%s1 + $0xe8] sm:$0xff]
    %v58 = vld [vmem:[%s1 + $0xf0] sm:$0xff]
    %v59 = vld [vmem:[%s1 + $0xf8] sm:$0xff]
    %v60 = vld [vmem:[%s1 + $0x100] sm:$0xff]
    %v61 = vld [vmem:[%s1 + $0x108] sm:$0xff]
    %v62 = vld [vmem:[%s1 + $0x110] sm:$0xff]
    %v63 = vld [vmem:[%s1 + $0x118] sm:$0xff]
    %v64 = vld [vmem:[%s1 + $0x120] sm:$0xff]
    %v65 = vld [vmem:[%s1 + $0x128] sm:$0xff]
    %v66 = vld [vmem:[%s1 + $0x130] sm:$0xff]
    %v67 = vld [vmem:[%s1 + $0x138] sm:$0xff]
    %v68 = vld [vmem:[%s1 + $0x140] sm:$0xff]
    %v69 = vld [vmem:[%s1 + $0x148] sm:$0xff]
    %v70 = vld [vmem:[%s1 + $0x150] sm:$0xff]
    %v71 = vld [vmem:[%s1 + $0x158] sm:$0xff]
    %v72 = vld [vmem:[%s1 + $0x160] sm:$0xff]
    %v73 = vld [vmem:[%s1 + $0x168] sm:$0xff]
    %v74 = vld [vmem:[%s1 + $0x170] sm:$0xff]
    %v75 = vld [vmem:[%s1 + $0x178] sm:$0xff]
    %v76 = vld [vmem:[%s1 + $0x180] sm:$0xff]
    %v77 = vld [vmem:[%s1 + $0x188] sm:$0xff]
    %v78 = vld [vmem:[%s2] sm:$0x1]
    %v80 = vlaneseq
    %v81 = vshrl.u32 %v80, 7
    %v82 = vsub.s32 0, %v81
    %v83 = vrot.slane %v78, %v82
    %v86 = vcombine.high %v27, %v27
    %v88 = vunpack.c.l.s4 1983009808
    %v89 = vunpack.c.0.s8 %v88
    %v90 = vlaneseq
    %v91 = vshrl.u32 %v90, 7
    %v92 = vsub.s32 %v89, %v91
    %v93 = vrot.slane %v27, %v92
    %v95 = vunpack.c.l.s4 1983009808
    %v96 = vunpack.c.0.s8 %v95
    %v97 = vlaneseq
    %v98 = vshrl.u32 %v97, 7
    %v99 = vsub.s32 %v96, %v98
    %v100 = vrot.slane %v86, %v99
    %v101 = vcombine.high %v93, %v93
    %v102 = vcombine.high %v100, %v100
    %vm106 = vcmask 130048
    %v107 = vsel %vm106, %v102, 0
    %109 = vmatprep.subr.mxu0 0.0
    %v110 = vand.u32 %v28, 4294901760
    %111 = vmatpush1.msra.mxu0 %v110
    %112 = vmatprep.subr.mxu0 0.0
    %v113 = vand.u32 %v29, 4294901760
    %114 = vmatpush1.msra.mxu0 %v113
    %115 = vmatprep.subr.mxu0 0.0
    %v116 = vand.u32 %v30, 4294901760
    %117 = vmatpush1.msra.mxu0 %v116
    %118 = vmatprep.subr.mxu0 0.0
    %v119 = vand.u32 %v31, 4294901760
    %120 = vmatpush1.msra.mxu0 %v119
    %121 = vmatprep.subr.mxu0 0.0
    %v122 = vand.u32 %v32, 4294901760
    %123 = vmatpush1.msra.mxu0 %v122
    %124 = vmatprep.subr.mxu0 0.0
    %v125 = vand.u32 %v33, 4294901760
    %126 = vmatpush1.msra.mxu0 %v125
    %127 = vmatprep.subr.mxu0 0.0
    %v128 = vand.u32 %v34, 4294901760
    %129 = vmatpush1.msra.mxu0 %v128
    %130 = vmatprep.subr.mxu0 0.0
    %v131 = vand.u32 %v35, 4294901760
    %132 = vmatpush1.msra.mxu0 %v131
    %133 = vmatprep.subr.mxu0 0.0
    %v134 = vand.u32 %v36, 4294901760
    %135 = vmatpush1.msra.mxu0 %v134
    %136 = vmatprep.subr.mxu0 0.0
    %v137 = vand.u32 %v37, 4294901760
    %138 = vmatpush1.msra.mxu0 %v137
    %139 = vmatprep.subr.mxu0 0.0
    %v140 = vand.u32 %v38, 4294901760
    %141 = vmatpush1.msra.mxu0 %v140
    %142 = vmatprep.subr.mxu0 0.0
    %v143 = vand.u32 %v39, 4294901760
    %144 = vmatpush1.msra.mxu0 %v143
    %145 = vmatprep.subr.mxu0 0.0
    %v146 = vand.u32 %v40, 4294901760
    %147 = vmatpush1.msra.mxu0 %v146
    %148 = vmatprep.subr.mxu0 0.0
    %v149 = vand.u32 %v41, 4294901760
    %150 = vmatpush1.msra.mxu0 %v149
    %151 = vmatprep.subr.mxu0 0.0
    %v152 = vand.u32 %v42, 4294901760
    %153 = vmatpush1.msra.mxu0 %v152
    %154 = vmatprep.subr.mxu0 0.0
    %v155 = vand.u32 %v43, 4294901760
    %156 = vmatpush1.msra.mxu0 %v155
    %157 = vmatprep.subr.mxu0 0.0
    %v158 = vand.u32 %v44, 4294901760
    %159 = vmatpush1.msra.mxu0 %v158
    %160 = vmatprep.subr.mxu0 0.0
    %v161 = vand.u32 %v45, 4294901760
    %162 = vmatpush1.msra.mxu0 %v161
    %163 = vmatprep.subr.mxu0 0.0
    %v164 = vand.u32 %v46, 4294901760
    %165 = vmatpush1.msra.mxu0 %v164
    %166 = vmatprep.subr.mxu0 0.0
    %v167 = vand.u32 %v47, 4294901760
    %168 = vmatpush1.msra.mxu0 %v167
    %169 = vmatprep.subr.mxu0 0.0
    %v170 = vand.u32 %v48, 4294901760
    %171 = vmatpush1.msra.mxu0 %v170
    %172 = vmatprep.subr.mxu0 0.0
    %v173 = vand.u32 %v49, 4294901760
    %174 = vmatpush1.msra.mxu0 %v173
    %175 = vmatprep.subr.mxu0 0.0
    %v176 = vand.u32 %v50, 4294901760
    %177 = vmatpush1.msra.mxu0 %v176
    %178 = vmatprep.subr.mxu0 0.0
    %v179 = vand.u32 %v51, 4294901760
    %180 = vmatpush1.msra.mxu0 %v179
    %181 = vmatprep.subr.mxu0 0.0
    %v182 = vand.u32 %v52, 4294901760
    %183 = vmatpush1.msra.mxu0 %v182
    %184 = vmatprep.subr.mxu0 0.0
    %v185 = vand.u32 %v53, 4294901760
    %186 = vmatpush1.msra.mxu0 %v185
    %187 = vmatprep.subr.mxu0 0.0
    %v188 = vand.u32 %v54, 4294901760
    %189 = vmatpush1.msra.mxu0 %v188
    %190 = vmatprep.subr.mxu0 0.0
    %v191 = vand.u32 %v55, 4294901760
    %192 = vmatpush1.msra.mxu0 %v191
    %193 = vmatprep.subr.mxu0 0.0
    %v194 = vand.u32 %v56, 4294901760
    %195 = vmatpush1.msra.mxu0 %v194
    %196 = vmatprep.subr.mxu0 0.0
    %v197 = vand.u32 %v57, 4294901760
    %198 = vmatpush1.msra.mxu0 %v197
    %199 = vmatprep.subr.mxu0 0.0
    %v200 = vand.u32 %v58, 4294901760
    %201 = vmatpush1.msra.mxu0 %v200
    %202 = vmatprep.subr.mxu0 0.0
    %v203 = vand.u32 %v59, 4294901760
    %204 = vmatpush1.msra.mxu0 %v203
    %v205 = vand.u32 %v101, 4294901760
    %v206 = vsub.f32 %v101, %v205
    %v207 = vand.u32 %v206, 4294901760
    %v208 = vsub.f32 %v206, %v207
    %v209 = vand.u32 %v208, 4294901760
    %210 = vmatprep.mubr.f32.mxu0 %v209
    %v211 = vand.u32 %v93, 4294901760
    %v212 = vsub.f32 %v93, %v211
    %v213 = vand.u32 %v212, 4294901760
    %v214 = vsub.f32 %v212, %v213
    %v215 = vand.u32 %v214, 4294901760
    %216 = vmatmul.mubr.f32.gmra.mrb[0].mxu0 %v215
    %v217 = vpop.f32.mrb[0].mxu0
    %v218 = vadd.f32 %v83, %v217
    %v219 = vpop.f32.mrb[0].mxu0
    %220 = vdwg.mxu0
    %221 = vmatprep.subr.mxu0 0.0
    %v222 = vand.u32 %v28, 4294901760
    %v223 = vsub.f32 %v28, %v222
    %v224 = vand.u32 %v223, 4294901760
    %v225 = vsub.f32 %v223, %v224
    %v226 = vand.u32 %v225, 4294901760
    %227 = vmatpush1.msra.mxu0 %v226
    %228 = vmatprep.subr.mxu0 0.0
    %v229 = vand.u32 %v29, 4294901760
    %v230 = vsub.f32 %v29, %v229
    %v231 = vand.u32 %v230, 4294901760
    %v232 = vsub.f32 %v230, %v231
    %v233 = vand.u32 %v232, 4294901760
    %234 = vmatpush1.msra.mxu0 %v233
    %235 = vmatprep.subr.mxu0 0.0
    %v236 = vand.u32 %v30, 4294901760
    %v237 = vsub.f32 %v30, %v236
    %v238 = vand.u32 %v237, 4294901760
    %v239 = vsub.f32 %v237, %v238
    %v240 = vand.u32 %v239, 4294901760
    %241 = vmatpush1.msra.mxu0 %v240
    %242 = vmatprep.subr.mxu0 0.0
    %v243 = vand.u32 %v31, 4294901760
    %v244 = vsub.f32 %v31, %v243
    %v245 = vand.u32 %v244, 4294901760
    %v246 = vsub.f32 %v244, %v245
    %v247 = vand.u32 %v246, 4294901760
    %248 = vmatpush1.msra.mxu0 %v247
    %249 = vmatprep.subr.mxu0 0.0
    %v250 = vand.u32 %v32, 4294901760
    %v251 = vsub.f32 %v32, %v250
    %v252 = vand.u32 %v251, 4294901760
    %v253 = vsub.f32 %v251, %v252
    %v254 = vand.u32 %v253, 4294901760
    %255 = vmatpush1.msra.mxu0 %v254
    %256 = vmatprep.subr.mxu0 0.0
    %v257 = vand.u32 %v33, 4294901760
    %v258 = vsub.f32 %v33, %v257
    %v259 = vand.u32 %v258, 4294901760
    %v260 = vsub.f32 %v258, %v259
    %v261 = vand.u32 %v260, 4294901760
    %262 = vmatpush1.msra.mxu0 %v261
    %263 = vmatprep.subr.mxu0 0.0
    %v264 = vand.u32 %v34, 4294901760
    %v265 = vsub.f32 %v34, %v264
    %v266 = vand.u32 %v265, 4294901760
    %v267 = vsub.f32 %v265, %v266
    %v268 = vand.u32 %v267, 4294901760
    %269 = vmatpush1.msra.mxu0 %v268
    %270 = vmatprep.subr.mxu0 0.0
    %v271 = vand.u32 %v35, 4294901760
    %v272 = vsub.f32 %v35, %v271
    %v273 = vand.u32 %v272, 4294901760
    %v274 = vsub.f32 %v272, %v273
    %v275 = vand.u32 %v274, 4294901760
    %276 = vmatpush1.msra.mxu0 %v275
    %277 = vmatprep.subr.mxu0 0.0
    %v278 = vand.u32 %v36, 4294901760
    %v279 = vsub.f32 %v36, %v278
    %v280 = vand.u32 %v279, 4294901760
    %v281 = vsub.f32 %v279, %v280
    %v282 = vand.u32 %v281, 4294901760
    %283 = vmatpush1.msra.mxu0 %v282
    %284 = vmatprep.subr.mxu0 0.0
    %v285 = vand.u32 %v37, 4294901760
    %v286 = vsub.f32 %v37, %v285
    %v287 = vand.u32 %v286, 4294901760
    %v288 = vsub.f32 %v286, %v287
    %v289 = vand.u32 %v288, 4294901760
    %290 = vmatpush1.msra.mxu0 %v289
    %291 = vmatprep.subr.mxu0 0.0
    %v292 = vand.u32 %v38, 4294901760
    %v293 = vsub.f32 %v38, %v292
    %v294 = vand.u32 %v293, 4294901760
    %v295 = vsub.f32 %v293, %v294
    %v296 = vand.u32 %v295, 4294901760
    %297 = vmatpush1.msra.mxu0 %v296
    %298 = vmatprep.subr.mxu0 0.0
    %v299 = vand.u32 %v39, 4294901760
    %v300 = vsub.f32 %v39, %v299
    %v301 = vand.u32 %v300, 4294901760
    %v302 = vsub.f32 %v300, %v301
    %v303 = vand.u32 %v302, 4294901760
    %304 = vmatpush1.msra.mxu0 %v303
    %305 = vmatprep.subr.mxu0 0.0
    %v306 = vand.u32 %v40, 4294901760
    %v307 = vsub.f32 %v40, %v306
    %v308 = vand.u32 %v307, 4294901760
    %v309 = vsub.f32 %v307, %v308
    %v310 = vand.u32 %v309, 4294901760
    %311 = vmatpush1.msra.mxu0 %v310
    %312 = vmatprep.subr.mxu0 0.0
    %v313 = vand.u32 %v41, 4294901760
    %v314 = vsub.f32 %v41, %v313
    %v315 = vand.u32 %v314, 4294901760
    %v316 = vsub.f32 %v314, %v315
    %v317 = vand.u32 %v316, 4294901760
    %318 = vmatpush1.msra.mxu0 %v317
    %319 = vmatprep.subr.mxu0 0.0
    %v320 = vand.u32 %v42, 4294901760
    %v321 = vsub.f32 %v42, %v320
    %v322 = vand.u32 %v321, 4294901760
    %v323 = vsub.f32 %v321, %v322
    %v324 = vand.u32 %v323, 4294901760
    %325 = vmatpush1.msra.mxu0 %v324
    %326 = vmatprep.subr.mxu0 0.0
    %v327 = vand.u32 %v43, 4294901760
    %v328 = vsub.f32 %v43, %v327
    %v329 = vand.u32 %v328, 4294901760
    %v330 = vsub.f32 %v328, %v329
    %v331 = vand.u32 %v330, 4294901760
    %332 = vmatpush1.msra.mxu0 %v331
    %333 = vmatprep.subr.mxu0 0.0
    %v334 = vand.u32 %v44, 4294901760
    %v335 = vsub.f32 %v44, %v334
    %v336 = vand.u32 %v335, 4294901760
    %v337 = vsub.f32 %v335, %v336
    %v338 = vand.u32 %v337, 4294901760
    %339 = vmatpush1.msra.mxu0 %v338
    %340 = vmatprep.subr.mxu0 0.0
    %v341 = vand.u32 %v45, 4294901760
    %v342 = vsub.f32 %v45, %v341
    %v343 = vand.u32 %v342, 4294901760
    %v344 = vsub.f32 %v342, %v343
    %v345 = vand.u32 %v344, 4294901760
    %346 = vmatpush1.msra.mxu0 %v345
    %347 = vmatprep.subr.mxu0 0.0
    %v348 = vand.u32 %v46, 4294901760
    %v349 = vsub.f32 %v46, %v348
    %v350 = vand.u32 %v349, 4294901760
    %v351 = vsub.f32 %v349, %v350
    %v352 = vand.u32 %v351, 4294901760
    %353 = vmatpush1.msra.mxu0 %v352
    %354 = vmatprep.subr.mxu0 0.0
    %v355 = vand.u32 %v47, 4294901760
    %v356 = vsub.f32 %v47, %v355
    %v357 = vand.u32 %v356, 4294901760
    %v358 = vsub.f32 %v356, %v357
    %v359 = vand.u32 %v358, 4294901760
    %360 = vmatpush1.msra.mxu0 %v359
    %361 = vmatprep.subr.mxu0 0.0
    %v362 = vand.u32 %v48, 4294901760
    %v363 = vsub.f32 %v48, %v362
    %v364 = vand.u32 %v363, 4294901760
    %v365 = vsub.f32 %v363, %v364
    %v366 = vand.u32 %v365, 4294901760
    %367 = vmatpush1.msra.mxu0 %v366
    %368 = vmatprep.subr.mxu0 0.0
    %v369 = vand.u32 %v49, 4294901760
    %v370 = vsub.f32 %v49, %v369
    %v371 = vand.u32 %v370, 4294901760
    %v372 = vsub.f32 %v370, %v371
    %v373 = vand.u32 %v372, 4294901760
    %374 = vmatpush1.msra.mxu0 %v373
    %375 = vmatprep.subr.mxu0 0.0
    %v376 = vand.u32 %v50, 4294901760
    %v377 = vsub.f32 %v50, %v376
    %v378 = vand.u32 %v377, 4294901760
    %v379 = vsub.f32 %v377, %v378
    %v380 = vand.u32 %v379, 4294901760
    %381 = vmatpush1.msra.mxu0 %v380
    %382 = vmatprep.subr.mxu0 0.0
    %v383 = vand.u32 %v51, 4294901760
    %v384 = vsub.f32 %v51, %v383
    %v385 = vand.u32 %v384, 4294901760
    %v386 = vsub.f32 %v384, %v385
    %v387 = vand.u32 %v386, 4294901760
    %388 = vmatpush1.msra.mxu0 %v387
    %389 = vmatprep.subr.mxu0 0.0
    %v390 = vand.u32 %v52, 4294901760
    %v391 = vsub.f32 %v52, %v390
    %v392 = vand.u32 %v391, 4294901760
    %v393 = vsub.f32 %v391, %v392
    %v394 = vand.u32 %v393, 4294901760
    %395 = vmatpush1.msra.mxu0 %v394
    %396 = vmatprep.subr.mxu0 0.0
    %v397 = vand.u32 %v53, 4294901760
    %v398 = vsub.f32 %v53, %v397
    %v399 = vand.u32 %v398, 4294901760
    %v400 = vsub.f32 %v398, %v399
    %v401 = vand.u32 %v400, 4294901760
    %402 = vmatpush1.msra.mxu0 %v401
    %403 = vmatprep.subr.mxu0 0.0
    %v404 = vand.u32 %v54, 4294901760
    %v405 = vsub.f32 %v54, %v404
    %v406 = vand.u32 %v405, 4294901760
    %v407 = vsub.f32 %v405, %v406
    %v408 = vand.u32 %v407, 4294901760
    %409 = vmatpush1.msra.mxu0 %v408
    %410 = vmatprep.subr.mxu0 0.0
    %v411 = vand.u32 %v55, 4294901760
    %v412 = vsub.f32 %v55, %v411
    %v413 = vand.u32 %v412, 4294901760
    %v414 = vsub.f32 %v412, %v413
    %v415 = vand.u32 %v414, 4294901760
    %416 = vmatpush1.msra.mxu0 %v415
    %417 = vmatprep.subr.mxu0 0.0
    %v418 = vand.u32 %v56, 4294901760
    %v419 = vsub.f32 %v56, %v418
    %v420 = vand.u32 %v419, 4294901760
    %v421 = vsub.f32 %v419, %v420
    %v422 = vand.u32 %v421, 4294901760
    %423 = vmatpush1.msra.mxu0 %v422
    %424 = vmatprep.subr.mxu0 0.0
    %v425 = vand.u32 %v57, 4294901760
    %v426 = vsub.f32 %v57, %v425
    %v427 = vand.u32 %v426, 4294901760
    %v428 = vsub.f32 %v426, %v427
    %v429 = vand.u32 %v428, 4294901760
    %430 = vmatpush1.msra.mxu0 %v429
    %431 = vmatprep.subr.mxu0 0.0
    %v432 = vand.u32 %v58, 4294901760
    %v433 = vsub.f32 %v58, %v432
    %v434 = vand.u32 %v433, 4294901760
    %v435 = vsub.f32 %v433, %v434
    %v436 = vand.u32 %v435, 4294901760
    %437 = vmatpush1.msra.mxu0 %v436
    %438 = vmatprep.subr.mxu0 0.0
    %v439 = vand.u32 %v59, 4294901760
    %v440 = vsub.f32 %v59, %v439
    %v441 = vand.u32 %v440, 4294901760
    %v442 = vsub.f32 %v440, %v441
    %v443 = vand.u32 %v442, 4294901760
    %444 = vmatpush1.msra.mxu0 %v443
    %v445 = vand.u32 %v101, 4294901760
    %446 = vmatprep.mubr.f32.mxu0 %v445
    %v447 = vand.u32 %v93, 4294901760
    %448 = vmatmul.mubr.f32.gmra.mrb[0].mxu0 %v447
    %v449 = vpop.f32.mrb[0].mxu0
    %v450 = vadd.f32 %v218, %v449
    %v451 = vpop.f32.mrb[0].mxu0
    %452 = vdwg.mxu0
    %453 = vmatprep.subr.mxu0 0.0
    %v454 = vand.u32 %v28, 4294901760
    %v455 = vsub.f32 %v28, %v454
    %456 = vmatpush1.msra.mxu0 %v455
    %457 = vmatprep.subr.mxu0 0.0
    %v458 = vand.u32 %v29, 4294901760
    %v459 = vsub.f32 %v29, %v458
    %460 = vmatpush1.msra.mxu0 %v459
    %461 = vmatprep.subr.mxu0 0.0
    %v462 = vand.u32 %v30, 4294901760
    %v463 = vsub.f32 %v30, %v462
    %464 = vmatpush1.msra.mxu0 %v463
    %465 = vmatprep.subr.mxu0 0.0
    %v466 = vand.u32 %v31, 4294901760
    %v467 = vsub.f32 %v31, %v466
    %468 = vmatpush1.msra.mxu0 %v467
    %469 = vmatprep.subr.mxu0 0.0
    %v470 = vand.u32 %v32, 4294901760
    %v471 = vsub.f32 %v32, %v470
    %472 = vmatpush1.msra.mxu0 %v471
    %473 = vmatprep.subr.mxu0 0.0
    %v474 = vand.u32 %v33, 4294901760
    %v475 = vsub.f32 %v33, %v474
    %476 = vmatpush1.msra.mxu0 %v475
    %477 = vmatprep.subr.mxu0 0.0
    %v478 = vand.u32 %v34, 4294901760
    %v479 = vsub.f32 %v34, %v478
    %480 = vmatpush1.msra.mxu0 %v479
    %481 = vmatprep.subr.mxu0 0.0
    %v482 = vand.u32 %v35, 4294901760
    %v483 = vsub.f32 %v35, %v482
    %484 = vmatpush1.msra.mxu0 %v483
    %485 = vmatprep.subr.mxu0 0.0
    %v486 = vand.u32 %v36, 4294901760
    %v487 = vsub.f32 %v36, %v486
    %488 = vmatpush1.msra.mxu0 %v487
    %489 = vmatprep.subr.mxu0 0.0
    %v490 = vand.u32 %v37, 4294901760
    %v491 = vsub.f32 %v37, %v490
    %492 = vmatpush1.msra.mxu0 %v491
    %493 = vmatprep.subr.mxu0 0.0
    %v494 = vand.u32 %v38, 4294901760
    %v495 = vsub.f32 %v38, %v494
    %496 = vmatpush1.msra.mxu0 %v495
    %497 = vmatprep.subr.mxu0 0.0
    %v498 = vand.u32 %v39, 4294901760
    %v499 = vsub.f32 %v39, %v498
    %500 = vmatpush1.msra.mxu0 %v499
    %501 = vmatprep.subr.mxu0 0.0
    %v502 = vand.u32 %v40, 4294901760
    %v503 = vsub.f32 %v40, %v502
    %504 = vmatpush1.msra.mxu0 %v503
    %505 = vmatprep.subr.mxu0 0.0
    %v506 = vand.u32 %v41, 4294901760
    %v507 = vsub.f32 %v41, %v506
    %508 = vmatpush1.msra.mxu0 %v507
    %509 = vmatprep.subr.mxu0 0.0
    %v510 = vand.u32 %v42, 4294901760
    %v511 = vsub.f32 %v42, %v510
    %512 = vmatpush1.msra.mxu0 %v511
    %513 = vmatprep.subr.mxu0 0.0
    %v514 = vand.u32 %v43, 4294901760
    %v515 = vsub.f32 %v43, %v514
    %516 = vmatpush1.msra.mxu0 %v515
    %517 = vmatprep.subr.mxu0 0.0
    %v518 = vand.u32 %v44, 4294901760
    %v519 = vsub.f32 %v44, %v518
    %520 = vmatpush1.msra.mxu0 %v519
    %521 = vmatprep.subr.mxu0 0.0
    %v522 = vand.u32 %v45, 4294901760
    %v523 = vsub.f32 %v45, %v522
    %524 = vmatpush1.msra.mxu0 %v523
    %525 = vmatprep.subr.mxu0 0.0
    %v526 = vand.u32 %v46, 4294901760
    %v527 = vsub.f32 %v46, %v526
    %528 = vmatpush1.msra.mxu0 %v527
    %529 = vmatprep.subr.mxu0 0.0
    %v530 = vand.u32 %v47, 4294901760
    %v531 = vsub.f32 %v47, %v530
    %532 = vmatpush1.msra.mxu0 %v531
    %533 = vmatprep.subr.mxu0 0.0
    %v534 = vand.u32 %v48, 4294901760
    %v535 = vsub.f32 %v48, %v534
    %536 = vmatpush1.msra.mxu0 %v535
    %537 = vmatprep.subr.mxu0 0.0
    %v538 = vand.u32 %v49, 4294901760
    %v539 = vsub.f32 %v49, %v538
    %540 = vmatpush1.msra.mxu0 %v539
    %541 = vmatprep.subr.mxu0 0.0
    %v542 = vand.u32 %v50, 4294901760
    %v543 = vsub.f32 %v50, %v542
    %544 = vmatpush1.msra.mxu0 %v543
    %545 = vmatprep.subr.mxu0 0.0
    %v546 = vand.u32 %v51, 4294901760
    %v547 = vsub.f32 %v51, %v546
    %548 = vmatpush1.msra.mxu0 %v547
    %549 = vmatprep.subr.mxu0 0.0
    %v550 = vand.u32 %v52, 4294901760
    %v551 = vsub.f32 %v52, %v550
    %552 = vmatpush1.msra.mxu0 %v551
    %553 = vmatprep.subr.mxu0 0.0
    %v554 = vand.u32 %v53, 4294901760
    %v555 = vsub.f32 %v53, %v554
    %556 = vmatpush1.msra.mxu0 %v555
    %557 = vmatprep.subr.mxu0 0.0
    %v558 = vand.u32 %v54, 4294901760
    %v559 = vsub.f32 %v54, %v558
    %560 = vmatpush1.msra.mxu0 %v559
    %561 = vmatprep.subr.mxu0 0.0
    %v562 = vand.u32 %v55, 4294901760
    %v563 = vsub.f32 %v55, %v562
    %564 = vmatpush1.msra.mxu0 %v563
    %565 = vmatprep.subr.mxu0 0.0
    %v566 = vand.u32 %v56, 4294901760
    %v567 = vsub.f32 %v56, %v566
    %568 = vmatpush1.msra.mxu0 %v567
    %569 = vmatprep.subr.mxu0 0.0
    %v570 = vand.u32 %v57, 4294901760
    %v571 = vsub.f32 %v57, %v570
    %572 = vmatpush1.msra.mxu0 %v571
    %573 = vmatprep.subr.mxu0 0.0
    %v574 = vand.u32 %v58, 4294901760
    %v575 = vsub.f32 %v58, %v574
    %576 = vmatpush1.msra.mxu0 %v575
    %577 = vmatprep.subr.mxu0 0.0
    %v578 = vand.u32 %v59, 4294901760
    %v579 = vsub.f32 %v59, %v578
    %580 = vmatpush1.msra.mxu0 %v579
    %v581 = vand.u32 %v101, 4294901760
    %v582 = vsub.f32 %v101, %v581
    %583 = vmatprep.mubr.f32.mxu0 %v582
    %v584 = vand.u32 %v93, 4294901760
    %v585 = vsub.f32 %v93, %v584
    %586 = vmatmul.mubr.f32.gmra.mrb[0].mxu0 %v585
    %v587 = vpop.f32.mrb[0].mxu0
    %v588 = vadd.f32 %v450, %v587
    %v589 = vpop.f32.mrb[0].mxu0
    %590 = vdwg.mxu0
    %591 = vmatprep.subr.mxu0 0.0
    %v592 = vand.u32 %v28, 4294901760
    %593 = vmatpush1.msra.mxu0 %v592
    %594 = vmatprep.subr.mxu0 0.0
    %v595 = vand.u32 %v29, 4294901760
    %596 = vmatpush1.msra.mxu0 %v595
    %597 = vmatprep.subr.mxu0 0.0
    %v598 = vand.u32 %v30, 4294901760
    %599 = vmatpush1.msra.mxu0 %v598
    %600 = vmatprep.subr.mxu0 0.0
    %v601 = vand.u32 %v31, 4294901760
    %602 = vmatpush1.msra.mxu0 %v601
    %603 = vmatprep.subr.mxu0 0.0
    %v604 = vand.u32 %v32, 4294901760
    %605 = vmatpush1.msra.mxu0 %v604
    %606 = vmatprep.subr.mxu0 0.0
    %v607 = vand.u32 %v33, 4294901760
    %608 = vmatpush1.msra.mxu0 %v607
    %609 = vmatprep.subr.mxu0 0.0
    %v610 = vand.u32 %v34, 4294901760
    %611 = vmatpush1.msra.mxu0 %v610
    %612 = vmatprep.subr.mxu0 0.0
    %v613 = vand.u32 %v35, 4294901760
    %614 = vmatpush1.msra.mxu0 %v613
    %615 = vmatprep.subr.mxu0 0.0
    %v616 = vand.u32 %v36, 4294901760
    %617 = vmatpush1.msra.mxu0 %v616
    %618 = vmatprep.subr.mxu0 0.0
    %v619 = vand.u32 %v37, 4294901760
    %620 = vmatpush1.msra.mxu0 %v619
    %621 = vmatprep.subr.mxu0 0.0
    %v622 = vand.u32 %v38, 4294901760
    %623 = vmatpush1.msra.mxu0 %v622
    %624 = vmatprep.subr.mxu0 0.0
    %v625 = vand.u32 %v39, 4294901760
    %626 = vmatpush1.msra.mxu0 %v625
    %627 = vmatprep.subr.mxu0 0.0
    %v628 = vand.u32 %v40, 4294901760
    %629 = vmatpush1.msra.mxu0 %v628
    %630 = vmatprep.subr.mxu0 0.0
    %v631 = vand.u32 %v41, 4294901760
    %632 = vmatpush1.msra.mxu0 %v631
    %633 = vmatprep.subr.mxu0 0.0
    %v634 = vand.u32 %v42, 4294901760
    %635 = vmatpush1.msra.mxu0 %v634
    %636 = vmatprep.subr.mxu0 0.0
    %v637 = vand.u32 %v43, 4294901760
    %638 = vmatpush1.msra.mxu0 %v637
    %639 = vmatprep.subr.mxu0 0.0
    %v640 = vand.u32 %v44, 4294901760
    %641 = vmatpush1.msra.mxu0 %v640
    %642 = vmatprep.subr.mxu0 0.0
    %v643 = vand.u32 %v45, 4294901760
    %644 = vmatpush1.msra.mxu0 %v643
    %645 = vmatprep.subr.mxu0 0.0
    %v646 = vand.u32 %v46, 4294901760
    %647 = vmatpush1.msra.mxu0 %v646
    %648 = vmatprep.subr.mxu0 0.0
    %v649 = vand.u32 %v47, 4294901760
    %650 = vmatpush1.msra.mxu0 %v649
    %651 = vmatprep.subr.mxu0 0.0
    %v652 = vand.u32 %v48, 4294901760
    %653 = vmatpush1.msra.mxu0 %v652
    %654 = vmatprep.subr.mxu0 0.0
    %v655 = vand.u32 %v49, 4294901760
    %656 = vmatpush1.msra.mxu0 %v655
    %657 = vmatprep.subr.mxu0 0.0
    %v658 = vand.u32 %v50, 4294901760
    %659 = vmatpush1.msra.mxu0 %v658
    %660 = vmatprep.subr.mxu0 0.0
    %v661 = vand.u32 %v51, 4294901760
    %662 = vmatpush1.msra.mxu0 %v661
    %663 = vmatprep.subr.mxu0 0.0
    %v664 = vand.u32 %v52, 4294901760
    %665 = vmatpush1.msra.mxu0 %v664
    %666 = vmatprep.subr.mxu0 0.0
    %v667 = vand.u32 %v53, 4294901760
    %668 = vmatpush1.msra.mxu0 %v667
    %669 = vmatprep.subr.mxu0 0.0
    %v670 = vand.u32 %v54, 4294901760
    %671 = vmatpush1.msra.mxu0 %v670
    %672 = vmatprep.subr.mxu0 0.0
    %v673 = vand.u32 %v55, 4294901760
    %674 = vmatpush1.msra.mxu0 %v673
    %675 = vmatprep.subr.mxu0 0.0
    %v676 = vand.u32 %v56, 4294901760
    %677 = vmatpush1.msra.mxu0 %v676
    %678 = vmatprep.subr.mxu0 0.0
    %v679 = vand.u32 %v57, 4294901760
    %680 = vmatpush1.msra.mxu0 %v679
    %681 = vmatprep.subr.mxu0 0.0
    %v682 = vand.u32 %v58, 4294901760
    %683 = vmatpush1.msra.mxu0 %v682
    %684 = vmatprep.subr.mxu0 0.0
    %v685 = vand.u32 %v59, 4294901760
    %686 = vmatpush1.msra.mxu0 %v685
    %v687 = vand.u32 %v101, 4294901760
    %v688 = vsub.f32 %v101, %v687
    %v689 = vand.u32 %v688, 4294901760
    %690 = vmatprep.mubr.f32.mxu0 %v689
    %v691 = vand.u32 %v93, 4294901760
    %v692 = vsub.f32 %v93, %v691
    %v693 = vand.u32 %v692, 4294901760
    %694 = vmatmul.mubr.f32.gmra.mrb[0].mxu0 %v693
    %v695 = vpop.f32.mrb[0].mxu0
    %v696 = vadd.f32 %v588, %v695
    %v697 = vpop.f32.mrb[0].mxu0
    %698 = vdwg.mxu0
    %699 = vmatprep.subr.mxu0 0.0
    %v700 = vand.u32 %v28, 4294901760
    %v701 = vsub.f32 %v28, %v700
    %v702 = vand.u32 %v701, 4294901760
    %703 = vmatpush1.msra.mxu0 %v702
    %704 = vmatprep.subr.mxu0 0.0
    %v705 = vand.u32 %v29, 4294901760
    %v706 = vsub.f32 %v29, %v705
    %v707 = vand.u32 %v706, 4294901760
    %708 = vmatpush1.msra.mxu0 %v707
    %709 = vmatprep.subr.mxu0 0.0
    %v710 = vand.u32 %v30, 4294901760
    %v711 = vsub.f32 %v30, %v710
    %v712 = vand.u32 %v711, 4294901760
    %713 = vmatpush1.msra.mxu0 %v712
    %714 = vmatprep.subr.mxu0 0.0
    %v715 = vand.u32 %v31, 4294901760
    %v716 = vsub.f32 %v31, %v715
    %v717 = vand.u32 %v716, 4294901760
    %718 = vmatpush1.msra.mxu0 %v717
    %719 = vmatprep.subr.mxu0 0.0
    %v720 = vand.u32 %v32, 4294901760
    %v721 = vsub.f32 %v32, %v720
    %v722 = vand.u32 %v721, 4294901760
    %723 = vmatpush1.msra.mxu0 %v722
    %724 = vmatprep.subr.mxu0 0.0
    %v725 = vand.u32 %v33, 4294901760
    %v726 = vsub.f32 %v33, %v725
    %v727 = vand.u32 %v726, 4294901760
    %728 = vmatpush1.msra.mxu0 %v727
    %729 = vmatprep.subr.mxu0 0.0
    %v730 = vand.u32 %v34, 4294901760
    %v731 = vsub.f32 %v34, %v730
    %v732 = vand.u32 %v731, 4294901760
    %733 = vmatpush1.msra.mxu0 %v732
    %734 = vmatprep.subr.mxu0 0.0
    %v735 = vand.u32 %v35, 4294901760
    %v736 = vsub.f32 %v35, %v735
    %v737 = vand.u32 %v736, 4294901760
    %738 = vmatpush1.msra.mxu0 %v737
    %739 = vmatprep.subr.mxu0 0.0
    %v740 = vand.u32 %v36, 4294901760
    %v741 = vsub.f32 %v36, %v740
    %v742 = vand.u32 %v741, 4294901760
    %743 = vmatpush1.msra.mxu0 %v742
    %744 = vmatprep.subr.mxu0 0.0
    %v745 = vand.u32 %v37, 4294901760
    %v746 = vsub.f32 %v37, %v745
    %v747 = vand.u32 %v746, 4294901760
    %748 = vmatpush1.msra.mxu0 %v747
    %749 = vmatprep.subr.mxu0 0.0
    %v750 = vand.u32 %v38, 4294901760
    %v751 = vsub.f32 %v38, %v750
    %v752 = vand.u32 %v751, 4294901760
    %753 = vmatpush1.msra.mxu0 %v752
    %754 = vmatprep.subr.mxu0 0.0
    %v755 = vand.u32 %v39, 4294901760
    %v756 = vsub.f32 %v39, %v755
    %v757 = vand.u32 %v756, 4294901760
    %758 = vmatpush1.msra.mxu0 %v757
    %759 = vmatprep.subr.mxu0 0.0
    %v760 = vand.u32 %v40, 4294901760
    %v761 = vsub.f32 %v40, %v760
    %v762 = vand.u32 %v761, 4294901760
    %763 = vmatpush1.msra.mxu0 %v762
    %764 = vmatprep.subr.mxu0 0.0
    %v765 = vand.u32 %v41, 4294901760
    %v766 = vsub.f32 %v41, %v765
    %v767 = vand.u32 %v766, 4294901760
    %768 = vmatpush1.msra.mxu0 %v767
    %769 = vmatprep.subr.mxu0 0.0
    %v770 = vand.u32 %v42, 4294901760
    %v771 = vsub.f32 %v42, %v770
    %v772 = vand.u32 %v771, 4294901760
    %773 = vmatpush1.msra.mxu0 %v772
    %774 = vmatprep.subr.mxu0 0.0
    %v775 = vand.u32 %v43, 4294901760
    %v776 = vsub.f32 %v43, %v775
    %v777 = vand.u32 %v776, 4294901760
    %778 = vmatpush1.msra.mxu0 %v777
    %779 = vmatprep.subr.mxu0 0.0
    %v780 = vand.u32 %v44, 4294901760
    %v781 = vsub.f32 %v44, %v780
    %v782 = vand.u32 %v781, 4294901760
    %783 = vmatpush1.msra.mxu0 %v782
    %784 = vmatprep.subr.mxu0 0.0
    %v785 = vand.u32 %v45, 4294901760
    %v786 = vsub.f32 %v45, %v785
    %v787 = vand.u32 %v786, 4294901760
    %788 = vmatpush1.msra.mxu0 %v787
    %789 = vmatprep.subr.mxu0 0.0
    %v790 = vand.u32 %v46, 4294901760
    %v791 = vsub.f32 %v46, %v790
    %v792 = vand.u32 %v791, 4294901760
    %793 = vmatpush1.msra.mxu0 %v792
    %794 = vmatprep.subr.mxu0 0.0
    %v795 = vand.u32 %v47, 4294901760
    %v796 = vsub.f32 %v47, %v795
    %v797 = vand.u32 %v796, 4294901760
    %798 = vmatpush1.msra.mxu0 %v797
    %799 = vmatprep.subr.mxu0 0.0
    %v800 = vand.u32 %v48, 4294901760
    %v801 = vsub.f32 %v48, %v800
    %v802 = vand.u32 %v801, 4294901760
    %803 = vmatpush1.msra.mxu0 %v802
    %804 = vmatprep.subr.mxu0 0.0
    %v805 = vand.u32 %v49, 4294901760
    %v806 = vsub.f32 %v49, %v805
    %v807 = vand.u32 %v806, 4294901760
    %808 = vmatpush1.msra.mxu0 %v807
    %809 = vmatprep.subr.mxu0 0.0
    %v810 = vand.u32 %v50, 4294901760
    %v811 = vsub.f32 %v50, %v810
    %v812 = vand.u32 %v811, 4294901760
    %813 = vmatpush1.msra.mxu0 %v812
    %814 = vmatprep.subr.mxu0 0.0
    %v815 = vand.u32 %v51, 4294901760
    %v816 = vsub.f32 %v51, %v815
    %v817 = vand.u32 %v816, 4294901760
    %818 = vmatpush1.msra.mxu0 %v817
    %819 = vmatprep.subr.mxu0 0.0
    %v820 = vand.u32 %v52, 4294901760
    %v821 = vsub.f32 %v52, %v820
    %v822 = vand.u32 %v821, 4294901760
    %823 = vmatpush1.msra.mxu0 %v822
    %824 = vmatprep.subr.mxu0 0.0
    %v825 = vand.u32 %v53, 4294901760
    %v826 = vsub.f32 %v53, %v825
    %v827 = vand.u32 %v826, 4294901760
    %828 = vmatpush1.msra.mxu0 %v827
    %829 = vmatprep.subr.mxu0 0.0
    %v830 = vand.u32 %v54, 4294901760
    %v831 = vsub.f32 %v54, %v830
    %v832 = vand.u32 %v831, 4294901760
    %833 = vmatpush1.msra.mxu0 %v832
    %834 = vmatprep.subr.mxu0 0.0
    %v835 = vand.u32 %v55, 4294901760
    %v836 = vsub.f32 %v55, %v835
    %v837 = vand.u32 %v836, 4294901760
    %838 = vmatpush1.msra.mxu0 %v837
    %839 = vmatprep.subr.mxu0 0.0
    %v840 = vand.u32 %v56, 4294901760
    %v841 = vsub.f32 %v56, %v840
    %v842 = vand.u32 %v841, 4294901760
    %843 = vmatpush1.msra.mxu0 %v842
    %844 = vmatprep.subr.mxu0 0.0
    %v845 = vand.u32 %v57, 4294901760
    %v846 = vsub.f32 %v57, %v845
    %v847 = vand.u32 %v846, 4294901760
    %848 = vmatpush1.msra.mxu0 %v847
    %849 = vmatprep.subr.mxu0 0.0
    %v850 = vand.u32 %v58, 4294901760
    %v851 = vsub.f32 %v58, %v850
    %v852 = vand.u32 %v851, 4294901760
    %853 = vmatpush1.msra.mxu0 %v852
    %854 = vmatprep.subr.mxu0 0.0
    %v855 = vand.u32 %v59, 4294901760
    %v856 = vsub.f32 %v59, %v855
    %v857 = vand.u32 %v856, 4294901760
    %858 = vmatpush1.msra.mxu0 %v857
    %v859 = vand.u32 %v101, 4294901760
    %860 = vmatprep.mubr.f32.mxu0 %v859
    %v861 = vand.u32 %v93, 4294901760
    %862 = vmatmul.mubr.f32.gmra.mrb[0].mxu0 %v861
    %v863 = vpop.f32.mrb[0].mxu0
    %v864 = vadd.f32 %v696, %v863
    %v865 = vpop.f32.mrb[0].mxu0
    %866 = vdwg.mxu0
    %867 = vmatprep.subr.mxu0 0.0
    %v868 = vand.u32 %v28, 4294901760
    %869 = vmatpush1.msra.mxu0 %v868
    %870 = vmatprep.subr.mxu0 0.0
    %v871 = vand.u32 %v29, 4294901760
    %872 = vmatpush1.msra.mxu0 %v871
    %873 = vmatprep.subr.mxu0 0.0
    %v874 = vand.u32 %v30, 4294901760
    %875 = vmatpush1.msra.mxu0 %v874
    %876 = vmatprep.subr.mxu0 0.0
    %v877 = vand.u32 %v31, 4294901760
    %878 = vmatpush1.msra.mxu0 %v877
    %879 = vmatprep.subr.mxu0 0.0
    %v880 = vand.u32 %v32, 4294901760
    %881 = vmatpush1.msra.mxu0 %v880
    %882 = vmatprep.subr.mxu0 0.0
    %v883 = vand.u32 %v33, 4294901760
    %884 = vmatpush1.msra.mxu0 %v883
    %885 = vmatprep.subr.mxu0 0.0
    %v886 = vand.u32 %v34, 4294901760
    %887 = vmatpush1.msra.mxu0 %v886
    %888 = vmatprep.subr.mxu0 0.0
    %v889 = vand.u32 %v35, 4294901760
    %890 = vmatpush1.msra.mxu0 %v889
    %891 = vmatprep.subr.mxu0 0.0
    %v892 = vand.u32 %v36, 4294901760
    %893 = vmatpush1.msra.mxu0 %v892
    %894 = vmatprep.subr.mxu0 0.0
    %v895 = vand.u32 %v37, 4294901760
    %896 = vmatpush1.msra.mxu0 %v895
    %897 = vmatprep.subr.mxu0 0.0
    %v898 = vand.u32 %v38, 4294901760
    %899 = vmatpush1.msra.mxu0 %v898
    %900 = vmatprep.subr.mxu0 0.0
    %v901 = vand.u32 %v39, 4294901760
    %902 = vmatpush1.msra.mxu0 %v901
    %903 = vmatprep.subr.mxu0 0.0
    %v904 = vand.u32 %v40, 4294901760
    %905 = vmatpush1.msra.mxu0 %v904
    %906 = vmatprep.subr.mxu0 0.0
    %v907 = vand.u32 %v41, 4294901760
    %908 = vmatpush1.msra.mxu0 %v907
    %909 = vmatprep.subr.mxu0 0.0
    %v910 = vand.u32 %v42, 4294901760
    %911 = vmatpush1.msra.mxu0 %v910
    %912 = vmatprep.subr.mxu0 0.0
    %v913 = vand.u32 %v43, 4294901760
    %914 = vmatpush1.msra.mxu0 %v913
    %915 = vmatprep.subr.mxu0 0.0
    %v916 = vand.u32 %v44, 4294901760
    %917 = vmatpush1.msra.mxu0 %v916
    %918 = vmatprep.subr.mxu0 0.0
    %v919 = vand.u32 %v45, 4294901760
    %920 = vmatpush1.msra.mxu0 %v919
    %921 = vmatprep.subr.mxu0 0.0
    %v922 = vand.u32 %v46, 4294901760
    %923 = vmatpush1.msra.mxu0 %v922
    %924 = vmatprep.subr.mxu0 0.0
    %v925 = vand.u32 %v47, 4294901760
    %926 = vmatpush1.msra.mxu0 %v925
    %927 = vmatprep.subr.mxu0 0.0
    %v928 = vand.u32 %v48, 4294901760
    %929 = vmatpush1.msra.mxu0 %v928
    %930 = vmatprep.subr.mxu0 0.0
    %v931 = vand.u32 %v49, 4294901760
    %932 = vmatpush1.msra.mxu0 %v931
    %933 = vmatprep.subr.mxu0 0.0
    %v934 = vand.u32 %v50, 4294901760
    %935 = vmatpush1.msra.mxu0 %v934
    %936 = vmatprep.subr.mxu0 0.0
    %v937 = vand.u32 %v51, 4294901760
    %938 = vmatpush1.msra.mxu0 %v937
    %939 = vmatprep.subr.mxu0 0.0
    %v940 = vand.u32 %v52, 4294901760
    %941 = vmatpush1.msra.mxu0 %v940
    %942 = vmatprep.subr.mxu0 0.0
    %v943 = vand.u32 %v53, 4294901760
    %944 = vmatpush1.msra.mxu0 %v943
    %945 = vmatprep.subr.mxu0 0.0
    %v946 = vand.u32 %v54, 4294901760
    %947 = vmatpush1.msra.mxu0 %v946
    %948 = vmatprep.subr.mxu0 0.0
    %v949 = vand.u32 %v55, 4294901760
    %950 = vmatpush1.msra.mxu0 %v949
    %951 = vmatprep.subr.mxu0 0.0
    %v952 = vand.u32 %v56, 4294901760
    %953 = vmatpush1.msra.mxu0 %v952
    %954 = vmatprep.subr.mxu0 0.0
    %v955 = vand.u32 %v57, 4294901760
    %956 = vmatpush1.msra.mxu0 %v955
    %957 = vmatprep.subr.mxu0 0.0
    %v958 = vand.u32 %v58, 4294901760
    %959 = vmatpush1.msra.mxu0 %v958
    %960 = vmatprep.subr.mxu0 0.0
    %v961 = vand.u32 %v59, 4294901760
    %962 = vmatpush1.msra.mxu0 %v961
    %v963 = vand.u32 %v101, 4294901760
    %964 = vmatprep.mubr.f32.mxu0 %v963
    %v965 = vand.u32 %v93, 4294901760
    %966 = vmatmul.mubr.f32.gmra.mrb[0].mxu0 %v965
    %v967 = vpop.f32.mrb[0].mxu0
    %v968 = vadd.f32 %v864, %v967
    %v969 = vpop.f32.mrb[0].mxu0
    %970 = vdwg.mxu0
    %971 = vmatprep.subr.mxu0 0.0
    %v972 = vand.u32 %v60, 4294901760
    %973 = vmatpush1.msra.mxu0 %v972
    %974 = vmatprep.subr.mxu0 0.0
    %v975 = vand.u32 %v61, 4294901760
    %976 = vmatpush1.msra.mxu0 %v975
    %977 = vmatprep.subr.mxu0 0.0
    %v978 = vand.u32 %v62, 4294901760
    %979 = vmatpush1.msra.mxu0 %v978
    %980 = vmatprep.subr.mxu0 0.0
    %v981 = vand.u32 %v63, 4294901760
    %982 = vmatpush1.msra.mxu0 %v981
    %983 = vmatprep.subr.mxu0 0.0
    %v984 = vand.u32 %v64, 4294901760
    %985 = vmatpush1.msra.mxu0 %v984
    %986 = vmatprep.subr.mxu0 0.0
    %v987 = vand.u32 %v65, 4294901760
    %988 = vmatpush1.msra.mxu0 %v987
    %989 = vmatprep.subr.mxu0 0.0
    %v990 = vand.u32 %v66, 4294901760
    %991 = vmatpush1.msra.mxu0 %v990
    %992 = vmatprep.subr.mxu0 0.0
    %v993 = vand.u32 %v67, 4294901760
    %994 = vmatpush1.msra.mxu0 %v993
    %995 = vmatprep.subr.mxu0 0.0
    %v996 = vand.u32 %v68, 4294901760
    %997 = vmatpush1.msra.mxu0 %v996
    %998 = vmatprep.subr.mxu0 0.0
    %v999 = vand.u32 %v69, 4294901760
    %1000 = vmatpush1.msra.mxu0 %v999
    %1001 = vmatprep.subr.mxu0 0.0
    %v1002 = vand.u32 %v70, 4294901760
    %1003 = vmatpush1.msra.mxu0 %v1002
    %1004 = vmatprep.subr.mxu0 0.0
    %v1005 = vand.u32 %v71, 4294901760
    %1006 = vmatpush1.msra.mxu0 %v1005
    %1007 = vmatprep.subr.mxu0 0.0
    %v1008 = vand.u32 %v72, 4294901760
    %1009 = vmatpush1.msra.mxu0 %v1008
    %1010 = vmatprep.subr.mxu0 0.0
    %v1011 = vand.u32 %v73, 4294901760
    %1012 = vmatpush1.msra.mxu0 %v1011
    %1013 = vmatprep.subr.mxu0 0.0
    %v1014 = vand.u32 %v74, 4294901760
    %1015 = vmatpush1.msra.mxu0 %v1014
    %1016 = vmatprep.subr.mxu0 0.0
    %v1017 = vand.u32 %v75, 4294901760
    %1018 = vmatpush1.msra.mxu0 %v1017
    %1019 = vmatprep.subr.mxu0 0.0
    %v1020 = vand.u32 %v76, 4294901760
    %1021 = vmatpush1.msra.mxu0 %v1020
    %1022 = vmatprep.subr.mxu0 0.0
    %v1023 = vand.u32 %v77, 4294901760
    %1024 = vmatpush1.msra.mxu0 %v1023
    %1025 = vmatprep.subr.mxu0 0.0
    %1026 = vmatpush1.msra.mxu0 0.0
    %1027 = vmatprep.subr.mxu0 0.0
    %1028 = vmatpush1.msra.mxu0 0.0
    %1029 = vmatprep.subr.mxu0 0.0
    %1030 = vmatpush1.msra.mxu0 0.0
    %1031 = vmatprep.subr.mxu0 0.0
    %1032 = vmatpush1.msra.mxu0 0.0
    %1033 = vmatprep.subr.mxu0 0.0
    %1034 = vmatpush1.msra.mxu0 0.0
    %1035 = vmatprep.subr.mxu0 0.0
    %1036 = vmatpush1.msra.mxu0 0.0
    %1037 = vmatprep.subr.mxu0 0.0
    %1038 = vmatpush1.msra.mxu0 0.0
    %1039 = vmatprep.subr.mxu0 0.0
    %1040 = vmatpush1.msra.mxu0 0.0
    %1041 = vmatprep.subr.mxu0 0.0
    %1042 = vmatpush1.msra.mxu0 0.0
    %1043 = vmatprep.subr.mxu0 0.0
    %1044 = vmatpush1.msra.mxu0 0.0
    %1045 = vmatprep.subr.mxu0 0.0
    %1046 = vmatpush1.msra.mxu0 0.0
    %1047 = vmatprep.subr.mxu0 0.0
    %1048 = vmatpush1.msra.mxu0 0.0
    %1049 = vmatprep.subr.mxu0 0.0
    %1050 = vmatpush1.msra.mxu0 0.0
    %1051 = vmatprep.subr.mxu0 0.0
    %1052 = vmatpush1.msra.mxu0 0.0
    %v1053 = vand.u32 %v107, 4294901760
    %v1054 = vsub.f32 %v107, %v1053
    %v1055 = vand.u32 %v1054, 4294901760
    %v1056 = vsub.f32 %v1054, %v1055
    %v1057 = vand.u32 %v1056, 4294901760
    %1058 = vmatprep.mubr.f32.mxu0 %v1057
    %v1059 = vand.u32 %v100, 4294901760
    %v1060 = vsub.f32 %v100, %v1059
    %v1061 = vand.u32 %v1060, 4294901760
    %v1062 = vsub.f32 %v1060, %v1061
    %v1063 = vand.u32 %v1062, 4294901760
    %1064 = vmatmul.mubr.f32.gmra.mrb[0].mxu0 %v1063
    %v1065 = vpop.f32.mrb[0].mxu0
    %v1066 = vadd.f32 %v968, %v1065
    %v1067 = vpop.f32.mrb[0].mxu0
    %1068 = vdwg.mxu0
    %1069 = vmatprep.subr.mxu0 0.0
    %v1070 = vand.u32 %v60, 4294901760
    %v1071 = vsub.f32 %v60, %v1070
    %v1072 = vand.u32 %v1071, 4294901760
    %v1073 = vsub.f32 %v1071, %v1072
    %v1074 = vand.u32 %v1073, 4294901760
    %1075 = vmatpush1.msra.mxu0 %v1074
    %1076 = vmatprep.subr.mxu0 0.0
    %v1077 = vand.u32 %v61, 4294901760
    %v1078 = vsub.f32 %v61, %v1077
    %v1079 = vand.u32 %v1078, 4294901760
    %v1080 = vsub.f32 %v1078, %v1079
    %v1081 = vand.u32 %v1080, 4294901760
    %1082 = vmatpush1.msra.mxu0 %v1081
    %1083 = vmatprep.subr.mxu0 0.0
    %v1084 = vand.u32 %v62, 4294901760
    %v1085 = vsub.f32 %v62, %v1084
    %v1086 = vand.u32 %v1085, 4294901760
    %v1087 = vsub.f32 %v1085, %v1086
    %v1088 = vand.u32 %v1087, 4294901760
    %1089 = vmatpush1.msra.mxu0 %v1088
    %1090 = vmatprep.subr.mxu0 0.0
    %v1091 = vand.u32 %v63, 4294901760
    %v1092 = vsub.f32 %v63, %v1091
    %v1093 = vand.u32 %v1092, 4294901760
    %v1094 = vsub.f32 %v1092, %v1093
    %v1095 = vand.u32 %v1094, 4294901760
    %1096 = vmatpush1.msra.mxu0 %v1095
    %1097 = vmatprep.subr.mxu0 0.0
    %v1098 = vand.u32 %v64, 4294901760
    %v1099 = vsub.f32 %v64, %v1098
    %v1100 = vand.u32 %v1099, 4294901760
    %v1101 = vsub.f32 %v1099, %v1100
    %v1102 = vand.u32 %v1101, 4294901760
    %1103 = vmatpush1.msra.mxu0 %v1102
    %1104 = vmatprep.subr.mxu0 0.0
    %v1105 = vand.u32 %v65, 4294901760
    %v1106 = vsub.f32 %v65, %v1105
    %v1107 = vand.u32 %v1106, 4294901760
    %v1108 = vsub.f32 %v1106, %v1107
    %v1109 = vand.u32 %v1108, 4294901760
    %1110 = vmatpush1.msra.mxu0 %v1109
    %1111 = vmatprep.subr.mxu0 0.0
    %v1112 = vand.u32 %v66, 4294901760
    %v1113 = vsub.f32 %v66, %v1112
    %v1114 = vand.u32 %v1113, 4294901760
    %v1115 = vsub.f32 %v1113, %v1114
    %v1116 = vand.u32 %v1115, 4294901760
    %1117 = vmatpush1.msra.mxu0 %v1116
    %1118 = vmatprep.subr.mxu0 0.0
    %v1119 = vand.u32 %v67, 4294901760
    %v1120 = vsub.f32 %v67, %v1119
    %v1121 = vand.u32 %v1120, 4294901760
    %v1122 = vsub.f32 %v1120, %v1121
    %v1123 = vand.u32 %v1122, 4294901760
    %1124 = vmatpush1.msra.mxu0 %v1123
    %1125 = vmatprep.subr.mxu0 0.0
    %v1126 = vand.u32 %v68, 4294901760
    %v1127 = vsub.f32 %v68, %v1126
    %v1128 = vand.u32 %v1127, 4294901760
    %v1129 = vsub.f32 %v1127, %v1128
    %v1130 = vand.u32 %v1129, 4294901760
    %1131 = vmatpush1.msra.mxu0 %v1130
    %1132 = vmatprep.subr.mxu0 0.0
    %v1133 = vand.u32 %v69, 4294901760
    %v1134 = vsub.f32 %v69, %v1133
    %v1135 = vand.u32 %v1134, 4294901760
    %v1136 = vsub.f32 %v1134, %v1135
    %v1137 = vand.u32 %v1136, 4294901760
    %1138 = vmatpush1.msra.mxu0 %v1137
    %1139 = vmatprep.subr.mxu0 0.0
    %v1140 = vand.u32 %v70, 4294901760
    %v1141 = vsub.f32 %v70, %v1140
    %v1142 = vand.u32 %v1141, 4294901760
    %v1143 = vsub.f32 %v1141, %v1142
    %v1144 = vand.u32 %v1143, 4294901760
    %1145 = vmatpush1.msra.mxu0 %v1144
    %1146 = vmatprep.subr.mxu0 0.0
    %v1147 = vand.u32 %v71, 4294901760
    %v1148 = vsub.f32 %v71, %v1147
    %v1149 = vand.u32 %v1148, 4294901760
    %v1150 = vsub.f32 %v1148, %v1149
    %v1151 = vand.u32 %v1150, 4294901760
    %1152 = vmatpush1.msra.mxu0 %v1151
    %1153 = vmatprep.subr.mxu0 0.0
    %v1154 = vand.u32 %v72, 4294901760
    %v1155 = vsub.f32 %v72, %v1154
    %v1156 = vand.u32 %v1155, 4294901760
    %v1157 = vsub.f32 %v1155, %v1156
    %v1158 = vand.u32 %v1157, 4294901760
    %1159 = vmatpush1.msra.mxu0 %v1158
    %1160 = vmatprep.subr.mxu0 0.0
    %v1161 = vand.u32 %v73, 4294901760
    %v1162 = vsub.f32 %v73, %v1161
    %v1163 = vand.u32 %v1162, 4294901760
    %v1164 = vsub.f32 %v1162, %v1163
    %v1165 = vand.u32 %v1164, 4294901760
    %1166 = vmatpush1.msra.mxu0 %v1165
    %1167 = vmatprep.subr.mxu0 0.0
    %v1168 = vand.u32 %v74, 4294901760
    %v1169 = vsub.f32 %v74, %v1168
    %v1170 = vand.u32 %v1169, 4294901760
    %v1171 = vsub.f32 %v1169, %v1170
    %v1172 = vand.u32 %v1171, 4294901760
    %1173 = vmatpush1.msra.mxu0 %v1172
    %1174 = vmatprep.subr.mxu0 0.0
    %v1175 = vand.u32 %v75, 4294901760
    %v1176 = vsub.f32 %v75, %v1175
    %v1177 = vand.u32 %v1176, 4294901760
    %v1178 = vsub.f32 %v1176, %v1177
    %v1179 = vand.u32 %v1178, 4294901760
    %1180 = vmatpush1.msra.mxu0 %v1179
    %1181 = vmatprep.subr.mxu0 0.0
    %v1182 = vand.u32 %v76, 4294901760
    %v1183 = vsub.f32 %v76, %v1182
    %v1184 = vand.u32 %v1183, 4294901760
    %v1185 = vsub.f32 %v1183, %v1184
    %v1186 = vand.u32 %v1185, 4294901760
    %1187 = vmatpush1.msra.mxu0 %v1186
    %1188 = vmatprep.subr.mxu0 0.0
    %v1189 = vand.u32 %v77, 4294901760
    %v1190 = vsub.f32 %v77, %v1189
    %v1191 = vand.u32 %v1190, 4294901760
    %v1192 = vsub.f32 %v1190, %v1191
    %v1193 = vand.u32 %v1192, 4294901760
    %1194 = vmatpush1.msra.mxu0 %v1193
    %1195 = vmatprep.subr.mxu0 0.0
    %1196 = vmatpush1.msra.mxu0 0.0
    %1197 = vmatprep.subr.mxu0 0.0
    %1198 = vmatpush1.msra.mxu0 0.0
    %1199 = vmatprep.subr.mxu0 0.0
    %1200 = vmatpush1.msra.mxu0 0.0
    %1201 = vmatprep.subr.mxu0 0.0
    %1202 = vmatpush1.msra.mxu0 0.0
    %1203 = vmatprep.subr.mxu0 0.0
    %1204 = vmatpush1.msra.mxu0 0.0
    %1205 = vmatprep.subr.mxu0 0.0
    %1206 = vmatpush1.msra.mxu0 0.0
    %1207 = vmatprep.subr.mxu0 0.0
    %1208 = vmatpush1.msra.mxu0 0.0
    %1209 = vmatprep.subr.mxu0 0.0
    %1210 = vmatpush1.msra.mxu0 0.0
    %1211 = vmatprep.subr.mxu0 0.0
    %1212 = vmatpush1.msra.mxu0 0.0
    %1213 = vmatprep.subr.mxu0 0.0
    %1214 = vmatpush1.msra.mxu0 0.0
    %1215 = vmatprep.subr.mxu0 0.0
    %1216 = vmatpush1.msra.mxu0 0.0
    %1217 = vmatprep.subr.mxu0 0.0
    %1218 = vmatpush1.msra.mxu0 0.0
    %1219 = vmatprep.subr.mxu0 0.0
    %1220 = vmatpush1.msra.mxu0 0.0
    %1221 = vmatprep.subr.mxu0 0.0
    %1222 = vmatpush1.msra.mxu0 0.0
    %v1223 = vand.u32 %v107, 4294901760
    %1224 = vmatprep.mubr.f32.mxu0 %v1223
    %v1225 = vand.u32 %v100, 4294901760
    %1226 = vmatmul.mubr.f32.gmra.mrb[0].mxu0 %v1225
    %v1227 = vpop.f32.mrb[0].mxu0
    %v1228 = vadd.f32 %v1066, %v1227
    %v1229 = vpop.f32.mrb[0].mxu0
    %1230 = vdwg.mxu0
    %1231 = vmatprep.subr.mxu0 0.0
    %v1232 = vand.u32 %v60, 4294901760
    %v1233 = vsub.f32 %v60, %v1232
    %1234 = vmatpush1.msra.mxu0 %v1233
    %1235 = vmatprep.subr.mxu0 0.0
    %v1236 = vand.u32 %v61, 4294901760
    %v1237 = vsub.f32 %v61, %v1236
    %1238 = vmatpush1.msra.mxu0 %v1237
    %1239 = vmatprep.subr.mxu0 0.0
    %v1240 = vand.u32 %v62, 4294901760
    %v1241 = vsub.f32 %v62, %v1240
    %1242 = vmatpush1.msra.mxu0 %v1241
    %1243 = vmatprep.subr.mxu0 0.0
    %v1244 = vand.u32 %v63, 4294901760
    %v1245 = vsub.f32 %v63, %v1244
    %1246 = vmatpush1.msra.mxu0 %v1245
    %1247 = vmatprep.subr.mxu0 0.0
    %v1248 = vand.u32 %v64, 4294901760
    %v1249 = vsub.f32 %v64, %v1248
    %1250 = vmatpush1.msra.mxu0 %v1249
    %1251 = vmatprep.subr.mxu0 0.0
    %v1252 = vand.u32 %v65, 4294901760
    %v1253 = vsub.f32 %v65, %v1252
    %1254 = vmatpush1.msra.mxu0 %v1253
    %1255 = vmatprep.subr.mxu0 0.0
    %v1256 = vand.u32 %v66, 4294901760
    %v1257 = vsub.f32 %v66, %v1256
    %1258 = vmatpush1.msra.mxu0 %v1257
    %1259 = vmatprep.subr.mxu0 0.0
    %v1260 = vand.u32 %v67, 4294901760
    %v1261 = vsub.f32 %v67, %v1260
    %1262 = vmatpush1.msra.mxu0 %v1261
    %1263 = vmatprep.subr.mxu0 0.0
    %v1264 = vand.u32 %v68, 4294901760
    %v1265 = vsub.f32 %v68, %v1264
    %1266 = vmatpush1.msra.mxu0 %v1265
    %1267 = vmatprep.subr.mxu0 0.0
    %v1268 = vand.u32 %v69, 4294901760
    %v1269 = vsub.f32 %v69, %v1268
    %1270 = vmatpush1.msra.mxu0 %v1269
    %1271 = vmatprep.subr.mxu0 0.0
    %v1272 = vand.u32 %v70, 4294901760
    %v1273 = vsub.f32 %v70, %v1272
    %1274 = vmatpush1.msra.mxu0 %v1273
    %1275 = vmatprep.subr.mxu0 0.0
    %v1276 = vand.u32 %v71, 4294901760
    %v1277 = vsub.f32 %v71, %v1276
    %1278 = vmatpush1.msra.mxu0 %v1277
    %1279 = vmatprep.subr.mxu0 0.0
    %v1280 = vand.u32 %v72, 4294901760
    %v1281 = vsub.f32 %v72, %v1280
    %1282 = vmatpush1.msra.mxu0 %v1281
    %1283 = vmatprep.subr.mxu0 0.0
    %v1284 = vand.u32 %v73, 4294901760
    %v1285 = vsub.f32 %v73, %v1284
    %1286 = vmatpush1.msra.mxu0 %v1285
    %1287 = vmatprep.subr.mxu0 0.0
    %v1288 = vand.u32 %v74, 4294901760
    %v1289 = vsub.f32 %v74, %v1288
    %1290 = vmatpush1.msra.mxu0 %v1289
    %1291 = vmatprep.subr.mxu0 0.0
    %v1292 = vand.u32 %v75, 4294901760
    %v1293 = vsub.f32 %v75, %v1292
    %1294 = vmatpush1.msra.mxu0 %v1293
    %1295 = vmatprep.subr.mxu0 0.0
    %v1296 = vand.u32 %v76, 4294901760
    %v1297 = vsub.f32 %v76, %v1296
    %1298 = vmatpush1.msra.mxu0 %v1297
    %1299 = vmatprep.subr.mxu0 0.0
    %v1300 = vand.u32 %v77, 4294901760
    %v1301 = vsub.f32 %v77, %v1300
    %1302 = vmatpush1.msra.mxu0 %v1301
    %1303 = vmatprep.subr.mxu0 0.0
    %1304 = vmatpush1.msra.mxu0 0.0
    %1305 = vmatprep.subr.mxu0 0.0
    %1306 = vmatpush1.msra.mxu0 0.0
    %1307 = vmatprep.subr.mxu0 0.0
    %1308 = vmatpush1.msra.mxu0 0.0
    %1309 = vmatprep.subr.mxu0 0.0
    %1310 = vmatpush1.msra.mxu0 0.0
    %1311 = vmatprep.subr.mxu0 0.0
    %1312 = vmatpush1.msra.mxu0 0.0
    %1313 = vmatprep.subr.mxu0 0.0
    %1314 = vmatpush1.msra.mxu0 0.0
    %1315 = vmatprep.subr.mxu0 0.0
    %1316 = vmatpush1.msra.mxu0 0.0
    %1317 = vmatprep.subr.mxu0 0.0
    %1318 = vmatpush1.msra.mxu0 0.0
    %1319 = vmatprep.subr.mxu0 0.0
    %1320 = vmatpush1.msra.mxu0 0.0
    %1321 = vmatprep.subr.mxu0 0.0
    %1322 = vmatpush1.msra.mxu0 0.0
    %1323 = vmatprep.subr.mxu0 0.0
    %1324 = vmatpush1.msra.mxu0 0.0
    %1325 = vmatprep.subr.mxu0 0.0
    %1326 = vmatpush1.msra.mxu0 0.0
    %1327 = vmatprep.subr.mxu0 0.0
    %1328 = vmatpush1.msra.mxu0 0.0
    %1329 = vmatprep.subr.mxu0 0.0
    %1330 = vmatpush1.msra.mxu0 0.0
    %v1331 = vand.u32 %v107, 4294901760
    %v1332 = vsub.f32 %v107, %v1331
    %1333 = vmatprep.mubr.f32.mxu0 %v1332
    %v1334 = vand.u32 %v100, 4294901760
    %v1335 = vsub.f32 %v100, %v1334
    %1336 = vmatmul.mubr.f32.gmra.mrb[0].mxu0 %v1335
    %v1337 = vpop.f32.mrb[0].mxu0
    %v1338 = vadd.f32 %v1228, %v1337
    %v1339 = vpop.f32.mrb[0].mxu0
    %1340 = vdwg.mxu0
    %1341 = vmatprep.subr.mxu0 0.0
    %v1342 = vand.u32 %v60, 4294901760
    %1343 = vmatpush1.msra.mxu0 %v1342
    %1344 = vmatprep.subr.mxu0 0.0
    %v1345 = vand.u32 %v61, 4294901760
    %1346 = vmatpush1.msra.mxu0 %v1345
    %1347 = vmatprep.subr.mxu0 0.0
    %v1348 = vand.u32 %v62, 4294901760
    %1349 = vmatpush1.msra.mxu0 %v1348
    %1350 = vmatprep.subr.mxu0 0.0
    %v1351 = vand.u32 %v63, 4294901760
    %1352 = vmatpush1.msra.mxu0 %v1351
    %1353 = vmatprep.subr.mxu0 0.0
    %v1354 = vand.u32 %v64, 4294901760
    %1355 = vmatpush1.msra.mxu0 %v1354
    %1356 = vmatprep.subr.mxu0 0.0
    %v1357 = vand.u32 %v65, 4294901760
    %1358 = vmatpush1.msra.mxu0 %v1357
    %1359 = vmatprep.subr.mxu0 0.0
    %v1360 = vand.u32 %v66, 4294901760
    %1361 = vmatpush1.msra.mxu0 %v1360
    %1362 = vmatprep.subr.mxu0 0.0
    %v1363 = vand.u32 %v67, 4294901760
    %1364 = vmatpush1.msra.mxu0 %v1363
    %1365 = vmatprep.subr.mxu0 0.0
    %v1366 = vand.u32 %v68, 4294901760
    %1367 = vmatpush1.msra.mxu0 %v1366
    %1368 = vmatprep.subr.mxu0 0.0
    %v1369 = vand.u32 %v69, 4294901760
    %1370 = vmatpush1.msra.mxu0 %v1369
    %1371 = vmatprep.subr.mxu0 0.0
    %v1372 = vand.u32 %v70, 4294901760
    %1373 = vmatpush1.msra.mxu0 %v1372
    %1374 = vmatprep.subr.mxu0 0.0
    %v1375 = vand.u32 %v71, 4294901760
    %1376 = vmatpush1.msra.mxu0 %v1375
    %1377 = vmatprep.subr.mxu0 0.0
    %v1378 = vand.u32 %v72, 4294901760
    %1379 = vmatpush1.msra.mxu0 %v1378
    %1380 = vmatprep.subr.mxu0 0.0
    %v1381 = vand.u32 %v73, 4294901760
    %1382 = vmatpush1.msra.mxu0 %v1381
    %1383 = vmatprep.subr.mxu0 0.0
    %v1384 = vand.u32 %v74, 4294901760
    %1385 = vmatpush1.msra.mxu0 %v1384
    %1386 = vmatprep.subr.mxu0 0.0
    %v1387 = vand.u32 %v75, 4294901760
    %1388 = vmatpush1.msra.mxu0 %v1387
    %1389 = vmatprep.subr.mxu0 0.0
    %v1390 = vand.u32 %v76, 4294901760
    %1391 = vmatpush1.msra.mxu0 %v1390
    %1392 = vmatprep.subr.mxu0 0.0
    %v1393 = vand.u32 %v77, 4294901760
    %1394 = vmatpush1.msra.mxu0 %v1393
    %1395 = vmatprep.subr.mxu0 0.0
    %1396 = vmatpush1.msra.mxu0 0.0
    %1397 = vmatprep.subr.mxu0 0.0
    %1398 = vmatpush1.msra.mxu0 0.0
    %1399 = vmatprep.subr.mxu0 0.0
    %1400 = vmatpush1.msra.mxu0 0.0
    %1401 = vmatprep.subr.mxu0 0.0
    %1402 = vmatpush1.msra.mxu0 0.0
    %1403 = vmatprep.subr.mxu0 0.0
    %1404 = vmatpush1.msra.mxu0 0.0
    %1405 = vmatprep.subr.mxu0 0.0
    %1406 = vmatpush1.msra.mxu0 0.0
    %1407 = vmatprep.subr.mxu0 0.0
    %1408 = vmatpush1.msra.mxu0 0.0
    %1409 = vmatprep.subr.mxu0 0.0
    %1410 = vmatpush1.msra.mxu0 0.0
    %1411 = vmatprep.subr.mxu0 0.0
    %1412 = vmatpush1.msra.mxu0 0.0
    %1413 = vmatprep.subr.mxu0 0.0
    %1414 = vmatpush1.msra.mxu0 0.0
    %1415 = vmatprep.subr.mxu0 0.0
    %1416 = vmatpush1.msra.mxu0 0.0
    %1417 = vmatprep.subr.mxu0 0.0
    %1418 = vmatpush1.msra.mxu0 0.0
    %1419 = vmatprep.subr.mxu0 0.0
    %1420 = vmatpush1.msra.mxu0 0.0
    %1421 = vmatprep.subr.mxu0 0.0
    %1422 = vmatpush1.msra.mxu0 0.0
    %v1423 = vand.u32 %v107, 4294901760
    %v1424 = vsub.f32 %v107, %v1423
    %v1425 = vand.u32 %v1424, 4294901760
    %1426 = vmatprep.mubr.f32.mxu0 %v1425
    %v1427 = vand.u32 %v100, 4294901760
    %v1428 = vsub.f32 %v100, %v1427
    %v1429 = vand.u32 %v1428, 4294901760
    %1430 = vmatmul.mubr.f32.gmra.mrb[0].mxu0 %v1429
    %v1431 = vpop.f32.mrb[0].mxu0
    %v1432 = vadd.f32 %v1338, %v1431
    %v1433 = vpop.f32.mrb[0].mxu0
    %1434 = vdwg.mxu0
    %1435 = vmatprep.subr.mxu0 0.0
    %v1436 = vand.u32 %v60, 4294901760
    %v1437 = vsub.f32 %v60, %v1436
    %v1438 = vand.u32 %v1437, 4294901760
    %1439 = vmatpush1.msra.mxu0 %v1438
    %1440 = vmatprep.subr.mxu0 0.0
    %v1441 = vand.u32 %v61, 4294901760
    %v1442 = vsub.f32 %v61, %v1441
    %v1443 = vand.u32 %v1442, 4294901760
    %1444 = vmatpush1.msra.mxu0 %v1443
    %1445 = vmatprep.subr.mxu0 0.0
    %v1446 = vand.u32 %v62, 4294901760
    %v1447 = vsub.f32 %v62, %v1446
    %v1448 = vand.u32 %v1447, 4294901760
    %1449 = vmatpush1.msra.mxu0 %v1448
    %1450 = vmatprep.subr.mxu0 0.0
    %v1451 = vand.u32 %v63, 4294901760
    %v1452 = vsub.f32 %v63, %v1451
    %v1453 = vand.u32 %v1452, 4294901760
    %1454 = vmatpush1.msra.mxu0 %v1453
    %1455 = vmatprep.subr.mxu0 0.0
    %v1456 = vand.u32 %v64, 4294901760
    %v1457 = vsub.f32 %v64, %v1456
    %v1458 = vand.u32 %v1457, 4294901760
    %1459 = vmatpush1.msra.mxu0 %v1458
    %1460 = vmatprep.subr.mxu0 0.0
    %v1461 = vand.u32 %v65, 4294901760
    %v1462 = vsub.f32 %v65, %v1461
    %v1463 = vand.u32 %v1462, 4294901760
    %1464 = vmatpush1.msra.mxu0 %v1463
    %1465 = vmatprep.subr.mxu0 0.0
    %v1466 = vand.u32 %v66, 4294901760
    %v1467 = vsub.f32 %v66, %v1466
    %v1468 = vand.u32 %v1467, 4294901760
    %1469 = vmatpush1.msra.mxu0 %v1468
    %1470 = vmatprep.subr.mxu0 0.0
    %v1471 = vand.u32 %v67, 4294901760
    %v1472 = vsub.f32 %v67, %v1471
    %v1473 = vand.u32 %v1472, 4294901760
    %1474 = vmatpush1.msra.mxu0 %v1473
    %1475 = vmatprep.subr.mxu0 0.0
    %v1476 = vand.u32 %v68, 4294901760
    %v1477 = vsub.f32 %v68, %v1476
    %v1478 = vand.u32 %v1477, 4294901760
    %1479 = vmatpush1.msra.mxu0 %v1478
    %1480 = vmatprep.subr.mxu0 0.0
    %v1481 = vand.u32 %v69, 4294901760
    %v1482 = vsub.f32 %v69, %v1481
    %v1483 = vand.u32 %v1482, 4294901760
    %1484 = vmatpush1.msra.mxu0 %v1483
    %1485 = vmatprep.subr.mxu0 0.0
    %v1486 = vand.u32 %v70, 4294901760
    %v1487 = vsub.f32 %v70, %v1486
    %v1488 = vand.u32 %v1487, 4294901760
    %1489 = vmatpush1.msra.mxu0 %v1488
    %1490 = vmatprep.subr.mxu0 0.0
    %v1491 = vand.u32 %v71, 4294901760
    %v1492 = vsub.f32 %v71, %v1491
    %v1493 = vand.u32 %v1492, 4294901760
    %1494 = vmatpush1.msra.mxu0 %v1493
    %1495 = vmatprep.subr.mxu0 0.0
    %v1496 = vand.u32 %v72, 4294901760
    %v1497 = vsub.f32 %v72, %v1496
    %v1498 = vand.u32 %v1497, 4294901760
    %1499 = vmatpush1.msra.mxu0 %v1498
    %1500 = vmatprep.subr.mxu0 0.0
    %v1501 = vand.u32 %v73, 4294901760
    %v1502 = vsub.f32 %v73, %v1501
    %v1503 = vand.u32 %v1502, 4294901760
    %1504 = vmatpush1.msra.mxu0 %v1503
    %1505 = vmatprep.subr.mxu0 0.0
    %v1506 = vand.u32 %v74, 4294901760
    %v1507 = vsub.f32 %v74, %v1506
    %v1508 = vand.u32 %v1507, 4294901760
    %1509 = vmatpush1.msra.mxu0 %v1508
    %1510 = vmatprep.subr.mxu0 0.0
    %v1511 = vand.u32 %v75, 4294901760
    %v1512 = vsub.f32 %v75, %v1511
    %v1513 = vand.u32 %v1512, 4294901760
    %1514 = vmatpush1.msra.mxu0 %v1513
    %1515 = vmatprep.subr.mxu0 0.0
    %v1516 = vand.u32 %v76, 4294901760
    %v1517 = vsub.f32 %v76, %v1516
    %v1518 = vand.u32 %v1517, 4294901760
    %1519 = vmatpush1.msra.mxu0 %v1518
    %1520 = vmatprep.subr.mxu0 0.0
    %v1521 = vand.u32 %v77, 4294901760
    %v1522 = vsub.f32 %v77, %v1521
    %v1523 = vand.u32 %v1522, 4294901760
    %1524 = vmatpush1.msra.mxu0 %v1523
    %1525 = vmatprep.subr.mxu0 0.0
    %1526 = vmatpush1.msra.mxu0 0.0
    %1527 = vmatprep.subr.mxu0 0.0
    %1528 = vmatpush1.msra.mxu0 0.0
    %1529 = vmatprep.subr.mxu0 0.0
    %1530 = vmatpush1.msra.mxu0 0.0
    %1531 = vmatprep.subr.mxu0 0.0
    %1532 = vmatpush1.msra.mxu0 0.0
    %1533 = vmatprep.subr.mxu0 0.0
    %1534 = vmatpush1.msra.mxu0 0.0
    %1535 = vmatprep.subr.mxu0 0.0
    %1536 = vmatpush1.msra.mxu0 0.0
    %1537 = vmatprep.subr.mxu0 0.0
    %1538 = vmatpush1.msra.mxu0 0.0
    %1539 = vmatprep.subr.mxu0 0.0
    %1540 = vmatpush1.msra.mxu0 0.0
    %1541 = vmatprep.subr.mxu0 0.0
    %1542 = vmatpush1.msra.mxu0 0.0
    %1543 = vmatprep.subr.mxu0 0.0
    %1544 = vmatpush1.msra.mxu0 0.0
    %1545 = vmatprep.subr.mxu0 0.0
    %1546 = vmatpush1.msra.mxu0 0.0
    %1547 = vmatprep.subr.mxu0 0.0
    %1548 = vmatpush1.msra.mxu0 0.0
    %1549 = vmatprep.subr.mxu0 0.0
    %1550 = vmatpush1.msra.mxu0 0.0
    %1551 = vmatprep.subr.mxu0 0.0
    %1552 = vmatpush1.msra.mxu0 0.0
    %v1553 = vand.u32 %v107, 4294901760
    %1554 = vmatprep.mubr.f32.mxu0 %v1553
    %v1555 = vand.u32 %v100, 4294901760
    %1556 = vmatmul.mubr.f32.gmra.mrb[0].mxu0 %v1555
    %v1557 = vpop.f32.mrb[0].mxu0
    %v1558 = vadd.f32 %v1432, %v1557
    %v1559 = vpop.f32.mrb[0].mxu0
    %1560 = vdwg.mxu0
    %1561 = vmatprep.subr.mxu0 0.0
    %v1562 = vand.u32 %v60, 4294901760
    %1563 = vmatpush1.msra.mxu0 %v1562
    %1564 = vmatprep.subr.mxu0 0.0
    %v1565 = vand.u32 %v61, 4294901760
    %1566 = vmatpush1.msra.mxu0 %v1565
    %1567 = vmatprep.subr.mxu0 0.0
    %v1568 = vand.u32 %v62, 4294901760
    %1569 = vmatpush1.msra.mxu0 %v1568
    %1570 = vmatprep.subr.mxu0 0.0
    %v1571 = vand.u32 %v63, 4294901760
    %1572 = vmatpush1.msra.mxu0 %v1571
    %1573 = vmatprep.subr.mxu0 0.0
    %v1574 = vand.u32 %v64, 4294901760
    %1575 = vmatpush1.msra.mxu0 %v1574
    %1576 = vmatprep.subr.mxu0 0.0
    %v1577 = vand.u32 %v65, 4294901760
    %1578 = vmatpush1.msra.mxu0 %v1577
    %1579 = vmatprep.subr.mxu0 0.0
    %v1580 = vand.u32 %v66, 4294901760
    %1581 = vmatpush1.msra.mxu0 %v1580
    %1582 = vmatprep.subr.mxu0 0.0
    %v1583 = vand.u32 %v67, 4294901760
    %1584 = vmatpush1.msra.mxu0 %v1583
    %1585 = vmatprep.subr.mxu0 0.0
    %v1586 = vand.u32 %v68, 4294901760
    %1587 = vmatpush1.msra.mxu0 %v1586
    %1588 = vmatprep.subr.mxu0 0.0
    %v1589 = vand.u32 %v69, 4294901760
    %1590 = vmatpush1.msra.mxu0 %v1589
    %1591 = vmatprep.subr.mxu0 0.0
    %v1592 = vand.u32 %v70, 4294901760
    %1593 = vmatpush1.msra.mxu0 %v1592
    %1594 = vmatprep.subr.mxu0 0.0
    %v1595 = vand.u32 %v71, 4294901760
    %1596 = vmatpush1.msra.mxu0 %v1595
    %1597 = vmatprep.subr.mxu0 0.0
    %v1598 = vand.u32 %v72, 4294901760
    %1599 = vmatpush1.msra.mxu0 %v1598
    %1600 = vmatprep.subr.mxu0 0.0
    %v1601 = vand.u32 %v73, 4294901760
    %1602 = vmatpush1.msra.mxu0 %v1601
    %1603 = vmatprep.subr.mxu0 0.0
    %v1604 = vand.u32 %v74, 4294901760
    %1605 = vmatpush1.msra.mxu0 %v1604
    %1606 = vmatprep.subr.mxu0 0.0
    %v1607 = vand.u32 %v75, 4294901760
    %1608 = vmatpush1.msra.mxu0 %v1607
    %1609 = vmatprep.subr.mxu0 0.0
    %v1610 = vand.u32 %v76, 4294901760
    %1611 = vmatpush1.msra.mxu0 %v1610
    %1612 = vmatprep.subr.mxu0 0.0
    %v1613 = vand.u32 %v77, 4294901760
    %1614 = vmatpush1.msra.mxu0 %v1613
    %1615 = vmatprep.subr.mxu0 0.0
    %1616 = vmatpush1.msra.mxu0 0.0
    %1617 = vmatprep.subr.mxu0 0.0
    %1618 = vmatpush1.msra.mxu0 0.0
    %1619 = vmatprep.subr.mxu0 0.0
    %1620 = vmatpush1.msra.mxu0 0.0
    %1621 = vmatprep.subr.mxu0 0.0
    %1622 = vmatpush1.msra.mxu0 0.0
    %1623 = vmatprep.subr.mxu0 0.0
    %1624 = vmatpush1.msra.mxu0 0.0
    %1625 = vmatprep.subr.mxu0 0.0
    %1626 = vmatpush1.msra.mxu0 0.0
    %1627 = vmatprep.subr.mxu0 0.0
    %1628 = vmatpush1.msra.mxu0 0.0
    %1629 = vmatprep.subr.mxu0 0.0
    %1630 = vmatpush1.msra.mxu0 0.0
    %1631 = vmatprep.subr.mxu0 0.0
    %1632 = vmatpush1.msra.mxu0 0.0
    %1633 = vmatprep.subr.mxu0 0.0
    %1634 = vmatpush1.msra.mxu0 0.0
    %1635 = vmatprep.subr.mxu0 0.0
    %1636 = vmatpush1.msra.mxu0 0.0
    %1637 = vmatprep.subr.mxu0 0.0
    %1638 = vmatpush1.msra.mxu0 0.0
    %1639 = vmatprep.subr.mxu0 0.0
    %1640 = vmatpush1.msra.mxu0 0.0
    %1641 = vmatprep.subr.mxu0 0.0
    %1642 = vmatpush1.msra.mxu0 0.0
    %v1643 = vand.u32 %v107, 4294901760
    %1644 = vmatprep.mubr.f32.mxu0 %v1643
    %v1645 = vand.u32 %v100, 4294901760
    %1646 = vmatmul.mubr.f32.gmra.mrb[0].mxu0 %v1645
    %v1647 = vpop.f32.mrb[0].mxu0
    %v1648 = vadd.f32 %v1558, %v1647
    %v1649 = vpop.f32.mrb[0].mxu0
    %1650 = vdwg.mxu0
    %v1651 = vmax.f32 %v1648, 0.0
    %v1652 = vld [vmem:[%s3] sm:$0xff]
    %v1653 = vld [vmem:[%s3 + $0x8] sm:$0xff]
    %v1654 = vld [vmem:[%s3 + $0x10] sm:$0xff]
    %v1655 = vld [vmem:[%s3 + $0x18] sm:$0xff]
    %v1656 = vld [vmem:[%s3 + $0x20] sm:$0xff]
    %v1657 = vld [vmem:[%s3 + $0x28] sm:$0xff]
    %v1658 = vld [vmem:[%s3 + $0x30] sm:$0xff]
    %v1659 = vld [vmem:[%s3 + $0x38] sm:$0xff]
    %v1660 = vld [vmem:[%s3 + $0x40] sm:$0xff]
    %v1661 = vld [vmem:[%s3 + $0x48] sm:$0xff]
    %v1662 = vld [vmem:[%s3 + $0x50] sm:$0xff]
    %v1663 = vld [vmem:[%s3 + $0x58] sm:$0xff]
    %v1664 = vld [vmem:[%s3 + $0x60] sm:$0xff]
    %v1665 = vld [vmem:[%s3 + $0x68] sm:$0xff]
    %v1666 = vld [vmem:[%s3 + $0x70] sm:$0xff]
    %v1667 = vld [vmem:[%s4] sm:$0x1]
    %v1669 = vlaneseq
    %v1670 = vshrl.u32 %v1669, 7
    %v1671 = vsub.s32 0, %v1670
    %v1672 = vrot.slane %v1667, %v1671
    %vm1674 = vcmask 982016
    %v1676 = vsel %vm1674, %v1651, 0
    %1678 = vmatprep.subr.mxu0 0.0
    %v1679 = vand.u32 %v1652, 4294901760
    %1680 = vmatpush1.msra.mxu0 %v1679
    %1681 = vmatprep.subr.mxu0 0.0
    %v1682 = vand.u32 %v1653, 4294901760
    %1683 = vmatpush1.msra.mxu0 %v1682
    %1684 = vmatprep.subr.mxu0 0.0
    %v1685 = vand.u32 %v1654, 4294901760
    %1686 = vmatpush1.msra.mxu0 %v1685
    %1687 = vmatprep.subr.mxu0 0.0
    %v1688 = vand.u32 %v1655, 4294901760
    %1689 = vmatpush1.msra.mxu0 %v1688
    %1690 = vmatprep.subr.mxu0 0.0
    %v1691 = vand.u32 %v1656, 4294901760
    %1692 = vmatpush1.msra.mxu0 %v1691
    %1693 = vmatprep.subr.mxu0 0.0
    %v1694 = vand.u32 %v1657, 4294901760
    %1695 = vmatpush1.msra.mxu0 %v1694
    %1696 = vmatprep.subr.mxu0 0.0
    %v1697 = vand.u32 %v1658, 4294901760
    %1698 = vmatpush1.msra.mxu0 %v1697
    %1699 = vmatprep.subr.mxu0 0.0
    %v1700 = vand.u32 %v1659, 4294901760
    %1701 = vmatpush1.msra.mxu0 %v1700
    %1702 = vmatprep.subr.mxu0 0.0
    %v1703 = vand.u32 %v1660, 4294901760
    %1704 = vmatpush1.msra.mxu0 %v1703
    %1705 = vmatprep.subr.mxu0 0.0
    %v1706 = vand.u32 %v1661, 4294901760
    %1707 = vmatpush1.msra.mxu0 %v1706
    %1708 = vmatprep.subr.mxu0 0.0
    %v1709 = vand.u32 %v1662, 4294901760
    %1710 = vmatpush1.msra.mxu0 %v1709
    %1711 = vmatprep.subr.mxu0 0.0
    %v1712 = vand.u32 %v1663, 4294901760
    %1713 = vmatpush1.msra.mxu0 %v1712
    %1714 = vmatprep.subr.mxu0 0.0
    %v1715 = vand.u32 %v1664, 4294901760
    %1716 = vmatpush1.msra.mxu0 %v1715
    %1717 = vmatprep.subr.mxu0 0.0
    %v1718 = vand.u32 %v1665, 4294901760
    %1719 = vmatpush1.msra.mxu0 %v1718
    %1720 = vmatprep.subr.mxu0 0.0
    %v1721 = vand.u32 %v1666, 4294901760
    %1722 = vmatpush1.msra.mxu0 %v1721
    %1723 = vmatprep.subr.mxu0 0.0
    %1724 = vmatpush1.msra.mxu0 0.0
    %1725 = vmatprep.subr.mxu0 0.0
    %1726 = vmatpush1.msra.mxu0 0.0
    %1727 = vmatprep.subr.mxu0 0.0
    %1728 = vmatpush1.msra.mxu0 0.0
    %1729 = vmatprep.subr.mxu0 0.0
    %1730 = vmatpush1.msra.mxu0 0.0
    %1731 = vmatprep.subr.mxu0 0.0
    %1732 = vmatpush1.msra.mxu0 0.0
    %1733 = vmatprep.subr.mxu0 0.0
    %1734 = vmatpush1.msra.mxu0 0.0
    %1735 = vmatprep.subr.mxu0 0.0
    %1736 = vmatpush1.msra.mxu0 0.0
    %1737 = vmatprep.subr.mxu0 0.0
    %1738 = vmatpush1.msra.mxu0 0.0
    %1739 = vmatprep.subr.mxu0 0.0
    %1740 = vmatpush1.msra.mxu0 0.0
    %1741 = vmatprep.subr.mxu0 0.0
    %1742 = vmatpush1.msra.mxu0 0.0
    %1743 = vmatprep.subr.mxu0 0.0
    %1744 = vmatpush1.msra.mxu0 0.0
    %1745 = vmatprep.subr.mxu0 0.0
    %1746 = vmatpush1.msra.mxu0 0.0
    %1747 = vmatprep.subr.mxu0 0.0
    %1748 = vmatpush1.msra.mxu0 0.0
    %1749 = vmatprep.subr.mxu0 0.0
    %1750 = vmatpush1.msra.mxu0 0.0
    %1751 = vmatprep.subr.mxu0 0.0
    %1752 = vmatpush1.msra.mxu0 0.0
    %1753 = vmatprep.subr.mxu0 0.0
    %1754 = vmatpush1.msra.mxu0 0.0
    %1755 = vmatprep.subr.mxu0 0.0
    %1756 = vmatpush1.msra.mxu0 0.0
    %1757 = vmatprep.mubr.f32.mxu0 0.0
    %v1758 = vand.u32 %v1676, 4294901760
    %v1759 = vsub.f32 %v1676, %v1758
    %v1760 = vand.u32 %v1759, 4294901760
    %v1761 = vsub.f32 %v1759, %v1760
    %v1762 = vand.u32 %v1761, 4294901760
    %1763 = vmatmul.mubr.f32.gmra.mrb[0].mxu0 %v1762
    %v1764 = vpop.f32.mrb[0].mxu0
    %v1765 = vadd.f32 %v1672, %v1764
    %v1766 = vpop.f32.mrb[0].mxu0
    %1767 = vdwg.mxu0
    %1768 = vmatprep.subr.mxu0 0.0
    %v1769 = vand.u32 %v1652, 4294901760
    %v1770 = vsub.f32 %v1652, %v1769
    %v1771 = vand.u32 %v1770, 4294901760
    %v1772 = vsub.f32 %v1770, %v1771
    %v1773 = vand.u32 %v1772, 4294901760
    %1774 = vmatpush1.msra.mxu0 %v1773
    %1775 = vmatprep.subr.mxu0 0.0
    %v1776 = vand.u32 %v1653, 4294901760
    %v1777 = vsub.f32 %v1653, %v1776
    %v1778 = vand.u32 %v1777, 4294901760
    %v1779 = vsub.f32 %v1777, %v1778
    %v1780 = vand.u32 %v1779, 4294901760
    %1781 = vmatpush1.msra.mxu0 %v1780
    %1782 = vmatprep.subr.mxu0 0.0
    %v1783 = vand.u32 %v1654, 4294901760
    %v1784 = vsub.f32 %v1654, %v1783
    %v1785 = vand.u32 %v1784, 4294901760
    %v1786 = vsub.f32 %v1784, %v1785
    %v1787 = vand.u32 %v1786, 4294901760
    %1788 = vmatpush1.msra.mxu0 %v1787
    %1789 = vmatprep.subr.mxu0 0.0
    %v1790 = vand.u32 %v1655, 4294901760
    %v1791 = vsub.f32 %v1655, %v1790
    %v1792 = vand.u32 %v1791, 4294901760
    %v1793 = vsub.f32 %v1791, %v1792
    %v1794 = vand.u32 %v1793, 4294901760
    %1795 = vmatpush1.msra.mxu0 %v1794
    %1796 = vmatprep.subr.mxu0 0.0
    %v1797 = vand.u32 %v1656, 4294901760
    %v1798 = vsub.f32 %v1656, %v1797
    %v1799 = vand.u32 %v1798, 4294901760
    %v1800 = vsub.f32 %v1798, %v1799
    %v1801 = vand.u32 %v1800, 4294901760
    %1802 = vmatpush1.msra.mxu0 %v1801
    %1803 = vmatprep.subr.mxu0 0.0
    %v1804 = vand.u32 %v1657, 4294901760
    %v1805 = vsub.f32 %v1657, %v1804
    %v1806 = vand.u32 %v1805, 4294901760
    %v1807 = vsub.f32 %v1805, %v1806
    %v1808 = vand.u32 %v1807, 4294901760
    %1809 = vmatpush1.msra.mxu0 %v1808
    %1810 = vmatprep.subr.mxu0 0.0
    %v1811 = vand.u32 %v1658, 4294901760
    %v1812 = vsub.f32 %v1658, %v1811
    %v1813 = vand.u32 %v1812, 4294901760
    %v1814 = vsub.f32 %v1812, %v1813
    %v1815 = vand.u32 %v1814, 4294901760
    %1816 = vmatpush1.msra.mxu0 %v1815
    %1817 = vmatprep.subr.mxu0 0.0
    %v1818 = vand.u32 %v1659, 4294901760
    %v1819 = vsub.f32 %v1659, %v1818
    %v1820 = vand.u32 %v1819, 4294901760
    %v1821 = vsub.f32 %v1819, %v1820
    %v1822 = vand.u32 %v1821, 4294901760
    %1823 = vmatpush1.msra.mxu0 %v1822
    %1824 = vmatprep.subr.mxu0 0.0
    %v1825 = vand.u32 %v1660, 4294901760
    %v1826 = vsub.f32 %v1660, %v1825
    %v1827 = vand.u32 %v1826, 4294901760
    %v1828 = vsub.f32 %v1826, %v1827
    %v1829 = vand.u32 %v1828, 4294901760
    %1830 = vmatpush1.msra.mxu0 %v1829
    %1831 = vmatprep.subr.mxu0 0.0
    %v1832 = vand.u32 %v1661, 4294901760
    %v1833 = vsub.f32 %v1661, %v1832
    %v1834 = vand.u32 %v1833, 4294901760
    %v1835 = vsub.f32 %v1833, %v1834
    %v1836 = vand.u32 %v1835, 4294901760
    %1837 = vmatpush1.msra.mxu0 %v1836
    %1838 = vmatprep.subr.mxu0 0.0
    %v1839 = vand.u32 %v1662, 4294901760
    %v1840 = vsub.f32 %v1662, %v1839
    %v1841 = vand.u32 %v1840, 4294901760
    %v1842 = vsub.f32 %v1840, %v1841
    %v1843 = vand.u32 %v1842, 4294901760
    %1844 = vmatpush1.msra.mxu0 %v1843
    %1845 = vmatprep.subr.mxu0 0.0
    %v1846 = vand.u32 %v1663, 4294901760
    %v1847 = vsub.f32 %v1663, %v1846
    %v1848 = vand.u32 %v1847, 4294901760
    %v1849 = vsub.f32 %v1847, %v1848
    %v1850 = vand.u32 %v1849, 4294901760
    %1851 = vmatpush1.msra.mxu0 %v1850
    %1852 = vmatprep.subr.mxu0 0.0
    %v1853 = vand.u32 %v1664, 4294901760
    %v1854 = vsub.f32 %v1664, %v1853
    %v1855 = vand.u32 %v1854, 4294901760
    %v1856 = vsub.f32 %v1854, %v1855
    %v1857 = vand.u32 %v1856, 4294901760
    %1858 = vmatpush1.msra.mxu0 %v1857
    %1859 = vmatprep.subr.mxu0 0.0
    %v1860 = vand.u32 %v1665, 4294901760
    %v1861 = vsub.f32 %v1665, %v1860
    %v1862 = vand.u32 %v1861, 4294901760
    %v1863 = vsub.f32 %v1861, %v1862
    %v1864 = vand.u32 %v1863, 4294901760
    %1865 = vmatpush1.msra.mxu0 %v1864
    %1866 = vmatprep.subr.mxu0 0.0
    %v1867 = vand.u32 %v1666, 4294901760
    %v1868 = vsub.f32 %v1666, %v1867
    %v1869 = vand.u32 %v1868, 4294901760
    %v1870 = vsub.f32 %v1868, %v1869
    %v1871 = vand.u32 %v1870, 4294901760
    %1872 = vmatpush1.msra.mxu0 %v1871
    %1873 = vmatprep.subr.mxu0 0.0
    %1874 = vmatpush1.msra.mxu0 0.0
    %1875 = vmatprep.subr.mxu0 0.0
    %1876 = vmatpush1.msra.mxu0 0.0
    %1877 = vmatprep.subr.mxu0 0.0
    %1878 = vmatpush1.msra.mxu0 0.0
    %1879 = vmatprep.subr.mxu0 0.0
    %1880 = vmatpush1.msra.mxu0 0.0
    %1881 = vmatprep.subr.mxu0 0.0
    %1882 = vmatpush1.msra.mxu0 0.0
    %1883 = vmatprep.subr.mxu0 0.0
    %1884 = vmatpush1.msra.mxu0 0.0
    %1885 = vmatprep.subr.mxu0 0.0
    %1886 = vmatpush1.msra.mxu0 0.0
    %1887 = vmatprep.subr.mxu0 0.0
    %1888 = vmatpush1.msra.mxu0 0.0
    %1889 = vmatprep.subr.mxu0 0.0
    %1890 = vmatpush1.msra.mxu0 0.0
    %1891 = vmatprep.subr.mxu0 0.0
    %1892 = vmatpush1.msra.mxu0 0.0
    %1893 = vmatprep.subr.mxu0 0.0
    %1894 = vmatpush1.msra.mxu0 0.0
    %1895 = vmatprep.subr.mxu0 0.0
    %1896 = vmatpush1.msra.mxu0 0.0
    %1897 = vmatprep.subr.mxu0 0.0
    %1898 = vmatpush1.msra.mxu0 0.0
    %1899 = vmatprep.subr.mxu0 0.0
    %1900 = vmatpush1.msra.mxu0 0.0
    %1901 = vmatprep.subr.mxu0 0.0
    %1902 = vmatpush1.msra.mxu0 0.0
    %1903 = vmatprep.subr.mxu0 0.0
    %1904 = vmatpush1.msra.mxu0 0.0
    %1905 = vmatprep.subr.mxu0 0.0
    %1906 = vmatpush1.msra.mxu0 0.0
    %1907 = vmatprep.mubr.f32.mxu0 0.0
    %v1908 = vand.u32 %v1676, 4294901760
    %1909 = vmatmul.mubr.f32.gmra.mrb[0].mxu0 %v1908
    %v1910 = vpop.f32.mrb[0].mxu0
    %v1911 = vadd.f32 %v1765, %v1910
    %v1912 = vpop.f32.mrb[0].mxu0
    %1913 = vdwg.mxu0
    %1914 = vmatprep.subr.mxu0 0.0
    %v1915 = vand.u32 %v1652, 4294901760
    %v1916 = vsub.f32 %v1652, %v1915
    %1917 = vmatpush1.msra.mxu0 %v1916
    %1918 = vmatprep.subr.mxu0 0.0
    %v1919 = vand.u32 %v1653, 4294901760
    %v1920 = vsub.f32 %v1653, %v1919
    %1921 = vmatpush1.msra.mxu0 %v1920
    %1922 = vmatprep.subr.mxu0 0.0
    %v1923 = vand.u32 %v1654, 4294901760
    %v1924 = vsub.f32 %v1654, %v1923
    %1925 = vmatpush1.msra.mxu0 %v1924
    %1926 = vmatprep.subr.mxu0 0.0
    %v1927 = vand.u32 %v1655, 4294901760
    %v1928 = vsub.f32 %v1655, %v1927
    %1929 = vmatpush1.msra.mxu0 %v1928
    %1930 = vmatprep.subr.mxu0 0.0
    %v1931 = vand.u32 %v1656, 4294901760
    %v1932 = vsub.f32 %v1656, %v1931
    %1933 = vmatpush1.msra.mxu0 %v1932
    %1934 = vmatprep.subr.mxu0 0.0
    %v1935 = vand.u32 %v1657, 4294901760
    %v1936 = vsub.f32 %v1657, %v1935
    %1937 = vmatpush1.msra.mxu0 %v1936
    %1938 = vmatprep.subr.mxu0 0.0
    %v1939 = vand.u32 %v1658, 4294901760
    %v1940 = vsub.f32 %v1658, %v1939
    %1941 = vmatpush1.msra.mxu0 %v1940
    %1942 = vmatprep.subr.mxu0 0.0
    %v1943 = vand.u32 %v1659, 4294901760
    %v1944 = vsub.f32 %v1659, %v1943
    %1945 = vmatpush1.msra.mxu0 %v1944
    %1946 = vmatprep.subr.mxu0 0.0
    %v1947 = vand.u32 %v1660, 4294901760
    %v1948 = vsub.f32 %v1660, %v1947
    %1949 = vmatpush1.msra.mxu0 %v1948
    %1950 = vmatprep.subr.mxu0 0.0
    %v1951 = vand.u32 %v1661, 4294901760
    %v1952 = vsub.f32 %v1661, %v1951
    %1953 = vmatpush1.msra.mxu0 %v1952
    %1954 = vmatprep.subr.mxu0 0.0
    %v1955 = vand.u32 %v1662, 4294901760
    %v1956 = vsub.f32 %v1662, %v1955
    %1957 = vmatpush1.msra.mxu0 %v1956
    %1958 = vmatprep.subr.mxu0 0.0
    %v1959 = vand.u32 %v1663, 4294901760
    %v1960 = vsub.f32 %v1663, %v1959
    %1961 = vmatpush1.msra.mxu0 %v1960
    %1962 = vmatprep.subr.mxu0 0.0
    %v1963 = vand.u32 %v1664, 4294901760
    %v1964 = vsub.f32 %v1664, %v1963
    %1965 = vmatpush1.msra.mxu0 %v1964
    %1966 = vmatprep.subr.mxu0 0.0
    %v1967 = vand.u32 %v1665, 4294901760
    %v1968 = vsub.f32 %v1665, %v1967
    %1969 = vmatpush1.msra.mxu0 %v1968
    %1970 = vmatprep.subr.mxu0 0.0
    %v1971 = vand.u32 %v1666, 4294901760
    %v1972 = vsub.f32 %v1666, %v1971
    %1973 = vmatpush1.msra.mxu0 %v1972
    %1974 = vmatprep.subr.mxu0 0.0
    %1975 = vmatpush1.msra.mxu0 0.0
    %1976 = vmatprep.subr.mxu0 0.0
    %1977 = vmatpush1.msra.mxu0 0.0
    %1978 = vmatprep.subr.mxu0 0.0
    %1979 = vmatpush1.msra.mxu0 0.0
    %1980 = vmatprep.subr.mxu0 0.0
    %1981 = vmatpush1.msra.mxu0 0.0
    %1982 = vmatprep.subr.mxu0 0.0
    %1983 = vmatpush1.msra.mxu0 0.0
    %1984 = vmatprep.subr.mxu0 0.0
    %1985 = vmatpush1.msra.mxu0 0.0
    %1986 = vmatprep.subr.mxu0 0.0
    %1987 = vmatpush1.msra.mxu0 0.0
    %1988 = vmatprep.subr.mxu0 0.0
    %1989 = vmatpush1.msra.mxu0 0.0
    %1990 = vmatprep.subr.mxu0 0.0
    %1991 = vmatpush1.msra.mxu0 0.0
    %1992 = vmatprep.subr.mxu0 0.0
    %1993 = vmatpush1.msra.mxu0 0.0
    %1994 = vmatprep.subr.mxu0 0.0
    %1995 = vmatpush1.msra.mxu0 0.0
    %1996 = vmatprep.subr.mxu0 0.0
    %1997 = vmatpush1.msra.mxu0 0.0
    %1998 = vmatprep.subr.mxu0 0.0
    %1999 = vmatpush1.msra.mxu0 0.0
    %2000 = vmatprep.subr.mxu0 0.0
    %2001 = vmatpush1.msra.mxu0 0.0
    %2002 = vmatprep.subr.mxu0 0.0
    %2003 = vmatpush1.msra.mxu0 0.0
    %2004 = vmatprep.subr.mxu0 0.0
    %2005 = vmatpush1.msra.mxu0 0.0
    %2006 = vmatprep.subr.mxu0 0.0
    %2007 = vmatpush1.msra.mxu0 0.0
    %2008 = vmatprep.mubr.f32.mxu0 0.0
    %v2009 = vand.u32 %v1676, 4294901760
    %v2010 = vsub.f32 %v1676, %v2009
    %2011 = vmatmul.mubr.f32.gmra.mrb[0].mxu0 %v2010
    %v2012 = vpop.f32.mrb[0].mxu0
    %v2013 = vadd.f32 %v1911, %v2012
    %v2014 = vpop.f32.mrb[0].mxu0
    %2015 = vdwg.mxu0
    %2016 = vmatprep.subr.mxu0 0.0
    %v2017 = vand.u32 %v1652, 4294901760
    %2018 = vmatpush1.msra.mxu0 %v2017
    %2019 = vmatprep.subr.mxu0 0.0
    %v2020 = vand.u32 %v1653, 4294901760
    %2021 = vmatpush1.msra.mxu0 %v2020
    %2022 = vmatprep.subr.mxu0 0.0
    %v2023 = vand.u32 %v1654, 4294901760
    %2024 = vmatpush1.msra.mxu0 %v2023
    %2025 = vmatprep.subr.mxu0 0.0
    %v2026 = vand.u32 %v1655, 4294901760
    %2027 = vmatpush1.msra.mxu0 %v2026
    %2028 = vmatprep.subr.mxu0 0.0
    %v2029 = vand.u32 %v1656, 4294901760
    %2030 = vmatpush1.msra.mxu0 %v2029
    %2031 = vmatprep.subr.mxu0 0.0
    %v2032 = vand.u32 %v1657, 4294901760
    %2033 = vmatpush1.msra.mxu0 %v2032
    %2034 = vmatprep.subr.mxu0 0.0
    %v2035 = vand.u32 %v1658, 4294901760
    %2036 = vmatpush1.msra.mxu0 %v2035
    %2037 = vmatprep.subr.mxu0 0.0
    %v2038 = vand.u32 %v1659, 4294901760
    %2039 = vmatpush1.msra.mxu0 %v2038
    %2040 = vmatprep.subr.mxu0 0.0
    %v2041 = vand.u32 %v1660, 4294901760
    %2042 = vmatpush1.msra.mxu0 %v2041
    %2043 = vmatprep.subr.mxu0 0.0
    %v2044 = vand.u32 %v1661, 4294901760
    %2045 = vmatpush1.msra.mxu0 %v2044
    %2046 = vmatprep.subr.mxu0 0.0
    %v2047 = vand.u32 %v1662, 4294901760
    %2048 = vmatpush1.msra.mxu0 %v2047
    %2049 = vmatprep.subr.mxu0 0.0
    %v2050 = vand.u32 %v1663, 4294901760
    %2051 = vmatpush1.msra.mxu0 %v2050
    %2052 = vmatprep.subr.mxu0 0.0
    %v2053 = vand.u32 %v1664, 4294901760
    %2054 = vmatpush1.msra.mxu0 %v2053
    %2055 = vmatprep.subr.mxu0 0.0
    %v2056 = vand.u32 %v1665, 4294901760
    %2057 = vmatpush1.msra.mxu0 %v2056
    %2058 = vmatprep.subr.mxu0 0.0
    %v2059 = vand.u32 %v1666, 4294901760
    %2060 = vmatpush1.msra.mxu0 %v2059
    %2061 = vmatprep.subr.mxu0 0.0
    %2062 = vmatpush1.msra.mxu0 0.0
    %2063 = vmatprep.subr.mxu0 0.0
    %2064 = vmatpush1.msra.mxu0 0.0
    %2065 = vmatprep.subr.mxu0 0.0
    %2066 = vmatpush1.msra.mxu0 0.0
    %2067 = vmatprep.subr.mxu0 0.0
    %2068 = vmatpush1.msra.mxu0 0.0
    %2069 = vmatprep.subr.mxu0 0.0
    %2070 = vmatpush1.msra.mxu0 0.0
    %2071 = vmatprep.subr.mxu0 0.0
    %2072 = vmatpush1.msra.mxu0 0.0
    %2073 = vmatprep.subr.mxu0 0.0
    %2074 = vmatpush1.msra.mxu0 0.0
    %2075 = vmatprep.subr.mxu0 0.0
    %2076 = vmatpush1.msra.mxu0 0.0
    %2077 = vmatprep.subr.mxu0 0.0
    %2078 = vmatpush1.msra.mxu0 0.0
    %2079 = vmatprep.subr.mxu0 0.0
    %2080 = vmatpush1.msra.mxu0 0.0
    %2081 = vmatprep.subr.mxu0 0.0
    %2082 = vmatpush1.msra.mxu0 0.0
    %2083 = vmatprep.subr.mxu0 0.0
    %2084 = vmatpush1.msra.mxu0 0.0
    %2085 = vmatprep.subr.mxu0 0.0
    %2086 = vmatpush1.msra.mxu0 0.0
    %2087 = vmatprep.subr.mxu0 0.0
    %2088 = vmatpush1.msra.mxu0 0.0
    %2089 = vmatprep.subr.mxu0 0.0
    %2090 = vmatpush1.msra.mxu0 0.0
    %2091 = vmatprep.subr.mxu0 0.0
    %2092 = vmatpush1.msra.mxu0 0.0
    %2093 = vmatprep.subr.mxu0 0.0
    %2094 = vmatpush1.msra.mxu0 0.0
    %2095 = vmatprep.mubr.f32.mxu0 0.0
    %v2096 = vand.u32 %v1676, 4294901760
    %v2097 = vsub.f32 %v1676, %v2096
    %v2098 = vand.u32 %v2097, 4294901760
    %2099 = vmatmul.mubr.f32.gmra.mrb[0].mxu0 %v2098
    %v2100 = vpop.f32.mrb[0].mxu0
    %v2101 = vadd.f32 %v2013, %v2100
    %v2102 = vpop.f32.mrb[0].mxu0
    %2103 = vdwg.mxu0
    %2104 = vmatprep.subr.mxu0 0.0
    %v2105 = vand.u32 %v1652, 4294901760
    %v2106 = vsub.f32 %v1652, %v2105
    %v2107 = vand.u32 %v2106, 4294901760
    %2108 = vmatpush1.msra.mxu0 %v2107
    %2109 = vmatprep.subr.mxu0 0.0
    %v2110 = vand.u32 %v1653, 4294901760
    %v2111 = vsub.f32 %v1653, %v2110
    %v2112 = vand.u32 %v2111, 4294901760
    %2113 = vmatpush1.msra.mxu0 %v2112
    %2114 = vmatprep.subr.mxu0 0.0
    %v2115 = vand.u32 %v1654, 4294901760
    %v2116 = vsub.f32 %v1654, %v2115
    %v2117 = vand.u32 %v2116, 4294901760
    %2118 = vmatpush1.msra.mxu0 %v2117
    %2119 = vmatprep.subr.mxu0 0.0
    %v2120 = vand.u32 %v1655, 4294901760
    %v2121 = vsub.f32 %v1655, %v2120
    %v2122 = vand.u32 %v2121, 4294901760
    %2123 = vmatpush1.msra.mxu0 %v2122
    %2124 = vmatprep.subr.mxu0 0.0
    %v2125 = vand.u32 %v1656, 4294901760
    %v2126 = vsub.f32 %v1656, %v2125
    %v2127 = vand.u32 %v2126, 4294901760
    %2128 = vmatpush1.msra.mxu0 %v2127
    %2129 = vmatprep.subr.mxu0 0.0
    %v2130 = vand.u32 %v1657, 4294901760
    %v2131 = vsub.f32 %v1657, %v2130
    %v2132 = vand.u32 %v2131, 4294901760
    %2133 = vmatpush1.msra.mxu0 %v2132
    %2134 = vmatprep.subr.mxu0 0.0
    %v2135 = vand.u32 %v1658, 4294901760
    %v2136 = vsub.f32 %v1658, %v2135
    %v2137 = vand.u32 %v2136, 4294901760
    %2138 = vmatpush1.msra.mxu0 %v2137
    %2139 = vmatprep.subr.mxu0 0.0
    %v2140 = vand.u32 %v1659, 4294901760
    %v2141 = vsub.f32 %v1659, %v2140
    %v2142 = vand.u32 %v2141, 4294901760
    %2143 = vmatpush1.msra.mxu0 %v2142
    %2144 = vmatprep.subr.mxu0 0.0
    %v2145 = vand.u32 %v1660, 4294901760
    %v2146 = vsub.f32 %v1660, %v2145
    %v2147 = vand.u32 %v2146, 4294901760
    %2148 = vmatpush1.msra.mxu0 %v2147
    %2149 = vmatprep.subr.mxu0 0.0
    %v2150 = vand.u32 %v1661, 4294901760
    %v2151 = vsub.f32 %v1661, %v2150
    %v2152 = vand.u32 %v2151, 4294901760
    %2153 = vmatpush1.msra.mxu0 %v2152
    %2154 = vmatprep.subr.mxu0 0.0
    %v2155 = vand.u32 %v1662, 4294901760
    %v2156 = vsub.f32 %v1662, %v2155
    %v2157 = vand.u32 %v2156, 4294901760
    %2158 = vmatpush1.msra.mxu0 %v2157
    %2159 = vmatprep.subr.mxu0 0.0
    %v2160 = vand.u32 %v1663, 4294901760
    %v2161 = vsub.f32 %v1663, %v2160
    %v2162 = vand.u32 %v2161, 4294901760
    %2163 = vmatpush1.msra.mxu0 %v2162
    %2164 = vmatprep.subr.mxu0 0.0
    %v2165 = vand.u32 %v1664, 4294901760
    %v2166 = vsub.f32 %v1664, %v2165
    %v2167 = vand.u32 %v2166, 4294901760
    %2168 = vmatpush1.msra.mxu0 %v2167
    %2169 = vmatprep.subr.mxu0 0.0
    %v2170 = vand.u32 %v1665, 4294901760
    %v2171 = vsub.f32 %v1665, %v2170
    %v2172 = vand.u32 %v2171, 4294901760
    %2173 = vmatpush1.msra.mxu0 %v2172
    %2174 = vmatprep.subr.mxu0 0.0
    %v2175 = vand.u32 %v1666, 4294901760
    %v2176 = vsub.f32 %v1666, %v2175
    %v2177 = vand.u32 %v2176, 4294901760
    %2178 = vmatpush1.msra.mxu0 %v2177
    %2179 = vmatprep.subr.mxu0 0.0
    %2180 = vmatpush1.msra.mxu0 0.0
    %2181 = vmatprep.subr.mxu0 0.0
    %2182 = vmatpush1.msra.mxu0 0.0
    %2183 = vmatprep.subr.mxu0 0.0
    %2184 = vmatpush1.msra.mxu0 0.0
    %2185 = vmatprep.subr.mxu0 0.0
    %2186 = vmatpush1.msra.mxu0 0.0
    %2187 = vmatprep.subr.mxu0 0.0
    %2188 = vmatpush1.msra.mxu0 0.0
    %2189 = vmatprep.subr.mxu0 0.0
    %2190 = vmatpush1.msra.mxu0 0.0
    %2191 = vmatprep.subr.mxu0 0.0
    %2192 = vmatpush1.msra.mxu0 0.0
    %2193 = vmatprep.subr.mxu0 0.0
    %2194 = vmatpush1.msra.mxu0 0.0
    %2195 = vmatprep.subr.mxu0 0.0
    %2196 = vmatpush1.msra.mxu0 0.0
    %2197 = vmatprep.subr.mxu0 0.0
    %2198 = vmatpush1.msra.mxu0 0.0
    %2199 = vmatprep.subr.mxu0 0.0
    %2200 = vmatpush1.msra.mxu0 0.0
    %2201 = vmatprep.subr.mxu0 0.0
    %2202 = vmatpush1.msra.mxu0 0.0
    %2203 = vmatprep.subr.mxu0 0.0
    %2204 = vmatpush1.msra.mxu0 0.0
    %2205 = vmatprep.subr.mxu0 0.0
    %2206 = vmatpush1.msra.mxu0 0.0
    %2207 = vmatprep.subr.mxu0 0.0
    %2208 = vmatpush1.msra.mxu0 0.0
    %2209 = vmatprep.subr.mxu0 0.0
    %2210 = vmatpush1.msra.mxu0 0.0
    %2211 = vmatprep.subr.mxu0 0.0
    %2212 = vmatpush1.msra.mxu0 0.0
    %2213 = vmatprep.mubr.f32.mxu0 0.0
    %v2214 = vand.u32 %v1676, 4294901760
    %2215 = vmatmul.mubr.f32.gmra.mrb[0].mxu0 %v2214
    %v2216 = vpop.f32.mrb[0].mxu0
    %v2217 = vadd.f32 %v2101, %v2216
    %v2218 = vpop.f32.mrb[0].mxu0
    %2219 = vdwg.mxu0
    %2220 = vmatprep.subr.mxu0 0.0
    %v2221 = vand.u32 %v1652, 4294901760
    %2222 = vmatpush1.msra.mxu0 %v2221
    %2223 = vmatprep.subr.mxu0 0.0
    %v2224 = vand.u32 %v1653, 4294901760
    %2225 = vmatpush1.msra.mxu0 %v2224
    %2226 = vmatprep.subr.mxu0 0.0
    %v2227 = vand.u32 %v1654, 4294901760
    %2228 = vmatpush1.msra.mxu0 %v2227
    %2229 = vmatprep.subr.mxu0 0.0
    %v2230 = vand.u32 %v1655, 4294901760
    %2231 = vmatpush1.msra.mxu0 %v2230
    %2232 = vmatprep.subr.mxu0 0.0
    %v2233 = vand.u32 %v1656, 4294901760
    %2234 = vmatpush1.msra.mxu0 %v2233
    %2235 = vmatprep.subr.mxu0 0.0
    %v2236 = vand.u32 %v1657, 4294901760
    %2237 = vmatpush1.msra.mxu0 %v2236
    %2238 = vmatprep.subr.mxu0 0.0
    %v2239 = vand.u32 %v1658, 4294901760
    %2240 = vmatpush1.msra.mxu0 %v2239
    %2241 = vmatprep.subr.mxu0 0.0
    %v2242 = vand.u32 %v1659, 4294901760
    %2243 = vmatpush1.msra.mxu0 %v2242
    %2244 = vmatprep.subr.mxu0 0.0
    %v2245 = vand.u32 %v1660, 4294901760
    %2246 = vmatpush1.msra.mxu0 %v2245
    %2247 = vmatprep.subr.mxu0 0.0
    %v2248 = vand.u32 %v1661, 4294901760
    %2249 = vmatpush1.msra.mxu0 %v2248
    %2250 = vmatprep.subr.mxu0 0.0
    %v2251 = vand.u32 %v1662, 4294901760
    %2252 = vmatpush1.msra.mxu0 %v2251
    %2253 = vmatprep.subr.mxu0 0.0
    %v2254 = vand.u32 %v1663, 4294901760
    %2255 = vmatpush1.msra.mxu0 %v2254
    %2256 = vmatprep.subr.mxu0 0.0
    %v2257 = vand.u32 %v1664, 4294901760
    %2258 = vmatpush1.msra.mxu0 %v2257
    %2259 = vmatprep.subr.mxu0 0.0
    %v2260 = vand.u32 %v1665, 4294901760
    %2261 = vmatpush1.msra.mxu0 %v2260
    %2262 = vmatprep.subr.mxu0 0.0
    %v2263 = vand.u32 %v1666, 4294901760
    %2264 = vmatpush1.msra.mxu0 %v2263
    %2265 = vmatprep.subr.mxu0 0.0
    %2266 = vmatpush1.msra.mxu0 0.0
    %2267 = vmatprep.subr.mxu0 0.0
    %2268 = vmatpush1.msra.mxu0 0.0
    %2269 = vmatprep.subr.mxu0 0.0
    %2270 = vmatpush1.msra.mxu0 0.0
    %2271 = vmatprep.subr.mxu0 0.0
    %2272 = vmatpush1.msra.mxu0 0.0
    %2273 = vmatprep.subr.mxu0 0.0
    %2274 = vmatpush1.msra.mxu0 0.0
    %2275 = vmatprep.subr.mxu0 0.0
    %2276 = vmatpush1.msra.mxu0 0.0
    %2277 = vmatprep.subr.mxu0 0.0
    %2278 = vmatpush1.msra.mxu0 0.0
    %2279 = vmatprep.subr.mxu0 0.0
    %2280 = vmatpush1.msra.mxu0 0.0
    %2281 = vmatprep.subr.mxu0 0.0
    %2282 = vmatpush1.msra.mxu0 0.0
    %2283 = vmatprep.subr.mxu0 0.0
    %2284 = vmatpush1.msra.mxu0 0.0
    %2285 = vmatprep.subr.mxu0 0.0
    %2286 = vmatpush1.msra.mxu0 0.0
    %2287 = vmatprep.subr.mxu0 0.0
    %2288 = vmatpush1.msra.mxu0 0.0
    %2289 = vmatprep.subr.mxu0 0.0
    %2290 = vmatpush1.msra.mxu0 0.0
    %2291 = vmatprep.subr.mxu0 0.0
    %2292 = vmatpush1.msra.mxu0 0.0
    %2293 = vmatprep.subr.mxu0 0.0
    %2294 = vmatpush1.msra.mxu0 0.0
    %2295 = vmatprep.subr.mxu0 0.0
    %2296 = vmatpush1.msra.mxu0 0.0
    %2297 = vmatprep.subr.mxu0 0.0
    %2298 = vmatpush1.msra.mxu0 0.0
    %2299 = vmatprep.mubr.f32.mxu0 0.0
    %v2300 = vand.u32 %v1676, 4294901760
    %2301 = vmatmul.mubr.f32.gmra.mrb[0].mxu0 %v2300
    %v2302 = vpop.f32.mrb[0].mxu0
    %v2303 = vadd.f32 %v2217, %v2302
    %v2304 = vpop.f32.mrb[0].mxu0
    %2305 = vdwg.mxu0
    %v2306 = vmax.f32 %v2303, 0.0
    %v2307 = vld [vmem:[%s5] sm:$0xff]
    %v2308 = vld [vmem:[%s5 + $0x8] sm:$0xff]
    %v2309 = vld [vmem:[%s5 + $0x10] sm:$0xff]
    %v2310 = vld [vmem:[%s5 + $0x18] sm:$0xff]
    %v2311 = vld [vmem:[%s5 + $0x20] sm:$0xff]
    %v2312 = vld [vmem:[%s5 + $0x28] sm:$0xff]
    %v2313 = vld [vmem:[%s5 + $0x30] sm:$0xff]
    %v2314 = vld [vmem:[%s5 + $0x38] sm:$0xff]
    %v2315 = vld [vmem:[%s5 + $0x40] sm:$0xff]
    %v2316 = vld [vmem:[%s5 + $0x48] sm:$0xff]
    %v2317 = vld [vmem:[%s5 + $0x50] sm:$0xf]
    %v2318 = vld [vmem:[%s6] sm:$0x1]
    %v2320 = vlaneseq
    %v2321 = vshrl.u32 %v2320, 7
    %v2322 = vsub.s32 0, %v2321
    %v2323 = vrot.slane %v2318, %v2322
    %vm2325 = vcmask 687104
    %v2327 = vsel %vm2325, %v2306, 0
    %vm2329 = vcmask 1043456
    %v2331 = vsel %vm2329, %v2317, 0
    %2333 = vmatprep.subr.mxu0 0.0
    %v2334 = vand.u32 %v2307, 4294901760
    %2335 = vmatpush1.msra.mxu0 %v2334
    %2336 = vmatprep.subr.mxu0 0.0
    %v2337 = vand.u32 %v2308, 4294901760
    %2338 = vmatpush1.msra.mxu0 %v2337
    %2339 = vmatprep.subr.mxu0 0.0
    %v2340 = vand.u32 %v2309, 4294901760
    %2341 = vmatpush1.msra.mxu0 %v2340
    %2342 = vmatprep.subr.mxu0 0.0
    %v2343 = vand.u32 %v2310, 4294901760
    %2344 = vmatpush1.msra.mxu0 %v2343
    %2345 = vmatprep.subr.mxu0 0.0
    %v2346 = vand.u32 %v2311, 4294901760
    %2347 = vmatpush1.msra.mxu0 %v2346
    %2348 = vmatprep.subr.mxu0 0.0
    %v2349 = vand.u32 %v2312, 4294901760
    %2350 = vmatpush1.msra.mxu0 %v2349
    %2351 = vmatprep.subr.mxu0 0.0
    %v2352 = vand.u32 %v2313, 4294901760
    %2353 = vmatpush1.msra.mxu0 %v2352
    %2354 = vmatprep.subr.mxu0 0.0
    %v2355 = vand.u32 %v2314, 4294901760
    %2356 = vmatpush1.msra.mxu0 %v2355
    %2357 = vmatprep.subr.mxu0 0.0
    %v2358 = vand.u32 %v2315, 4294901760
    %2359 = vmatpush1.msra.mxu0 %v2358
    %2360 = vmatprep.subr.mxu0 0.0
    %v2361 = vand.u32 %v2316, 4294901760
    %2362 = vmatpush1.msra.mxu0 %v2361
    %2363 = vmatprep.subr.mxu0 0.0
    %v2364 = vand.u32 %v2331, 4294901760
    %2365 = vmatpush1.msra.mxu0 %v2364
    %2366 = vmatprep.subr.mxu0 0.0
    %2367 = vmatpush1.msra.mxu0 0.0
    %2368 = vmatprep.subr.mxu0 0.0
    %2369 = vmatpush1.msra.mxu0 0.0
    %2370 = vmatprep.subr.mxu0 0.0
    %2371 = vmatpush1.msra.mxu0 0.0
    %2372 = vmatprep.subr.mxu0 0.0
    %2373 = vmatpush1.msra.mxu0 0.0
    %2374 = vmatprep.subr.mxu0 0.0
    %2375 = vmatpush1.msra.mxu0 0.0
    %2376 = vmatprep.subr.mxu0 0.0
    %2377 = vmatpush1.msra.mxu0 0.0
    %2378 = vmatprep.subr.mxu0 0.0
    %2379 = vmatpush1.msra.mxu0 0.0
    %2380 = vmatprep.subr.mxu0 0.0
    %2381 = vmatpush1.msra.mxu0 0.0
    %2382 = vmatprep.subr.mxu0 0.0
    %2383 = vmatpush1.msra.mxu0 0.0
    %2384 = vmatprep.subr.mxu0 0.0
    %2385 = vmatpush1.msra.mxu0 0.0
    %2386 = vmatprep.subr.mxu0 0.0
    %2387 = vmatpush1.msra.mxu0 0.0
    %2388 = vmatprep.subr.mxu0 0.0
    %2389 = vmatpush1.msra.mxu0 0.0
    %2390 = vmatprep.subr.mxu0 0.0
    %2391 = vmatpush1.msra.mxu0 0.0
    %2392 = vmatprep.subr.mxu0 0.0
    %2393 = vmatpush1.msra.mxu0 0.0
    %2394 = vmatprep.subr.mxu0 0.0
    %2395 = vmatpush1.msra.mxu0 0.0
    %2396 = vmatprep.subr.mxu0 0.0
    %2397 = vmatpush1.msra.mxu0 0.0
    %2398 = vmatprep.subr.mxu0 0.0
    %2399 = vmatpush1.msra.mxu0 0.0
    %2400 = vmatprep.subr.mxu0 0.0
    %2401 = vmatpush1.msra.mxu0 0.0
    %2402 = vmatprep.subr.mxu0 0.0
    %2403 = vmatpush1.msra.mxu0 0.0
    %2404 = vmatprep.subr.mxu0 0.0
    %2405 = vmatpush1.msra.mxu0 0.0
    %2406 = vmatprep.subr.mxu0 0.0
    %2407 = vmatpush1.msra.mxu0 0.0
    %2408 = vmatprep.mubr.f32.mxu0 0.0
    %v2409 = vand.u32 %v2327, 4294901760
    %v2410 = vsub.f32 %v2327, %v2409
    %v2411 = vand.u32 %v2410, 4294901760
    %v2412 = vsub.f32 %v2410, %v2411
    %v2413 = vand.u32 %v2412, 4294901760
    %2414 = vmatmul.mubr.f32.gmra.mrb[0].mxu0 %v2413
    %v2415 = vpop.f32.mrb[0].mxu0
    %v2416 = vadd.f32 %v2323, %v2415
    %v2417 = vpop.f32.mrb[0].mxu0
    %2418 = vdwg.mxu0
    %2419 = vmatprep.subr.mxu0 0.0
    %v2420 = vand.u32 %v2307, 4294901760
    %v2421 = vsub.f32 %v2307, %v2420
    %v2422 = vand.u32 %v2421, 4294901760
    %v2423 = vsub.f32 %v2421, %v2422
    %v2424 = vand.u32 %v2423, 4294901760
    %2425 = vmatpush1.msra.mxu0 %v2424
    %2426 = vmatprep.subr.mxu0 0.0
    %v2427 = vand.u32 %v2308, 4294901760
    %v2428 = vsub.f32 %v2308, %v2427
    %v2429 = vand.u32 %v2428, 4294901760
    %v2430 = vsub.f32 %v2428, %v2429
    %v2431 = vand.u32 %v2430, 4294901760
    %2432 = vmatpush1.msra.mxu0 %v2431
    %2433 = vmatprep.subr.mxu0 0.0
    %v2434 = vand.u32 %v2309, 4294901760
    %v2435 = vsub.f32 %v2309, %v2434
    %v2436 = vand.u32 %v2435, 4294901760
    %v2437 = vsub.f32 %v2435, %v2436
    %v2438 = vand.u32 %v2437, 4294901760
    %2439 = vmatpush1.msra.mxu0 %v2438
    %2440 = vmatprep.subr.mxu0 0.0
    %v2441 = vand.u32 %v2310, 4294901760
    %v2442 = vsub.f32 %v2310, %v2441
    %v2443 = vand.u32 %v2442, 4294901760
    %v2444 = vsub.f32 %v2442, %v2443
    %v2445 = vand.u32 %v2444, 4294901760
    %2446 = vmatpush1.msra.mxu0 %v2445
    %2447 = vmatprep.subr.mxu0 0.0
    %v2448 = vand.u32 %v2311, 4294901760
    %v2449 = vsub.f32 %v2311, %v2448
    %v2450 = vand.u32 %v2449, 4294901760
    %v2451 = vsub.f32 %v2449, %v2450
    %v2452 = vand.u32 %v2451, 4294901760
    %2453 = vmatpush1.msra.mxu0 %v2452
    %2454 = vmatprep.subr.mxu0 0.0
    %v2455 = vand.u32 %v2312, 4294901760
    %v2456 = vsub.f32 %v2312, %v2455
    %v2457 = vand.u32 %v2456, 4294901760
    %v2458 = vsub.f32 %v2456, %v2457
    %v2459 = vand.u32 %v2458, 4294901760
    %2460 = vmatpush1.msra.mxu0 %v2459
    %2461 = vmatprep.subr.mxu0 0.0
    %v2462 = vand.u32 %v2313, 4294901760
    %v2463 = vsub.f32 %v2313, %v2462
    %v2464 = vand.u32 %v2463, 4294901760
    %v2465 = vsub.f32 %v2463, %v2464
    %v2466 = vand.u32 %v2465, 4294901760
    %2467 = vmatpush1.msra.mxu0 %v2466
    %2468 = vmatprep.subr.mxu0 0.0
    %v2469 = vand.u32 %v2314, 4294901760
    %v2470 = vsub.f32 %v2314, %v2469
    %v2471 = vand.u32 %v2470, 4294901760
    %v2472 = vsub.f32 %v2470, %v2471
    %v2473 = vand.u32 %v2472, 4294901760
    %2474 = vmatpush1.msra.mxu0 %v2473
    %2475 = vmatprep.subr.mxu0 0.0
    %v2476 = vand.u32 %v2315, 4294901760
    %v2477 = vsub.f32 %v2315, %v2476
    %v2478 = vand.u32 %v2477, 4294901760
    %v2479 = vsub.f32 %v2477, %v2478
    %v2480 = vand.u32 %v2479, 4294901760
    %2481 = vmatpush1.msra.mxu0 %v2480
    %2482 = vmatprep.subr.mxu0 0.0
    %v2483 = vand.u32 %v2316, 4294901760
    %v2484 = vsub.f32 %v2316, %v2483
    %v2485 = vand.u32 %v2484, 4294901760
    %v2486 = vsub.f32 %v2484, %v2485
    %v2487 = vand.u32 %v2486, 4294901760
    %2488 = vmatpush1.msra.mxu0 %v2487
    %2489 = vmatprep.subr.mxu0 0.0
    %v2490 = vand.u32 %v2331, 4294901760
    %v2491 = vsub.f32 %v2331, %v2490
    %v2492 = vand.u32 %v2491, 4294901760
    %v2493 = vsub.f32 %v2491, %v2492
    %v2494 = vand.u32 %v2493, 4294901760
    %2495 = vmatpush1.msra.mxu0 %v2494
    %2496 = vmatprep.subr.mxu0 0.0
    %2497 = vmatpush1.msra.mxu0 0.0
    %2498 = vmatprep.subr.mxu0 0.0
    %2499 = vmatpush1.msra.mxu0 0.0
    %2500 = vmatprep.subr.mxu0 0.0
    %2501 = vmatpush1.msra.mxu0 0.0
    %2502 = vmatprep.subr.mxu0 0.0
    %2503 = vmatpush1.msra.mxu0 0.0
    %2504 = vmatprep.subr.mxu0 0.0
    %2505 = vmatpush1.msra.mxu0 0.0
    %2506 = vmatprep.subr.mxu0 0.0
    %2507 = vmatpush1.msra.mxu0 0.0
    %2508 = vmatprep.subr.mxu0 0.0
    %2509 = vmatpush1.msra.mxu0 0.0
    %2510 = vmatprep.subr.mxu0 0.0
    %2511 = vmatpush1.msra.mxu0 0.0
    %2512 = vmatprep.subr.mxu0 0.0
    %2513 = vmatpush1.msra.mxu0 0.0
    %2514 = vmatprep.subr.mxu0 0.0
    %2515 = vmatpush1.msra.mxu0 0.0
    %2516 = vmatprep.subr.mxu0 0.0
    %2517 = vmatpush1.msra.mxu0 0.0
    %2518 = vmatprep.subr.mxu0 0.0
    %2519 = vmatpush1.msra.mxu0 0.0
    %2520 = vmatprep.subr.mxu0 0.0
    %2521 = vmatpush1.msra.mxu0 0.0
    %2522 = vmatprep.subr.mxu0 0.0
    %2523 = vmatpush1.msra.mxu0 0.0
    %2524 = vmatprep.subr.mxu0 0.0
    %2525 = vmatpush1.msra.mxu0 0.0
    %2526 = vmatprep.subr.mxu0 0.0
    %2527 = vmatpush1.msra.mxu0 0.0
    %2528 = vmatprep.subr.mxu0 0.0
    %2529 = vmatpush1.msra.mxu0 0.0
    %2530 = vmatprep.subr.mxu0 0.0
    %2531 = vmatpush1.msra.mxu0 0.0
    %2532 = vmatprep.subr.mxu0 0.0
    %2533 = vmatpush1.msra.mxu0 0.0
    %2534 = vmatprep.subr.mxu0 0.0
    %2535 = vmatpush1.msra.mxu0 0.0
    %2536 = vmatprep.subr.mxu0 0.0
    %2537 = vmatpush1.msra.mxu0 0.0
    %2538 = vmatprep.mubr.f32.mxu0 0.0
    %v2539 = vand.u32 %v2327, 4294901760
    %2540 = vmatmul.mubr.f32.gmra.mrb[0].mxu0 %v2539
    %v2541 = vpop.f32.mrb[0].mxu0
    %v2542 = vadd.f32 %v2416, %v2541
    %v2543 = vpop.f32.mrb[0].mxu0
    %2544 = vdwg.mxu0
    %2545 = vmatprep.subr.mxu0 0.0
    %v2546 = vand.u32 %v2307, 4294901760
    %v2547 = vsub.f32 %v2307, %v2546
    %2548 = vmatpush1.msra.mxu0 %v2547
    %2549 = vmatprep.subr.mxu0 0.0
    %v2550 = vand.u32 %v2308, 4294901760
    %v2551 = vsub.f32 %v2308, %v2550
    %2552 = vmatpush1.msra.mxu0 %v2551
    %2553 = vmatprep.subr.mxu0 0.0
    %v2554 = vand.u32 %v2309, 4294901760
    %v2555 = vsub.f32 %v2309, %v2554
    %2556 = vmatpush1.msra.mxu0 %v2555
    %2557 = vmatprep.subr.mxu0 0.0
    %v2558 = vand.u32 %v2310, 4294901760
    %v2559 = vsub.f32 %v2310, %v2558
    %2560 = vmatpush1.msra.mxu0 %v2559
    %2561 = vmatprep.subr.mxu0 0.0
    %v2562 = vand.u32 %v2311, 4294901760
    %v2563 = vsub.f32 %v2311, %v2562
    %2564 = vmatpush1.msra.mxu0 %v2563
    %2565 = vmatprep.subr.mxu0 0.0
    %v2566 = vand.u32 %v2312, 4294901760
    %v2567 = vsub.f32 %v2312, %v2566
    %2568 = vmatpush1.msra.mxu0 %v2567
    %2569 = vmatprep.subr.mxu0 0.0
    %v2570 = vand.u32 %v2313, 4294901760
    %v2571 = vsub.f32 %v2313, %v2570
    %2572 = vmatpush1.msra.mxu0 %v2571
    %2573 = vmatprep.subr.mxu0 0.0
    %v2574 = vand.u32 %v2314, 4294901760
    %v2575 = vsub.f32 %v2314, %v2574
    %2576 = vmatpush1.msra.mxu0 %v2575
    %2577 = vmatprep.subr.mxu0 0.0
    %v2578 = vand.u32 %v2315, 4294901760
    %v2579 = vsub.f32 %v2315, %v2578
    %2580 = vmatpush1.msra.mxu0 %v2579
    %2581 = vmatprep.subr.mxu0 0.0
    %v2582 = vand.u32 %v2316, 4294901760
    %v2583 = vsub.f32 %v2316, %v2582
    %2584 = vmatpush1.msra.mxu0 %v2583
    %2585 = vmatprep.subr.mxu0 0.0
    %v2586 = vand.u32 %v2331, 4294901760
    %v2587 = vsub.f32 %v2331, %v2586
    %2588 = vmatpush1.msra.mxu0 %v2587
    %2589 = vmatprep.subr.mxu0 0.0
    %2590 = vmatpush1.msra.mxu0 0.0
    %2591 = vmatprep.subr.mxu0 0.0
    %2592 = vmatpush1.msra.mxu0 0.0
    %2593 = vmatprep.subr.mxu0 0.0
    %2594 = vmatpush1.msra.mxu0 0.0
    %2595 = vmatprep.subr.mxu0 0.0
    %2596 = vmatpush1.msra.mxu0 0.0
    %2597 = vmatprep.subr.mxu0 0.0
    %2598 = vmatpush1.msra.mxu0 0.0
    %2599 = vmatprep.subr.mxu0 0.0
    %2600 = vmatpush1.msra.mxu0 0.0
    %2601 = vmatprep.subr.mxu0 0.0
    %2602 = vmatpush1.msra.mxu0 0.0
    %2603 = vmatprep.subr.mxu0 0.0
    %2604 = vmatpush1.msra.mxu0 0.0
    %2605 = vmatprep.subr.mxu0 0.0
    %2606 = vmatpush1.msra.mxu0 0.0
    %2607 = vmatprep.subr.mxu0 0.0
    %2608 = vmatpush1.msra.mxu0 0.0
    %2609 = vmatprep.subr.mxu0 0.0
    %2610 = vmatpush1.msra.mxu0 0.0
    %2611 = vmatprep.subr.mxu0 0.0
    %2612 = vmatpush1.msra.mxu0 0.0
    %2613 = vmatprep.subr.mxu0 0.0
    %2614 = vmatpush1.msra.mxu0 0.0
    %2615 = vmatprep.subr.mxu0 0.0
    %2616 = vmatpush1.msra.mxu0 0.0
    %2617 = vmatprep.subr.mxu0 0.0
    %2618 = vmatpush1.msra.mxu0 0.0
    %2619 = vmatprep.subr.mxu0 0.0
    %2620 = vmatpush1.msra.mxu0 0.0
    %2621 = vmatprep.subr.mxu0 0.0
    %2622 = vmatpush1.msra.mxu0 0.0
    %2623 = vmatprep.subr.mxu0 0.0
    %2624 = vmatpush1.msra.mxu0 0.0
    %2625 = vmatprep.subr.mxu0 0.0
    %2626 = vmatpush1.msra.mxu0 0.0
    %2627 = vmatprep.subr.mxu0 0.0
    %2628 = vmatpush1.msra.mxu0 0.0
    %2629 = vmatprep.subr.mxu0 0.0
    %2630 = vmatpush1.msra.mxu0 0.0
    %2631 = vmatprep.mubr.f32.mxu0 0.0
    %v2632 = vand.u32 %v2327, 4294901760
    %v2633 = vsub.f32 %v2327, %v2632
    %2634 = vmatmul.mubr.f32.gmra.mrb[0].mxu0 %v2633
    %v2635 = vpop.f32.mrb[0].mxu0
    %v2636 = vadd.f32 %v2542, %v2635
    %v2637 = vpop.f32.mrb[0].mxu0
    %2638 = vdwg.mxu0
    %2639 = vmatprep.subr.mxu0 0.0
    %v2640 = vand.u32 %v2307, 4294901760
    %2641 = vmatpush1.msra.mxu0 %v2640
    %2642 = vmatprep.subr.mxu0 0.0
    %v2643 = vand.u32 %v2308, 4294901760
    %2644 = vmatpush1.msra.mxu0 %v2643
    %2645 = vmatprep.subr.mxu0 0.0
    %v2646 = vand.u32 %v2309, 4294901760
    %2647 = vmatpush1.msra.mxu0 %v2646
    %2648 = vmatprep.subr.mxu0 0.0
    %v2649 = vand.u32 %v2310, 4294901760
    %2650 = vmatpush1.msra.mxu0 %v2649
    %2651 = vmatprep.subr.mxu0 0.0
    %v2652 = vand.u32 %v2311, 4294901760
    %2653 = vmatpush1.msra.mxu0 %v2652
    %2654 = vmatprep.subr.mxu0 0.0
    %v2655 = vand.u32 %v2312, 4294901760
    %2656 = vmatpush1.msra.mxu0 %v2655
    %2657 = vmatprep.subr.mxu0 0.0
    %v2658 = vand.u32 %v2313, 4294901760
    %2659 = vmatpush1.msra.mxu0 %v2658
    %2660 = vmatprep.subr.mxu0 0.0
    %v2661 = vand.u32 %v2314, 4294901760
    %2662 = vmatpush1.msra.mxu0 %v2661
    %2663 = vmatprep.subr.mxu0 0.0
    %v2664 = vand.u32 %v2315, 4294901760
    %2665 = vmatpush1.msra.mxu0 %v2664
    %2666 = vmatprep.subr.mxu0 0.0
    %v2667 = vand.u32 %v2316, 4294901760
    %2668 = vmatpush1.msra.mxu0 %v2667
    %2669 = vmatprep.subr.mxu0 0.0
    %v2670 = vand.u32 %v2331, 4294901760
    %2671 = vmatpush1.msra.mxu0 %v2670
    %2672 = vmatprep.subr.mxu0 0.0
    %2673 = vmatpush1.msra.mxu0 0.0
    %2674 = vmatprep.subr.mxu0 0.0
    %2675 = vmatpush1.msra.mxu0 0.0
    %2676 = vmatprep.subr.mxu0 0.0
    %2677 = vmatpush1.msra.mxu0 0.0
    %2678 = vmatprep.subr.mxu0 0.0
    %2679 = vmatpush1.msra.mxu0 0.0
    %2680 = vmatprep.subr.mxu0 0.0
    %2681 = vmatpush1.msra.mxu0 0.0
    %2682 = vmatprep.subr.mxu0 0.0
    %2683 = vmatpush1.msra.mxu0 0.0
    %2684 = vmatprep.subr.mxu0 0.0
    %2685 = vmatpush1.msra.mxu0 0.0
    %2686 = vmatprep.subr.mxu0 0.0
    %2687 = vmatpush1.msra.mxu0 0.0
    %2688 = vmatprep.subr.mxu0 0.0
    %2689 = vmatpush1.msra.mxu0 0.0
    %2690 = vmatprep.subr.mxu0 0.0
    %2691 = vmatpush1.msra.mxu0 0.0
    %2692 = vmatprep.subr.mxu0 0.0
    %2693 = vmatpush1.msra.mxu0 0.0
    %2694 = vmatprep.subr.mxu0 0.0
    %2695 = vmatpush1.msra.mxu0 0.0
    %2696 = vmatprep.subr.mxu0 0.0
    %2697 = vmatpush1.msra.mxu0 0.0
    %2698 = vmatprep.subr.mxu0 0.0
    %2699 = vmatpush1.msra.mxu0 0.0
    %2700 = vmatprep.subr.mxu0 0.0
    %2701 = vmatpush1.msra.mxu0 0.0
    %2702 = vmatprep.subr.mxu0 0.0
    %2703 = vmatpush1.msra.mxu0 0.0
    %2704 = vmatprep.subr.mxu0 0.0
    %2705 = vmatpush1.msra.mxu0 0.0
    %2706 = vmatprep.subr.mxu0 0.0
    %2707 = vmatpush1.msra.mxu0 0.0
    %2708 = vmatprep.subr.mxu0 0.0
    %2709 = vmatpush1.msra.mxu0 0.0
    %2710 = vmatprep.subr.mxu0 0.0
    %2711 = vmatpush1.msra.mxu0 0.0
    %2712 = vmatprep.subr.mxu0 0.0
    %2713 = vmatpush1.msra.mxu0 0.0
    %2714 = vmatprep.mubr.f32.mxu0 0.0
    %v2715 = vand.u32 %v2327, 4294901760
    %v2716 = vsub.f32 %v2327, %v2715
    %v2717 = vand.u32 %v2716, 4294901760
    %2718 = vmatmul.mubr.f32.gmra.mrb[0].mxu0 %v2717
    %v2719 = vpop.f32.mrb[0].mxu0
    %v2720 = vadd.f32 %v2636, %v2719
    %v2721 = vpop.f32.mrb[0].mxu0
    %2722 = vdwg.mxu0
    %2723 = vmatprep.subr.mxu0 0.0
    %v2724 = vand.u32 %v2307, 4294901760
    %v2725 = vsub.f32 %v2307, %v2724
    %v2726 = vand.u32 %v2725, 4294901760
    %2727 = vmatpush1.msra.mxu0 %v2726
    %2728 = vmatprep.subr.mxu0 0.0
    %v2729 = vand.u32 %v2308, 4294901760
    %v2730 = vsub.f32 %v2308, %v2729
    %v2731 = vand.u32 %v2730, 4294901760
    %2732 = vmatpush1.msra.mxu0 %v2731
    %2733 = vmatprep.subr.mxu0 0.0
    %v2734 = vand.u32 %v2309, 4294901760
    %v2735 = vsub.f32 %v2309, %v2734
    %v2736 = vand.u32 %v2735, 4294901760
    %2737 = vmatpush1.msra.mxu0 %v2736
    %2738 = vmatprep.subr.mxu0 0.0
    %v2739 = vand.u32 %v2310, 4294901760
    %v2740 = vsub.f32 %v2310, %v2739
    %v2741 = vand.u32 %v2740, 4294901760
    %2742 = vmatpush1.msra.mxu0 %v2741
    %2743 = vmatprep.subr.mxu0 0.0
    %v2744 = vand.u32 %v2311, 4294901760
    %v2745 = vsub.f32 %v2311, %v2744
    %v2746 = vand.u32 %v2745, 4294901760
    %2747 = vmatpush1.msra.mxu0 %v2746
    %2748 = vmatprep.subr.mxu0 0.0
    %v2749 = vand.u32 %v2312, 4294901760
    %v2750 = vsub.f32 %v2312, %v2749
    %v2751 = vand.u32 %v2750, 4294901760
    %2752 = vmatpush1.msra.mxu0 %v2751
    %2753 = vmatprep.subr.mxu0 0.0
    %v2754 = vand.u32 %v2313, 4294901760
    %v2755 = vsub.f32 %v2313, %v2754
    %v2756 = vand.u32 %v2755, 4294901760
    %2757 = vmatpush1.msra.mxu0 %v2756
    %2758 = vmatprep.subr.mxu0 0.0
    %v2759 = vand.u32 %v2314, 4294901760
    %v2760 = vsub.f32 %v2314, %v2759
    %v2761 = vand.u32 %v2760, 4294901760
    %2762 = vmatpush1.msra.mxu0 %v2761
    %2763 = vmatprep.subr.mxu0 0.0
    %v2764 = vand.u32 %v2315, 4294901760
    %v2765 = vsub.f32 %v2315, %v2764
    %v2766 = vand.u32 %v2765, 4294901760
    %2767 = vmatpush1.msra.mxu0 %v2766
    %2768 = vmatprep.subr.mxu0 0.0
    %v2769 = vand.u32 %v2316, 4294901760
    %v2770 = vsub.f32 %v2316, %v2769
    %v2771 = vand.u32 %v2770, 4294901760
    %2772 = vmatpush1.msra.mxu0 %v2771
    %2773 = vmatprep.subr.mxu0 0.0
    %v2774 = vand.u32 %v2331, 4294901760
    %v2775 = vsub.f32 %v2331, %v2774
    %v2776 = vand.u32 %v2775, 4294901760
    %2777 = vmatpush1.msra.mxu0 %v2776
    %2778 = vmatprep.subr.mxu0 0.0
    %2779 = vmatpush1.msra.mxu0 0.0
    %2780 = vmatprep.subr.mxu0 0.0
    %2781 = vmatpush1.msra.mxu0 0.0
    %2782 = vmatprep.subr.mxu0 0.0
    %2783 = vmatpush1.msra.mxu0 0.0
    %2784 = vmatprep.subr.mxu0 0.0
    %2785 = vmatpush1.msra.mxu0 0.0
    %2786 = vmatprep.subr.mxu0 0.0
    %2787 = vmatpush1.msra.mxu0 0.0
    %2788 = vmatprep.subr.mxu0 0.0
    %2789 = vmatpush1.msra.mxu0 0.0
    %2790 = vmatprep.subr.mxu0 0.0
    %2791 = vmatpush1.msra.mxu0 0.0
    %2792 = vmatprep.subr.mxu0 0.0
    %2793 = vmatpush1.msra.mxu0 0.0
    %2794 = vmatprep.subr.mxu0 0.0
    %2795 = vmatpush1.msra.mxu0 0.0
    %2796 = vmatprep.subr.mxu0 0.0
    %2797 = vmatpush1.msra.mxu0 0.0
    %2798 = vmatprep.subr.mxu0 0.0
    %2799 = vmatpush1.msra.mxu0 0.0
    %2800 = vmatprep.subr.mxu0 0.0
    %2801 = vmatpush1.msra.mxu0 0.0
    %2802 = vmatprep.subr.mxu0 0.0
    %2803 = vmatpush1.msra.mxu0 0.0
    %2804 = vmatprep.subr.mxu0 0.0
    %2805 = vmatpush1.msra.mxu0 0.0
    %2806 = vmatprep.subr.mxu0 0.0
    %2807 = vmatpush1.msra.mxu0 0.0
    %2808 = vmatprep.subr.mxu0 0.0
    %2809 = vmatpush1.msra.mxu0 0.0
    %2810 = vmatprep.subr.mxu0 0.0
    %2811 = vmatpush1.msra.mxu0 0.0
    %2812 = vmatprep.subr.mxu0 0.0
    %2813 = vmatpush1.msra.mxu0 0.0
    %2814 = vmatprep.subr.mxu0 0.0
    %2815 = vmatpush1.msra.mxu0 0.0
    %2816 = vmatprep.subr.mxu0 0.0
    %2817 = vmatpush1.msra.mxu0 0.0
    %2818 = vmatprep.subr.mxu0 0.0
    %2819 = vmatpush1.msra.mxu0 0.0
    %2820 = vmatprep.mubr.f32.mxu0 0.0
    %v2821 = vand.u32 %v2327, 4294901760
    %2822 = vmatmul.mubr.f32.gmra.mrb[0].mxu0 %v2821
    %v2823 = vpop.f32.mrb[0].mxu0
    %v2824 = vadd.f32 %v2720, %v2823
    %v2825 = vpop.f32.mrb[0].mxu0
    %2826 = vdwg.mxu0
    %2827 = vmatprep.subr.mxu0 0.0
    %v2828 = vand.u32 %v2307, 4294901760
    %2829 = vmatpush1.msra.mxu0 %v2828
    %2830 = vmatprep.subr.mxu0 0.0
    %v2831 = vand.u32 %v2308, 4294901760
    %2832 = vmatpush1.msra.mxu0 %v2831
    %2833 = vmatprep.subr.mxu0 0.0
    %v2834 = vand.u32 %v2309, 4294901760
    %2835 = vmatpush1.msra.mxu0 %v2834
    %2836 = vmatprep.subr.mxu0 0.0
    %v2837 = vand.u32 %v2310, 4294901760
    %2838 = vmatpush1.msra.mxu0 %v2837
    %2839 = vmatprep.subr.mxu0 0.0
    %v2840 = vand.u32 %v2311, 4294901760
    %2841 = vmatpush1.msra.mxu0 %v2840
    %2842 = vmatprep.subr.mxu0 0.0
    %v2843 = vand.u32 %v2312, 4294901760
    %2844 = vmatpush1.msra.mxu0 %v2843
    %2845 = vmatprep.subr.mxu0 0.0
    %v2846 = vand.u32 %v2313, 4294901760
    %2847 = vmatpush1.msra.mxu0 %v2846
    %2848 = vmatprep.subr.mxu0 0.0
    %v2849 = vand.u32 %v2314, 4294901760
    %2850 = vmatpush1.msra.mxu0 %v2849
    %2851 = vmatprep.subr.mxu0 0.0
    %v2852 = vand.u32 %v2315, 4294901760
    %2853 = vmatpush1.msra.mxu0 %v2852
    %2854 = vmatprep.subr.mxu0 0.0
    %v2855 = vand.u32 %v2316, 4294901760
    %2856 = vmatpush1.msra.mxu0 %v2855
    %2857 = vmatprep.subr.mxu0 0.0
    %v2858 = vand.u32 %v2331, 4294901760
    %2859 = vmatpush1.msra.mxu0 %v2858
    %2860 = vmatprep.subr.mxu0 0.0
    %2861 = vmatpush1.msra.mxu0 0.0
    %2862 = vmatprep.subr.mxu0 0.0
    %2863 = vmatpush1.msra.mxu0 0.0
    %2864 = vmatprep.subr.mxu0 0.0
    %2865 = vmatpush1.msra.mxu0 0.0
    %2866 = vmatprep.subr.mxu0 0.0
    %2867 = vmatpush1.msra.mxu0 0.0
    %2868 = vmatprep.subr.mxu0 0.0
    %2869 = vmatpush1.msra.mxu0 0.0
    %2870 = vmatprep.subr.mxu0 0.0
    %2871 = vmatpush1.msra.mxu0 0.0
    %2872 = vmatprep.subr.mxu0 0.0
    %2873 = vmatpush1.msra.mxu0 0.0
    %2874 = vmatprep.subr.mxu0 0.0
    %2875 = vmatpush1.msra.mxu0 0.0
    %2876 = vmatprep.subr.mxu0 0.0
    %2877 = vmatpush1.msra.mxu0 0.0
    %2878 = vmatprep.subr.mxu0 0.0
    %2879 = vmatpush1.msra.mxu0 0.0
    %2880 = vmatprep.subr.mxu0 0.0
    %2881 = vmatpush1.msra.mxu0 0.0
    %2882 = vmatprep.subr.mxu0 0.0
    %2883 = vmatpush1.msra.mxu0 0.0
    %2884 = vmatprep.subr.mxu0 0.0
    %2885 = vmatpush1.msra.mxu0 0.0
    %2886 = vmatprep.subr.mxu0 0.0
    %2887 = vmatpush1.msra.mxu0 0.0
    %2888 = vmatprep.subr.mxu0 0.0
    %2889 = vmatpush1.msra.mxu0 0.0
    %2890 = vmatprep.subr.mxu0 0.0
    %2891 = vmatpush1.msra.mxu0 0.0
    %2892 = vmatprep.subr.mxu0 0.0
    %2893 = vmatpush1.msra.mxu0 0.0
    %2894 = vmatprep.subr.mxu0 0.0
    %2895 = vmatpush1.msra.mxu0 0.0
    %2896 = vmatprep.subr.mxu0 0.0
    %2897 = vmatpush1.msra.mxu0 0.0
    %2898 = vmatprep.subr.mxu0 0.0
    %2899 = vmatpush1.msra.mxu0 0.0
    %2900 = vmatprep.subr.mxu0 0.0
    %2901 = vmatpush1.msra.mxu0 0.0
    %2902 = vmatprep.mubr.f32.mxu0 0.0
    %v2903 = vand.u32 %v2327, 4294901760
    %2904 = vmatmul.mubr.f32.gmra.mrb[0].mxu0 %v2903
    %v2905 = vpop.f32.mrb[0].mxu0
    %v2906 = vadd.f32 %v2824, %v2905
    %v2907 = vpop.f32.mrb[0].mxu0
    %2908 = vdwg.mxu0
    %vm2909 = vcmask 74752
    %2910 = vst.msk [vmem:[#allocation2] sm:$0x3] %vm2909, %v2906
    // Predicated region
    $region30: #{net_forward.5} parent=1 // pred_check
      _
    $region31: #{net_forward.5} parent=1 // pred_check_branch
      %2912 = sbr.rel (0) target = $region33
    $region32: #{net_forward.5} parent=1 // pred_region
      %s2914 = ssub.s32 32, 32
      %2915 = vsyncadd [#allocation3], %s2914
      %s2917 = sshll.u32 [#allocation2], 4
      %s2918 = int_to_ptr.vmem [resolvable:$true] %s2917
      %2920 = dma.vmem_to_hbm [thread:$0]  %s2918, 32, %s7, [#allocation3]
    $region33: #{net_forward.5} parent=1 // pred_fallthru
      _
    // Predicated region
    $region34: #{net_forward.5} parent=1 // pred_check
      _
    $region35: #{net_forward.5} parent=1 // pred_check_branch
      %2922 = sbr.rel (0) target = $region37
    $region36: #{net_forward.5} parent=1 // pred_region
      %2923 = dma.done [#allocation3], 32
    $region37: #{net_forward.5} parent=1 // pred_fallthru
      _
    %2924 = vsyncpa [#allocation3], 1

</llo_original>
